<compile_context>
chip_gen: v6e
topology: v6e:2x2x1
jax: 0.10.0
libtpu: 0.0.40
codegen_flags: <defaults>
</compile_context>

<pallas_src>
import numpy as np
import jax
import jax.numpy as jnp
from jax.experimental import pallas as pl
from jax.experimental.pallas import tpu as pltpu


# -----------------------------------------------------------------------------
# Fused kernel: cfc + ffc projections, cosine-similarity, cls head, rel-max.
# -----------------------------------------------------------------------------
def _fused_llm_kernel(
        # inputs
        xc_ref, xf_ref, wc_ref, bc_ref, wf_ref, bff_ref, e_ref,
        expc_ref, expf_ref, sel_ref,
        w0_ref, b0_ref, w1_ref, b1_ref, w2_ref, b2_ref, rel_ref,
        # outputs
        out_ref, cv_ref, fv_ref,
        # scratch (persists across grid steps)
        h1_acc, dc_acc, qc2_acc, ec2_acc, df_acc, qf2_acc, ef2_acc):
    j = pl.program_id(0)
    nj = pl.num_programs(0)

    @pl.when(j == 0)
    def _init():
        h1_acc[...] = jnp.zeros_like(h1_acc)
        dc_acc[...] = jnp.zeros_like(dc_acc)
        qc2_acc[...] = jnp.zeros_like(qc2_acc)
        ec2_acc[...] = jnp.zeros_like(ec2_acc)
        df_acc[...] = jnp.zeros_like(df_acc)
        qf2_acc[...] = jnp.zeros_like(qf2_acc)
        ef2_acc[...] = jnp.zeros_like(ef2_acc)

    # --- cfc / ffc projections for this H tile (MXU, bf16 operands, f32 acc)
    qc = jnp.dot(xc_ref[...].astype(jnp.bfloat16), wc_ref[...],
                 preferred_element_type=jnp.float32) + bc_ref[...]       # (Mc, tn)
    qf = jnp.dot(xf_ref[...].astype(jnp.bfloat16), wf_ref[...],
                 preferred_element_type=jnp.float32) + bff_ref[...]      # (Mf, tn)

    # --- selected label embedding broadcast to token rows via one-hot matmuls
    e = e_ref[...]                                                       # (pbs, tn)
    e_c = jnp.dot(expc_ref[...], e, preferred_element_type=jnp.float32)  # (Mc, tn)
    e_f = jnp.dot(expf_ref[...], e, preferred_element_type=jnp.float32)  # (Mf, tn)

    # --- cosine-similarity partial sums (lane reductions ride the XLU)
    dc_acc[...] += jnp.sum(qc * e_c, axis=-1, keepdims=True)
    qc2_acc[...] += jnp.sum(qc * qc, axis=-1, keepdims=True)
    ec2_acc[...] += jnp.sum(e_c * e_c, axis=-1, keepdims=True)
    df_acc[...] += jnp.sum(qf * e_f, axis=-1, keepdims=True)
    qf2_acc[...] += jnp.sum(qf * qf, axis=-1, keepdims=True)
    ef2_acc[...] += jnp.sum(e_f * e_f, axis=-1, keepdims=True)

    # --- cls0 partial product over H (contraction axis == grid axis).
    # hs == last hidden state of the identity llmmodel stand-in
    #    == last concatenated input embedding == queries_f[:, -1, :].
    hs_tile = jnp.dot(sel_ref[...], qf,
                      preferred_element_type=jnp.float32)                # (bs, tn)
    h1_acc[...] += jnp.dot(hs_tile.astype(jnp.bfloat16), w0_ref[...],
                           preferred_element_type=jnp.float32)           # (bs, 1024)

    @pl.when(j == nj - 1)
    def _finalize():
        eps = jnp.float32(1e-8)
        cos_c = dc_acc[...] / (jnp.maximum(jnp.sqrt(qc2_acc[...]), eps)
                               * jnp.maximum(jnp.sqrt(ec2_acc[...]), eps))
        cos_f = df_acc[...] / (jnp.maximum(jnp.sqrt(qf2_acc[...]), eps)
                               * jnp.maximum(jnp.sqrt(ef2_acc[...]), eps))
        cv_ref[...] = 1.0 - jnp.sum(cos_c, axis=0, keepdims=True) / cos_c.shape[0]
        fv_ref[...] = 1.0 - jnp.sum(cos_f, axis=0, keepdims=True) / cos_f.shape[0]

        # cls head: 4096 -> 1024 -> 128 -> 8, final elementwise max(rel, .) fused
        h1 = h1_acc[...] + b0_ref[...]                                   # (bs, 1024)
        h2 = jnp.dot(h1.astype(jnp.bfloat16), w1_ref[...],
                     preferred_element_type=jnp.float32) + b1_ref[...]   # (bs, 128)
        y = jnp.dot(h2, w2_ref[...],
                    preferred_element_type=jnp.float32) + b2_ref[...]    # (bs, 8)
        out_ref[...] = jnp.maximum(y, rel_ref[...])


# -----------------------------------------------------------------------------
# Wrapper around the single pallas_call
# -----------------------------------------------------------------------------
def _pick_tile(h):
    for t in (1024, 512, 256, 128):
        if h % t == 0:
            return t
    return h


def llm_fused_forward(params, lab_sel, rel, queries_c, queries_f):
    bs, nq_c, cdim = queries_c.shape
    _, nq_f, fdim = queries_f.shape
    H = params["cfc_w"].shape[1]
    N0 = params["cls0_w"].shape[1]
    N1 = params["cls1_w"].shape[1]
    N2 = params["cls2_w"].shape[1]
    Mc, Mf = bs * nq_c, bs * nq_f
    tn = _pick_tile(H)

    xc = queries_c.reshape(Mc, cdim)
    xf = queries_f.reshape(Mf, fdim)

    # Pad the tiny sample axis so small matmul contraction dims are >= 8.
    pbs = max(bs, 8)
    if pbs > bs:
        lab_sel = jnp.concatenate(
            [lab_sel, jnp.zeros((pbs - bs, H), lab_sel.dtype)], axis=0)

    # Tiny host-built one-hot constants (fetched once; constant index_map):
    #   expand_* maps each token row to its sample's label embedding,
    #   sel_last picks the last queries_f token of each sample.
    expand_c = np.zeros((Mc, pbs), np.float32)
    expand_c[np.arange(Mc), np.arange(Mc) // nq_c] = 1.0
    expand_f = np.zeros((Mf, pbs), np.float32)
    expand_f[np.arange(Mf), np.arange(Mf) // nq_f] = 1.0
    sel_last = np.zeros((bs, Mf), np.float32)
    sel_last[np.arange(bs), np.arange(bs) * nq_f + (nq_f - 1)] = 1.0

    tiled_n = lambda j: (0, j)   # tile along the H axis (columns)
    tiled_k = lambda j: (j, 0)   # tile along the H axis (rows of cls0_w)
    whole = lambda j: (0, 0)     # full array, fetched once

    result, cv, fv = pl.pallas_call(
        _fused_llm_kernel,
        out_shape=(
            jax.ShapeDtypeStruct((bs, N2), jnp.float32),   # result
            jax.ShapeDtypeStruct((1, 1), jnp.float32),     # cv
            jax.ShapeDtypeStruct((1, 1), jnp.float32),     # fv
        ),
        grid=(H // tn,),
        in_specs=[
            pl.BlockSpec((Mc, cdim), whole),      # xc
            pl.BlockSpec((Mf, fdim), whole),      # xf
            pl.BlockSpec((cdim, tn), tiled_n),    # cfc_w (bf16)
            pl.BlockSpec((1, tn), tiled_n),       # cfc_b
            pl.BlockSpec((fdim, tn), tiled_n),    # ffc_w (bf16)
            pl.BlockSpec((1, tn), tiled_n),       # ffc_b
            pl.BlockSpec((pbs, tn), tiled_n),     # selected label embedding
            pl.BlockSpec((Mc, pbs), whole),       # expand_c
            pl.BlockSpec((Mf, pbs), whole),       # expand_f
            pl.BlockSpec((bs, Mf), whole),        # sel_last
            pl.BlockSpec((tn, N0), tiled_k),      # cls0_w (bf16)
            pl.BlockSpec((1, N0), whole),         # cls0_b
            pl.BlockSpec((N0, N1), whole),        # cls1_w (bf16)
            pl.BlockSpec((1, N1), whole),         # cls1_b
            pl.BlockSpec((N1, N2), whole),        # cls2_w
            pl.BlockSpec((1, N2), whole),         # cls2_b
            pl.BlockSpec((bs, N2), whole),        # rel
        ],
        out_specs=(
            pl.BlockSpec((bs, N2), whole),
            pl.BlockSpec((1, 1), whole),
            pl.BlockSpec((1, 1), whole),
        ),
        scratch_shapes=[
            pltpu.VMEM((bs, N0), jnp.float32),    # h1 accumulator (cls0 K-accum)
            pltpu.VMEM((Mc, 1), jnp.float32),     # sum qc.e
            pltpu.VMEM((Mc, 1), jnp.float32),     # sum |qc|^2
            pltpu.VMEM((Mc, 1), jnp.float32),     # sum |e|^2 (per c-token row)
            pltpu.VMEM((Mf, 1), jnp.float32),     # sum qf.e
            pltpu.VMEM((Mf, 1), jnp.float32),     # sum |qf|^2
            pltpu.VMEM((Mf, 1), jnp.float32),     # sum |e|^2 (per f-token row)
        ],
        compiler_params=pltpu.CompilerParams(
            dimension_semantics=("arbitrary",)),  # reduction over H tiles
    )(xc, xf,
      params["cfc_w"], params["cfc_b"],
      params["ffc_w"], params["ffc_b"],
      lab_sel,
      expand_c, expand_f, sel_last,
      params["cls0_w"], params["cls0_b"],
      params["cls1_w"], params["cls1_b"],
      params["cls2_w"], params["cls2_b"],
      rel)

    return result, cv[0, 0], fv[0, 0]


# -----------------------------------------------------------------------------
# Parameters (PyTorch-nn.Linear-style uniform init; matmul weights in bf16)
# -----------------------------------------------------------------------------
def init_params(key, cdim, fdim, H=4096):
    def lin(k, fan_in, fan_out, w_dtype=jnp.bfloat16):
        kw, kb = jax.random.split(k)
        bound = 1.0 / (fan_in ** 0.5)
        w = jax.random.uniform(kw, (fan_in, fan_out), jnp.float32, -bound, bound)
        b = jax.random.uniform(kb, (1, fan_out), jnp.float32, -bound, bound)
        return w.astype(w_dtype), b

    keys = jax.random.split(key, 5)
    p = {}
    p["cfc_w"], p["cfc_b"] = lin(keys[0], cdim, H)
    p["ffc_w"], p["ffc_b"] = lin(keys[1], fdim, H)
    p["cls0_w"], p["cls0_b"] = lin(keys[2], H, 1024)
    p["cls1_w"], p["cls1_b"] = lin(keys[3], 1024, 128)
    p["cls2_w"], p["cls2_b"] = lin(keys[4], 128, 8, w_dtype=jnp.float32)  # tiny
    return p


# -----------------------------------------------------------------------------
# Forward pass (mirrors LLM.forward -> (result, cv, fv))
# -----------------------------------------------------------------------------
def llm_forward(params, label_list, lab_emb, bos_emb, rel, cfeatures, ffeatures):
    # TODO(synk): Qformer internals unspecified -> identity stand-ins.
    queries_c = cfeatures
    queries_f = ffeatures
    # get_sim uses the per-sample selected label embedding (gather is XLA glue).
    lab_sel = lab_emb[label_list]                     # (bs, H)
    # TODO(synk): under the identity llmmodel stand-in, bos_emb / queries_c only
    # occupy positions before -1 of `embeds`, so hs == queries_f[:, -1, :] and
    # bos_emb is not needed inside the kernel.
    del bos_emb
    return llm_fused_forward(params, lab_sel, rel, queries_c, queries_f)


# -----------------------------------------------------------------------------
if __name__ == "__main__":
    key = jax.random.PRNGKey(0)
    bs, nq, cdim, fdim, H = 2, 8, 32, 64, 4096
    num_labels = 8

    k = jax.random.split(key, 7)
    params = init_params(k[0], cdim, fdim, H)
    cfeatures = jax.random.normal(k[1], (bs, nq, cdim), jnp.float32)
    ffeatures = jax.random.normal(k[2], (bs, nq, fdim), jnp.float32)
    lab_emb = jax.random.normal(k[3], (num_labels, H), jnp.float32)
    bos_emb = jax.random.normal(k[4], (1, 1, H), jnp.float32)
    rel = jax.random.normal(k[5], (bs, 8), jnp.float32)
    label_list = jnp.array([1, 3], dtype=jnp.int32)

    fwd = jax.jit(llm_forward)
    result, cv, fv = fwd(params, label_list, lab_emb, bos_emb, rel,
                         cfeatures, ffeatures)
    jax.block_until_ready((result, cv, fv))
    assert result.shape == (bs, 8)
    print("KERNEL_OK")
</pallas_src>

<mosaic_0001>
module attributes {stable_mosaic.version = 11 : i64} {
  func.func @_fused_llm_kernel(%arg0: i32, %arg1: memref<16x32xf32, #tpu.memory_space<vmem>>, %arg2: memref<16x64xf32, #tpu.memory_space<vmem>>, %arg3: memref<32x1024xbf16, #tpu.memory_space<vmem>>, %arg4: memref<1x1024xf32, #tpu.memory_space<vmem>>, %arg5: memref<64x1024xbf16, #tpu.memory_space<vmem>>, %arg6: memref<1x1024xf32, #tpu.memory_space<vmem>>, %arg7: memref<8x1024xf32, #tpu.memory_space<vmem>>, %arg8: memref<16x8xf32, #tpu.memory_space<vmem>>, %arg9: memref<16x8xf32, #tpu.memory_space<vmem>>, %arg10: memref<2x16xf32, #tpu.memory_space<vmem>>, %arg11: memref<1024x1024xbf16, #tpu.memory_space<vmem>>, %arg12: memref<1x1024xf32, #tpu.memory_space<vmem>>, %arg13: memref<1024x128xbf16, #tpu.memory_space<vmem>>, %arg14: memref<1x128xf32, #tpu.memory_space<vmem>>, %arg15: memref<128x8xf32, #tpu.memory_space<vmem>>, %arg16: memref<1x8xf32, #tpu.memory_space<vmem>>, %arg17: memref<2x8xf32, #tpu.memory_space<vmem>>, %arg18: memref<2x8xf32, #tpu.memory_space<vmem>>, %arg19: memref<1x1xf32, #tpu.memory_space<vmem>>, %arg20: memref<1x1xf32, #tpu.memory_space<vmem>>, %arg21: memref<2x1024xf32, #tpu.memory_space<vmem>>, %arg22: memref<16x1xf32, #tpu.memory_space<vmem>>, %arg23: memref<16x1xf32, #tpu.memory_space<vmem>>, %arg24: memref<16x1xf32, #tpu.memory_space<vmem>>, %arg25: memref<16x1xf32, #tpu.memory_space<vmem>>, %arg26: memref<16x1xf32, #tpu.memory_space<vmem>>, %arg27: memref<16x1xf32, #tpu.memory_space<vmem>>) attributes {dimension_semantics = [#tpu.dimension_semantics<arbitrary>], iteration_bounds = array<i64: 4>, scalar_prefetch = 0 : i64, scratch_operands = 7 : i64, tpu.core_type = #tpu.core_type<tc>, window_params = [{pipeline_mode = #tpu.pipeline_mode<synchronous>, transform_indices = @transform_0, window_bounds = array<i64: 16, 32>}, {pipeline_mode = #tpu.pipeline_mode<synchronous>, transform_indices = @transform_1, window_bounds = array<i64: 16, 64>}, {transform_indices = @transform_2, window_bounds = array<i64: 32, 1024>}, {transform_indices = @transform_3, window_bounds = array<i64: 1, 1024>}, {transform_indices = @transform_4, window_bounds = array<i64: 64, 1024>}, {transform_indices = @transform_5, window_bounds = array<i64: 1, 1024>}, {transform_indices = @transform_6, window_bounds = array<i64: 8, 1024>}, {pipeline_mode = #tpu.pipeline_mode<synchronous>, transform_indices = @transform_7, window_bounds = array<i64: 16, 8>}, {pipeline_mode = #tpu.pipeline_mode<synchronous>, transform_indices = @transform_8, window_bounds = array<i64: 16, 8>}, {pipeline_mode = #tpu.pipeline_mode<synchronous>, transform_indices = @transform_9, window_bounds = array<i64: 2, 16>}, {transform_indices = @transform_10, window_bounds = array<i64: 1024, 1024>}, {pipeline_mode = #tpu.pipeline_mode<synchronous>, transform_indices = @transform_11, window_bounds = array<i64: 1, 1024>}, {pipeline_mode = #tpu.pipeline_mode<synchronous>, transform_indices = @transform_12, window_bounds = array<i64: 1024, 128>}, {pipeline_mode = #tpu.pipeline_mode<synchronous>, transform_indices = @transform_13, window_bounds = array<i64: 1, 128>}, {pipeline_mode = #tpu.pipeline_mode<synchronous>, transform_indices = @transform_14, window_bounds = array<i64: 128, 8>}, {pipeline_mode = #tpu.pipeline_mode<synchronous>, transform_indices = @transform_15, window_bounds = array<i64: 1, 8>}, {pipeline_mode = #tpu.pipeline_mode<synchronous>, transform_indices = @transform_16, window_bounds = array<i64: 2, 8>}, {pipeline_mode = #tpu.pipeline_mode<synchronous>, transform_indices = @transform_17, window_bounds = array<i64: 2, 8>}, {pipeline_mode = #tpu.pipeline_mode<synchronous>, transform_indices = @transform_18, window_bounds = array<i64: 1, 1>}, {pipeline_mode = #tpu.pipeline_mode<synchronous>, transform_indices = @transform_19, window_bounds = array<i64: 1, 1>}]} {
    %c0_i32 = arith.constant 0 : i32
    %0 = arith.cmpi eq, %arg0, %c0_i32 : i32
    %1 = arith.extui %0 : i1 to i32
    %c0_i32_0 = arith.constant 0 : i32
    %2 = arith.cmpi ne, %1, %c0_i32_0 : i32
    scf.if %2 {
      %cst_62 = arith.constant 0.000000e+00 : f32
      %69 = vector.broadcast %cst_62 : f32 to vector<2x1024xf32>
      %c0_63 = arith.constant 0 : index
      %c0_64 = arith.constant 0 : index
      %70 = vector.load %arg21[%c0_63, %c0_64] : memref<2x1024xf32, #tpu.memory_space<vmem>>, vector<2x1024xf32>
      tpu.vector_store %arg21[%c0_63, %c0_64], %69 {strides = array<i32>} : memref<2x1024xf32, #tpu.memory_space<vmem>>, vector<2x1024xf32>,
      %cst_65 = arith.constant 0.000000e+00 : f32
      %71 = vector.broadcast %cst_65 : f32 to vector<16x1xf32>
      %c0_66 = arith.constant 0 : index
      %c0_67 = arith.constant 0 : index
      %72 = vector.load %arg22[%c0_66, %c0_67] : memref<16x1xf32, #tpu.memory_space<vmem>>, vector<16x1xf32>
      tpu.vector_store %arg22[%c0_66, %c0_67], %71 {strides = array<i32>} : memref<16x1xf32, #tpu.memory_space<vmem>>, vector<16x1xf32>,
      %cst_68 = arith.constant 0.000000e+00 : f32
      %73 = vector.broadcast %cst_68 : f32 to vector<16x1xf32>
      %c0_69 = arith.constant 0 : index
      %c0_70 = arith.constant 0 : index
      %74 = vector.load %arg23[%c0_69, %c0_70] : memref<16x1xf32, #tpu.memory_space<vmem>>, vector<16x1xf32>
      tpu.vector_store %arg23[%c0_69, %c0_70], %73 {strides = array<i32>} : memref<16x1xf32, #tpu.memory_space<vmem>>, vector<16x1xf32>,
      %cst_71 = arith.constant 0.000000e+00 : f32
      %75 = vector.broadcast %cst_71 : f32 to vector<16x1xf32>
      %c0_72 = arith.constant 0 : index
      %c0_73 = arith.constant 0 : index
      %76 = vector.load %arg24[%c0_72, %c0_73] : memref<16x1xf32, #tpu.memory_space<vmem>>, vector<16x1xf32>
      tpu.vector_store %arg24[%c0_72, %c0_73], %75 {strides = array<i32>} : memref<16x1xf32, #tpu.memory_space<vmem>>, vector<16x1xf32>,
      %cst_74 = arith.constant 0.000000e+00 : f32
      %77 = vector.broadcast %cst_74 : f32 to vector<16x1xf32>
      %c0_75 = arith.constant 0 : index
      %c0_76 = arith.constant 0 : index
      %78 = vector.load %arg25[%c0_75, %c0_76] : memref<16x1xf32, #tpu.memory_space<vmem>>, vector<16x1xf32>
      tpu.vector_store %arg25[%c0_75, %c0_76], %77 {strides = array<i32>} : memref<16x1xf32, #tpu.memory_space<vmem>>, vector<16x1xf32>,
      %cst_77 = arith.constant 0.000000e+00 : f32
      %79 = vector.broadcast %cst_77 : f32 to vector<16x1xf32>
      %c0_78 = arith.constant 0 : index
      %c0_79 = arith.constant 0 : index
      %80 = vector.load %arg26[%c0_78, %c0_79] : memref<16x1xf32, #tpu.memory_space<vmem>>, vector<16x1xf32>
      tpu.vector_store %arg26[%c0_78, %c0_79], %79 {strides = array<i32>} : memref<16x1xf32, #tpu.memory_space<vmem>>, vector<16x1xf32>,
      %cst_80 = arith.constant 0.000000e+00 : f32
      %81 = vector.broadcast %cst_80 : f32 to vector<16x1xf32>
      %c0_81 = arith.constant 0 : index
      %c0_82 = arith.constant 0 : index
      %82 = vector.load %arg27[%c0_81, %c0_82] : memref<16x1xf32, #tpu.memory_space<vmem>>, vector<16x1xf32>
      tpu.vector_store %arg27[%c0_81, %c0_82], %81 {strides = array<i32>} : memref<16x1xf32, #tpu.memory_space<vmem>>, vector<16x1xf32>,
    } else {
    }
    %c0 = arith.constant 0 : index
    %c0_1 = arith.constant 0 : index
    %3 = vector.load %arg1[%c0, %c0_1] : memref<16x32xf32, #tpu.memory_space<vmem>>, vector<16x32xf32>
    %4 = arith.truncf %3 : vector<16x32xf32> to vector<16x32xbf16>
    %c0_2 = arith.constant 0 : index
    %c0_3 = arith.constant 0 : index
    %5 = vector.load %arg3[%c0_2, %c0_3] : memref<32x1024xbf16, #tpu.memory_space<vmem>>, vector<32x1024xbf16>
    %cst = arith.constant dense<0.000000e+00> : vector<16x1024xf32>
    %6 = tpu.matmul %4, %5, %cst {dimension_numbers = #tpu.dot_dimension_numbers<[1], [0], [0], [1], [0, 0, 1, 1], [], []>} : vector<16x32xbf16>, vector<32x1024xbf16>, vector<16x1024xf32> -> vector<16x1024xf32>
    %c0_4 = arith.constant 0 : index
    %c0_5 = arith.constant 0 : index
    %7 = vector.load %arg4[%c0_4, %c0_5] : memref<1x1024xf32, #tpu.memory_space<vmem>>, vector<1x1024xf32>
    %8 = vector.broadcast %7 : vector<1x1024xf32> to vector<16x1024xf32>
    %9 = arith.addf %6, %8 : vector<16x1024xf32>
    %c0_6 = arith.constant 0 : index
    %c0_7 = arith.constant 0 : index
    %10 = vector.load %arg2[%c0_6, %c0_7] : memref<16x64xf32, #tpu.memory_space<vmem>>, vector<16x64xf32>
    %11 = arith.truncf %10 : vector<16x64xf32> to vector<16x64xbf16>
    %c0_8 = arith.constant 0 : index
    %c0_9 = arith.constant 0 : index
    %12 = vector.load %arg5[%c0_8, %c0_9] : memref<64x1024xbf16, #tpu.memory_space<vmem>>, vector<64x1024xbf16>
    %cst_10 = arith.constant dense<0.000000e+00> : vector<16x1024xf32>
    %13 = tpu.matmul %11, %12, %cst_10 {dimension_numbers = #tpu.dot_dimension_numbers<[1], [0], [0], [1], [0, 0, 1, 1], [], []>} : vector<16x64xbf16>, vector<64x1024xbf16>, vector<16x1024xf32> -> vector<16x1024xf32>
    %c0_11 = arith.constant 0 : index
    %c0_12 = arith.constant 0 : index
    %14 = vector.load %arg6[%c0_11, %c0_12] : memref<1x1024xf32, #tpu.memory_space<vmem>>, vector<1x1024xf32>
    %15 = vector.broadcast %14 : vector<1x1024xf32> to vector<16x1024xf32>
    %16 = arith.addf %13, %15 : vector<16x1024xf32>
    %c0_13 = arith.constant 0 : index
    %c0_14 = arith.constant 0 : index
    %17 = vector.load %arg7[%c0_13, %c0_14] : memref<8x1024xf32, #tpu.memory_space<vmem>>, vector<8x1024xf32>
    %c0_15 = arith.constant 0 : index
    %c0_16 = arith.constant 0 : index
    %18 = vector.load %arg8[%c0_15, %c0_16] : memref<16x8xf32, #tpu.memory_space<vmem>>, vector<16x8xf32>
    %cst_17 = arith.constant dense<0.000000e+00> : vector<16x1024xf32>
    %19 = tpu.matmul %18, %17, %cst_17 {dimension_numbers = #tpu.dot_dimension_numbers<[1], [0], [0], [1], [0, 0, 1, 1], [], []>} : vector<16x8xf32>, vector<8x1024xf32>, vector<16x1024xf32> -> vector<16x1024xf32>
    %c0_18 = arith.constant 0 : index
    %c0_19 = arith.constant 0 : index
    %20 = vector.load %arg9[%c0_18, %c0_19] : memref<16x8xf32, #tpu.memory_space<vmem>>, vector<16x8xf32>
    %cst_20 = arith.constant dense<0.000000e+00> : vector<16x1024xf32>
    %21 = tpu.matmul %20, %17, %cst_20 {dimension_numbers = #tpu.dot_dimension_numbers<[1], [0], [0], [1], [0, 0, 1, 1], [], []>} : vector<16x8xf32>, vector<8x1024xf32>, vector<16x1024xf32> -> vector<16x1024xf32>
    %c0_21 = arith.constant 0 : index
    %c0_22 = arith.constant 0 : index
    %22 = vector.load %arg22[%c0_21, %c0_22] : memref<16x1xf32, #tpu.memory_space<vmem>>, vector<16x1xf32>
    %23 = arith.mulf %9, %19 : vector<16x1024xf32>
    %cst_23 = arith.constant dense<0.000000e+00> : vector<16xf32>
    %24 = vector.multi_reduction <add>, %23, %cst_23 [1] : vector<16x1024xf32> to vector<16xf32>
    %25 = vector.shape_cast %24 : vector<16xf32> to vector<16x1xf32>
    %26 = arith.addf %22, %25 : vector<16x1xf32>
    %c0_24 = arith.constant 0 : index
    %c0_25 = arith.constant 0 : index
    %27 = vector.load %arg22[%c0_24, %c0_25] : memref<16x1xf32, #tpu.memory_space<vmem>>, vector<16x1xf32>
    tpu.vector_store %arg22[%c0_24, %c0_25], %26 {strides = array<i32>} : memref<16x1xf32, #tpu.memory_space<vmem>>, vector<16x1xf32>,
    %c0_26 = arith.constant 0 : index
    %c0_27 = arith.constant 0 : index
    %28 = vector.load %arg23[%c0_26, %c0_27] : memref<16x1xf32, #tpu.memory_space<vmem>>, vector<16x1xf32>
    %29 = arith.mulf %9, %9 : vector<16x1024xf32>
    %cst_28 = arith.constant dense<0.000000e+00> : vector<16xf32>
    %30 = vector.multi_reduction <add>, %29, %cst_28 [1] : vector<16x1024xf32> to vector<16xf32>
    %31 = vector.shape_cast %30 : vector<16xf32> to vector<16x1xf32>
    %32 = arith.addf %28, %31 : vector<16x1xf32>
    %c0_29 = arith.constant 0 : index
    %c0_30 = arith.constant 0 : index
    %33 = vector.load %arg23[%c0_29, %c0_30] : memref<16x1xf32, #tpu.memory_space<vmem>>, vector<16x1xf32>
    tpu.vector_store %arg23[%c0_29, %c0_30], %32 {strides = array<i32>} : memref<16x1xf32, #tpu.memory_space<vmem>>, vector<16x1xf32>,
    %c0_31 = arith.constant 0 : index
    %c0_32 = arith.constant 0 : index
    %34 = vector.load %arg24[%c0_31, %c0_32] : memref<16x1xf32, #tpu.memory_space<vmem>>, vector<16x1xf32>
    %35 = arith.mulf %19, %19 : vector<16x1024xf32>
    %cst_33 = arith.constant dense<0.000000e+00> : vector<16xf32>
    %36 = vector.multi_reduction <add>, %35, %cst_33 [1] : vector<16x1024xf32> to vector<16xf32>
    %37 = vector.shape_cast %36 : vector<16xf32> to vector<16x1xf32>
    %38 = arith.addf %34, %37 : vector<16x1xf32>
    %c0_34 = arith.constant 0 : index
    %c0_35 = arith.constant 0 : index
    %39 = vector.load %arg24[%c0_34, %c0_35] : memref<16x1xf32, #tpu.memory_space<vmem>>, vector<16x1xf32>
    tpu.vector_store %arg24[%c0_34, %c0_35], %38 {strides = array<i32>} : memref<16x1xf32, #tpu.memory_space<vmem>>, vector<16x1xf32>,
    %c0_36 = arith.constant 0 : index
    %c0_37 = arith.constant 0 : index
    %40 = vector.load %arg25[%c0_36, %c0_37] : memref<16x1xf32, #tpu.memory_space<vmem>>, vector<16x1xf32>
    %41 = arith.mulf %16, %21 : vector<16x1024xf32>
    %cst_38 = arith.constant dense<0.000000e+00> : vector<16xf32>
    %42 = vector.multi_reduction <add>, %41, %cst_38 [1] : vector<16x1024xf32> to vector<16xf32>
    %43 = vector.shape_cast %42 : vector<16xf32> to vector<16x1xf32>
    %44 = arith.addf %40, %43 : vector<16x1xf32>
    %c0_39 = arith.constant 0 : index
    %c0_40 = arith.constant 0 : index
    %45 = vector.load %arg25[%c0_39, %c0_40] : memref<16x1xf32, #tpu.memory_space<vmem>>, vector<16x1xf32>
    tpu.vector_store %arg25[%c0_39, %c0_40], %44 {strides = array<i32>} : memref<16x1xf32, #tpu.memory_space<vmem>>, vector<16x1xf32>,
    %c0_41 = arith.constant 0 : index
    %c0_42 = arith.constant 0 : index
    %46 = vector.load %arg26[%c0_41, %c0_42] : memref<16x1xf32, #tpu.memory_space<vmem>>, vector<16x1xf32>
    %47 = arith.mulf %16, %16 : vector<16x1024xf32>
    %cst_43 = arith.constant dense<0.000000e+00> : vector<16xf32>
    %48 = vector.multi_reduction <add>, %47, %cst_43 [1] : vector<16x1024xf32> to vector<16xf32>
    %49 = vector.shape_cast %48 : vector<16xf32> to vector<16x1xf32>
    %50 = arith.addf %46, %49 : vector<16x1xf32>
    %c0_44 = arith.constant 0 : index
    %c0_45 = arith.constant 0 : index
    %51 = vector.load %arg26[%c0_44, %c0_45] : memref<16x1xf32, #tpu.memory_space<vmem>>, vector<16x1xf32>
    tpu.vector_store %arg26[%c0_44, %c0_45], %50 {strides = array<i32>} : memref<16x1xf32, #tpu.memory_space<vmem>>, vector<16x1xf32>,
    %c0_46 = arith.constant 0 : index
    %c0_47 = arith.constant 0 : index
    %52 = vector.load %arg27[%c0_46, %c0_47] : memref<16x1xf32, #tpu.memory_space<vmem>>, vector<16x1xf32>
    %53 = arith.mulf %21, %21 : vector<16x1024xf32>
    %cst_48 = arith.constant dense<0.000000e+00> : vector<16xf32>
    %54 = vector.multi_reduction <add>, %53, %cst_48 [1] : vector<16x1024xf32> to vector<16xf32>
    %55 = vector.shape_cast %54 : vector<16xf32> to vector<16x1xf32>
    %56 = arith.addf %52, %55 : vector<16x1xf32>
    %c0_49 = arith.constant 0 : index
    %c0_50 = arith.constant 0 : index
    %57 = vector.load %arg27[%c0_49, %c0_50] : memref<16x1xf32, #tpu.memory_space<vmem>>, vector<16x1xf32>
    tpu.vector_store %arg27[%c0_49, %c0_50], %56 {strides = array<i32>} : memref<16x1xf32, #tpu.memory_space<vmem>>, vector<16x1xf32>,
    %c0_51 = arith.constant 0 : index
    %c0_52 = arith.constant 0 : index
    %58 = vector.load %arg10[%c0_51, %c0_52] : memref<2x16xf32, #tpu.memory_space<vmem>>, vector<2x16xf32>
    %cst_53 = arith.constant dense<0.000000e+00> : vector<2x1024xf32>
    %59 = tpu.matmul %58, %16, %cst_53 {dimension_numbers = #tpu.dot_dimension_numbers<[1], [0], [0], [1], [0, 0, 1, 1], [], []>} : vector<2x16xf32>, vector<16x1024xf32>, vector<2x1024xf32> -> vector<2x1024xf32>
    %c0_54 = arith.constant 0 : index
    %c0_55 = arith.constant 0 : index
    %60 = vector.load %arg21[%c0_54, %c0_55] : memref<2x1024xf32, #tpu.memory_space<vmem>>, vector<2x1024xf32>
    %61 = arith.truncf %59 : vector<2x1024xf32> to vector<2x1024xbf16>
    %c0_56 = arith.constant 0 : index
    %c0_57 = arith.constant 0 : index
    %62 = vector.load %arg11[%c0_56, %c0_57] : memref<1024x1024xbf16, #tpu.memory_space<vmem>>, vector<1024x1024xbf16>
    %cst_58 = arith.constant dense<0.000000e+00> : vector<2x1024xf32>
    %63 = tpu.matmul %61, %62, %cst_58 {dimension_numbers = #tpu.dot_dimension_numbers<[1], [0], [0], [1], [0, 0, 1, 1], [], []>} : vector<2x1024xbf16>, vector<1024x1024xbf16>, vector<2x1024xf32> -> vector<2x1024xf32>
    %64 = arith.addf %60, %63 : vector<2x1024xf32>
    %c0_59 = arith.constant 0 : index
    %c0_60 = arith.constant 0 : index
    %65 = vector.load %arg21[%c0_59, %c0_60] : memref<2x1024xf32, #tpu.memory_space<vmem>>, vector<2x1024xf32>
    tpu.vector_store %arg21[%c0_59, %c0_60], %64 {strides = array<i32>} : memref<2x1024xf32, #tpu.memory_space<vmem>>, vector<2x1024xf32>,
    %c3_i32 = arith.constant 3 : i32
    %66 = arith.cmpi eq, %arg0, %c3_i32 : i32
    %67 = arith.extui %66 : i1 to i32
    %c0_i32_61 = arith.constant 0 : i32
    %68 = arith.cmpi ne, %67, %c0_i32_61 : i32
    scf.if %68 {
      %c0_62 = arith.constant 0 : index
      %c0_63 = arith.constant 0 : index
      %69 = vector.load %arg22[%c0_62, %c0_63] : memref<16x1xf32, #tpu.memory_space<vmem>>, vector<16x1xf32>
      %c0_64 = arith.constant 0 : index
      %c0_65 = arith.constant 0 : index
      %70 = vector.load %arg23[%c0_64, %c0_65] : memref<16x1xf32, #tpu.memory_space<vmem>>, vector<16x1xf32>
      %71 = math.sqrt %70 : vector<16x1xf32>
      %cst_66 = arith.constant 9.99999993E-9 : f32
      %72 = vector.broadcast %cst_66 : f32 to vector<16x1xf32>
      %73 = arith.maximumf %71, %72 : vector<16x1xf32>
      %c0_67 = arith.constant 0 : index
      %c0_68 = arith.constant 0 : index
      %74 = vector.load %arg24[%c0_67, %c0_68] : memref<16x1xf32, #tpu.memory_space<vmem>>, vector<16x1xf32>
      %75 = math.sqrt %74 : vector<16x1xf32>
      %cst_69 = arith.constant 9.99999993E-9 : f32
      %76 = vector.broadcast %cst_69 : f32 to vector<16x1xf32>
      %77 = arith.maximumf %75, %76 : vector<16x1xf32>
      %78 = arith.mulf %73, %77 : vector<16x1xf32>
      %79 = arith.divf %69, %78 : vector<16x1xf32>
      %c0_70 = arith.constant 0 : index
      %c0_71 = arith.constant 0 : index
      %80 = vector.load %arg25[%c0_70, %c0_71] : memref<16x1xf32, #tpu.memory_space<vmem>>, vector<16x1xf32>
      %c0_72 = arith.constant 0 : index
      %c0_73 = arith.constant 0 : index
      %81 = vector.load %arg26[%c0_72, %c0_73] : memref<16x1xf32, #tpu.memory_space<vmem>>, vector<16x1xf32>
      %82 = math.sqrt %81 : vector<16x1xf32>
      %cst_74 = arith.constant 9.99999993E-9 : f32
      %83 = vector.broadcast %cst_74 : f32 to vector<16x1xf32>
      %84 = arith.maximumf %82, %83 : vector<16x1xf32>
      %c0_75 = arith.constant 0 : index
      %c0_76 = arith.constant 0 : index
      %85 = vector.load %arg27[%c0_75, %c0_76] : memref<16x1xf32, #tpu.memory_space<vmem>>, vector<16x1xf32>
      %86 = math.sqrt %85 : vector<16x1xf32>
      %cst_77 = arith.constant 9.99999993E-9 : f32
      %87 = vector.broadcast %cst_77 : f32 to vector<16x1xf32>
      %88 = arith.maximumf %86, %87 : vector<16x1xf32>
      %89 = arith.mulf %84, %88 : vector<16x1xf32>
      %90 = arith.divf %80, %89 : vector<16x1xf32>
      %cst_78 = arith.constant dense<0.000000e+00> : vector<1xf32>
      %91 = vector.multi_reduction <add>, %79, %cst_78 [0] : vector<16x1xf32> to vector<1xf32>
      %92 = vector.shape_cast %91 : vector<1xf32> to vector<1x1xf32>
      %cst_79 = arith.constant 1.600000e+01 : f32
      %93 = vector.broadcast %cst_79 : f32 to vector<1x1xf32>
      %94 = arith.divf %92, %93 : vector<1x1xf32>
      %cst_80 = arith.constant 1.000000e+00 : f32
      %95 = vector.broadcast %cst_80 : f32 to vector<1x1xf32>
      %96 = arith.subf %95, %94 : vector<1x1xf32>
      %c0_81 = arith.constant 0 : index
      %c0_82 = arith.constant 0 : index
      %97 = vector.load %arg19[%c0_81, %c0_82] : memref<1x1xf32, #tpu.memory_space<vmem>>, vector<1x1xf32>
      tpu.vector_store %arg19[%c0_81, %c0_82], %96 {strides = array<i32>} : memref<1x1xf32, #tpu.memory_space<vmem>>, vector<1x1xf32>,
      %cst_83 = arith.constant dense<0.000000e+00> : vector<1xf32>
      %98 = vector.multi_reduction <add>, %90, %cst_83 [0] : vector<16x1xf32> to vector<1xf32>
      %99 = vector.shape_cast %98 : vector<1xf32> to vector<1x1xf32>
      %cst_84 = arith.constant 1.600000e+01 : f32
      %100 = vector.broadcast %cst_84 : f32 to vector<1x1xf32>
      %101 = arith.divf %99, %100 : vector<1x1xf32>
      %cst_85 = arith.constant 1.000000e+00 : f32
      %102 = vector.broadcast %cst_85 : f32 to vector<1x1xf32>
      %103 = arith.subf %102, %101 : vector<1x1xf32>
      %c0_86 = arith.constant 0 : index
      %c0_87 = arith.constant 0 : index
      %104 = vector.load %arg20[%c0_86, %c0_87] : memref<1x1xf32, #tpu.memory_space<vmem>>, vector<1x1xf32>
      tpu.vector_store %arg20[%c0_86, %c0_87], %103 {strides = array<i32>} : memref<1x1xf32, #tpu.memory_space<vmem>>, vector<1x1xf32>,
      %c0_88 = arith.constant 0 : index
      %c0_89 = arith.constant 0 : index
      %105 = vector.load %arg21[%c0_88, %c0_89] : memref<2x1024xf32, #tpu.memory_space<vmem>>, vector<2x1024xf32>
      %c0_90 = arith.constant 0 : index
      %c0_91 = arith.constant 0 : index
      %106 = vector.load %arg12[%c0_90, %c0_91] : memref<1x1024xf32, #tpu.memory_space<vmem>>, vector<1x1024xf32>
      %107 = vector.broadcast %106 : vector<1x1024xf32> to vector<2x1024xf32>
      %108 = arith.addf %105, %107 : vector<2x1024xf32>
      %109 = arith.truncf %108 : vector<2x1024xf32> to vector<2x1024xbf16>
      %c0_92 = arith.constant 0 : index
      %c0_93 = arith.constant 0 : index
      %110 = vector.load %arg13[%c0_92, %c0_93] : memref<1024x128xbf16, #tpu.memory_space<vmem>>, vector<1024x128xbf16>
      %cst_94 = arith.constant dense<0.000000e+00> : vector<2x128xf32>
      %111 = tpu.matmul %109, %110, %cst_94 {dimension_numbers = #tpu.dot_dimension_numbers<[1], [0], [0], [1], [0, 0, 1, 1], [], []>} : vector<2x1024xbf16>, vector<1024x128xbf16>, vector<2x128xf32> -> vector<2x128xf32>
      %c0_95 = arith.constant 0 : index
      %c0_96 = arith.constant 0 : index
      %112 = vector.load %arg14[%c0_95, %c0_96] : memref<1x128xf32, #tpu.memory_space<vmem>>, vector<1x128xf32>
      %113 = vector.broadcast %112 : vector<1x128xf32> to vector<2x128xf32>
      %114 = arith.addf %111, %113 : vector<2x128xf32>
      %c0_97 = arith.constant 0 : index
      %c0_98 = arith.constant 0 : index
      %115 = vector.load %arg15[%c0_97, %c0_98] : memref<128x8xf32, #tpu.memory_space<vmem>>, vector<128x8xf32>
      %cst_99 = arith.constant dense<0.000000e+00> : vector<2x8xf32>
      %116 = tpu.matmul %114, %115, %cst_99 {dimension_numbers = #tpu.dot_dimension_numbers<[1], [0], [0], [1], [0, 0, 1, 1], [], []>} : vector<2x128xf32>, vector<128x8xf32>, vector<2x8xf32> -> vector<2x8xf32>
      %c0_100 = arith.constant 0 : index
      %c0_101 = arith.constant 0 : index
      %117 = vector.load %arg16[%c0_100, %c0_101] : memref<1x8xf32, #tpu.memory_space<vmem>>, vector<1x8xf32>
      %118 = vector.broadcast %117 : vector<1x8xf32> to vector<2x8xf32>
      %119 = arith.addf %116, %118 : vector<2x8xf32>
      %c0_102 = arith.constant 0 : index
      %c0_103 = arith.constant 0 : index
      %120 = vector.load %arg17[%c0_102, %c0_103] : memref<2x8xf32, #tpu.memory_space<vmem>>, vector<2x8xf32>
      %121 = arith.maximumf %119, %120 : vector<2x8xf32>
      %c0_104 = arith.constant 0 : index
      %c0_105 = arith.constant 0 : index
      %122 = vector.load %arg18[%c0_104, %c0_105] : memref<2x8xf32, #tpu.memory_space<vmem>>, vector<2x8xf32>
      tpu.vector_store %arg18[%c0_104, %c0_105], %121 {strides = array<i32>} : memref<2x8xf32, #tpu.memory_space<vmem>>, vector<2x8xf32>,
    } else {
    }
    return
  }
  func.func @transform_0(%arg0: i32) -> (i32, i32) {
    %c0_i32 = arith.constant 0 : i32
    %c0_i32_0 = arith.constant 0 : i32
    %c0_i32_1 = arith.constant 0 : i32
    return %c0_i32, %c0_i32_0 : i32, i32
  }
  func.func @transform_1(%arg0: i32) -> (i32, i32) {
    %c0_i32 = arith.constant 0 : i32
    %c0_i32_0 = arith.constant 0 : i32
    %c0_i32_1 = arith.constant 0 : i32
    return %c0_i32, %c0_i32_0 : i32, i32
  }
  func.func @transform_2(%arg0: i32) -> (i32, i32) {
    %c0_i32 = arith.constant 0 : i32
    %c0_i32_0 = arith.constant 0 : i32
    return %c0_i32, %arg0 : i32, i32
  }
  func.func @transform_3(%arg0: i32) -> (i32, i32) {
    %c0_i32 = arith.constant 0 : i32
    %c0_i32_0 = arith.constant 0 : i32
    return %c0_i32, %arg0 : i32, i32
  }
  func.func @transform_4(%arg0: i32) -> (i32, i32) {
    %c0_i32 = arith.constant 0 : i32
    %c0_i32_0 = arith.constant 0 : i32
    return %c0_i32, %arg0 : i32, i32
  }
  func.func @transform_5(%arg0: i32) -> (i32, i32) {
    %c0_i32 = arith.constant 0 : i32
    %c0_i32_0 = arith.constant 0 : i32
    return %c0_i32, %arg0 : i32, i32
  }
  func.func @transform_6(%arg0: i32) -> (i32, i32) {
    %c0_i32 = arith.constant 0 : i32
    %c0_i32_0 = arith.constant 0 : i32
    return %c0_i32, %arg0 : i32, i32
  }
  func.func @transform_7(%arg0: i32) -> (i32, i32) {
    %c0_i32 = arith.constant 0 : i32
    %c0_i32_0 = arith.constant 0 : i32
    %c0_i32_1 = arith.constant 0 : i32
    return %c0_i32, %c0_i32_0 : i32, i32
  }
  func.func @transform_8(%arg0: i32) -> (i32, i32) {
    %c0_i32 = arith.constant 0 : i32
    %c0_i32_0 = arith.constant 0 : i32
    %c0_i32_1 = arith.constant 0 : i32
    return %c0_i32, %c0_i32_0 : i32, i32
  }
  func.func @transform_9(%arg0: i32) -> (i32, i32) {
    %c0_i32 = arith.constant 0 : i32
    %c0_i32_0 = arith.constant 0 : i32
    %c0_i32_1 = arith.constant 0 : i32
    return %c0_i32, %c0_i32_0 : i32, i32
  }
  func.func @transform_10(%arg0: i32) -> (i32, i32) {
    %c0_i32 = arith.constant 0 : i32
    %c0_i32_0 = arith.constant 0 : i32
    return %arg0, %c0_i32 : i32, i32
  }
  func.func @transform_11(%arg0: i32) -> (i32, i32) {
    %c0_i32 = arith.constant 0 : i32
    %c0_i32_0 = arith.constant 0 : i32
    %c0_i32_1 = arith.constant 0 : i32
    return %c0_i32, %c0_i32_0 : i32, i32
  }
  func.func @transform_12(%arg0: i32) -> (i32, i32) {
    %c0_i32 = arith.constant 0 : i32
    %c0_i32_0 = arith.constant 0 : i32
    %c0_i32_1 = arith.constant 0 : i32
    return %c0_i32, %c0_i32_0 : i32, i32
  }
  func.func @transform_13(%arg0: i32) -> (i32, i32) {
    %c0_i32 = arith.constant 0 : i32
    %c0_i32_0 = arith.constant 0 : i32
    %c0_i32_1 = arith.constant 0 : i32
    return %c0_i32, %c0_i32_0 : i32, i32
  }
  func.func @transform_14(%arg0: i32) -> (i32, i32) {
    %c0_i32 = arith.constant 0 : i32
    %c0_i32_0 = arith.constant 0 : i32
    %c0_i32_1 = arith.constant 0 : i32
    return %c0_i32, %c0_i32_0 : i32, i32
  }
  func.func @transform_15(%arg0: i32) -> (i32, i32) {
    %c0_i32 = arith.constant 0 : i32
    %c0_i32_0 = arith.constant 0 : i32
    %c0_i32_1 = arith.constant 0 : i32
    return %c0_i32, %c0_i32_0 : i32, i32
  }
  func.func @transform_16(%arg0: i32) -> (i32, i32) {
    %c0_i32 = arith.constant 0 : i32
    %c0_i32_0 = arith.constant 0 : i32
    %c0_i32_1 = arith.constant 0 : i32
    return %c0_i32, %c0_i32_0 : i32, i32
  }
  func.func @transform_17(%arg0: i32) -> (i32, i32) {
    %c0_i32 = arith.constant 0 : i32
    %c0_i32_0 = arith.constant 0 : i32
    %c0_i32_1 = arith.constant 0 : i32
    return %c0_i32, %c0_i32_0 : i32, i32
  }
  func.func @transform_18(%arg0: i32) -> (i32, i32) {
    %c0_i32 = arith.constant 0 : i32
    %c0_i32_0 = arith.constant 0 : i32
    %c0_i32_1 = arith.constant 0 : i32
    return %c0_i32, %c0_i32_0 : i32, i32
  }
  func.func @transform_19(%arg0: i32) -> (i32, i32) {
    %c0_i32 = arith.constant 0 : i32
    %c0_i32_0 = arith.constant 0 : i32
    %c0_i32_1 = arith.constant 0 : i32
    return %c0_i32, %c0_i32_0 : i32, i32
  }
}

</mosaic_0001>

<llo_original>
// kernel: llm_forward.1
$region0: #{llm_forward.1}
  #allocation0 [shape = 'u32[]', space=smem, size = 0x4, offset = 0x4, fixed_abs, tag = 'smem constant byte address 0x4 - core index']
  #allocation1 [shape = 'u32[144,128]{1,0:T(1,128)}', space=vmem, size = 0x12000, scoped, tag = 'internal scratch']
  #allocation2 [shape = 'f32[2,1024]{1,0:T(2,128)}', space=vmem, size = 0x2000, scoped, tag = 'scratch operand']
  #allocation3 [shape = 'f32[16,1]{1,0:T(8,128)}', space=vmem, size = 0x2000, scoped, tag = 'scratch operand']
  #allocation4 [shape = 'f32[16,1]{1,0:T(8,128)}', space=vmem, size = 0x2000, scoped, tag = 'scratch operand']
  #allocation5 [shape = 'f32[16,1]{1,0:T(8,128)}', space=vmem, size = 0x2000, scoped, tag = 'scratch operand']
  #allocation6 [shape = 'f32[16,1]{1,0:T(8,128)}', space=vmem, size = 0x2000, scoped, tag = 'scratch operand']
  #allocation7 [shape = 'f32[16,1]{1,0:T(8,128)}', space=vmem, size = 0x2000, scoped, tag = 'scratch operand']
  #allocation8 [shape = 'f32[16,1]{1,0:T(8,128)}', space=vmem, size = 0x2000, scoped, tag = 'scratch operand']
  %s0 = inlined_call_operand.hbm [shape: f32[16,32], index: 0, kind: input, shape index: {}]
  %s1 = inlined_call_operand.hbm [shape: f32[16,64], index: 1, kind: input, shape index: {}]
  %s2 = inlined_call_operand.hbm [shape: bf16[32,4096], index: 2, kind: input, shape index: {}]
  %s3 = inlined_call_operand.hbm [shape: f32[1,4096], index: 3, kind: input, shape index: {}]
  %s4 = inlined_call_operand.hbm [shape: bf16[64,4096], index: 4, kind: input, shape index: {}]
  %s5 = inlined_call_operand.hbm [shape: f32[1,4096], index: 5, kind: input, shape index: {}]
  %s6 = inlined_call_operand.vmem [shape: f32[8,4096], index: 6, kind: input, shape index: {}]
  %s7 = inlined_call_operand.hbm [shape: f32[16,8], index: 7, kind: input, shape index: {}, may-alias: {7,8}]
  %s8 = inlined_call_operand.hbm [shape: f32[16,8], index: 8, kind: input, shape index: {}, may-alias: {7,8}]
  %s9 = inlined_call_operand.hbm [shape: f32[2,16], index: 9, kind: input, shape index: {}]
  %s10 = inlined_call_operand.hbm [shape: bf16[4096,1024], index: 10, kind: input, shape index: {}]
  %s11 = inlined_call_operand.hbm [shape: f32[1,1024], index: 11, kind: input, shape index: {}]
  %s12 = inlined_call_operand.hbm [shape: bf16[1024,128], index: 12, kind: input, shape index: {}]
  %s13 = inlined_call_operand.hbm [shape: f32[1,128], index: 13, kind: input, shape index: {}]
  %s14 = inlined_call_operand.vmem [shape: f32[128,8], index: 14, kind: input, shape index: {}]
  %s15 = inlined_call_operand.hbm [shape: f32[1,8], index: 15, kind: input, shape index: {}]
  %s16 = inlined_call_operand.hbm [shape: f32[2,8], index: 16, kind: input, shape index: {}]
  %s17 = inlined_call_operand.hbm [shape: f32[2,8], index: 17, kind: output, shape index: {0}]
  %s18 = inlined_call_operand.hbm [shape: f32[1,1], index: 18, kind: output, shape index: {1}]
  %s19 = inlined_call_operand.hbm [shape: f32[1,1], index: 19, kind: output, shape index: {2}]
  %20 = xla_tuple %s17, %s18, %s19
  %s21 = sld [smem:[#allocation0]]
  $region185: #{llm_forward.1} parent=0
    _
  %s23 = ssub.s32 1, %s21
  %s24 = scalar_select 0, %s23, %s21
  $region1: #{llm_forward.1} parent=0
    #allocation9 [shape = 'u8[8192]{0}', space=vmem, size = 0x2000, scoped, tag = 'input window, operand 0, single buffered']
    #allocation10 [shape = 's32[2]{0}', space=sflag, size = 0x8, scoped, tag = 'scoped memory for llm_forward.1']
    #allocation11 [shape = 's32[2]{0}', space=sflag, size = 0x8, scoped, tag = 'scoped memory for llm_forward.1']
    #allocation12 [shape = 'u8[8192]{0}', space=vmem, size = 0x2000, scoped, tag = 'input window, operand 1, single buffered']
    #allocation13 [shape = 's32[1]{0}', space=sflag, size = 0x4, scoped, tag = 'scoped memory for llm_forward.1']
    #allocation14 [shape = 'u8[131072]{0}', space=vmem, size = 0x20000, scoped, tag = 'input window, operand 2']
    #allocation15 [shape = 'u8[8192]{0}', space=vmem, size = 0x2000, scoped, tag = 'input window, operand 3']
    #allocation16 [shape = 'u8[262144]{0}', space=vmem, size = 0x40000, scoped, tag = 'input window, operand 4']
    #allocation17 [shape = 'u8[8192]{0}', space=vmem, size = 0x2000, scoped, tag = 'input window, operand 5']
    #allocation18 [shape = 'u8[8192]{0}', space=vmem, size = 0x2000, scoped, tag = 'input window, operand 7, single buffered']
    #allocation19 [shape = 'u8[8192]{0}', space=vmem, size = 0x2000, scoped, tag = 'input window, operand 8, single buffered']
    #allocation20 [shape = 's32[1]{0}', space=sflag, size = 0x4, scoped, tag = 'scoped memory for llm_forward.1']
    #allocation21 [shape = 'u8[1024]{0}', space=vmem, size = 0x400, scoped, tag = 'input window, operand 9, single buffered']
    #allocation22 [shape = 'u8[4194304]{0}', space=vmem, size = 0x400000, scoped, tag = 'input window, operand 10']
    #allocation23 [shape = 's32[2]{0}', space=sflag, size = 0x8, scoped, tag = 'scoped memory for llm_forward.1']
    #allocation24 [shape = 'u8[4096]{0}', space=vmem, size = 0x1000, scoped, tag = 'input window, operand 11, single buffered']
    #allocation25 [shape = 'u8[262144]{0}', space=vmem, size = 0x40000, scoped, tag = 'input window, operand 12, single buffered']
    #allocation26 [shape = 's32[1]{0}', space=sflag, size = 0x4, scoped, tag = 'scoped memory for llm_forward.1']
    #allocation27 [shape = 'u8[512]{0}', space=vmem, size = 0x400, scoped, tag = 'input window, operand 13, single buffered']
    #allocation28 [shape = 'u8[512]{0}', space=vmem, size = 0x400, scoped, tag = 'input window, operand 15, single buffered']
    #allocation29 [shape = 's32[1]{0}', space=sflag, size = 0x4, scoped, tag = 'scoped memory for llm_forward.1']
    #allocation30 [shape = 'u8[1024]{0}', space=vmem, size = 0x400, scoped, tag = 'input window, operand 16, single buffered']
    #allocation31 [shape = 'u8[1024]{0}', space=vmem, size = 0x400, scoped, tag = 'output window, operand 0, single buffered']
    #allocation32 [shape = 'u8[512]{0}', space=vmem, size = 0x400, scoped, tag = 'output window, operand 1, single buffered']
    #allocation33 [shape = 's32[1]{0}', space=sflag, size = 0x4, scoped, tag = 'scoped memory for llm_forward.1']
    #allocation34 [shape = 'u8[512]{0}', space=vmem, size = 0x400, scoped, tag = 'output window, operand 2, single buffered']
    %25 = vsyncpa [#allocation10], 0
    %26 = vsyncpa [#allocation13], 0
    %27 = vsyncpa [#allocation20], 0
    %28 = vsyncpa [#allocation23], 0
    %s29 = scalar_lea.sflag [#allocation23], 1
    %30 = vsyncpa %s29, 0
    %31 = vsyncpa [#allocation26], 0
    %32 = vsyncpa [#allocation29], 0
    %33 = vsyncpa [#allocation11], 0
    %34 = vsyncpa [#allocation33], 0
    loop: start=0, step=1, limit=6
    $region2: #{llm_forward.1} parent=1 // loop_pre_header
      _
    $region3: #{llm_forward.1} parent=1 // loop_header
      %s36 = sphi 0, %s40
      %p37 = scmp.ge.s32.totalorder %s36, 6
      %s44 = sphi 0, %s44
      %s46 = sphi 0, %s44
      %s47 = sphi 0, %s46
      %s61 = sphi 0, %s47
      %s65 = sphi 0, %s65
      %s67 = sphi 0, %s65
      %s68 = sphi 0, %s67
      %s82 = sphi 0, %s68
      %s88 = sphi 0, %s90
      %s91 = sphi 0, %s88
      %s92 = sphi 0, %s91
      %s108 = sphi 0, %s92
      %s114 = sphi 0, %s116
      %s117 = sphi 0, %s114
      %s118 = sphi 0, %s117
      %s134 = sphi 0, %s118
      %s140 = sphi 0, %s142
      %s143 = sphi 0, %s140
      %s144 = sphi 0, %s143
      %s160 = sphi 0, %s144
      %s166 = sphi 0, %s168
      %s169 = sphi 0, %s166
      %s170 = sphi 0, %s169
      %s186 = sphi 0, %s170
      %s192 = sphi 0, %s194
      %s195 = sphi 0, %s192
      %s196 = sphi 0, %s195
      %s212 = sphi 0, %s196
      %s216 = sphi 0, %s216
      %s218 = sphi 0, %s216
      %s219 = sphi 0, %s218
      %s233 = sphi 0, %s219
      %s237 = sphi 0, %s237
      %s239 = sphi 0, %s237
      %s240 = sphi 0, %s239
      %s254 = sphi 0, %s240
      %s258 = sphi 0, %s258
      %s260 = sphi 0, %s258
      %s261 = sphi 0, %s260
      %s275 = sphi 0, %s261
      %s281 = sphi 0, %s283
      %s284 = sphi 0, %s281
      %s285 = sphi 0, %s284
      %s301 = sphi 0, %s285
      %s305 = sphi 0, %s305
      %s307 = sphi 0, %s305
      %s308 = sphi 0, %s307
      %s322 = sphi 0, %s308
      %s326 = sphi 0, %s326
      %s328 = sphi 0, %s326
      %s329 = sphi 0, %s328
      %s343 = sphi 0, %s329
      %s347 = sphi 0, %s347
      %s349 = sphi 0, %s347
      %s350 = sphi 0, %s349
      %s364 = sphi 0, %s350
      %s368 = sphi 0, %s368
      %s370 = sphi 0, %s368
      %s371 = sphi 0, %s370
      %s385 = sphi 0, %s371
      %s389 = sphi 0, %s389
      %s391 = sphi 0, %s389
      %s392 = sphi 0, %s391
      %s406 = sphi 0, %s392
      %s410 = sphi 0, %s410
      %s412 = sphi 0, %s410
      %s413 = sphi 0, %s412
      %s427 = sphi 0, %s413
      %s431 = sphi 0, %s431
      %s433 = sphi 0, %s431
      %s434 = sphi 0, %s433
      %s448 = sphi 0, %s434
      %s452 = sphi 0, %s452
      %s454 = sphi 0, %s452
      %s455 = sphi 0, %s454
      %s469 = sphi 0, %s455
      %s473 = sphi 0, %s473
      %s475 = sphi 0, %s473
      %s476 = sphi 0, %s475
      %s490 = sphi 0, %s476
    $region4: #{llm_forward.1} parent=1 // loop_header_branch
      %39 = sbr.rel (%p37) target = $region8
    $region5: #{llm_forward.1} parent=1 // loop_body
      %s41 = ssub.s32 %s36, 1
      %s42 = ssub.s32 %s36, 2
      %s43 = sadd.s32 %s36, 1
      %s45 = sadd.s32 %s44, 1
      %p48 = scmp.eq.s32.totalorder %s36, 3
      %p49 = scmp.ne.s32.totalorder %s44, %s46
      %p50 = scmp.eq.s32.totalorder %s36, 0
      %p51 = por %p49, %p50
      %p52 = scmp.ne.s32.totalorder %s44, %s46
      %p53 = scmp.eq.s32.totalorder %s41, 3
      %p54 = por %p52, %p53
      %p55 = scmp.ne.s32.totalorder %s46, %s47
      %p56 = scmp.eq.s32.totalorder %s41, 0
      %p57 = por %p55, %p56
      %p58 = scmp.ne.s32.totalorder %s46, %s47
      %p59 = scmp.eq.s32.totalorder %s42, 3
      %p60 = por %p58, %p59
      %p62 = scmp.ne.s32.totalorder %s47, %s61
      %p63 = scmp.eq.s32.totalorder %s42, 0
      %p64 = por %p62, %p63
      %s66 = sadd.s32 %s65, 1
      %p69 = scmp.eq.s32.totalorder %s36, 3
      %p70 = scmp.ne.s32.totalorder %s65, %s67
      %p71 = scmp.eq.s32.totalorder %s36, 0
      %p72 = por %p70, %p71
      %p73 = scmp.ne.s32.totalorder %s65, %s67
      %p74 = scmp.eq.s32.totalorder %s41, 3
      %p75 = por %p73, %p74
      %p76 = scmp.ne.s32.totalorder %s67, %s68
      %p77 = scmp.eq.s32.totalorder %s41, 0
      %p78 = por %p76, %p77
      %p79 = scmp.ne.s32.totalorder %s67, %s68
      %p80 = scmp.eq.s32.totalorder %s42, 3
      %p81 = por %p79, %p80
      %p83 = scmp.ne.s32.totalorder %s68, %s82
      %p84 = scmp.eq.s32.totalorder %s42, 0
      %p85 = por %p83, %p84
      %s86 = ssub.s32 %s36, %s43
      %p87 = scmp.eq.s32.totalorder %s86, 0
      %s89 = sadd.s32 %s88, 1
      %s90 = scalar_select %p87, %s88, %s89
      %p93 = pneg %p87
      %p94 = scmp.eq.s32.totalorder %s36, 3
      %p95 = por %p93, %p94
      %p96 = scmp.ne.s32.totalorder %s88, %s91
      %p97 = scmp.eq.s32.totalorder %s36, 0
      %p98 = por %p96, %p97
      %p99 = scmp.ne.s32.totalorder %s88, %s91
      %p100 = scmp.eq.s32.totalorder %s41, 3
      %p101 = por %p99, %p100
      %p102 = scmp.ne.s32.totalorder %s91, %s92
      %p103 = scmp.eq.s32.totalorder %s41, 0
      %p104 = por %p102, %p103
      %p105 = scmp.ne.s32.totalorder %s91, %s92
      %p106 = scmp.eq.s32.totalorder %s42, 3
      %p107 = por %p105, %p106
      %p109 = scmp.ne.s32.totalorder %s92, %s108
      %p110 = scmp.eq.s32.totalorder %s42, 0
      %p111 = por %p109, %p110
      %s112 = ssub.s32 %s36, %s43
      %p113 = scmp.eq.s32.totalorder %s112, 0
      %s115 = sadd.s32 %s114, 1
      %s116 = scalar_select %p113, %s114, %s115
      %p119 = pneg %p113
      %p120 = scmp.eq.s32.totalorder %s36, 3
      %p121 = por %p119, %p120
      %p122 = scmp.ne.s32.totalorder %s114, %s117
      %p123 = scmp.eq.s32.totalorder %s36, 0
      %p124 = por %p122, %p123
      %p125 = scmp.ne.s32.totalorder %s114, %s117
      %p126 = scmp.eq.s32.totalorder %s41, 3
      %p127 = por %p125, %p126
      %p128 = scmp.ne.s32.totalorder %s117, %s118
      %p129 = scmp.eq.s32.totalorder %s41, 0
      %p130 = por %p128, %p129
      %p131 = scmp.ne.s32.totalorder %s117, %s118
      %p132 = scmp.eq.s32.totalorder %s42, 3
      %p133 = por %p131, %p132
      %p135 = scmp.ne.s32.totalorder %s118, %s134
      %p136 = scmp.eq.s32.totalorder %s42, 0
      %p137 = por %p135, %p136
      %s138 = ssub.s32 %s36, %s43
      %p139 = scmp.eq.s32.totalorder %s138, 0
      %s141 = sadd.s32 %s140, 1
      %s142 = scalar_select %p139, %s140, %s141
      %p145 = pneg %p139
      %p146 = scmp.eq.s32.totalorder %s36, 3
      %p147 = por %p145, %p146
      %p148 = scmp.ne.s32.totalorder %s140, %s143
      %p149 = scmp.eq.s32.totalorder %s36, 0
      %p150 = por %p148, %p149
      %p151 = scmp.ne.s32.totalorder %s140, %s143
      %p152 = scmp.eq.s32.totalorder %s41, 3
      %p153 = por %p151, %p152
      %p154 = scmp.ne.s32.totalorder %s143, %s144
      %p155 = scmp.eq.s32.totalorder %s41, 0
      %p156 = por %p154, %p155
      %p157 = scmp.ne.s32.totalorder %s143, %s144
      %p158 = scmp.eq.s32.totalorder %s42, 3
      %p159 = por %p157, %p158
      %p161 = scmp.ne.s32.totalorder %s144, %s160
      %p162 = scmp.eq.s32.totalorder %s42, 0
      %p163 = por %p161, %p162
      %s164 = ssub.s32 %s36, %s43
      %p165 = scmp.eq.s32.totalorder %s164, 0
      %s167 = sadd.s32 %s166, 1
      %s168 = scalar_select %p165, %s166, %s167
      %p171 = pneg %p165
      %p172 = scmp.eq.s32.totalorder %s36, 3
      %p173 = por %p171, %p172
      %p174 = scmp.ne.s32.totalorder %s166, %s169
      %p175 = scmp.eq.s32.totalorder %s36, 0
      %p176 = por %p174, %p175
      %p177 = scmp.ne.s32.totalorder %s166, %s169
      %p178 = scmp.eq.s32.totalorder %s41, 3
      %p179 = por %p177, %p178
      %p180 = scmp.ne.s32.totalorder %s169, %s170
      %p181 = scmp.eq.s32.totalorder %s41, 0
      %p182 = por %p180, %p181
      %p183 = scmp.ne.s32.totalorder %s169, %s170
      %p184 = scmp.eq.s32.totalorder %s42, 3
      %p185 = por %p183, %p184
      %p187 = scmp.ne.s32.totalorder %s170, %s186
      %p188 = scmp.eq.s32.totalorder %s42, 0
      %p189 = por %p187, %p188
      %s190 = ssub.s32 %s36, %s43
      %p191 = scmp.eq.s32.totalorder %s190, 0
      %s193 = sadd.s32 %s192, 1
      %s194 = scalar_select %p191, %s192, %s193
      %p197 = pneg %p191
      %p198 = scmp.eq.s32.totalorder %s36, 3
      %p199 = por %p197, %p198
      %p200 = scmp.ne.s32.totalorder %s192, %s195
      %p201 = scmp.eq.s32.totalorder %s36, 0
      %p202 = por %p200, %p201
      %p203 = scmp.ne.s32.totalorder %s192, %s195
      %p204 = scmp.eq.s32.totalorder %s41, 3
      %p205 = por %p203, %p204
      %p206 = scmp.ne.s32.totalorder %s195, %s196
      %p207 = scmp.eq.s32.totalorder %s41, 0
      %p208 = por %p206, %p207
      %p209 = scmp.ne.s32.totalorder %s195, %s196
      %p210 = scmp.eq.s32.totalorder %s42, 3
      %p211 = por %p209, %p210
      %p213 = scmp.ne.s32.totalorder %s196, %s212
      %p214 = scmp.eq.s32.totalorder %s42, 0
      %p215 = por %p213, %p214
      %s217 = sadd.s32 %s216, 1
      %p220 = scmp.eq.s32.totalorder %s36, 3
      %p221 = scmp.ne.s32.totalorder %s216, %s218
      %p222 = scmp.eq.s32.totalorder %s36, 0
      %p223 = por %p221, %p222
      %p224 = scmp.ne.s32.totalorder %s216, %s218
      %p225 = scmp.eq.s32.totalorder %s41, 3
      %p226 = por %p224, %p225
      %p227 = scmp.ne.s32.totalorder %s218, %s219
      %p228 = scmp.eq.s32.totalorder %s41, 0
      %p229 = por %p227, %p228
      %p230 = scmp.ne.s32.totalorder %s218, %s219
      %p231 = scmp.eq.s32.totalorder %s42, 3
      %p232 = por %p230, %p231
      %p234 = scmp.ne.s32.totalorder %s219, %s233
      %p235 = scmp.eq.s32.totalorder %s42, 0
      %p236 = por %p234, %p235
      %s238 = sadd.s32 %s237, 1
      %p241 = scmp.eq.s32.totalorder %s36, 3
      %p242 = scmp.ne.s32.totalorder %s237, %s239
      %p243 = scmp.eq.s32.totalorder %s36, 0
      %p244 = por %p242, %p243
      %p245 = scmp.ne.s32.totalorder %s237, %s239
      %p246 = scmp.eq.s32.totalorder %s41, 3
      %p247 = por %p245, %p246
      %p248 = scmp.ne.s32.totalorder %s239, %s240
      %p249 = scmp.eq.s32.totalorder %s41, 0
      %p250 = por %p248, %p249
      %p251 = scmp.ne.s32.totalorder %s239, %s240
      %p252 = scmp.eq.s32.totalorder %s42, 3
      %p253 = por %p251, %p252
      %p255 = scmp.ne.s32.totalorder %s240, %s254
      %p256 = scmp.eq.s32.totalorder %s42, 0
      %p257 = por %p255, %p256
      %s259 = sadd.s32 %s258, 1
      %p262 = scmp.eq.s32.totalorder %s36, 3
      %p263 = scmp.ne.s32.totalorder %s258, %s260
      %p264 = scmp.eq.s32.totalorder %s36, 0
      %p265 = por %p263, %p264
      %p266 = scmp.ne.s32.totalorder %s258, %s260
      %p267 = scmp.eq.s32.totalorder %s41, 3
      %p268 = por %p266, %p267
      %p269 = scmp.ne.s32.totalorder %s260, %s261
      %p270 = scmp.eq.s32.totalorder %s41, 0
      %p271 = por %p269, %p270
      %p272 = scmp.ne.s32.totalorder %s260, %s261
      %p273 = scmp.eq.s32.totalorder %s42, 3
      %p274 = por %p272, %p273
      %p276 = scmp.ne.s32.totalorder %s261, %s275
      %p277 = scmp.eq.s32.totalorder %s42, 0
      %p278 = por %p276, %p277
      %s279 = ssub.s32 %s36, %s43
      %p280 = scmp.eq.s32.totalorder %s279, 0
      %s282 = sadd.s32 %s281, 1
      %s283 = scalar_select %p280, %s281, %s282
      %p286 = pneg %p280
      %p287 = scmp.eq.s32.totalorder %s36, 3
      %p288 = por %p286, %p287
      %p289 = scmp.ne.s32.totalorder %s281, %s284
      %p290 = scmp.eq.s32.totalorder %s36, 0
      %p291 = por %p289, %p290
      %p292 = scmp.ne.s32.totalorder %s281, %s284
      %p293 = scmp.eq.s32.totalorder %s41, 3
      %p294 = por %p292, %p293
      %p295 = scmp.ne.s32.totalorder %s284, %s285
      %p296 = scmp.eq.s32.totalorder %s41, 0
      %p297 = por %p295, %p296
      %p298 = scmp.ne.s32.totalorder %s284, %s285
      %p299 = scmp.eq.s32.totalorder %s42, 3
      %p300 = por %p298, %p299
      %p302 = scmp.ne.s32.totalorder %s285, %s301
      %p303 = scmp.eq.s32.totalorder %s42, 0
      %p304 = por %p302, %p303
      %s306 = sadd.s32 %s305, 1
      %p309 = scmp.eq.s32.totalorder %s36, 3
      %p310 = scmp.ne.s32.totalorder %s305, %s307
      %p311 = scmp.eq.s32.totalorder %s36, 0
      %p312 = por %p310, %p311
      %p313 = scmp.ne.s32.totalorder %s305, %s307
      %p314 = scmp.eq.s32.totalorder %s41, 3
      %p315 = por %p313, %p314
      %p316 = scmp.ne.s32.totalorder %s307, %s308
      %p317 = scmp.eq.s32.totalorder %s41, 0
      %p318 = por %p316, %p317
      %p319 = scmp.ne.s32.totalorder %s307, %s308
      %p320 = scmp.eq.s32.totalorder %s42, 3
      %p321 = por %p319, %p320
      %p323 = scmp.ne.s32.totalorder %s308, %s322
      %p324 = scmp.eq.s32.totalorder %s42, 0
      %p325 = por %p323, %p324
      %s327 = sadd.s32 %s326, 1
      %p330 = scmp.eq.s32.totalorder %s36, 3
      %p331 = scmp.ne.s32.totalorder %s326, %s328
      %p332 = scmp.eq.s32.totalorder %s36, 0
      %p333 = por %p331, %p332
      %p334 = scmp.ne.s32.totalorder %s326, %s328
      %p335 = scmp.eq.s32.totalorder %s41, 3
      %p336 = por %p334, %p335
      %p337 = scmp.ne.s32.totalorder %s328, %s329
      %p338 = scmp.eq.s32.totalorder %s41, 0
      %p339 = por %p337, %p338
      %p340 = scmp.ne.s32.totalorder %s328, %s329
      %p341 = scmp.eq.s32.totalorder %s42, 3
      %p342 = por %p340, %p341
      %p344 = scmp.ne.s32.totalorder %s329, %s343
      %p345 = scmp.eq.s32.totalorder %s42, 0
      %p346 = por %p344, %p345
      %s348 = sadd.s32 %s347, 1
      %p351 = scmp.eq.s32.totalorder %s36, 3
      %p352 = scmp.ne.s32.totalorder %s347, %s349
      %p353 = scmp.eq.s32.totalorder %s36, 0
      %p354 = por %p352, %p353
      %p355 = scmp.ne.s32.totalorder %s347, %s349
      %p356 = scmp.eq.s32.totalorder %s41, 3
      %p357 = por %p355, %p356
      %p358 = scmp.ne.s32.totalorder %s349, %s350
      %p359 = scmp.eq.s32.totalorder %s41, 0
      %p360 = por %p358, %p359
      %p361 = scmp.ne.s32.totalorder %s349, %s350
      %p362 = scmp.eq.s32.totalorder %s42, 3
      %p363 = por %p361, %p362
      %p365 = scmp.ne.s32.totalorder %s350, %s364
      %p366 = scmp.eq.s32.totalorder %s42, 0
      %p367 = por %p365, %p366
      %s369 = sadd.s32 %s368, 1
      %p372 = scmp.eq.s32.totalorder %s36, 3
      %p373 = scmp.ne.s32.totalorder %s368, %s370
      %p374 = scmp.eq.s32.totalorder %s36, 0
      %p375 = por %p373, %p374
      %p376 = scmp.ne.s32.totalorder %s368, %s370
      %p377 = scmp.eq.s32.totalorder %s41, 3
      %p378 = por %p376, %p377
      %p379 = scmp.ne.s32.totalorder %s370, %s371
      %p380 = scmp.eq.s32.totalorder %s41, 0
      %p381 = por %p379, %p380
      %p382 = scmp.ne.s32.totalorder %s370, %s371
      %p383 = scmp.eq.s32.totalorder %s42, 3
      %p384 = por %p382, %p383
      %p386 = scmp.ne.s32.totalorder %s371, %s385
      %p387 = scmp.eq.s32.totalorder %s42, 0
      %p388 = por %p386, %p387
      %s390 = sadd.s32 %s389, 1
      %p393 = scmp.eq.s32.totalorder %s36, 3
      %p394 = scmp.ne.s32.totalorder %s389, %s391
      %p395 = scmp.eq.s32.totalorder %s36, 0
      %p396 = por %p394, %p395
      %p397 = scmp.ne.s32.totalorder %s389, %s391
      %p398 = scmp.eq.s32.totalorder %s41, 3
      %p399 = por %p397, %p398
      %p400 = scmp.ne.s32.totalorder %s391, %s392
      %p401 = scmp.eq.s32.totalorder %s41, 0
      %p402 = por %p400, %p401
      %p403 = scmp.ne.s32.totalorder %s391, %s392
      %p404 = scmp.eq.s32.totalorder %s42, 3
      %p405 = por %p403, %p404
      %p407 = scmp.ne.s32.totalorder %s392, %s406
      %p408 = scmp.eq.s32.totalorder %s42, 0
      %p409 = por %p407, %p408
      %s411 = sadd.s32 %s410, 1
      %p414 = scmp.eq.s32.totalorder %s36, 3
      %p415 = scmp.ne.s32.totalorder %s410, %s412
      %p416 = scmp.eq.s32.totalorder %s36, 0
      %p417 = por %p415, %p416
      %p418 = scmp.ne.s32.totalorder %s410, %s412
      %p419 = scmp.eq.s32.totalorder %s41, 3
      %p420 = por %p418, %p419
      %p421 = scmp.ne.s32.totalorder %s412, %s413
      %p422 = scmp.eq.s32.totalorder %s41, 0
      %p423 = por %p421, %p422
      %p424 = scmp.ne.s32.totalorder %s412, %s413
      %p425 = scmp.eq.s32.totalorder %s42, 3
      %p426 = por %p424, %p425
      %p428 = scmp.ne.s32.totalorder %s413, %s427
      %p429 = scmp.eq.s32.totalorder %s42, 0
      %p430 = por %p428, %p429
      %s432 = sadd.s32 %s431, 1
      %p435 = scmp.eq.s32.totalorder %s36, 3
      %p436 = scmp.ne.s32.totalorder %s431, %s433
      %p437 = scmp.eq.s32.totalorder %s36, 0
      %p438 = por %p436, %p437
      %p439 = scmp.ne.s32.totalorder %s431, %s433
      %p440 = scmp.eq.s32.totalorder %s41, 3
      %p441 = por %p439, %p440
      %p442 = scmp.ne.s32.totalorder %s433, %s434
      %p443 = scmp.eq.s32.totalorder %s41, 0
      %p444 = por %p442, %p443
      %p445 = scmp.ne.s32.totalorder %s433, %s434
      %p446 = scmp.eq.s32.totalorder %s42, 3
      %p447 = por %p445, %p446
      %p449 = scmp.ne.s32.totalorder %s434, %s448
      %p450 = scmp.eq.s32.totalorder %s42, 0
      %p451 = por %p449, %p450
      %s453 = sadd.s32 %s452, 1
      %p456 = scmp.eq.s32.totalorder %s36, 3
      %p457 = scmp.ne.s32.totalorder %s452, %s454
      %p458 = scmp.eq.s32.totalorder %s36, 0
      %p459 = por %p457, %p458
      %p460 = scmp.ne.s32.totalorder %s452, %s454
      %p461 = scmp.eq.s32.totalorder %s41, 3
      %p462 = por %p460, %p461
      %p463 = scmp.ne.s32.totalorder %s454, %s455
      %p464 = scmp.eq.s32.totalorder %s41, 0
      %p465 = por %p463, %p464
      %p466 = scmp.ne.s32.totalorder %s454, %s455
      %p467 = scmp.eq.s32.totalorder %s42, 3
      %p468 = por %p466, %p467
      %p470 = scmp.ne.s32.totalorder %s455, %s469
      %p471 = scmp.eq.s32.totalorder %s42, 0
      %p472 = por %p470, %p471
      %s474 = sadd.s32 %s473, 1
      %p477 = scmp.eq.s32.totalorder %s36, 3
      %p478 = scmp.ne.s32.totalorder %s473, %s475
      %p479 = scmp.eq.s32.totalorder %s36, 0
      %p480 = por %p478, %p479
      %p481 = scmp.ne.s32.totalorder %s473, %s475
      %p482 = scmp.eq.s32.totalorder %s41, 3
      %p483 = por %p481, %p482
      %p484 = scmp.ne.s32.totalorder %s475, %s476
      %p485 = scmp.eq.s32.totalorder %s41, 0
      %p486 = por %p484, %p485
      %p487 = scmp.ne.s32.totalorder %s475, %s476
      %p488 = scmp.eq.s32.totalorder %s42, 3
      %p489 = por %p487, %p488
      %p491 = scmp.ne.s32.totalorder %s476, %s490
      %p492 = scmp.eq.s32.totalorder %s42, 0
      %p493 = por %p491, %p492
      %p494 = scmp.le.s32.totalorder 1, %s36
      %p495 = scmp.lt.s32.totalorder %s36, 5
      %p496 = pnand %p494, %p495
      %p497 = pneg %p496
      // Predicated region
      $region9: #{llm_forward.1} parent=5 // pred_check
        _
      $region10: #{llm_forward.1} parent=5 // pred_check_branch
        %499 = sbr.rel (%p496) target = $region12
      $region11: #{llm_forward.1} parent=5 // pred_region
        %s500 = ssub.s32 %s36, 1
        // Predicated region
        $region13: #{llm_forward.1} parent=11 // pred_check
          %p501 = pneg %p57
        $region14: #{llm_forward.1} parent=11 // pred_check_branch
          %503 = sbr.rel (%p501) target = $region16
        $region15: #{llm_forward.1} parent=11 // pred_region
          %s505 = ssub.s32 256, 256
          %506 = vsyncadd [#allocation10], %s505
          %s507 = sshll.u32 [#allocation9], 4
          %s508 = int_to_ptr.vmem [resolvable:$true] %s507
          %513 = dma.hbm_to_vmem [thread:$0]  %s0, 256, %s508, [#allocation10], 128, 128, 8
        $region16: #{llm_forward.1} parent=11 // pred_fallthru
          _
        // Predicated region
        $region17: #{llm_forward.1} parent=11 // pred_check
          %p514 = pneg %p78
        $region18: #{llm_forward.1} parent=11 // pred_check_branch
          %516 = sbr.rel (%p514) target = $region20
        $region19: #{llm_forward.1} parent=11 // pred_region
          %s518 = ssub.s32 256, 256
          %519 = vsyncadd [#allocation13], %s518
          %s520 = sshll.u32 [#allocation12], 4
          %s521 = int_to_ptr.vmem [resolvable:$true] %s520
          %526 = dma.hbm_to_vmem [thread:$0]  %s1, 256, %s521, [#allocation13], 128, 128, 8
        $region20: #{llm_forward.1} parent=11 // pred_fallthru
          _
        // Predicated region
        $region21: #{llm_forward.1} parent=11 // pred_check
          %p527 = pneg %p229
        $region22: #{llm_forward.1} parent=11 // pred_check_branch
          %529 = sbr.rel (%p527) target = $region24
        $region23: #{llm_forward.1} parent=11 // pred_region
          %s531 = ssub.s32 256, 256
          %532 = vsyncadd [#allocation13], %s531
          %s533 = sshll.u32 [#allocation18], 4
          %s534 = int_to_ptr.vmem [resolvable:$true] %s533
          %539 = dma.hbm_to_vmem [thread:$0]  %s7, 256, %s534, [#allocation13], 128, 128, 8
        $region24: #{llm_forward.1} parent=11 // pred_fallthru
          _
        // Predicated region
        $region25: #{llm_forward.1} parent=11 // pred_check
          %p540 = pneg %p250
        $region26: #{llm_forward.1} parent=11 // pred_check_branch
          %542 = sbr.rel (%p540) target = $region28
        $region27: #{llm_forward.1} parent=11 // pred_region
          %s544 = ssub.s32 256, 256
          %545 = vsyncadd [#allocation20], %s544
          %s546 = sshll.u32 [#allocation19], 4
          %s547 = int_to_ptr.vmem [resolvable:$true] %s546
          %552 = dma.hbm_to_vmem [thread:$0]  %s8, 256, %s547, [#allocation20], 128, 128, 8
        $region28: #{llm_forward.1} parent=11 // pred_fallthru
          _
        // Predicated region
        $region29: #{llm_forward.1} parent=11 // pred_check
          %p553 = pneg %p271
        $region30: #{llm_forward.1} parent=11 // pred_check_branch
          %555 = sbr.rel (%p553) target = $region32
        $region31: #{llm_forward.1} parent=11 // pred_region
          %s557 = ssub.s32 32, 32
          %558 = vsyncadd [#allocation20], %s557
          %s560 = sshll.u32 [#allocation21], 4
          %s561 = int_to_ptr.vmem [resolvable:$true] %s560
          %563 = dma.hbm_to_vmem [thread:$0]  %s9, 32, %s561, [#allocation20]
        $region32: #{llm_forward.1} parent=11 // pred_fallthru
          _
        // Predicated region
        $region33: #{llm_forward.1} parent=11 // pred_check
          %p564 = pneg %p318
        $region34: #{llm_forward.1} parent=11 // pred_check_branch
          %566 = sbr.rel (%p564) target = $region36
        $region35: #{llm_forward.1} parent=11 // pred_region
          %s568 = ssub.s32 128, 128
          %569 = vsyncadd [#allocation23], %s568
          %s571 = sshll.u32 [#allocation24], 4
          %s572 = int_to_ptr.vmem [resolvable:$true] %s571
          %574 = dma.hbm_to_vmem [thread:$0]  %s11, 128, %s572, [#allocation23]
        $region36: #{llm_forward.1} parent=11 // pred_fallthru
          _
        // Predicated region
        $region37: #{llm_forward.1} parent=11 // pred_check
          %p575 = pneg %p339
        $region38: #{llm_forward.1} parent=11 // pred_check_branch
          %577 = sbr.rel (%p575) target = $region40
        $region39: #{llm_forward.1} parent=11 // pred_region
          %s579 = ssub.s32 8192, 8192
          %580 = vsyncadd [#allocation26], %s579
          %s581 = sshll.u32 [#allocation25], 4
          %s582 = int_to_ptr.vmem [resolvable:$true] %s581
          %587 = dma.hbm_to_vmem [thread:$0]  %s12, 8192, %s582, [#allocation26], 64, 64, 4
        $region40: #{llm_forward.1} parent=11 // pred_fallthru
          _
        // Predicated region
        $region41: #{llm_forward.1} parent=11 // pred_check
          %p588 = pneg %p360
        $region42: #{llm_forward.1} parent=11 // pred_check_branch
          %590 = sbr.rel (%p588) target = $region44
        $region43: #{llm_forward.1} parent=11 // pred_region
          %s592 = ssub.s32 16, 16
          %593 = vsyncadd [#allocation26], %s592
          %s595 = sshll.u32 [#allocation27], 4
          %s596 = int_to_ptr.vmem [resolvable:$true] %s595
          %598 = dma.hbm_to_vmem [thread:$0]  %s13, 16, %s596, [#allocation26]
        $region44: #{llm_forward.1} parent=11 // pred_fallthru
          _
        // Predicated region
        $region45: #{llm_forward.1} parent=11 // pred_check
          %p599 = pneg %p381
        $region46: #{llm_forward.1} parent=11 // pred_check_branch
          %601 = sbr.rel (%p599) target = $region48
        $region47: #{llm_forward.1} parent=11 // pred_region
          _
        $region48: #{llm_forward.1} parent=11 // pred_fallthru
          _
        // Predicated region
        $region49: #{llm_forward.1} parent=11 // pred_check
          %p602 = pneg %p402
        $region50: #{llm_forward.1} parent=11 // pred_check_branch
          %604 = sbr.rel (%p602) target = $region52
        $region51: #{llm_forward.1} parent=11 // pred_region
          %s606 = ssub.s32 16, 16
          %607 = vsyncadd [#allocation29], %s606
          %s609 = sshll.u32 [#allocation28], 4
          %s610 = int_to_ptr.vmem [resolvable:$true] %s609
          %612 = dma.hbm_to_vmem [thread:$0]  %s15, 16, %s610, [#allocation29]
        $region52: #{llm_forward.1} parent=11 // pred_fallthru
          _
        // Predicated region
        $region53: #{llm_forward.1} parent=11 // pred_check
          %p613 = pneg %p423
        $region54: #{llm_forward.1} parent=11 // pred_check_branch
          %615 = sbr.rel (%p613) target = $region56
        $region55: #{llm_forward.1} parent=11 // pred_region
          %s617 = ssub.s32 32, 32
          %618 = vsyncadd [#allocation29], %s617
          %s620 = sshll.u32 [#allocation30], 4
          %s621 = int_to_ptr.vmem [resolvable:$true] %s620
          %623 = dma.hbm_to_vmem [thread:$0]  %s16, 32, %s621, [#allocation29]
        $region56: #{llm_forward.1} parent=11 // pred_fallthru
          _
      $region12: #{llm_forward.1} parent=5 // pred_fallthru
        _
      %p624 = scmp.lt.s32.totalorder %s36, 4
      // Predicated region
      $region57: #{llm_forward.1} parent=5 // pred_check
        %p625 = pneg %p624
      $region58: #{llm_forward.1} parent=5 // pred_check_branch
        %627 = sbr.rel (%p625) target = $region60
      $region59: #{llm_forward.1} parent=5 // pred_region
        // Predicated region
        $region61: #{llm_forward.1} parent=59 // pred_check
          %p628 = pneg %p98
        $region62: #{llm_forward.1} parent=59 // pred_check_branch
          %630 = sbr.rel (%p628) target = $region64
        $region63: #{llm_forward.1} parent=59 // pred_region
          %s631 = sand.u32 %s36, 1
          %s632 = scalar_lea.sflag [#allocation10], %s631
          %s633 = sand.u32 %s88, 1
          %s634 = smul.addr %s633, 128
          %s635 = scalar_lea.vmem [#allocation14], %s634
          %s636 = smul.u32 8, %s36
          %s638 = ssub.s32 2048, 2048
          %639 = vsyncadd %s632, %s638
          %s640 = smul.addr %s636, 64
          %s641 = scalar_lea.hbm %s2, %s640
          %s642 = sshll.u32 %s635, 4
          %s643 = int_to_ptr.vmem [resolvable:$true] %s642
          %648 = dma.hbm_to_vmem [thread:$0]  %s641, 2048, %s643, %s632, 2048, 512, 32
        $region64: #{llm_forward.1} parent=59 // pred_fallthru
          _
        // Predicated region
        $region65: #{llm_forward.1} parent=59 // pred_check
          %p649 = pneg %p124
        $region66: #{llm_forward.1} parent=59 // pred_check_branch
          %651 = sbr.rel (%p649) target = $region68
        $region67: #{llm_forward.1} parent=59 // pred_region
          %s652 = sand.u32 %s36, 1
          %s653 = scalar_lea.sflag [#allocation10], %s652
          %s654 = sand.u32 %s114, 1
          %s655 = smul.addr %s654, 8
          %s656 = scalar_lea.vmem [#allocation15], %s655
          %s657 = smul.u32 8, %s36
          %s659 = ssub.s32 128, 128
          %660 = vsyncadd %s653, %s659
          %s661 = smul.addr %s657, 16
          %s662 = scalar_lea.hbm %s3, %s661
          %s664 = sshll.u32 %s656, 4
          %s665 = int_to_ptr.vmem [resolvable:$true] %s664
          %667 = dma.hbm_to_vmem [thread:$0]  %s662, 128, %s665, %s653
        $region68: #{llm_forward.1} parent=59 // pred_fallthru
          _
        // Predicated region
        $region69: #{llm_forward.1} parent=59 // pred_check
          %p668 = pneg %p150
        $region70: #{llm_forward.1} parent=59 // pred_check_branch
          %670 = sbr.rel (%p668) target = $region72
        $region71: #{llm_forward.1} parent=59 // pred_region
          %s671 = sand.u32 %s36, 1
          %s672 = scalar_lea.sflag [#allocation10], %s671
          %s673 = sand.u32 %s140, 1
          %s674 = smul.addr %s673, 256
          %s675 = scalar_lea.vmem [#allocation16], %s674
          %s676 = smul.u32 8, %s36
          %s678 = ssub.s32 4096, 4096
          %679 = vsyncadd %s672, %s678
          %s680 = smul.addr %s676, 64
          %s681 = scalar_lea.hbm %s4, %s680
          %s682 = sshll.u32 %s675, 4
          %s683 = int_to_ptr.vmem [resolvable:$true] %s682
          %688 = dma.hbm_to_vmem [thread:$0]  %s681, 4096, %s683, %s672, 2048, 512, 32
        $region72: #{llm_forward.1} parent=59 // pred_fallthru
          _
        // Predicated region
        $region73: #{llm_forward.1} parent=59 // pred_check
          %p689 = pneg %p176
        $region74: #{llm_forward.1} parent=59 // pred_check_branch
          %691 = sbr.rel (%p689) target = $region76
        $region75: #{llm_forward.1} parent=59 // pred_region
          %s692 = sand.u32 %s36, 1
          %s693 = scalar_lea.sflag [#allocation10], %s692
          %s694 = sand.u32 %s166, 1
          %s695 = smul.addr %s694, 8
          %s696 = scalar_lea.vmem [#allocation17], %s695
          %s697 = smul.u32 8, %s36
          %s699 = ssub.s32 128, 128
          %700 = vsyncadd %s693, %s699
          %s701 = smul.addr %s697, 16
          %s702 = scalar_lea.hbm %s5, %s701
          %s704 = sshll.u32 %s696, 4
          %s705 = int_to_ptr.vmem [resolvable:$true] %s704
          %707 = dma.hbm_to_vmem [thread:$0]  %s702, 128, %s705, %s693
        $region76: #{llm_forward.1} parent=59 // pred_fallthru
          _
        // Predicated region
        $region77: #{llm_forward.1} parent=59 // pred_check
          %p708 = pneg %p202
        $region78: #{llm_forward.1} parent=59 // pred_check_branch
          %710 = sbr.rel (%p708) target = $region80
        $region79: #{llm_forward.1} parent=59 // pred_region
          %s711 = smul.u32 8, %s36
          %p712 = scmp.lt.s32.totalorder %s711, 31
          %s713 = scalar_select %p712, %s711, 31
          %s714 = smul.addr %s713, 8
          %s715 = scalar_lea.vmem %s6, %s714
          %s716 = smul.u32 8, %s36
        $region80: #{llm_forward.1} parent=59 // pred_fallthru
          _
        // Predicated region
        $region81: #{llm_forward.1} parent=59 // pred_check
          %p717 = pneg %p291
        $region82: #{llm_forward.1} parent=59 // pred_check_branch
          %719 = sbr.rel (%p717) target = $region84
        $region83: #{llm_forward.1} parent=59 // pred_region
          %s720 = sand.u32 %s36, 1
          %s721 = scalar_lea.sflag [#allocation23], %s720
          %s722 = sand.u32 %s281, 1
          %s723 = smul.addr %s722, 4096
          %s724 = scalar_lea.vmem [#allocation22], %s723
          %s725 = smul.u32 128, %s36
          %s727 = ssub.s32 65536, 65536
          %728 = vsyncadd %s721, %s727
          %s729 = smul.addr %s725, 8
          %s730 = smul.addr %s729, 64
          %s731 = scalar_lea.hbm %s10, %s730
          %s732 = sshll.u32 %s724, 4
          %s733 = int_to_ptr.vmem [resolvable:$true] %s732
          %738 = dma.hbm_to_vmem [thread:$0]  %s731, 65536, %s733, %s721, 512, 512, 32
        $region84: #{llm_forward.1} parent=59 // pred_fallthru
          _
      $region60: #{llm_forward.1} parent=5 // pred_fallthru
        _
      %p739 = scmp.le.s32.totalorder 1, %s36
      %p740 = scmp.lt.s32.totalorder %s36, 5
      %p741 = pnand %p739, %p740
      %p742 = pneg %p741
      // Predicated region
      $region85: #{llm_forward.1} parent=5 // pred_check
        _
      $region86: #{llm_forward.1} parent=5 // pred_check_branch
        %744 = sbr.rel (%p741) target = $region88
      $region87: #{llm_forward.1} parent=5 // pred_region
        %s745 = ssub.s32 %s36, 1
        // Predicated region
        $region89: #{llm_forward.1} parent=87 // pred_check
          %p746 = pneg %p57
        $region90: #{llm_forward.1} parent=87 // pred_check_branch
          %748 = sbr.rel (%p746) target = $region92
        $region91: #{llm_forward.1} parent=87 // pred_region
          %749 = dma.done [#allocation10], 256
        $region92: #{llm_forward.1} parent=87 // pred_fallthru
          _
        // Predicated region
        $region93: #{llm_forward.1} parent=87 // pred_check
          %p750 = pneg %p78
        $region94: #{llm_forward.1} parent=87 // pred_check_branch
          %752 = sbr.rel (%p750) target = $region96
        $region95: #{llm_forward.1} parent=87 // pred_region
          %753 = dma.done [#allocation13], 256
        $region96: #{llm_forward.1} parent=87 // pred_fallthru
          _
        %s754 = sand.u32 %s41, 1
        %s755 = scalar_lea.sflag [#allocation10], %s754
        %s756 = sand.u32 %s91, 1
        %s757 = smul.addr %s756, 128
        %s758 = scalar_lea.vmem [#allocation14], %s757
        // Predicated region
        $region97: #{llm_forward.1} parent=87 // pred_check
          %p759 = pneg %p104
        $region98: #{llm_forward.1} parent=87 // pred_check_branch
          %761 = sbr.rel (%p759) target = $region100
        $region99: #{llm_forward.1} parent=87 // pred_region
          %762 = dma.done %s755, 2048
        $region100: #{llm_forward.1} parent=87 // pred_fallthru
          _
        %s763 = sand.u32 %s41, 1
        %s764 = scalar_lea.sflag [#allocation10], %s763
        %s765 = sand.u32 %s117, 1
        %s766 = smul.addr %s765, 8
        %s767 = scalar_lea.vmem [#allocation15], %s766
        // Predicated region
        $region101: #{llm_forward.1} parent=87 // pred_check
          %p768 = pneg %p130
        $region102: #{llm_forward.1} parent=87 // pred_check_branch
          %770 = sbr.rel (%p768) target = $region104
        $region103: #{llm_forward.1} parent=87 // pred_region
          %771 = dma.done %s764, 128
        $region104: #{llm_forward.1} parent=87 // pred_fallthru
          _
        %s772 = sand.u32 %s41, 1
        %s773 = scalar_lea.sflag [#allocation10], %s772
        %s774 = sand.u32 %s143, 1
        %s775 = smul.addr %s774, 256
        %s776 = scalar_lea.vmem [#allocation16], %s775
        // Predicated region
        $region105: #{llm_forward.1} parent=87 // pred_check
          %p777 = pneg %p156
        $region106: #{llm_forward.1} parent=87 // pred_check_branch
          %779 = sbr.rel (%p777) target = $region108
        $region107: #{llm_forward.1} parent=87 // pred_region
          %780 = dma.done %s773, 4096
        $region108: #{llm_forward.1} parent=87 // pred_fallthru
          _
        %s781 = sand.u32 %s41, 1
        %s782 = scalar_lea.sflag [#allocation10], %s781
        %s783 = sand.u32 %s169, 1
        %s784 = smul.addr %s783, 8
        %s785 = scalar_lea.vmem [#allocation17], %s784
        // Predicated region
        $region109: #{llm_forward.1} parent=87 // pred_check
          %p786 = pneg %p182
        $region110: #{llm_forward.1} parent=87 // pred_check_branch
          %788 = sbr.rel (%p786) target = $region112
        $region111: #{llm_forward.1} parent=87 // pred_region
          %789 = dma.done %s782, 128
        $region112: #{llm_forward.1} parent=87 // pred_fallthru
          _
        // Predicated region
        $region113: #{llm_forward.1} parent=87 // pred_check
          %p790 = pneg %p229
        $region114: #{llm_forward.1} parent=87 // pred_check_branch
          %792 = sbr.rel (%p790) target = $region116
        $region115: #{llm_forward.1} parent=87 // pred_region
          %793 = dma.done [#allocation13], 256
        $region116: #{llm_forward.1} parent=87 // pred_fallthru
          _
        // Predicated region
        $region117: #{llm_forward.1} parent=87 // pred_check
          %p794 = pneg %p250
        $region118: #{llm_forward.1} parent=87 // pred_check_branch
          %796 = sbr.rel (%p794) target = $region120
        $region119: #{llm_forward.1} parent=87 // pred_region
          %797 = dma.done [#allocation20], 256
        $region120: #{llm_forward.1} parent=87 // pred_fallthru
          _
        // Predicated region
        $region121: #{llm_forward.1} parent=87 // pred_check
          %p798 = pneg %p271
        $region122: #{llm_forward.1} parent=87 // pred_check_branch
          %800 = sbr.rel (%p798) target = $region124
        $region123: #{llm_forward.1} parent=87 // pred_region
          %801 = dma.done [#allocation20], 32
        $region124: #{llm_forward.1} parent=87 // pred_fallthru
          _
        %s802 = sand.u32 %s41, 1
        %s803 = scalar_lea.sflag [#allocation23], %s802
        %s804 = sand.u32 %s284, 1
        %s805 = smul.addr %s804, 4096
        %s806 = scalar_lea.vmem [#allocation22], %s805
        // Predicated region
        $region125: #{llm_forward.1} parent=87 // pred_check
          %p807 = pneg %p297
        $region126: #{llm_forward.1} parent=87 // pred_check_branch
          %809 = sbr.rel (%p807) target = $region128
        $region127: #{llm_forward.1} parent=87 // pred_region
          %810 = dma.done %s803, 65536
        $region128: #{llm_forward.1} parent=87 // pred_fallthru
          _
        // Predicated region
        $region129: #{llm_forward.1} parent=87 // pred_check
          %p811 = pneg %p318
        $region130: #{llm_forward.1} parent=87 // pred_check_branch
          %813 = sbr.rel (%p811) target = $region132
        $region131: #{llm_forward.1} parent=87 // pred_region
          %814 = dma.done [#allocation23], 128
        $region132: #{llm_forward.1} parent=87 // pred_fallthru
          _
        // Predicated region
        $region133: #{llm_forward.1} parent=87 // pred_check
          %p815 = pneg %p339
        $region134: #{llm_forward.1} parent=87 // pred_check_branch
          %817 = sbr.rel (%p815) target = $region136
        $region135: #{llm_forward.1} parent=87 // pred_region
          %818 = dma.done [#allocation26], 8192
        $region136: #{llm_forward.1} parent=87 // pred_fallthru
          _
        // Predicated region
        $region137: #{llm_forward.1} parent=87 // pred_check
          %p819 = pneg %p360
        $region138: #{llm_forward.1} parent=87 // pred_check_branch
          %821 = sbr.rel (%p819) target = $region140
        $region139: #{llm_forward.1} parent=87 // pred_region
          %822 = dma.done [#allocation26], 16
        $region140: #{llm_forward.1} parent=87 // pred_fallthru
          _
        // Predicated region
        $region141: #{llm_forward.1} parent=87 // pred_check
          %p823 = pneg %p402
        $region142: #{llm_forward.1} parent=87 // pred_check_branch
          %825 = sbr.rel (%p823) target = $region144
        $region143: #{llm_forward.1} parent=87 // pred_region
          %826 = dma.done [#allocation29], 16
        $region144: #{llm_forward.1} parent=87 // pred_fallthru
          _
        // Predicated region
        $region145: #{llm_forward.1} parent=87 // pred_check
          %p827 = pneg %p423
        $region146: #{llm_forward.1} parent=87 // pred_check_branch
          %829 = sbr.rel (%p827) target = $region148
        $region147: #{llm_forward.1} parent=87 // pred_region
          %830 = dma.done [#allocation29], 32
        $region148: #{llm_forward.1} parent=87 // pred_fallthru
          _
        %p831 = pneg %p57
        %p832 = pneg %p54
        %p833 = pneg %p78
        %p834 = pneg %p75
        %s835 = sand.u32 %s41, 1
        %s836 = scalar_lea.sflag [#allocation10], %s835
        %s837 = sand.u32 %s91, 1
        %s838 = smul.addr %s837, 128
        %s839 = scalar_lea.vmem [#allocation14], %s838
        %p840 = pneg %p104
        %p841 = pneg %p101
        %s842 = sand.u32 %s41, 1
        %s843 = scalar_lea.sflag [#allocation10], %s842
        %s844 = sand.u32 %s117, 1
        %s845 = smul.addr %s844, 8
        %s846 = scalar_lea.vmem [#allocation15], %s845
        %p847 = pneg %p130
        %p848 = pneg %p127
        %s849 = sand.u32 %s41, 1
        %s850 = scalar_lea.sflag [#allocation10], %s849
        %s851 = sand.u32 %s143, 1
        %s852 = smul.addr %s851, 256
        %s853 = scalar_lea.vmem [#allocation16], %s852
        %p854 = pneg %p156
        %p855 = pneg %p153
        %s856 = sand.u32 %s41, 1
        %s857 = scalar_lea.sflag [#allocation10], %s856
        %s858 = sand.u32 %s169, 1
        %s859 = smul.addr %s858, 8
        %s860 = scalar_lea.vmem [#allocation17], %s859
        %p861 = pneg %p182
        %p862 = pneg %p179
        %s863 = smul.u32 8, %s41
        %p864 = scmp.lt.s32.totalorder %s863, 31
        %s865 = scalar_select %p864, %s863, 31
        %s866 = smul.addr %s865, 8
        %s867 = scalar_lea.vmem %s6, %s866
        %p868 = pneg %p208
        %p869 = pneg %p205
        %p870 = pneg %p229
        %p871 = pneg %p226
        %p872 = pneg %p250
        %p873 = pneg %p247
        %p874 = pneg %p271
        %p875 = pneg %p268
        %s876 = sand.u32 %s41, 1
        %s877 = scalar_lea.sflag [#allocation23], %s876
        %s878 = sand.u32 %s284, 1
        %s879 = smul.addr %s878, 4096
        %s880 = scalar_lea.vmem [#allocation22], %s879
        %p881 = pneg %p297
        %p882 = pneg %p294
        %p883 = pneg %p318
        %p884 = pneg %p315
        %p885 = pneg %p339
        %p886 = pneg %p336
        %p887 = pneg %p360
        %p888 = pneg %p357
        %p889 = pneg %p381
        %p890 = pneg %p378
        %p891 = pneg %p402
        %p892 = pneg %p399
        %p893 = pneg %p423
        %p894 = pneg %p420
        %p895 = pneg %p444
        %p896 = pneg %p441
        %p897 = pneg %p465
        %p898 = pneg %p462
        %p899 = pneg %p486
        %p900 = pneg %p483
        %s901 = smul.u32 8, %s41
        %s902 = smul.u32 8, %s41
        %s903 = smul.u32 8, %s41
        %s904 = smul.u32 8, %s41
        %s905 = smul.u32 8, %s41
        %p906 = scmp.lt.s32.totalorder %s905, 31
        %s907 = scalar_select %p906, %s905, 31
        %s908 = smul.addr %s907, 8
        %s909 = scalar_lea.vmem %s6, %s908
        %s910 = smul.u32 8, %s41
        %s911 = smul.u32 128, %s41
        %p913 = scmp.eq.s32.totalorder %s41, 0
        // Predicated region
        $region149: #{llm_forward.1} parent=87 // pred_check
          %p914 = pneg %p913
        $region150: #{llm_forward.1} parent=87 // pred_check_branch
          %916 = sbr.rel (%p914) target = $region152
        $region151: #{llm_forward.1} parent=87 // pred_region
          %917 = vst [vmem:[#allocation2] sm:$0xff] 0.0
          %918 = vst [vmem:[#allocation2 + $0x8] sm:$0xff] 0.0
          %vm919 = vcmask 7168
          %920 = vst.msk [vmem:[#allocation3] sm:$0xff] %vm919, 0.0
          %921 = vst.msk [vmem:[#allocation3 + $0x8] sm:$0xff] %vm919, 0.0
          %922 = vst.msk [vmem:[#allocation4] sm:$0xff] %vm919, 0.0
          %923 = vst.msk [vmem:[#allocation4 + $0x8] sm:$0xff] %vm919, 0.0
          %924 = vst.msk [vmem:[#allocation5] sm:$0xff] %vm919, 0.0
          %925 = vst.msk [vmem:[#allocation5 + $0x8] sm:$0xff] %vm919, 0.0
          %926 = vst.msk [vmem:[#allocation6] sm:$0xff] %vm919, 0.0
          %927 = vst.msk [vmem:[#allocation6 + $0x8] sm:$0xff] %vm919, 0.0
          %928 = vst.msk [vmem:[#allocation7] sm:$0xff] %vm919, 0.0
          %929 = vst.msk [vmem:[#allocation7 + $0x8] sm:$0xff] %vm919, 0.0
          %930 = vst.msk [vmem:[#allocation8] sm:$0xff] %vm919, 0.0
          %931 = vst.msk [vmem:[#allocation8 + $0x8] sm:$0xff] %vm919, 0.0
        $region152: #{llm_forward.1} parent=87 // pred_fallthru
          _
        %v932 = vld [vmem:[#allocation9] sm:$0xff]
        %v933 = vld [vmem:[#allocation9 + $0x8] sm:$0xff]
        %v934 = vpack.c.bf16 %v933, %v932
        %v935 = vld [vmem:[%s758] sm:$0xff]
        %v936 = vld [vmem:[%s758 + $0x8] sm:$0xff]
        %v937 = vld [vmem:[%s758 + $0x10] sm:$0xff]
        %v938 = vld [vmem:[%s758 + $0x18] sm:$0xff]
        %v939 = vld [vmem:[%s758 + $0x20] sm:$0xff]
        %v940 = vld [vmem:[%s758 + $0x28] sm:$0xff]
        %v941 = vld [vmem:[%s758 + $0x30] sm:$0xff]
        %v942 = vld [vmem:[%s758 + $0x38] sm:$0xff]
        %v943 = vld [vmem:[%s758 + $0x40] sm:$0xff]
        %v944 = vld [vmem:[%s758 + $0x48] sm:$0xff]
        %v945 = vld [vmem:[%s758 + $0x50] sm:$0xff]
        %v946 = vld [vmem:[%s758 + $0x58] sm:$0xff]
        %v947 = vld [vmem:[%s758 + $0x60] sm:$0xff]
        %v948 = vld [vmem:[%s758 + $0x68] sm:$0xff]
        %v949 = vld [vmem:[%s758 + $0x70] sm:$0xff]
        %v950 = vld [vmem:[%s758 + $0x78] sm:$0xff]
        %v951 = vld [vmem:[%s767] sm:$0xff]
        %v953 = vlaneseq
        %v954 = vshrl.u32 %v953, 7
        %v955 = vsub.s32 0, %v954
        %v956 = vrot.slane %v951, %v955
        %v957 = vlaneseq
        %v958 = vshrl.u32 %v957, 7
        %v959 = vsub.s32 1, %v958
        %v960 = vrot.slane %v951, %v959
        %v961 = vlaneseq
        %v962 = vshrl.u32 %v961, 7
        %v963 = vsub.s32 2, %v962
        %v964 = vrot.slane %v951, %v963
        %v965 = vlaneseq
        %v966 = vshrl.u32 %v965, 7
        %v967 = vsub.s32 3, %v966
        %v968 = vrot.slane %v951, %v967
        %v969 = vlaneseq
        %v970 = vshrl.u32 %v969, 7
        %v971 = vsub.s32 4, %v970
        %v972 = vrot.slane %v951, %v971
        %v973 = vlaneseq
        %v974 = vshrl.u32 %v973, 7
        %v975 = vsub.s32 5, %v974
        %v976 = vrot.slane %v951, %v975
        %v977 = vlaneseq
        %v978 = vshrl.u32 %v977, 7
        %v979 = vsub.s32 6, %v978
        %v980 = vrot.slane %v951, %v979
        %v981 = vlaneseq
        %v982 = vshrl.u32 %v981, 7
        %v983 = vsub.s32 7, %v982
        %v984 = vrot.slane %v951, %v983
        %v1009 = vunpack.c.l.b16 %v935
        %v1010 = vunpack.c.h.b16 %v935
        %v1011 = vunpack.c.l.b16 %v936
        %v1012 = vunpack.c.h.b16 %v936
        %v1013 = vunpack.c.l.b16 %v937
        %v1014 = vunpack.c.h.b16 %v937
        %v1015 = vunpack.c.l.b16 %v938
        %v1016 = vunpack.c.h.b16 %v938
        %v1017 = vunpack.c.l.b16 %v939
        %v1018 = vunpack.c.h.b16 %v939
        %v1019 = vunpack.c.l.b16 %v940
        %v1020 = vunpack.c.h.b16 %v940
        %v1021 = vunpack.c.l.b16 %v941
        %v1022 = vunpack.c.h.b16 %v941
        %v1023 = vunpack.c.l.b16 %v942
        %v1024 = vunpack.c.h.b16 %v942
        %v1025 = vunpack.c.l.b16 %v943
        %v1026 = vunpack.c.h.b16 %v943
        %v1027 = vunpack.c.l.b16 %v944
        %v1028 = vunpack.c.h.b16 %v944
        %v1029 = vunpack.c.l.b16 %v945
        %v1030 = vunpack.c.h.b16 %v945
        %v1031 = vunpack.c.l.b16 %v946
        %v1032 = vunpack.c.h.b16 %v946
        %v1033 = vunpack.c.l.b16 %v947
        %v1034 = vunpack.c.h.b16 %v947
        %v1035 = vunpack.c.l.b16 %v948
        %v1036 = vunpack.c.h.b16 %v948
        %v1037 = vunpack.c.l.b16 %v949
        %v1038 = vunpack.c.h.b16 %v949
        %v1039 = vunpack.c.l.b16 %v950
        %v1040 = vunpack.c.h.b16 %v950
        %v1041 = vpack.c.b16 %v1017, %v1009
        %v1042 = vpack.c.b16 %v1018, %v1010
        %v1043 = vpack.c.b16 %v1019, %v1011
        %v1044 = vpack.c.b16 %v1020, %v1012
        %v1045 = vpack.c.b16 %v1021, %v1013
        %v1046 = vpack.c.b16 %v1022, %v1014
        %v1047 = vpack.c.b16 %v1023, %v1015
        %v1048 = vpack.c.b16 %v1024, %v1016
        %v1049 = vpack.c.b16 %v1033, %v1025
        %v1050 = vpack.c.b16 %v1034, %v1026
        %v1051 = vpack.c.b16 %v1035, %v1027
        %v1052 = vpack.c.b16 %v1036, %v1028
        %v1053 = vpack.c.b16 %v1037, %v1029
        %v1054 = vpack.c.b16 %v1038, %v1030
        %v1055 = vpack.c.b16 %v1039, %v1031
        %v1056 = vpack.c.b16 %v1040, %v1032
        %vm1073 = vcmask 261120
        %v1075 = vsel %vm1073, %v934, 0
        %1077 = vmatprep.subr.bf16.mxu0 0
        %1078 = vmatpush1.bf16.msra.mxu0 0
        %1079 = vmatprep.subr.bf16.mxu0 0
        %1080 = vmatpush1.bf16.msra.mxu0 0
        %1081 = vmatprep.subr.bf16.mxu0 0
        %1082 = vmatpush1.bf16.msra.mxu0 0
        %1083 = vmatprep.subr.bf16.mxu0 0
        %1084 = vmatpush1.bf16.msra.mxu0 0
        %1085 = vmatprep.subr.bf16.mxu0 0
        %1086 = vmatpush1.bf16.msra.mxu0 0
        %1087 = vmatprep.subr.bf16.mxu0 0
        %1088 = vmatpush1.bf16.msra.mxu0 0
        %1089 = vmatprep.subr.bf16.mxu0 %v1050
        %1090 = vmatpush1.bf16.msra.mxu0 %v1049
        %1091 = vmatprep.subr.bf16.mxu0 %v1042
        %1092 = vmatpush1.bf16.msra.mxu0 %v1041
        %1093 = vmatprep.subr.bf16.mxu0 0
        %1094 = vmatpush2.bf16.msra.mxu0 0
        %1095 = vmatprep.subr.bf16.mxu0 0
        %1096 = vmatpush2.bf16.msra.mxu0 0
        %1097 = vmatprep.subr.bf16.mxu0 0
        %1098 = vmatpush2.bf16.msra.mxu0 0
        %1099 = vmatprep.subr.bf16.mxu0 0
        %1100 = vmatpush2.bf16.msra.mxu0 0
        %1101 = vmatprep.subr.bf16.mxu0 0
        %1102 = vmatpush2.bf16.msra.mxu0 0
        %1103 = vmatprep.subr.bf16.mxu0 0
        %1104 = vmatpush2.bf16.msra.mxu0 0
        %1105 = vmatprep.subr.bf16.mxu0 0
        %1106 = vmatpush2.bf16.msra.mxu0 0
        %1107 = vmatprep.subr.bf16.mxu0 0
        %1108 = vmatpush2.bf16.msra.mxu0 0
        %1109 = vmatprep.mubr.bf16.mxu0 0
        %1110 = vmatmul.mubr.bf16.gmra.mxu0 %v1075
        %v1111 = vpop.f32.mrf.mxu0
        %v1112 = vadd.f32 %v956, %v1111
        %v1113 = vpop.f32.mrf.mxu0
        %v1114 = vadd.f32 %v960, %v1113
        %v1115 = vpop.f32.mrf.mxu0
        %v1116 = vadd.f32 %v956, %v1115
        %v1117 = vpop.f32.mrf.mxu0
        %v1118 = vadd.f32 %v960, %v1117
        %1119 = vdwg.mxu0
        %1120 = vmatprep.subr.bf16.mxu0 0
        %1121 = vmatpush1.bf16.msra.mxu0 0
        %1122 = vmatprep.subr.bf16.mxu0 0
        %1123 = vmatpush1.bf16.msra.mxu0 0
        %1124 = vmatprep.subr.bf16.mxu0 0
        %1125 = vmatpush1.bf16.msra.mxu0 0
        %1126 = vmatprep.subr.bf16.mxu0 0
        %1127 = vmatpush1.bf16.msra.mxu0 0
        %1128 = vmatprep.subr.bf16.mxu0 0
        %1129 = vmatpush1.bf16.msra.mxu0 0
        %1130 = vmatprep.subr.bf16.mxu0 0
        %1131 = vmatpush1.bf16.msra.mxu0 0
        %1132 = vmatprep.subr.bf16.mxu0 %v1052
        %1133 = vmatpush1.bf16.msra.mxu0 %v1051
        %1134 = vmatprep.subr.bf16.mxu0 %v1044
        %1135 = vmatpush1.bf16.msra.mxu0 %v1043
        %1136 = vmatprep.subr.bf16.mxu0 0
        %1137 = vmatpush2.bf16.msra.mxu0 0
        %1138 = vmatprep.subr.bf16.mxu0 0
        %1139 = vmatpush2.bf16.msra.mxu0 0
        %1140 = vmatprep.subr.bf16.mxu0 0
        %1141 = vmatpush2.bf16.msra.mxu0 0
        %1142 = vmatprep.subr.bf16.mxu0 0
        %1143 = vmatpush2.bf16.msra.mxu0 0
        %1144 = vmatprep.subr.bf16.mxu0 0
        %1145 = vmatpush2.bf16.msra.mxu0 0
        %1146 = vmatprep.subr.bf16.mxu0 0
        %1147 = vmatpush2.bf16.msra.mxu0 0
        %1148 = vmatprep.subr.bf16.mxu0 0
        %1149 = vmatpush2.bf16.msra.mxu0 0
        %1150 = vmatprep.subr.bf16.mxu0 0
        %1151 = vmatpush2.bf16.msra.mxu0 0
        %1152 = vmatprep.mubr.bf16.mxu0 0
        %1153 = vmatmul.mubr.bf16.gmra.mxu0 %v1075
        %v1154 = vpop.f32.mrf.mxu0
        %v1155 = vadd.f32 %v964, %v1154
        %v1156 = vpop.f32.mrf.mxu0
        %v1157 = vadd.f32 %v968, %v1156
        %v1158 = vpop.f32.mrf.mxu0
        %v1159 = vadd.f32 %v964, %v1158
        %v1160 = vpop.f32.mrf.mxu0
        %v1161 = vadd.f32 %v968, %v1160
        %1162 = vdwg.mxu0
        %1163 = vmatprep.subr.bf16.mxu0 0
        %1164 = vmatpush1.bf16.msra.mxu0 0
        %1165 = vmatprep.subr.bf16.mxu0 0
        %1166 = vmatpush1.bf16.msra.mxu0 0
        %1167 = vmatprep.subr.bf16.mxu0 0
        %1168 = vmatpush1.bf16.msra.mxu0 0
        %1169 = vmatprep.subr.bf16.mxu0 0
        %1170 = vmatpush1.bf16.msra.mxu0 0
        %1171 = vmatprep.subr.bf16.mxu0 0
        %1172 = vmatpush1.bf16.msra.mxu0 0
        %1173 = vmatprep.subr.bf16.mxu0 0
        %1174 = vmatpush1.bf16.msra.mxu0 0
        %1175 = vmatprep.subr.bf16.mxu0 %v1054
        %1176 = vmatpush1.bf16.msra.mxu0 %v1053
        %1177 = vmatprep.subr.bf16.mxu0 %v1046
        %1178 = vmatpush1.bf16.msra.mxu0 %v1045
        %1179 = vmatprep.subr.bf16.mxu0 0
        %1180 = vmatpush2.bf16.msra.mxu0 0
        %1181 = vmatprep.subr.bf16.mxu0 0
        %1182 = vmatpush2.bf16.msra.mxu0 0
        %1183 = vmatprep.subr.bf16.mxu0 0
        %1184 = vmatpush2.bf16.msra.mxu0 0
        %1185 = vmatprep.subr.bf16.mxu0 0
        %1186 = vmatpush2.bf16.msra.mxu0 0
        %1187 = vmatprep.subr.bf16.mxu0 0
        %1188 = vmatpush2.bf16.msra.mxu0 0
        %1189 = vmatprep.subr.bf16.mxu0 0
        %1190 = vmatpush2.bf16.msra.mxu0 0
        %1191 = vmatprep.subr.bf16.mxu0 0
        %1192 = vmatpush2.bf16.msra.mxu0 0
        %1193 = vmatprep.subr.bf16.mxu0 0
        %1194 = vmatpush2.bf16.msra.mxu0 0
        %1195 = vmatprep.mubr.bf16.mxu0 0
        %1196 = vmatmul.mubr.bf16.gmra.mxu0 %v1075
        %v1197 = vpop.f32.mrf.mxu0
        %v1198 = vadd.f32 %v972, %v1197
        %v1199 = vpop.f32.mrf.mxu0
        %v1200 = vadd.f32 %v976, %v1199
        %v1201 = vpop.f32.mrf.mxu0
        %v1202 = vadd.f32 %v972, %v1201
        %v1203 = vpop.f32.mrf.mxu0
        %v1204 = vadd.f32 %v976, %v1203
        %1205 = vdwg.mxu0
        %1206 = vmatprep.subr.bf16.mxu0 0
        %1207 = vmatpush1.bf16.msra.mxu0 0
        %1208 = vmatprep.subr.bf16.mxu0 0
        %1209 = vmatpush1.bf16.msra.mxu0 0
        %1210 = vmatprep.subr.bf16.mxu0 0
        %1211 = vmatpush1.bf16.msra.mxu0 0
        %1212 = vmatprep.subr.bf16.mxu0 0
        %1213 = vmatpush1.bf16.msra.mxu0 0
        %1214 = vmatprep.subr.bf16.mxu0 0
        %1215 = vmatpush1.bf16.msra.mxu0 0
        %1216 = vmatprep.subr.bf16.mxu0 0
        %1217 = vmatpush1.bf16.msra.mxu0 0
        %1218 = vmatprep.subr.bf16.mxu0 %v1056
        %1219 = vmatpush1.bf16.msra.mxu0 %v1055
        %1220 = vmatprep.subr.bf16.mxu0 %v1048
        %1221 = vmatpush1.bf16.msra.mxu0 %v1047
        %1222 = vmatprep.subr.bf16.mxu0 0
        %1223 = vmatpush2.bf16.msra.mxu0 0
        %1224 = vmatprep.subr.bf16.mxu0 0
        %1225 = vmatpush2.bf16.msra.mxu0 0
        %1226 = vmatprep.subr.bf16.mxu0 0
        %1227 = vmatpush2.bf16.msra.mxu0 0
        %1228 = vmatprep.subr.bf16.mxu0 0
        %1229 = vmatpush2.bf16.msra.mxu0 0
        %1230 = vmatprep.subr.bf16.mxu0 0
        %1231 = vmatpush2.bf16.msra.mxu0 0
        %1232 = vmatprep.subr.bf16.mxu0 0
        %1233 = vmatpush2.bf16.msra.mxu0 0
        %1234 = vmatprep.subr.bf16.mxu0 0
        %1235 = vmatpush2.bf16.msra.mxu0 0
        %1236 = vmatprep.subr.bf16.mxu0 0
        %1237 = vmatpush2.bf16.msra.mxu0 0
        %1238 = vmatprep.mubr.bf16.mxu0 0
        %1239 = vmatmul.mubr.bf16.gmra.mxu0 %v1075
        %v1240 = vpop.f32.mrf.mxu0
        %v1241 = vadd.f32 %v980, %v1240
        %v1242 = vpop.f32.mrf.mxu0
        %v1243 = vadd.f32 %v984, %v1242
        %v1244 = vpop.f32.mrf.mxu0
        %v1245 = vadd.f32 %v980, %v1244
        %v1246 = vpop.f32.mrf.mxu0
        %v1247 = vadd.f32 %v984, %v1246
        %1248 = vdwg.mxu0
        %v1249 = vld [vmem:[#allocation12] sm:$0xff]
        %v1250 = vld [vmem:[#allocation12 + $0x8] sm:$0xff]
        %v1251 = vpack.c.bf16 %v1250, %v1249
        %v1252 = vld [vmem:[%s776] sm:$0xff]
        %v1253 = vld [vmem:[%s776 + $0x8] sm:$0xff]
        %v1254 = vld [vmem:[%s776 + $0x10] sm:$0xff]
        %v1255 = vld [vmem:[%s776 + $0x18] sm:$0xff]
        %v1256 = vld [vmem:[%s776 + $0x20] sm:$0xff]
        %v1257 = vld [vmem:[%s776 + $0x28] sm:$0xff]
        %v1258 = vld [vmem:[%s776 + $0x30] sm:$0xff]
        %v1259 = vld [vmem:[%s776 + $0x38] sm:$0xff]
        %v1260 = vld [vmem:[%s776 + $0x40] sm:$0xff]
        %v1261 = vld [vmem:[%s776 + $0x48] sm:$0xff]
        %v1262 = vld [vmem:[%s776 + $0x50] sm:$0xff]
        %v1263 = vld [vmem:[%s776 + $0x58] sm:$0xff]
        %v1264 = vld [vmem:[%s776 + $0x60] sm:$0xff]
        %v1265 = vld [vmem:[%s776 + $0x68] sm:$0xff]
        %v1266 = vld [vmem:[%s776 + $0x70] sm:$0xff]
        %v1267 = vld [vmem:[%s776 + $0x78] sm:$0xff]
        %v1268 = vld [vmem:[%s776 + $0x80] sm:$0xff]
        %v1269 = vld [vmem:[%s776 + $0x88] sm:$0xff]
        %v1270 = vld [vmem:[%s776 + $0x90] sm:$0xff]
        %v1271 = vld [vmem:[%s776 + $0x98] sm:$0xff]
        %v1272 = vld [vmem:[%s776 + $0xa0] sm:$0xff]
        %v1273 = vld [vmem:[%s776 + $0xa8] sm:$0xff]
        %v1274 = vld [vmem:[%s776 + $0xb0] sm:$0xff]
        %v1275 = vld [vmem:[%s776 + $0xb8] sm:$0xff]
        %v1276 = vld [vmem:[%s776 + $0xc0] sm:$0xff]
        %v1277 = vld [vmem:[%s776 + $0xc8] sm:$0xff]
        %v1278 = vld [vmem:[%s776 + $0xd0] sm:$0xff]
        %v1279 = vld [vmem:[%s776 + $0xd8] sm:$0xff]
        %v1280 = vld [vmem:[%s776 + $0xe0] sm:$0xff]
        %v1281 = vld [vmem:[%s776 + $0xe8] sm:$0xff]
        %v1282 = vld [vmem:[%s776 + $0xf0] sm:$0xff]
        %v1283 = vld [vmem:[%s776 + $0xf8] sm:$0xff]
        %v1284 = vld [vmem:[%s785] sm:$0xff]
        %v1286 = vlaneseq
        %v1287 = vshrl.u32 %v1286, 7
        %v1288 = vsub.s32 0, %v1287
        %v1289 = vrot.slane %v1284, %v1288
        %v1290 = vlaneseq
        %v1291 = vshrl.u32 %v1290, 7
        %v1292 = vsub.s32 1, %v1291
        %v1293 = vrot.slane %v1284, %v1292
        %v1294 = vlaneseq
        %v1295 = vshrl.u32 %v1294, 7
        %v1296 = vsub.s32 2, %v1295
        %v1297 = vrot.slane %v1284, %v1296
        %v1298 = vlaneseq
        %v1299 = vshrl.u32 %v1298, 7
        %v1300 = vsub.s32 3, %v1299
        %v1301 = vrot.slane %v1284, %v1300
        %v1302 = vlaneseq
        %v1303 = vshrl.u32 %v1302, 7
        %v1304 = vsub.s32 4, %v1303
        %v1305 = vrot.slane %v1284, %v1304
        %v1306 = vlaneseq
        %v1307 = vshrl.u32 %v1306, 7
        %v1308 = vsub.s32 5, %v1307
        %v1309 = vrot.slane %v1284, %v1308
        %v1310 = vlaneseq
        %v1311 = vshrl.u32 %v1310, 7
        %v1312 = vsub.s32 6, %v1311
        %v1313 = vrot.slane %v1284, %v1312
        %v1314 = vlaneseq
        %v1315 = vshrl.u32 %v1314, 7
        %v1316 = vsub.s32 7, %v1315
        %v1317 = vrot.slane %v1284, %v1316
        %v1358 = vunpack.c.l.b16 %v1252
        %v1359 = vunpack.c.h.b16 %v1252
        %v1360 = vunpack.c.l.b16 %v1253
        %v1361 = vunpack.c.h.b16 %v1253
        %v1362 = vunpack.c.l.b16 %v1254
        %v1363 = vunpack.c.h.b16 %v1254
        %v1364 = vunpack.c.l.b16 %v1255
        %v1365 = vunpack.c.h.b16 %v1255
        %v1366 = vunpack.c.l.b16 %v1256
        %v1367 = vunpack.c.h.b16 %v1256
        %v1368 = vunpack.c.l.b16 %v1257
        %v1369 = vunpack.c.h.b16 %v1257
        %v1370 = vunpack.c.l.b16 %v1258
        %v1371 = vunpack.c.h.b16 %v1258
        %v1372 = vunpack.c.l.b16 %v1259
        %v1373 = vunpack.c.h.b16 %v1259
        %v1374 = vunpack.c.l.b16 %v1260
        %v1375 = vunpack.c.h.b16 %v1260
        %v1376 = vunpack.c.l.b16 %v1261
        %v1377 = vunpack.c.h.b16 %v1261
        %v1378 = vunpack.c.l.b16 %v1262
        %v1379 = vunpack.c.h.b16 %v1262
        %v1380 = vunpack.c.l.b16 %v1263
        %v1381 = vunpack.c.h.b16 %v1263
        %v1382 = vunpack.c.l.b16 %v1264
        %v1383 = vunpack.c.h.b16 %v1264
        %v1384 = vunpack.c.l.b16 %v1265
        %v1385 = vunpack.c.h.b16 %v1265
        %v1386 = vunpack.c.l.b16 %v1266
        %v1387 = vunpack.c.h.b16 %v1266
        %v1388 = vunpack.c.l.b16 %v1267
        %v1389 = vunpack.c.h.b16 %v1267
        %v1390 = vunpack.c.l.b16 %v1268
        %v1391 = vunpack.c.h.b16 %v1268
        %v1392 = vunpack.c.l.b16 %v1269
        %v1393 = vunpack.c.h.b16 %v1269
        %v1394 = vunpack.c.l.b16 %v1270
        %v1395 = vunpack.c.h.b16 %v1270
        %v1396 = vunpack.c.l.b16 %v1271
        %v1397 = vunpack.c.h.b16 %v1271
        %v1398 = vunpack.c.l.b16 %v1272
        %v1399 = vunpack.c.h.b16 %v1272
        %v1400 = vunpack.c.l.b16 %v1273
        %v1401 = vunpack.c.h.b16 %v1273
        %v1402 = vunpack.c.l.b16 %v1274
        %v1403 = vunpack.c.h.b16 %v1274
        %v1404 = vunpack.c.l.b16 %v1275
        %v1405 = vunpack.c.h.b16 %v1275
        %v1406 = vunpack.c.l.b16 %v1276
        %v1407 = vunpack.c.h.b16 %v1276
        %v1408 = vunpack.c.l.b16 %v1277
        %v1409 = vunpack.c.h.b16 %v1277
        %v1410 = vunpack.c.l.b16 %v1278
        %v1411 = vunpack.c.h.b16 %v1278
        %v1412 = vunpack.c.l.b16 %v1279
        %v1413 = vunpack.c.h.b16 %v1279
        %v1414 = vunpack.c.l.b16 %v1280
        %v1415 = vunpack.c.h.b16 %v1280
        %v1416 = vunpack.c.l.b16 %v1281
        %v1417 = vunpack.c.h.b16 %v1281
        %v1418 = vunpack.c.l.b16 %v1282
        %v1419 = vunpack.c.h.b16 %v1282
        %v1420 = vunpack.c.l.b16 %v1283
        %v1421 = vunpack.c.h.b16 %v1283
        %v1422 = vpack.c.b16 %v1366, %v1358
        %v1423 = vpack.c.b16 %v1367, %v1359
        %v1424 = vpack.c.b16 %v1368, %v1360
        %v1425 = vpack.c.b16 %v1369, %v1361
        %v1426 = vpack.c.b16 %v1370, %v1362
        %v1427 = vpack.c.b16 %v1371, %v1363
        %v1428 = vpack.c.b16 %v1372, %v1364
        %v1429 = vpack.c.b16 %v1373, %v1365
        %v1430 = vpack.c.b16 %v1382, %v1374
        %v1431 = vpack.c.b16 %v1383, %v1375
        %v1432 = vpack.c.b16 %v1384, %v1376
        %v1433 = vpack.c.b16 %v1385, %v1377
        %v1434 = vpack.c.b16 %v1386, %v1378
        %v1435 = vpack.c.b16 %v1387, %v1379
        %v1436 = vpack.c.b16 %v1388, %v1380
        %v1437 = vpack.c.b16 %v1389, %v1381
        %v1438 = vpack.c.b16 %v1398, %v1390
        %v1439 = vpack.c.b16 %v1399, %v1391
        %v1440 = vpack.c.b16 %v1400, %v1392
        %v1441 = vpack.c.b16 %v1401, %v1393
        %v1442 = vpack.c.b16 %v1402, %v1394
        %v1443 = vpack.c.b16 %v1403, %v1395
        %v1444 = vpack.c.b16 %v1404, %v1396
        %v1445 = vpack.c.b16 %v1405, %v1397
        %v1446 = vpack.c.b16 %v1414, %v1406
        %v1447 = vpack.c.b16 %v1415, %v1407
        %v1448 = vpack.c.b16 %v1416, %v1408
        %v1449 = vpack.c.b16 %v1417, %v1409
        %v1450 = vpack.c.b16 %v1418, %v1410
        %v1451 = vpack.c.b16 %v1419, %v1411
        %v1452 = vpack.c.b16 %v1420, %v1412
        %v1453 = vpack.c.b16 %v1421, %v1413
        %vm1486 = vcmask 523264
        %v1488 = vsel %vm1486, %v1251, 0
        %1490 = vmatprep.subr.bf16.mxu0 0
        %1491 = vmatpush1.bf16.msra.mxu0 0
        %1492 = vmatprep.subr.bf16.mxu0 0
        %1493 = vmatpush1.bf16.msra.mxu0 0
        %1494 = vmatprep.subr.bf16.mxu0 0
        %1495 = vmatpush1.bf16.msra.mxu0 0
        %1496 = vmatprep.subr.bf16.mxu0 0
        %1497 = vmatpush1.bf16.msra.mxu0 0
        %1498 = vmatprep.subr.bf16.mxu0 %v1447
        %1499 = vmatpush1.bf16.msra.mxu0 %v1446
        %1500 = vmatprep.subr.bf16.mxu0 %v1439
        %1501 = vmatpush1.bf16.msra.mxu0 %v1438
        %1502 = vmatprep.subr.bf16.mxu0 %v1431
        %1503 = vmatpush1.bf16.msra.mxu0 %v1430
        %1504 = vmatprep.subr.bf16.mxu0 %v1423
        %1505 = vmatpush1.bf16.msra.mxu0 %v1422
        %1506 = vmatprep.subr.bf16.mxu0 0
        %1507 = vmatpush2.bf16.msra.mxu0 0
        %1508 = vmatprep.subr.bf16.mxu0 0
        %1509 = vmatpush2.bf16.msra.mxu0 0
        %1510 = vmatprep.subr.bf16.mxu0 0
        %1511 = vmatpush2.bf16.msra.mxu0 0
        %1512 = vmatprep.subr.bf16.mxu0 0
        %1513 = vmatpush2.bf16.msra.mxu0 0
        %1514 = vmatprep.subr.bf16.mxu0 0
        %1515 = vmatpush2.bf16.msra.mxu0 0
        %1516 = vmatprep.subr.bf16.mxu0 0
        %1517 = vmatpush2.bf16.msra.mxu0 0
        %1518 = vmatprep.subr.bf16.mxu0 0
        %1519 = vmatpush2.bf16.msra.mxu0 0
        %1520 = vmatprep.subr.bf16.mxu0 0
        %1521 = vmatpush2.bf16.msra.mxu0 0
        %1522 = vmatprep.mubr.bf16.mxu0 0
        %1523 = vmatmul.mubr.bf16.gmra.mxu0 %v1488
        %v1524 = vpop.f32.mrf.mxu0
        %v1525 = vadd.f32 %v1289, %v1524
        %v1526 = vpop.f32.mrf.mxu0
        %v1527 = vadd.f32 %v1293, %v1526
        %v1528 = vpop.f32.mrf.mxu0
        %v1529 = vadd.f32 %v1289, %v1528
        %v1530 = vpop.f32.mrf.mxu0
        %v1531 = vadd.f32 %v1293, %v1530
        %1532 = vdwg.mxu0
        %1533 = vmatprep.subr.bf16.mxu0 0
        %1534 = vmatpush1.bf16.msra.mxu0 0
        %1535 = vmatprep.subr.bf16.mxu0 0
        %1536 = vmatpush1.bf16.msra.mxu0 0
        %1537 = vmatprep.subr.bf16.mxu0 0
        %1538 = vmatpush1.bf16.msra.mxu0 0
        %1539 = vmatprep.subr.bf16.mxu0 0
        %1540 = vmatpush1.bf16.msra.mxu0 0
        %1541 = vmatprep.subr.bf16.mxu0 %v1449
        %1542 = vmatpush1.bf16.msra.mxu0 %v1448
        %1543 = vmatprep.subr.bf16.mxu0 %v1441
        %1544 = vmatpush1.bf16.msra.mxu0 %v1440
        %1545 = vmatprep.subr.bf16.mxu0 %v1433
        %1546 = vmatpush1.bf16.msra.mxu0 %v1432
        %1547 = vmatprep.subr.bf16.mxu0 %v1425
        %1548 = vmatpush1.bf16.msra.mxu0 %v1424
        %1549 = vmatprep.subr.bf16.mxu0 0
        %1550 = vmatpush2.bf16.msra.mxu0 0
        %1551 = vmatprep.subr.bf16.mxu0 0
        %1552 = vmatpush2.bf16.msra.mxu0 0
        %1553 = vmatprep.subr.bf16.mxu0 0
        %1554 = vmatpush2.bf16.msra.mxu0 0
        %1555 = vmatprep.subr.bf16.mxu0 0
        %1556 = vmatpush2.bf16.msra.mxu0 0
        %1557 = vmatprep.subr.bf16.mxu0 0
        %1558 = vmatpush2.bf16.msra.mxu0 0
        %1559 = vmatprep.subr.bf16.mxu0 0
        %1560 = vmatpush2.bf16.msra.mxu0 0
        %1561 = vmatprep.subr.bf16.mxu0 0
        %1562 = vmatpush2.bf16.msra.mxu0 0
        %1563 = vmatprep.subr.bf16.mxu0 0
        %1564 = vmatpush2.bf16.msra.mxu0 0
        %1565 = vmatprep.mubr.bf16.mxu0 0
        %1566 = vmatmul.mubr.bf16.gmra.mxu0 %v1488
        %v1567 = vpop.f32.mrf.mxu0
        %v1568 = vadd.f32 %v1297, %v1567
        %v1569 = vpop.f32.mrf.mxu0
        %v1570 = vadd.f32 %v1301, %v1569
        %v1571 = vpop.f32.mrf.mxu0
        %v1572 = vadd.f32 %v1297, %v1571
        %v1573 = vpop.f32.mrf.mxu0
        %v1574 = vadd.f32 %v1301, %v1573
        %1575 = vdwg.mxu0
        %1576 = vmatprep.subr.bf16.mxu0 0
        %1577 = vmatpush1.bf16.msra.mxu0 0
        %1578 = vmatprep.subr.bf16.mxu0 0
        %1579 = vmatpush1.bf16.msra.mxu0 0
        %1580 = vmatprep.subr.bf16.mxu0 0
        %1581 = vmatpush1.bf16.msra.mxu0 0
        %1582 = vmatprep.subr.bf16.mxu0 0
        %1583 = vmatpush1.bf16.msra.mxu0 0
        %1584 = vmatprep.subr.bf16.mxu0 %v1451
        %1585 = vmatpush1.bf16.msra.mxu0 %v1450
        %1586 = vmatprep.subr.bf16.mxu0 %v1443
        %1587 = vmatpush1.bf16.msra.mxu0 %v1442
        %1588 = vmatprep.subr.bf16.mxu0 %v1435
        %1589 = vmatpush1.bf16.msra.mxu0 %v1434
        %1590 = vmatprep.subr.bf16.mxu0 %v1427
        %1591 = vmatpush1.bf16.msra.mxu0 %v1426
        %1592 = vmatprep.subr.bf16.mxu0 0
        %1593 = vmatpush2.bf16.msra.mxu0 0
        %1594 = vmatprep.subr.bf16.mxu0 0
        %1595 = vmatpush2.bf16.msra.mxu0 0
        %1596 = vmatprep.subr.bf16.mxu0 0
        %1597 = vmatpush2.bf16.msra.mxu0 0
        %1598 = vmatprep.subr.bf16.mxu0 0
        %1599 = vmatpush2.bf16.msra.mxu0 0
        %1600 = vmatprep.subr.bf16.mxu0 0
        %1601 = vmatpush2.bf16.msra.mxu0 0
        %1602 = vmatprep.subr.bf16.mxu0 0
        %1603 = vmatpush2.bf16.msra.mxu0 0
        %1604 = vmatprep.subr.bf16.mxu0 0
        %1605 = vmatpush2.bf16.msra.mxu0 0
        %1606 = vmatprep.subr.bf16.mxu0 0
        %1607 = vmatpush2.bf16.msra.mxu0 0
        %1608 = vmatprep.mubr.bf16.mxu0 0
        %1609 = vmatmul.mubr.bf16.gmra.mxu0 %v1488
        %v1610 = vpop.f32.mrf.mxu0
        %v1611 = vadd.f32 %v1305, %v1610
        %v1612 = vpop.f32.mrf.mxu0
        %v1613 = vadd.f32 %v1309, %v1612
        %v1614 = vpop.f32.mrf.mxu0
        %v1615 = vadd.f32 %v1305, %v1614
        %v1616 = vpop.f32.mrf.mxu0
        %v1617 = vadd.f32 %v1309, %v1616
        %1618 = vdwg.mxu0
        %1619 = vmatprep.subr.bf16.mxu0 0
        %1620 = vmatpush1.bf16.msra.mxu0 0
        %1621 = vmatprep.subr.bf16.mxu0 0
        %1622 = vmatpush1.bf16.msra.mxu0 0
        %1623 = vmatprep.subr.bf16.mxu0 0
        %1624 = vmatpush1.bf16.msra.mxu0 0
        %1625 = vmatprep.subr.bf16.mxu0 0
        %1626 = vmatpush1.bf16.msra.mxu0 0
        %1627 = vmatprep.subr.bf16.mxu0 %v1453
        %1628 = vmatpush1.bf16.msra.mxu0 %v1452
        %1629 = vmatprep.subr.bf16.mxu0 %v1445
        %1630 = vmatpush1.bf16.msra.mxu0 %v1444
        %1631 = vmatprep.subr.bf16.mxu0 %v1437
        %1632 = vmatpush1.bf16.msra.mxu0 %v1436
        %1633 = vmatprep.subr.bf16.mxu0 %v1429
        %1634 = vmatpush1.bf16.msra.mxu0 %v1428
        %1635 = vmatprep.subr.bf16.mxu0 0
        %1636 = vmatpush2.bf16.msra.mxu0 0
        %1637 = vmatprep.subr.bf16.mxu0 0
        %1638 = vmatpush2.bf16.msra.mxu0 0
        %1639 = vmatprep.subr.bf16.mxu0 0
        %1640 = vmatpush2.bf16.msra.mxu0 0
        %1641 = vmatprep.subr.bf16.mxu0 0
        %1642 = vmatpush2.bf16.msra.mxu0 0
        %1643 = vmatprep.subr.bf16.mxu0 0
        %1644 = vmatpush2.bf16.msra.mxu0 0
        %1645 = vmatprep.subr.bf16.mxu0 0
        %1646 = vmatpush2.bf16.msra.mxu0 0
        %1647 = vmatprep.subr.bf16.mxu0 0
        %1648 = vmatpush2.bf16.msra.mxu0 0
        %1649 = vmatprep.subr.bf16.mxu0 0
        %1650 = vmatpush2.bf16.msra.mxu0 0
        %1651 = vmatprep.mubr.bf16.mxu0 0
        %1652 = vmatmul.mubr.bf16.gmra.mxu0 %v1488
        %v1653 = vpop.f32.mrf.mxu0
        %v1654 = vadd.f32 %v1313, %v1653
        %v1655 = vpop.f32.mrf.mxu0
        %v1656 = vadd.f32 %v1317, %v1655
        %v1657 = vpop.f32.mrf.mxu0
        %v1658 = vadd.f32 %v1313, %v1657
        %v1659 = vpop.f32.mrf.mxu0
        %v1660 = vadd.f32 %v1317, %v1659
        %1661 = vdwg.mxu0
        %v1662 = vld [vmem:[%s909] sm:$0xff]
        %v1663 = vld [vmem:[%s909 + $0x8] sm:$0xff]
        %v1664 = vld [vmem:[%s909 + $0x10] sm:$0xff]
        %v1665 = vld [vmem:[%s909 + $0x18] sm:$0xff]
        %v1666 = vld [vmem:[%s909 + $0x20] sm:$0xff]
        %v1667 = vld [vmem:[%s909 + $0x28] sm:$0xff]
        %v1668 = vld [vmem:[%s909 + $0x30] sm:$0xff]
        %v1669 = vld [vmem:[%s909 + $0x38] sm:$0xff]
        %v1670 = vld [vmem:[#allocation18] sm:$0xff]
        %v1671 = vld [vmem:[#allocation18 + $0x8] sm:$0xff]
        %vm1672 = vcmask 64512
        %v1674 = vsel %vm1672, %v1670, 0
        %v1677 = vsel %vm1672, %v1671, 0
        %1679 = vmatprep.subr.mxu0 0.0
        %1680 = vmatpush1.msra.mxu0 0.0
        %1681 = vmatprep.subr.mxu0 0.0
        %1682 = vmatpush1.msra.mxu0 0.0
        %1683 = vmatprep.subr.mxu0 0.0
        %1684 = vmatpush1.msra.mxu0 0.0
        %1685 = vmatprep.subr.mxu0 0.0
        %1686 = vmatpush1.msra.mxu0 0.0
        %1687 = vmatprep.subr.mxu0 0.0
        %1688 = vmatpush1.msra.mxu0 0.0
        %1689 = vmatprep.subr.mxu0 0.0
        %1690 = vmatpush1.msra.mxu0 0.0
        %1691 = vmatprep.subr.mxu0 0.0
        %1692 = vmatpush1.msra.mxu0 0.0
        %1693 = vmatprep.subr.mxu0 0.0
        %1694 = vmatpush1.msra.mxu0 0.0
        %1695 = vmatprep.subr.mxu0 0.0
        %1696 = vmatpush1.msra.mxu0 0.0
        %1697 = vmatprep.subr.mxu0 0.0
        %1698 = vmatpush1.msra.mxu0 0.0
        %1699 = vmatprep.subr.mxu0 0.0
        %1700 = vmatpush1.msra.mxu0 0.0
        %1701 = vmatprep.subr.mxu0 0.0
        %1702 = vmatpush1.msra.mxu0 0.0
        %1703 = vmatprep.subr.mxu0 0.0
        %1704 = vmatpush1.msra.mxu0 0.0
        %1705 = vmatprep.subr.mxu0 0.0
        %1706 = vmatpush1.msra.mxu0 0.0
        %1707 = vmatprep.subr.mxu0 0.0
        %1708 = vmatpush1.msra.mxu0 0.0
        %1709 = vmatprep.subr.mxu0 %v1663
        %1710 = vmatpush1.msra.mxu0 %v1662
        %1711 = vmatprep.subr.mxu0 0.0
        %1712 = vmatpush2.msra.mxu0 0.0
        %1713 = vmatprep.subr.mxu0 0.0
        %1714 = vmatpush2.msra.mxu0 0.0
        %1715 = vmatprep.subr.mxu0 0.0
        %1716 = vmatpush2.msra.mxu0 0.0
        %1717 = vmatprep.subr.mxu0 0.0
        %1718 = vmatpush2.msra.mxu0 0.0
        %1719 = vmatprep.subr.mxu0 0.0
        %1720 = vmatpush2.msra.mxu0 0.0
        %1721 = vmatprep.subr.mxu0 0.0
        %1722 = vmatpush2.msra.mxu0 0.0
        %1723 = vmatprep.subr.mxu0 0.0
        %1724 = vmatpush2.msra.mxu0 0.0
        %1725 = vmatprep.subr.mxu0 0.0
        %1726 = vmatpush2.msra.mxu0 0.0
        %1727 = vmatprep.subr.mxu0 0.0
        %1728 = vmatpush2.msra.mxu0 0.0
        %1729 = vmatprep.subr.mxu0 0.0
        %1730 = vmatpush2.msra.mxu0 0.0
        %1731 = vmatprep.subr.mxu0 0.0
        %1732 = vmatpush2.msra.mxu0 0.0
        %1733 = vmatprep.subr.mxu0 0.0
        %1734 = vmatpush2.msra.mxu0 0.0
        %1735 = vmatprep.subr.mxu0 0.0
        %1736 = vmatpush2.msra.mxu0 0.0
        %1737 = vmatprep.subr.mxu0 0.0
        %1738 = vmatpush2.msra.mxu0 0.0
        %1739 = vmatprep.subr.mxu0 0.0
        %1740 = vmatpush2.msra.mxu0 0.0
        %1741 = vmatprep.subr.mxu0 0.0
        %1742 = vmatpush2.msra.mxu0 0.0
        %1743 = vmatprep.mubr.f32.mxu0 0.0
        %1744 = vmatmul.mubr.f32.gmra.mxu0 %v1674
        %v1745 = vpop.f32.mrf.mxu0
        %v1746 = vadd.f32 0.0, %v1745
        %v1747 = vpop.f32.mrf.mxu0
        %v1748 = vadd.f32 0.0, %v1747
        %1749 = vmatprep.mubr.f32.mxu0 0.0
        %1750 = vmatmul.mubr.f32.gmra.mxu0 %v1677
        %v1751 = vpop.f32.mrf.mxu0
        %v1752 = vadd.f32 0.0, %v1751
        %v1753 = vpop.f32.mrf.mxu0
        %v1754 = vadd.f32 0.0, %v1753
        %1755 = vdwg.mxu0
        %1756 = vmatprep.subr.mxu0 0.0
        %1757 = vmatpush1.msra.mxu0 0.0
        %1758 = vmatprep.subr.mxu0 0.0
        %1759 = vmatpush1.msra.mxu0 0.0
        %1760 = vmatprep.subr.mxu0 0.0
        %1761 = vmatpush1.msra.mxu0 0.0
        %1762 = vmatprep.subr.mxu0 0.0
        %1763 = vmatpush1.msra.mxu0 0.0
        %1764 = vmatprep.subr.mxu0 0.0
        %1765 = vmatpush1.msra.mxu0 0.0
        %1766 = vmatprep.subr.mxu0 0.0
        %1767 = vmatpush1.msra.mxu0 0.0
        %1768 = vmatprep.subr.mxu0 0.0
        %1769 = vmatpush1.msra.mxu0 0.0
        %1770 = vmatprep.subr.mxu0 0.0
        %1771 = vmatpush1.msra.mxu0 0.0
        %1772 = vmatprep.subr.mxu0 0.0
        %1773 = vmatpush1.msra.mxu0 0.0
        %1774 = vmatprep.subr.mxu0 0.0
        %1775 = vmatpush1.msra.mxu0 0.0
        %1776 = vmatprep.subr.mxu0 0.0
        %1777 = vmatpush1.msra.mxu0 0.0
        %1778 = vmatprep.subr.mxu0 0.0
        %1779 = vmatpush1.msra.mxu0 0.0
        %1780 = vmatprep.subr.mxu0 0.0
        %1781 = vmatpush1.msra.mxu0 0.0
        %1782 = vmatprep.subr.mxu0 0.0
        %1783 = vmatpush1.msra.mxu0 0.0
        %1784 = vmatprep.subr.mxu0 0.0
        %1785 = vmatpush1.msra.mxu0 0.0
        %1786 = vmatprep.subr.mxu0 %v1665
        %1787 = vmatpush1.msra.mxu0 %v1664
        %1788 = vmatprep.subr.mxu0 0.0
        %1789 = vmatpush2.msra.mxu0 0.0
        %1790 = vmatprep.subr.mxu0 0.0
        %1791 = vmatpush2.msra.mxu0 0.0
        %1792 = vmatprep.subr.mxu0 0.0
        %1793 = vmatpush2.msra.mxu0 0.0
        %1794 = vmatprep.subr.mxu0 0.0
        %1795 = vmatpush2.msra.mxu0 0.0
        %1796 = vmatprep.subr.mxu0 0.0
        %1797 = vmatpush2.msra.mxu0 0.0
        %1798 = vmatprep.subr.mxu0 0.0
        %1799 = vmatpush2.msra.mxu0 0.0
        %1800 = vmatprep.subr.mxu0 0.0
        %1801 = vmatpush2.msra.mxu0 0.0
        %1802 = vmatprep.subr.mxu0 0.0
        %1803 = vmatpush2.msra.mxu0 0.0
        %1804 = vmatprep.subr.mxu0 0.0
        %1805 = vmatpush2.msra.mxu0 0.0
        %1806 = vmatprep.subr.mxu0 0.0
        %1807 = vmatpush2.msra.mxu0 0.0
        %1808 = vmatprep.subr.mxu0 0.0
        %1809 = vmatpush2.msra.mxu0 0.0
        %1810 = vmatprep.subr.mxu0 0.0
        %1811 = vmatpush2.msra.mxu0 0.0
        %1812 = vmatprep.subr.mxu0 0.0
        %1813 = vmatpush2.msra.mxu0 0.0
        %1814 = vmatprep.subr.mxu0 0.0
        %1815 = vmatpush2.msra.mxu0 0.0
        %1816 = vmatprep.subr.mxu0 0.0
        %1817 = vmatpush2.msra.mxu0 0.0
        %1818 = vmatprep.subr.mxu0 0.0
        %1819 = vmatpush2.msra.mxu0 0.0
        %1820 = vmatprep.mubr.f32.mxu0 0.0
        %1821 = vmatmul.mubr.f32.gmra.mxu0 %v1674
        %v1822 = vpop.f32.mrf.mxu0
        %v1823 = vadd.f32 0.0, %v1822
        %v1824 = vpop.f32.mrf.mxu0
        %v1825 = vadd.f32 0.0, %v1824
        %1826 = vmatprep.mubr.f32.mxu0 0.0
        %1827 = vmatmul.mubr.f32.gmra.mxu0 %v1677
        %v1828 = vpop.f32.mrf.mxu0
        %v1829 = vadd.f32 0.0, %v1828
        %v1830 = vpop.f32.mrf.mxu0
        %v1831 = vadd.f32 0.0, %v1830
        %1832 = vdwg.mxu0
        %1833 = vmatprep.subr.mxu0 0.0
        %1834 = vmatpush1.msra.mxu0 0.0
        %1835 = vmatprep.subr.mxu0 0.0
        %1836 = vmatpush1.msra.mxu0 0.0
        %1837 = vmatprep.subr.mxu0 0.0
        %1838 = vmatpush1.msra.mxu0 0.0
        %1839 = vmatprep.subr.mxu0 0.0
        %1840 = vmatpush1.msra.mxu0 0.0
        %1841 = vmatprep.subr.mxu0 0.0
        %1842 = vmatpush1.msra.mxu0 0.0
        %1843 = vmatprep.subr.mxu0 0.0
        %1844 = vmatpush1.msra.mxu0 0.0
        %1845 = vmatprep.subr.mxu0 0.0
        %1846 = vmatpush1.msra.mxu0 0.0
        %1847 = vmatprep.subr.mxu0 0.0
        %1848 = vmatpush1.msra.mxu0 0.0
        %1849 = vmatprep.subr.mxu0 0.0
        %1850 = vmatpush1.msra.mxu0 0.0
        %1851 = vmatprep.subr.mxu0 0.0
        %1852 = vmatpush1.msra.mxu0 0.0
        %1853 = vmatprep.subr.mxu0 0.0
        %1854 = vmatpush1.msra.mxu0 0.0
        %1855 = vmatprep.subr.mxu0 0.0
        %1856 = vmatpush1.msra.mxu0 0.0
        %1857 = vmatprep.subr.mxu0 0.0
        %1858 = vmatpush1.msra.mxu0 0.0
        %1859 = vmatprep.subr.mxu0 0.0
        %1860 = vmatpush1.msra.mxu0 0.0
        %1861 = vmatprep.subr.mxu0 0.0
        %1862 = vmatpush1.msra.mxu0 0.0
        %1863 = vmatprep.subr.mxu0 %v1667
        %1864 = vmatpush1.msra.mxu0 %v1666
        %1865 = vmatprep.subr.mxu0 0.0
        %1866 = vmatpush2.msra.mxu0 0.0
        %1867 = vmatprep.subr.mxu0 0.0
        %1868 = vmatpush2.msra.mxu0 0.0
        %1869 = vmatprep.subr.mxu0 0.0
        %1870 = vmatpush2.msra.mxu0 0.0
        %1871 = vmatprep.subr.mxu0 0.0
        %1872 = vmatpush2.msra.mxu0 0.0
        %1873 = vmatprep.subr.mxu0 0.0
        %1874 = vmatpush2.msra.mxu0 0.0
        %1875 = vmatprep.subr.mxu0 0.0
        %1876 = vmatpush2.msra.mxu0 0.0
        %1877 = vmatprep.subr.mxu0 0.0
        %1878 = vmatpush2.msra.mxu0 0.0
        %1879 = vmatprep.subr.mxu0 0.0
        %1880 = vmatpush2.msra.mxu0 0.0
        %1881 = vmatprep.subr.mxu0 0.0
        %1882 = vmatpush2.msra.mxu0 0.0
        %1883 = vmatprep.subr.mxu0 0.0
        %1884 = vmatpush2.msra.mxu0 0.0
        %1885 = vmatprep.subr.mxu0 0.0
        %1886 = vmatpush2.msra.mxu0 0.0
        %1887 = vmatprep.subr.mxu0 0.0
        %1888 = vmatpush2.msra.mxu0 0.0
        %1889 = vmatprep.subr.mxu0 0.0
        %1890 = vmatpush2.msra.mxu0 0.0
        %1891 = vmatprep.subr.mxu0 0.0
        %1892 = vmatpush2.msra.mxu0 0.0
        %1893 = vmatprep.subr.mxu0 0.0
        %1894 = vmatpush2.msra.mxu0 0.0
        %1895 = vmatprep.subr.mxu0 0.0
        %1896 = vmatpush2.msra.mxu0 0.0
        %1897 = vmatprep.mubr.f32.mxu0 0.0
        %1898 = vmatmul.mubr.f32.gmra.mxu0 %v1674
        %v1899 = vpop.f32.mrf.mxu0
        %v1900 = vadd.f32 0.0, %v1899
        %v1901 = vpop.f32.mrf.mxu0
        %v1902 = vadd.f32 0.0, %v1901
        %1903 = vmatprep.mubr.f32.mxu0 0.0
        %1904 = vmatmul.mubr.f32.gmra.mxu0 %v1677
        %v1905 = vpop.f32.mrf.mxu0
        %v1906 = vadd.f32 0.0, %v1905
        %v1907 = vpop.f32.mrf.mxu0
        %v1908 = vadd.f32 0.0, %v1907
        %1909 = vdwg.mxu0
        %1910 = vmatprep.subr.mxu0 0.0
        %1911 = vmatpush1.msra.mxu0 0.0
        %1912 = vmatprep.subr.mxu0 0.0
        %1913 = vmatpush1.msra.mxu0 0.0
        %1914 = vmatprep.subr.mxu0 0.0
        %1915 = vmatpush1.msra.mxu0 0.0
        %1916 = vmatprep.subr.mxu0 0.0
        %1917 = vmatpush1.msra.mxu0 0.0
        %1918 = vmatprep.subr.mxu0 0.0
        %1919 = vmatpush1.msra.mxu0 0.0
        %1920 = vmatprep.subr.mxu0 0.0
        %1921 = vmatpush1.msra.mxu0 0.0
        %1922 = vmatprep.subr.mxu0 0.0
        %1923 = vmatpush1.msra.mxu0 0.0
        %1924 = vmatprep.subr.mxu0 0.0
        %1925 = vmatpush1.msra.mxu0 0.0
        %1926 = vmatprep.subr.mxu0 0.0
        %1927 = vmatpush1.msra.mxu0 0.0
        %1928 = vmatprep.subr.mxu0 0.0
        %1929 = vmatpush1.msra.mxu0 0.0
        %1930 = vmatprep.subr.mxu0 0.0
        %1931 = vmatpush1.msra.mxu0 0.0
        %1932 = vmatprep.subr.mxu0 0.0
        %1933 = vmatpush1.msra.mxu0 0.0
        %1934 = vmatprep.subr.mxu0 0.0
        %1935 = vmatpush1.msra.mxu0 0.0
        %1936 = vmatprep.subr.mxu0 0.0
        %1937 = vmatpush1.msra.mxu0 0.0
        %1938 = vmatprep.subr.mxu0 0.0
        %1939 = vmatpush1.msra.mxu0 0.0
        %1940 = vmatprep.subr.mxu0 %v1669
        %1941 = vmatpush1.msra.mxu0 %v1668
        %1942 = vmatprep.subr.mxu0 0.0
        %1943 = vmatpush2.msra.mxu0 0.0
        %1944 = vmatprep.subr.mxu0 0.0
        %1945 = vmatpush2.msra.mxu0 0.0
        %1946 = vmatprep.subr.mxu0 0.0
        %1947 = vmatpush2.msra.mxu0 0.0
        %1948 = vmatprep.subr.mxu0 0.0
        %1949 = vmatpush2.msra.mxu0 0.0
        %1950 = vmatprep.subr.mxu0 0.0
        %1951 = vmatpush2.msra.mxu0 0.0
        %1952 = vmatprep.subr.mxu0 0.0
        %1953 = vmatpush2.msra.mxu0 0.0
        %1954 = vmatprep.subr.mxu0 0.0
        %1955 = vmatpush2.msra.mxu0 0.0
        %1956 = vmatprep.subr.mxu0 0.0
        %1957 = vmatpush2.msra.mxu0 0.0
        %1958 = vmatprep.subr.mxu0 0.0
        %1959 = vmatpush2.msra.mxu0 0.0
        %1960 = vmatprep.subr.mxu0 0.0
        %1961 = vmatpush2.msra.mxu0 0.0
        %1962 = vmatprep.subr.mxu0 0.0
        %1963 = vmatpush2.msra.mxu0 0.0
        %1964 = vmatprep.subr.mxu0 0.0
        %1965 = vmatpush2.msra.mxu0 0.0
        %1966 = vmatprep.subr.mxu0 0.0
        %1967 = vmatpush2.msra.mxu0 0.0
        %1968 = vmatprep.subr.mxu0 0.0
        %1969 = vmatpush2.msra.mxu0 0.0
        %1970 = vmatprep.subr.mxu0 0.0
        %1971 = vmatpush2.msra.mxu0 0.0
        %1972 = vmatprep.subr.mxu0 0.0
        %1973 = vmatpush2.msra.mxu0 0.0
        %1974 = vmatprep.mubr.f32.mxu0 0.0
        %1975 = vmatmul.mubr.f32.gmra.mxu0 %v1674
        %v1976 = vpop.f32.mrf.mxu0
        %v1977 = vadd.f32 0.0, %v1976
        %v1978 = vpop.f32.mrf.mxu0
        %v1979 = vadd.f32 0.0, %v1978
        %1980 = vmatprep.mubr.f32.mxu0 0.0
        %1981 = vmatmul.mubr.f32.gmra.mxu0 %v1677
        %v1982 = vpop.f32.mrf.mxu0
        %v1983 = vadd.f32 0.0, %v1982
        %v1984 = vpop.f32.mrf.mxu0
        %v1985 = vadd.f32 0.0, %v1984
        %1986 = vdwg.mxu0
        %v1987 = vld [vmem:[#allocation19] sm:$0xff]
        %v1988 = vld [vmem:[#allocation19 + $0x8] sm:$0xff]
        %v1990 = vsel %vm1672, %v1987, 0
        %v1993 = vsel %vm1672, %v1988, 0
        %1995 = vmatprep.subr.mxu0 0.0
        %1996 = vmatpush1.msra.mxu0 0.0
        %1997 = vmatprep.subr.mxu0 0.0
        %1998 = vmatpush1.msra.mxu0 0.0
        %1999 = vmatprep.subr.mxu0 0.0
        %2000 = vmatpush1.msra.mxu0 0.0
        %2001 = vmatprep.subr.mxu0 0.0
        %2002 = vmatpush1.msra.mxu0 0.0
        %2003 = vmatprep.subr.mxu0 0.0
        %2004 = vmatpush1.msra.mxu0 0.0
        %2005 = vmatprep.subr.mxu0 0.0
        %2006 = vmatpush1.msra.mxu0 0.0
        %2007 = vmatprep.subr.mxu0 0.0
        %2008 = vmatpush1.msra.mxu0 0.0
        %2009 = vmatprep.subr.mxu0 0.0
        %2010 = vmatpush1.msra.mxu0 0.0
        %2011 = vmatprep.subr.mxu0 0.0
        %2012 = vmatpush1.msra.mxu0 0.0
        %2013 = vmatprep.subr.mxu0 0.0
        %2014 = vmatpush1.msra.mxu0 0.0
        %2015 = vmatprep.subr.mxu0 0.0
        %2016 = vmatpush1.msra.mxu0 0.0
        %2017 = vmatprep.subr.mxu0 0.0
        %2018 = vmatpush1.msra.mxu0 0.0
        %2019 = vmatprep.subr.mxu0 0.0
        %2020 = vmatpush1.msra.mxu0 0.0
        %2021 = vmatprep.subr.mxu0 0.0
        %2022 = vmatpush1.msra.mxu0 0.0
        %2023 = vmatprep.subr.mxu0 0.0
        %2024 = vmatpush1.msra.mxu0 0.0
        %2025 = vmatprep.subr.mxu0 %v1663
        %2026 = vmatpush1.msra.mxu0 %v1662
        %2027 = vmatprep.subr.mxu0 0.0
        %2028 = vmatpush2.msra.mxu0 0.0
        %2029 = vmatprep.subr.mxu0 0.0
        %2030 = vmatpush2.msra.mxu0 0.0
        %2031 = vmatprep.subr.mxu0 0.0
        %2032 = vmatpush2.msra.mxu0 0.0
        %2033 = vmatprep.subr.mxu0 0.0
        %2034 = vmatpush2.msra.mxu0 0.0
        %2035 = vmatprep.subr.mxu0 0.0
        %2036 = vmatpush2.msra.mxu0 0.0
        %2037 = vmatprep.subr.mxu0 0.0
        %2038 = vmatpush2.msra.mxu0 0.0
        %2039 = vmatprep.subr.mxu0 0.0
        %2040 = vmatpush2.msra.mxu0 0.0
        %2041 = vmatprep.subr.mxu0 0.0
        %2042 = vmatpush2.msra.mxu0 0.0
        %2043 = vmatprep.subr.mxu0 0.0
        %2044 = vmatpush2.msra.mxu0 0.0
        %2045 = vmatprep.subr.mxu0 0.0
        %2046 = vmatpush2.msra.mxu0 0.0
        %2047 = vmatprep.subr.mxu0 0.0
        %2048 = vmatpush2.msra.mxu0 0.0
        %2049 = vmatprep.subr.mxu0 0.0
        %2050 = vmatpush2.msra.mxu0 0.0
        %2051 = vmatprep.subr.mxu0 0.0
        %2052 = vmatpush2.msra.mxu0 0.0
        %2053 = vmatprep.subr.mxu0 0.0
        %2054 = vmatpush2.msra.mxu0 0.0
        %2055 = vmatprep.subr.mxu0 0.0
        %2056 = vmatpush2.msra.mxu0 0.0
        %2057 = vmatprep.subr.mxu0 0.0
        %2058 = vmatpush2.msra.mxu0 0.0
        %2059 = vmatprep.mubr.f32.mxu0 0.0
        %2060 = vmatmul.mubr.f32.gmra.mxu0 %v1990
        %v2061 = vpop.f32.mrf.mxu0
        %v2062 = vadd.f32 0.0, %v2061
        %v2063 = vpop.f32.mrf.mxu0
        %v2064 = vadd.f32 0.0, %v2063
        %2065 = vmatprep.mubr.f32.mxu0 0.0
        %2066 = vmatmul.mubr.f32.gmra.mxu0 %v1993
        %v2067 = vpop.f32.mrf.mxu0
        %v2068 = vadd.f32 0.0, %v2067
        %v2069 = vpop.f32.mrf.mxu0
        %v2070 = vadd.f32 0.0, %v2069
        %2071 = vdwg.mxu0
        %2072 = vmatprep.subr.mxu0 0.0
        %2073 = vmatpush1.msra.mxu0 0.0
        %2074 = vmatprep.subr.mxu0 0.0
        %2075 = vmatpush1.msra.mxu0 0.0
        %2076 = vmatprep.subr.mxu0 0.0
        %2077 = vmatpush1.msra.mxu0 0.0
        %2078 = vmatprep.subr.mxu0 0.0
        %2079 = vmatpush1.msra.mxu0 0.0
        %2080 = vmatprep.subr.mxu0 0.0
        %2081 = vmatpush1.msra.mxu0 0.0
        %2082 = vmatprep.subr.mxu0 0.0
        %2083 = vmatpush1.msra.mxu0 0.0
        %2084 = vmatprep.subr.mxu0 0.0
        %2085 = vmatpush1.msra.mxu0 0.0
        %2086 = vmatprep.subr.mxu0 0.0
        %2087 = vmatpush1.msra.mxu0 0.0
        %2088 = vmatprep.subr.mxu0 0.0
        %2089 = vmatpush1.msra.mxu0 0.0
        %2090 = vmatprep.subr.mxu0 0.0
        %2091 = vmatpush1.msra.mxu0 0.0
        %2092 = vmatprep.subr.mxu0 0.0
        %2093 = vmatpush1.msra.mxu0 0.0
        %2094 = vmatprep.subr.mxu0 0.0
        %2095 = vmatpush1.msra.mxu0 0.0
        %2096 = vmatprep.subr.mxu0 0.0
        %2097 = vmatpush1.msra.mxu0 0.0
        %2098 = vmatprep.subr.mxu0 0.0
        %2099 = vmatpush1.msra.mxu0 0.0
        %2100 = vmatprep.subr.mxu0 0.0
        %2101 = vmatpush1.msra.mxu0 0.0
        %2102 = vmatprep.subr.mxu0 %v1665
        %2103 = vmatpush1.msra.mxu0 %v1664
        %2104 = vmatprep.subr.mxu0 0.0
        %2105 = vmatpush2.msra.mxu0 0.0
        %2106 = vmatprep.subr.mxu0 0.0
        %2107 = vmatpush2.msra.mxu0 0.0
        %2108 = vmatprep.subr.mxu0 0.0
        %2109 = vmatpush2.msra.mxu0 0.0
        %2110 = vmatprep.subr.mxu0 0.0
        %2111 = vmatpush2.msra.mxu0 0.0
        %2112 = vmatprep.subr.mxu0 0.0
        %2113 = vmatpush2.msra.mxu0 0.0
        %2114 = vmatprep.subr.mxu0 0.0
        %2115 = vmatpush2.msra.mxu0 0.0
        %2116 = vmatprep.subr.mxu0 0.0
        %2117 = vmatpush2.msra.mxu0 0.0
        %2118 = vmatprep.subr.mxu0 0.0
        %2119 = vmatpush2.msra.mxu0 0.0
        %2120 = vmatprep.subr.mxu0 0.0
        %2121 = vmatpush2.msra.mxu0 0.0
        %2122 = vmatprep.subr.mxu0 0.0
        %2123 = vmatpush2.msra.mxu0 0.0
        %2124 = vmatprep.subr.mxu0 0.0
        %2125 = vmatpush2.msra.mxu0 0.0
        %2126 = vmatprep.subr.mxu0 0.0
        %2127 = vmatpush2.msra.mxu0 0.0
        %2128 = vmatprep.subr.mxu0 0.0
        %2129 = vmatpush2.msra.mxu0 0.0
        %2130 = vmatprep.subr.mxu0 0.0
        %2131 = vmatpush2.msra.mxu0 0.0
        %2132 = vmatprep.subr.mxu0 0.0
        %2133 = vmatpush2.msra.mxu0 0.0
        %2134 = vmatprep.subr.mxu0 0.0
        %2135 = vmatpush2.msra.mxu0 0.0
        %2136 = vmatprep.mubr.f32.mxu0 0.0
        %2137 = vmatmul.mubr.f32.gmra.mxu0 %v1990
        %v2138 = vpop.f32.mrf.mxu0
        %v2139 = vadd.f32 0.0, %v2138
        %v2140 = vpop.f32.mrf.mxu0
        %v2141 = vadd.f32 0.0, %v2140
        %2142 = vmatprep.mubr.f32.mxu0 0.0
        %2143 = vmatmul.mubr.f32.gmra.mxu0 %v1993
        %v2144 = vpop.f32.mrf.mxu0
        %v2145 = vadd.f32 0.0, %v2144
        %v2146 = vpop.f32.mrf.mxu0
        %v2147 = vadd.f32 0.0, %v2146
        %2148 = vdwg.mxu0
        %2149 = vmatprep.subr.mxu0 0.0
        %2150 = vmatpush1.msra.mxu0 0.0
        %2151 = vmatprep.subr.mxu0 0.0
        %2152 = vmatpush1.msra.mxu0 0.0
        %2153 = vmatprep.subr.mxu0 0.0
        %2154 = vmatpush1.msra.mxu0 0.0
        %2155 = vmatprep.subr.mxu0 0.0
        %2156 = vmatpush1.msra.mxu0 0.0
        %2157 = vmatprep.subr.mxu0 0.0
        %2158 = vmatpush1.msra.mxu0 0.0
        %2159 = vmatprep.subr.mxu0 0.0
        %2160 = vmatpush1.msra.mxu0 0.0
        %2161 = vmatprep.subr.mxu0 0.0
        %2162 = vmatpush1.msra.mxu0 0.0
        %2163 = vmatprep.subr.mxu0 0.0
        %2164 = vmatpush1.msra.mxu0 0.0
        %2165 = vmatprep.subr.mxu0 0.0
        %2166 = vmatpush1.msra.mxu0 0.0
        %2167 = vmatprep.subr.mxu0 0.0
        %2168 = vmatpush1.msra.mxu0 0.0
        %2169 = vmatprep.subr.mxu0 0.0
        %2170 = vmatpush1.msra.mxu0 0.0
        %2171 = vmatprep.subr.mxu0 0.0
        %2172 = vmatpush1.msra.mxu0 0.0
        %2173 = vmatprep.subr.mxu0 0.0
        %2174 = vmatpush1.msra.mxu0 0.0
        %2175 = vmatprep.subr.mxu0 0.0
        %2176 = vmatpush1.msra.mxu0 0.0
        %2177 = vmatprep.subr.mxu0 0.0
        %2178 = vmatpush1.msra.mxu0 0.0
        %2179 = vmatprep.subr.mxu0 %v1667
        %2180 = vmatpush1.msra.mxu0 %v1666
        %2181 = vmatprep.subr.mxu0 0.0
        %2182 = vmatpush2.msra.mxu0 0.0
        %2183 = vmatprep.subr.mxu0 0.0
        %2184 = vmatpush2.msra.mxu0 0.0
        %2185 = vmatprep.subr.mxu0 0.0
        %2186 = vmatpush2.msra.mxu0 0.0
        %2187 = vmatprep.subr.mxu0 0.0
        %2188 = vmatpush2.msra.mxu0 0.0
        %2189 = vmatprep.subr.mxu0 0.0
        %2190 = vmatpush2.msra.mxu0 0.0
        %2191 = vmatprep.subr.mxu0 0.0
        %2192 = vmatpush2.msra.mxu0 0.0
        %2193 = vmatprep.subr.mxu0 0.0
        %2194 = vmatpush2.msra.mxu0 0.0
        %2195 = vmatprep.subr.mxu0 0.0
        %2196 = vmatpush2.msra.mxu0 0.0
        %2197 = vmatprep.subr.mxu0 0.0
        %2198 = vmatpush2.msra.mxu0 0.0
        %2199 = vmatprep.subr.mxu0 0.0
        %2200 = vmatpush2.msra.mxu0 0.0
        %2201 = vmatprep.subr.mxu0 0.0
        %2202 = vmatpush2.msra.mxu0 0.0
        %2203 = vmatprep.subr.mxu0 0.0
        %2204 = vmatpush2.msra.mxu0 0.0
        %2205 = vmatprep.subr.mxu0 0.0
        %2206 = vmatpush2.msra.mxu0 0.0
        %2207 = vmatprep.subr.mxu0 0.0
        %2208 = vmatpush2.msra.mxu0 0.0
        %2209 = vmatprep.subr.mxu0 0.0
        %2210 = vmatpush2.msra.mxu0 0.0
        %2211 = vmatprep.subr.mxu0 0.0
        %2212 = vmatpush2.msra.mxu0 0.0
        %2213 = vmatprep.mubr.f32.mxu0 0.0
        %2214 = vmatmul.mubr.f32.gmra.mxu0 %v1990
        %v2215 = vpop.f32.mrf.mxu0
        %v2216 = vadd.f32 0.0, %v2215
        %v2217 = vpop.f32.mrf.mxu0
        %v2218 = vadd.f32 0.0, %v2217
        %2219 = vmatprep.mubr.f32.mxu0 0.0
        %2220 = vmatmul.mubr.f32.gmra.mxu0 %v1993
        %v2221 = vpop.f32.mrf.mxu0
        %v2222 = vadd.f32 0.0, %v2221
        %v2223 = vpop.f32.mrf.mxu0
        %v2224 = vadd.f32 0.0, %v2223
        %2225 = vdwg.mxu0
        %2226 = vmatprep.subr.mxu0 0.0
        %2227 = vmatpush1.msra.mxu0 0.0
        %2228 = vmatprep.subr.mxu0 0.0
        %2229 = vmatpush1.msra.mxu0 0.0
        %2230 = vmatprep.subr.mxu0 0.0
        %2231 = vmatpush1.msra.mxu0 0.0
        %2232 = vmatprep.subr.mxu0 0.0
        %2233 = vmatpush1.msra.mxu0 0.0
        %2234 = vmatprep.subr.mxu0 0.0
        %2235 = vmatpush1.msra.mxu0 0.0
        %2236 = vmatprep.subr.mxu0 0.0
        %2237 = vmatpush1.msra.mxu0 0.0
        %2238 = vmatprep.subr.mxu0 0.0
        %2239 = vmatpush1.msra.mxu0 0.0
        %2240 = vmatprep.subr.mxu0 0.0
        %2241 = vmatpush1.msra.mxu0 0.0
        %2242 = vmatprep.subr.mxu0 0.0
        %2243 = vmatpush1.msra.mxu0 0.0
        %2244 = vmatprep.subr.mxu0 0.0
        %2245 = vmatpush1.msra.mxu0 0.0
        %2246 = vmatprep.subr.mxu0 0.0
        %2247 = vmatpush1.msra.mxu0 0.0
        %2248 = vmatprep.subr.mxu0 0.0
        %2249 = vmatpush1.msra.mxu0 0.0
        %2250 = vmatprep.subr.mxu0 0.0
        %2251 = vmatpush1.msra.mxu0 0.0
        %2252 = vmatprep.subr.mxu0 0.0
        %2253 = vmatpush1.msra.mxu0 0.0
        %2254 = vmatprep.subr.mxu0 0.0
        %2255 = vmatpush1.msra.mxu0 0.0
        %2256 = vmatprep.subr.mxu0 %v1669
        %2257 = vmatpush1.msra.mxu0 %v1668
        %2258 = vmatprep.subr.mxu0 0.0
        %2259 = vmatpush2.msra.mxu0 0.0
        %2260 = vmatprep.subr.mxu0 0.0
        %2261 = vmatpush2.msra.mxu0 0.0
        %2262 = vmatprep.subr.mxu0 0.0
        %2263 = vmatpush2.msra.mxu0 0.0
        %2264 = vmatprep.subr.mxu0 0.0
        %2265 = vmatpush2.msra.mxu0 0.0
        %2266 = vmatprep.subr.mxu0 0.0
        %2267 = vmatpush2.msra.mxu0 0.0
        %2268 = vmatprep.subr.mxu0 0.0
        %2269 = vmatpush2.msra.mxu0 0.0
        %2270 = vmatprep.subr.mxu0 0.0
        %2271 = vmatpush2.msra.mxu0 0.0
        %2272 = vmatprep.subr.mxu0 0.0
        %2273 = vmatpush2.msra.mxu0 0.0
        %2274 = vmatprep.subr.mxu0 0.0
        %2275 = vmatpush2.msra.mxu0 0.0
        %2276 = vmatprep.subr.mxu0 0.0
        %2277 = vmatpush2.msra.mxu0 0.0
        %2278 = vmatprep.subr.mxu0 0.0
        %2279 = vmatpush2.msra.mxu0 0.0
        %2280 = vmatprep.subr.mxu0 0.0
        %2281 = vmatpush2.msra.mxu0 0.0
        %2282 = vmatprep.subr.mxu0 0.0
        %2283 = vmatpush2.msra.mxu0 0.0
        %2284 = vmatprep.subr.mxu0 0.0
        %2285 = vmatpush2.msra.mxu0 0.0
        %2286 = vmatprep.subr.mxu0 0.0
        %2287 = vmatpush2.msra.mxu0 0.0
        %2288 = vmatprep.subr.mxu0 0.0
        %2289 = vmatpush2.msra.mxu0 0.0
        %2290 = vmatprep.mubr.f32.mxu0 0.0
        %2291 = vmatmul.mubr.f32.gmra.mxu0 %v1990
        %v2292 = vpop.f32.mrf.mxu0
        %v2293 = vadd.f32 0.0, %v2292
        %v2294 = vpop.f32.mrf.mxu0
        %v2295 = vadd.f32 0.0, %v2294
        %2296 = vmatprep.mubr.f32.mxu0 0.0
        %2297 = vmatmul.mubr.f32.gmra.mxu0 %v1993
        %v2298 = vpop.f32.mrf.mxu0
        %v2299 = vadd.f32 0.0, %v2298
        %v2300 = vpop.f32.mrf.mxu0
        %v2301 = vadd.f32 0.0, %v2300
        %2302 = vdwg.mxu0
        %v2303 = vld [vmem:[#allocation3] sm:$0xff]
        %v2304 = vld [vmem:[#allocation3 + $0x8] sm:$0xff]
        %v2305 = vmul.f32 %v1112, %v1746
        %v2306 = vmul.f32 %v1114, %v1748
        %v2307 = vmul.f32 %v1155, %v1823
        %v2308 = vmul.f32 %v1157, %v1825
        %v2309 = vmul.f32 %v1198, %v1900
        %v2310 = vmul.f32 %v1200, %v1902
        %v2311 = vmul.f32 %v1241, %v1977
        %v2312 = vmul.f32 %v1243, %v1979
        %v2313 = vmul.f32 %v1116, %v1752
        %v2314 = vmul.f32 %v1118, %v1754
        %v2315 = vmul.f32 %v1159, %v1829
        %v2316 = vmul.f32 %v1161, %v1831
        %v2317 = vmul.f32 %v1202, %v1906
        %v2318 = vmul.f32 %v1204, %v1908
        %v2319 = vmul.f32 %v1245, %v1983
        %v2320 = vmul.f32 %v1247, %v1985
        %v2321 = vadd.f32 %v2305, %v2306
        %v2322 = vadd.f32 %v2321, %v2307
        %v2323 = vadd.f32 %v2322, %v2308
        %v2324 = vadd.f32 %v2323, %v2309
        %v2325 = vadd.f32 %v2324, %v2310
        %v2326 = vadd.f32 %v2325, %v2311
        %v2327 = vadd.f32 %v2326, %v2312
        %2328 = vadd.xlane.f32.xlu0 %v2327
        %v2329 = vpop.xlane.xlu0 %2328
        %v2330 = vadd.f32 %v2313, %v2314
        %v2331 = vadd.f32 %v2330, %v2315
        %v2332 = vadd.f32 %v2331, %v2316
        %v2333 = vadd.f32 %v2332, %v2317
        %v2334 = vadd.f32 %v2333, %v2318
        %v2335 = vadd.f32 %v2334, %v2319
        %v2336 = vadd.f32 %v2335, %v2320
        %2337 = vadd.xlane.f32.xlu0 %v2336
        %v2338 = vpop.xlane.xlu0 %2337
        %v2339 = vadd.f32 %v2303, %v2329
        %v2340 = vadd.f32 %v2304, %v2338
        %vm2341 = vcmask 7168
        %2342 = vst.msk [vmem:[#allocation3] sm:$0xff] %vm2341, %v2339
        %2343 = vst.msk [vmem:[#allocation3 + $0x8] sm:$0xff] %vm2341, %v2340
        %v2344 = vld [vmem:[#allocation4] sm:$0xff]
        %v2345 = vld [vmem:[#allocation4 + $0x8] sm:$0xff]
        %v2346 = vmul.f32 %v1112, %v1112
        %v2347 = vmul.f32 %v1114, %v1114
        %v2348 = vmul.f32 %v1155, %v1155
        %v2349 = vmul.f32 %v1157, %v1157
        %v2350 = vmul.f32 %v1198, %v1198
        %v2351 = vmul.f32 %v1200, %v1200
        %v2352 = vmul.f32 %v1241, %v1241
        %v2353 = vmul.f32 %v1243, %v1243
        %v2354 = vmul.f32 %v1116, %v1116
        %v2355 = vmul.f32 %v1118, %v1118
        %v2356 = vmul.f32 %v1159, %v1159
        %v2357 = vmul.f32 %v1161, %v1161
        %v2358 = vmul.f32 %v1202, %v1202
        %v2359 = vmul.f32 %v1204, %v1204
        %v2360 = vmul.f32 %v1245, %v1245
        %v2361 = vmul.f32 %v1247, %v1247
        %v2362 = vadd.f32 %v2346, %v2347
        %v2363 = vadd.f32 %v2362, %v2348
        %v2364 = vadd.f32 %v2363, %v2349
        %v2365 = vadd.f32 %v2364, %v2350
        %v2366 = vadd.f32 %v2365, %v2351
        %v2367 = vadd.f32 %v2366, %v2352
        %v2368 = vadd.f32 %v2367, %v2353
        %2369 = vadd.xlane.f32.xlu0 %v2368
        %v2370 = vpop.xlane.xlu0 %2369
        %v2371 = vadd.f32 %v2354, %v2355
        %v2372 = vadd.f32 %v2371, %v2356
        %v2373 = vadd.f32 %v2372, %v2357
        %v2374 = vadd.f32 %v2373, %v2358
        %v2375 = vadd.f32 %v2374, %v2359
        %v2376 = vadd.f32 %v2375, %v2360
        %v2377 = vadd.f32 %v2376, %v2361
        %2378 = vadd.xlane.f32.xlu0 %v2377
        %v2379 = vpop.xlane.xlu0 %2378
        %v2380 = vadd.f32 %v2344, %v2370
        %v2381 = vadd.f32 %v2345, %v2379
        %2382 = vst.msk [vmem:[#allocation4] sm:$0xff] %vm2341, %v2380
        %2383 = vst.msk [vmem:[#allocation4 + $0x8] sm:$0xff] %vm2341, %v2381
        %v2384 = vld [vmem:[#allocation5] sm:$0xff]
        %v2385 = vld [vmem:[#allocation5 + $0x8] sm:$0xff]
        %v2386 = vmul.f32 %v1746, %v1746
        %v2387 = vmul.f32 %v1748, %v1748
        %v2388 = vmul.f32 %v1823, %v1823
        %v2389 = vmul.f32 %v1825, %v1825
        %v2390 = vmul.f32 %v1900, %v1900
        %v2391 = vmul.f32 %v1902, %v1902
        %v2392 = vmul.f32 %v1977, %v1977
        %v2393 = vmul.f32 %v1979, %v1979
        %v2394 = vmul.f32 %v1752, %v1752
        %v2395 = vmul.f32 %v1754, %v1754
        %v2396 = vmul.f32 %v1829, %v1829
        %v2397 = vmul.f32 %v1831, %v1831
        %v2398 = vmul.f32 %v1906, %v1906
        %v2399 = vmul.f32 %v1908, %v1908
        %v2400 = vmul.f32 %v1983, %v1983
        %v2401 = vmul.f32 %v1985, %v1985
        %v2402 = vadd.f32 %v2386, %v2387
        %v2403 = vadd.f32 %v2402, %v2388
        %v2404 = vadd.f32 %v2403, %v2389
        %v2405 = vadd.f32 %v2404, %v2390
        %v2406 = vadd.f32 %v2405, %v2391
        %v2407 = vadd.f32 %v2406, %v2392
        %v2408 = vadd.f32 %v2407, %v2393
        %2409 = vadd.xlane.f32.xlu0 %v2408
        %v2410 = vpop.xlane.xlu0 %2409
        %v2411 = vadd.f32 %v2394, %v2395
        %v2412 = vadd.f32 %v2411, %v2396
        %v2413 = vadd.f32 %v2412, %v2397
        %v2414 = vadd.f32 %v2413, %v2398
        %v2415 = vadd.f32 %v2414, %v2399
        %v2416 = vadd.f32 %v2415, %v2400
        %v2417 = vadd.f32 %v2416, %v2401
        %2418 = vadd.xlane.f32.xlu0 %v2417
        %v2419 = vpop.xlane.xlu0 %2418
        %v2420 = vadd.f32 %v2384, %v2410
        %v2421 = vadd.f32 %v2385, %v2419
        %2422 = vst.msk [vmem:[#allocation5] sm:$0xff] %vm2341, %v2420
        %2423 = vst.msk [vmem:[#allocation5 + $0x8] sm:$0xff] %vm2341, %v2421
        %v2424 = vld [vmem:[#allocation6] sm:$0xff]
        %v2425 = vld [vmem:[#allocation6 + $0x8] sm:$0xff]
        %v2426 = vmul.f32 %v1525, %v2062
        %v2427 = vmul.f32 %v1527, %v2064
        %v2428 = vmul.f32 %v1568, %v2139
        %v2429 = vmul.f32 %v1570, %v2141
        %v2430 = vmul.f32 %v1611, %v2216
        %v2431 = vmul.f32 %v1613, %v2218
        %v2432 = vmul.f32 %v1654, %v2293
        %v2433 = vmul.f32 %v1656, %v2295
        %v2434 = vmul.f32 %v1529, %v2068
        %v2435 = vmul.f32 %v1531, %v2070
        %v2436 = vmul.f32 %v1572, %v2145
        %v2437 = vmul.f32 %v1574, %v2147
        %v2438 = vmul.f32 %v1615, %v2222
        %v2439 = vmul.f32 %v1617, %v2224
        %v2440 = vmul.f32 %v1658, %v2299
        %v2441 = vmul.f32 %v1660, %v2301
        %v2442 = vadd.f32 %v2426, %v2427
        %v2443 = vadd.f32 %v2442, %v2428
        %v2444 = vadd.f32 %v2443, %v2429
        %v2445 = vadd.f32 %v2444, %v2430
        %v2446 = vadd.f32 %v2445, %v2431
        %v2447 = vadd.f32 %v2446, %v2432
        %v2448 = vadd.f32 %v2447, %v2433
        %2449 = vadd.xlane.f32.xlu0 %v2448
        %v2450 = vpop.xlane.xlu0 %2449
        %v2451 = vadd.f32 %v2434, %v2435
        %v2452 = vadd.f32 %v2451, %v2436
        %v2453 = vadd.f32 %v2452, %v2437
        %v2454 = vadd.f32 %v2453, %v2438
        %v2455 = vadd.f32 %v2454, %v2439
        %v2456 = vadd.f32 %v2455, %v2440
        %v2457 = vadd.f32 %v2456, %v2441
        %2458 = vadd.xlane.f32.xlu0 %v2457
        %v2459 = vpop.xlane.xlu0 %2458
        %v2460 = vadd.f32 %v2424, %v2450
        %v2461 = vadd.f32 %v2425, %v2459
        %2462 = vst.msk [vmem:[#allocation6] sm:$0xff] %vm2341, %v2460
        %2463 = vst.msk [vmem:[#allocation6 + $0x8] sm:$0xff] %vm2341, %v2461
        %v2464 = vld [vmem:[#allocation7] sm:$0xff]
        %v2465 = vld [vmem:[#allocation7 + $0x8] sm:$0xff]
        %v2466 = vmul.f32 %v1525, %v1525
        %v2467 = vmul.f32 %v1527, %v1527
        %v2468 = vmul.f32 %v1568, %v1568
        %v2469 = vmul.f32 %v1570, %v1570
        %v2470 = vmul.f32 %v1611, %v1611
        %v2471 = vmul.f32 %v1613, %v1613
        %v2472 = vmul.f32 %v1654, %v1654
        %v2473 = vmul.f32 %v1656, %v1656
        %v2474 = vmul.f32 %v1529, %v1529
        %v2475 = vmul.f32 %v1531, %v1531
        %v2476 = vmul.f32 %v1572, %v1572
        %v2477 = vmul.f32 %v1574, %v1574
        %v2478 = vmul.f32 %v1615, %v1615
        %v2479 = vmul.f32 %v1617, %v1617
        %v2480 = vmul.f32 %v1658, %v1658
        %v2481 = vmul.f32 %v1660, %v1660
        %v2482 = vadd.f32 %v2466, %v2467
        %v2483 = vadd.f32 %v2482, %v2468
        %v2484 = vadd.f32 %v2483, %v2469
        %v2485 = vadd.f32 %v2484, %v2470
        %v2486 = vadd.f32 %v2485, %v2471
        %v2487 = vadd.f32 %v2486, %v2472
        %v2488 = vadd.f32 %v2487, %v2473
        %2489 = vadd.xlane.f32.xlu0 %v2488
        %v2490 = vpop.xlane.xlu0 %2489
        %v2491 = vadd.f32 %v2474, %v2475
        %v2492 = vadd.f32 %v2491, %v2476
        %v2493 = vadd.f32 %v2492, %v2477
        %v2494 = vadd.f32 %v2493, %v2478
        %v2495 = vadd.f32 %v2494, %v2479
        %v2496 = vadd.f32 %v2495, %v2480
        %v2497 = vadd.f32 %v2496, %v2481
        %2498 = vadd.xlane.f32.xlu0 %v2497
        %v2499 = vpop.xlane.xlu0 %2498
        %v2500 = vadd.f32 %v2464, %v2490
        %v2501 = vadd.f32 %v2465, %v2499
        %2502 = vst.msk [vmem:[#allocation7] sm:$0xff] %vm2341, %v2500
        %2503 = vst.msk [vmem:[#allocation7 + $0x8] sm:$0xff] %vm2341, %v2501
        %v2504 = vld [vmem:[#allocation8] sm:$0xff]
        %v2505 = vld [vmem:[#allocation8 + $0x8] sm:$0xff]
        %v2506 = vmul.f32 %v2062, %v2062
        %v2507 = vmul.f32 %v2064, %v2064
        %v2508 = vmul.f32 %v2139, %v2139
        %v2509 = vmul.f32 %v2141, %v2141
        %v2510 = vmul.f32 %v2216, %v2216
        %v2511 = vmul.f32 %v2218, %v2218
        %v2512 = vmul.f32 %v2293, %v2293
        %v2513 = vmul.f32 %v2295, %v2295
        %v2514 = vmul.f32 %v2068, %v2068
        %v2515 = vmul.f32 %v2070, %v2070
        %v2516 = vmul.f32 %v2145, %v2145
        %v2517 = vmul.f32 %v2147, %v2147
        %v2518 = vmul.f32 %v2222, %v2222
        %v2519 = vmul.f32 %v2224, %v2224
        %v2520 = vmul.f32 %v2299, %v2299
        %v2521 = vmul.f32 %v2301, %v2301
        %v2522 = vadd.f32 %v2506, %v2507
        %v2523 = vadd.f32 %v2522, %v2508
        %v2524 = vadd.f32 %v2523, %v2509
        %v2525 = vadd.f32 %v2524, %v2510
        %v2526 = vadd.f32 %v2525, %v2511
        %v2527 = vadd.f32 %v2526, %v2512
        %v2528 = vadd.f32 %v2527, %v2513
        %2529 = vadd.xlane.f32.xlu0 %v2528
        %v2530 = vpop.xlane.xlu0 %2529
        %v2531 = vadd.f32 %v2514, %v2515
        %v2532 = vadd.f32 %v2531, %v2516
        %v2533 = vadd.f32 %v2532, %v2517
        %v2534 = vadd.f32 %v2533, %v2518
        %v2535 = vadd.f32 %v2534, %v2519
        %v2536 = vadd.f32 %v2535, %v2520
        %v2537 = vadd.f32 %v2536, %v2521
        %2538 = vadd.xlane.f32.xlu0 %v2537
        %v2539 = vpop.xlane.xlu0 %2538
        %v2540 = vadd.f32 %v2504, %v2530
        %v2541 = vadd.f32 %v2505, %v2539
        %2542 = vst.msk [vmem:[#allocation8] sm:$0xff] %vm2341, %v2540
        %2543 = vst.msk [vmem:[#allocation8 + $0x8] sm:$0xff] %vm2341, %v2541
        %v2544 = vld [vmem:[#allocation21] sm:$0x3]
        %vm2545 = vcmask 130048
        %v2547 = vsel %vm2545, %v2544, 0
        %2549 = vmatprep.subr.mxu0 0.0
        %2550 = vmatpush1.msra.mxu0 0.0
        %2551 = vmatprep.subr.mxu0 0.0
        %2552 = vmatpush1.msra.mxu0 0.0
        %2553 = vmatprep.subr.mxu0 0.0
        %2554 = vmatpush1.msra.mxu0 0.0
        %2555 = vmatprep.subr.mxu0 0.0
        %2556 = vmatpush1.msra.mxu0 0.0
        %2557 = vmatprep.subr.mxu0 0.0
        %2558 = vmatpush1.msra.mxu0 0.0
        %2559 = vmatprep.subr.mxu0 0.0
        %2560 = vmatpush1.msra.mxu0 0.0
        %2561 = vmatprep.subr.mxu0 0.0
        %2562 = vmatpush1.msra.mxu0 0.0
        %2563 = vmatprep.subr.mxu0 0.0
        %2564 = vmatpush1.msra.mxu0 0.0
        %2565 = vmatprep.subr.mxu0 0.0
        %2566 = vmatpush1.msra.mxu0 0.0
        %2567 = vmatprep.subr.mxu0 0.0
        %2568 = vmatpush1.msra.mxu0 0.0
        %2569 = vmatprep.subr.mxu0 0.0
        %2570 = vmatpush1.msra.mxu0 0.0
        %2571 = vmatprep.subr.mxu0 0.0
        %2572 = vmatpush1.msra.mxu0 0.0
        %2573 = vmatprep.subr.mxu0 0.0
        %2574 = vmatpush1.msra.mxu0 0.0
        %2575 = vmatprep.subr.mxu0 0.0
        %2576 = vmatpush1.msra.mxu0 0.0
        %2577 = vmatprep.subr.mxu0 %v1531
        %2578 = vmatpush1.msra.mxu0 %v1529
        %2579 = vmatprep.subr.mxu0 %v1527
        %2580 = vmatpush1.msra.mxu0 %v1525
        %2581 = vmatprep.subr.mxu0 0.0
        %2582 = vmatpush2.msra.mxu0 0.0
        %2583 = vmatprep.subr.mxu0 0.0
        %2584 = vmatpush2.msra.mxu0 0.0
        %2585 = vmatprep.subr.mxu0 0.0
        %2586 = vmatpush2.msra.mxu0 0.0
        %2587 = vmatprep.subr.mxu0 0.0
        %2588 = vmatpush2.msra.mxu0 0.0
        %2589 = vmatprep.subr.mxu0 0.0
        %2590 = vmatpush2.msra.mxu0 0.0
        %2591 = vmatprep.subr.mxu0 0.0
        %2592 = vmatpush2.msra.mxu0 0.0
        %2593 = vmatprep.subr.mxu0 0.0
        %2594 = vmatpush2.msra.mxu0 0.0
        %2595 = vmatprep.subr.mxu0 0.0
        %2596 = vmatpush2.msra.mxu0 0.0
        %2597 = vmatprep.subr.mxu0 0.0
        %2598 = vmatpush2.msra.mxu0 0.0
        %2599 = vmatprep.subr.mxu0 0.0
        %2600 = vmatpush2.msra.mxu0 0.0
        %2601 = vmatprep.subr.mxu0 0.0
        %2602 = vmatpush2.msra.mxu0 0.0
        %2603 = vmatprep.subr.mxu0 0.0
        %2604 = vmatpush2.msra.mxu0 0.0
        %2605 = vmatprep.subr.mxu0 0.0
        %2606 = vmatpush2.msra.mxu0 0.0
        %2607 = vmatprep.subr.mxu0 0.0
        %2608 = vmatpush2.msra.mxu0 0.0
        %2609 = vmatprep.subr.mxu0 0.0
        %2610 = vmatpush2.msra.mxu0 0.0
        %2611 = vmatprep.subr.mxu0 0.0
        %2612 = vmatpush2.msra.mxu0 0.0
        %2613 = vmatprep.mubr.f32.mxu0 0.0
        %2614 = vmatmul.mubr.f32.gmra.mxu0 %v2547
        %v2615 = vpop.f32.mrf.mxu0
        %v2616 = vadd.f32 0.0, %v2615
        %v2617 = vpop.f32.mrf.mxu0
        %v2618 = vadd.f32 0.0, %v2617
        %2619 = vdwg.mxu0
        %2620 = vmatprep.subr.mxu0 0.0
        %2621 = vmatpush1.msra.mxu0 0.0
        %2622 = vmatprep.subr.mxu0 0.0
        %2623 = vmatpush1.msra.mxu0 0.0
        %2624 = vmatprep.subr.mxu0 0.0
        %2625 = vmatpush1.msra.mxu0 0.0
        %2626 = vmatprep.subr.mxu0 0.0
        %2627 = vmatpush1.msra.mxu0 0.0
        %2628 = vmatprep.subr.mxu0 0.0
        %2629 = vmatpush1.msra.mxu0 0.0
        %2630 = vmatprep.subr.mxu0 0.0
        %2631 = vmatpush1.msra.mxu0 0.0
        %2632 = vmatprep.subr.mxu0 0.0
        %2633 = vmatpush1.msra.mxu0 0.0
        %2634 = vmatprep.subr.mxu0 0.0
        %2635 = vmatpush1.msra.mxu0 0.0
        %2636 = vmatprep.subr.mxu0 0.0
        %2637 = vmatpush1.msra.mxu0 0.0
        %2638 = vmatprep.subr.mxu0 0.0
        %2639 = vmatpush1.msra.mxu0 0.0
        %2640 = vmatprep.subr.mxu0 0.0
        %2641 = vmatpush1.msra.mxu0 0.0
        %2642 = vmatprep.subr.mxu0 0.0
        %2643 = vmatpush1.msra.mxu0 0.0
        %2644 = vmatprep.subr.mxu0 0.0
        %2645 = vmatpush1.msra.mxu0 0.0
        %2646 = vmatprep.subr.mxu0 0.0
        %2647 = vmatpush1.msra.mxu0 0.0
        %2648 = vmatprep.subr.mxu0 %v1574
        %2649 = vmatpush1.msra.mxu0 %v1572
        %2650 = vmatprep.subr.mxu0 %v1570
        %2651 = vmatpush1.msra.mxu0 %v1568
        %2652 = vmatprep.subr.mxu0 0.0
        %2653 = vmatpush2.msra.mxu0 0.0
        %2654 = vmatprep.subr.mxu0 0.0
        %2655 = vmatpush2.msra.mxu0 0.0
        %2656 = vmatprep.subr.mxu0 0.0
        %2657 = vmatpush2.msra.mxu0 0.0
        %2658 = vmatprep.subr.mxu0 0.0
        %2659 = vmatpush2.msra.mxu0 0.0
        %2660 = vmatprep.subr.mxu0 0.0
        %2661 = vmatpush2.msra.mxu0 0.0
        %2662 = vmatprep.subr.mxu0 0.0
        %2663 = vmatpush2.msra.mxu0 0.0
        %2664 = vmatprep.subr.mxu0 0.0
        %2665 = vmatpush2.msra.mxu0 0.0
        %2666 = vmatprep.subr.mxu0 0.0
        %2667 = vmatpush2.msra.mxu0 0.0
        %2668 = vmatprep.subr.mxu0 0.0
        %2669 = vmatpush2.msra.mxu0 0.0
        %2670 = vmatprep.subr.mxu0 0.0
        %2671 = vmatpush2.msra.mxu0 0.0
        %2672 = vmatprep.subr.mxu0 0.0
        %2673 = vmatpush2.msra.mxu0 0.0
        %2674 = vmatprep.subr.mxu0 0.0
        %2675 = vmatpush2.msra.mxu0 0.0
        %2676 = vmatprep.subr.mxu0 0.0
        %2677 = vmatpush2.msra.mxu0 0.0
        %2678 = vmatprep.subr.mxu0 0.0
        %2679 = vmatpush2.msra.mxu0 0.0
        %2680 = vmatprep.subr.mxu0 0.0
        %2681 = vmatpush2.msra.mxu0 0.0
        %2682 = vmatprep.subr.mxu0 0.0
        %2683 = vmatpush2.msra.mxu0 0.0
        %2684 = vmatprep.mubr.f32.mxu0 0.0
        %2685 = vmatmul.mubr.f32.gmra.mxu0 %v2547
        %v2686 = vpop.f32.mrf.mxu0
        %v2687 = vadd.f32 0.0, %v2686
        %v2688 = vpop.f32.mrf.mxu0
        %v2689 = vadd.f32 0.0, %v2688
        %2690 = vdwg.mxu0
        %2691 = vmatprep.subr.mxu0 0.0
        %2692 = vmatpush1.msra.mxu0 0.0
        %2693 = vmatprep.subr.mxu0 0.0
        %2694 = vmatpush1.msra.mxu0 0.0
        %2695 = vmatprep.subr.mxu0 0.0
        %2696 = vmatpush1.msra.mxu0 0.0
        %2697 = vmatprep.subr.mxu0 0.0
        %2698 = vmatpush1.msra.mxu0 0.0
        %2699 = vmatprep.subr.mxu0 0.0
        %2700 = vmatpush1.msra.mxu0 0.0
        %2701 = vmatprep.subr.mxu0 0.0
        %2702 = vmatpush1.msra.mxu0 0.0
        %2703 = vmatprep.subr.mxu0 0.0
        %2704 = vmatpush1.msra.mxu0 0.0
        %2705 = vmatprep.subr.mxu0 0.0
        %2706 = vmatpush1.msra.mxu0 0.0
        %2707 = vmatprep.subr.mxu0 0.0
        %2708 = vmatpush1.msra.mxu0 0.0
        %2709 = vmatprep.subr.mxu0 0.0
        %2710 = vmatpush1.msra.mxu0 0.0
        %2711 = vmatprep.subr.mxu0 0.0
        %2712 = vmatpush1.msra.mxu0 0.0
        %2713 = vmatprep.subr.mxu0 0.0
        %2714 = vmatpush1.msra.mxu0 0.0
        %2715 = vmatprep.subr.mxu0 0.0
        %2716 = vmatpush1.msra.mxu0 0.0
        %2717 = vmatprep.subr.mxu0 0.0
        %2718 = vmatpush1.msra.mxu0 0.0
        %2719 = vmatprep.subr.mxu0 %v1617
        %2720 = vmatpush1.msra.mxu0 %v1615
        %2721 = vmatprep.subr.mxu0 %v1613
        %2722 = vmatpush1.msra.mxu0 %v1611
        %2723 = vmatprep.subr.mxu0 0.0
        %2724 = vmatpush2.msra.mxu0 0.0
        %2725 = vmatprep.subr.mxu0 0.0
        %2726 = vmatpush2.msra.mxu0 0.0
        %2727 = vmatprep.subr.mxu0 0.0
        %2728 = vmatpush2.msra.mxu0 0.0
        %2729 = vmatprep.subr.mxu0 0.0
        %2730 = vmatpush2.msra.mxu0 0.0
        %2731 = vmatprep.subr.mxu0 0.0
        %2732 = vmatpush2.msra.mxu0 0.0
        %2733 = vmatprep.subr.mxu0 0.0
        %2734 = vmatpush2.msra.mxu0 0.0
        %2735 = vmatprep.subr.mxu0 0.0
        %2736 = vmatpush2.msra.mxu0 0.0
        %2737 = vmatprep.subr.mxu0 0.0
        %2738 = vmatpush2.msra.mxu0 0.0
        %2739 = vmatprep.subr.mxu0 0.0
        %2740 = vmatpush2.msra.mxu0 0.0
        %2741 = vmatprep.subr.mxu0 0.0
        %2742 = vmatpush2.msra.mxu0 0.0
        %2743 = vmatprep.subr.mxu0 0.0
        %2744 = vmatpush2.msra.mxu0 0.0
        %2745 = vmatprep.subr.mxu0 0.0
        %2746 = vmatpush2.msra.mxu0 0.0
        %2747 = vmatprep.subr.mxu0 0.0
        %2748 = vmatpush2.msra.mxu0 0.0
        %2749 = vmatprep.subr.mxu0 0.0
        %2750 = vmatpush2.msra.mxu0 0.0
        %2751 = vmatprep.subr.mxu0 0.0
        %2752 = vmatpush2.msra.mxu0 0.0
        %2753 = vmatprep.subr.mxu0 0.0
        %2754 = vmatpush2.msra.mxu0 0.0
        %2755 = vmatprep.mubr.f32.mxu0 0.0
        %2756 = vmatmul.mubr.f32.gmra.mxu0 %v2547
        %v2757 = vpop.f32.mrf.mxu0
        %v2758 = vadd.f32 0.0, %v2757
        %v2759 = vpop.f32.mrf.mxu0
        %v2760 = vadd.f32 0.0, %v2759
        %2761 = vdwg.mxu0
        %2762 = vmatprep.subr.mxu0 0.0
        %2763 = vmatpush1.msra.mxu0 0.0
        %2764 = vmatprep.subr.mxu0 0.0
        %2765 = vmatpush1.msra.mxu0 0.0
        %2766 = vmatprep.subr.mxu0 0.0
        %2767 = vmatpush1.msra.mxu0 0.0
        %2768 = vmatprep.subr.mxu0 0.0
        %2769 = vmatpush1.msra.mxu0 0.0
        %2770 = vmatprep.subr.mxu0 0.0
        %2771 = vmatpush1.msra.mxu0 0.0
        %2772 = vmatprep.subr.mxu0 0.0
        %2773 = vmatpush1.msra.mxu0 0.0
        %2774 = vmatprep.subr.mxu0 0.0
        %2775 = vmatpush1.msra.mxu0 0.0
        %2776 = vmatprep.subr.mxu0 0.0
        %2777 = vmatpush1.msra.mxu0 0.0
        %2778 = vmatprep.subr.mxu0 0.0
        %2779 = vmatpush1.msra.mxu0 0.0
        %2780 = vmatprep.subr.mxu0 0.0
        %2781 = vmatpush1.msra.mxu0 0.0
        %2782 = vmatprep.subr.mxu0 0.0
        %2783 = vmatpush1.msra.mxu0 0.0
        %2784 = vmatprep.subr.mxu0 0.0
        %2785 = vmatpush1.msra.mxu0 0.0
        %2786 = vmatprep.subr.mxu0 0.0
        %2787 = vmatpush1.msra.mxu0 0.0
        %2788 = vmatprep.subr.mxu0 0.0
        %2789 = vmatpush1.msra.mxu0 0.0
        %2790 = vmatprep.subr.mxu0 %v1660
        %2791 = vmatpush1.msra.mxu0 %v1658
        %2792 = vmatprep.subr.mxu0 %v1656
        %2793 = vmatpush1.msra.mxu0 %v1654
        %2794 = vmatprep.subr.mxu0 0.0
        %2795 = vmatpush2.msra.mxu0 0.0
        %2796 = vmatprep.subr.mxu0 0.0
        %2797 = vmatpush2.msra.mxu0 0.0
        %2798 = vmatprep.subr.mxu0 0.0
        %2799 = vmatpush2.msra.mxu0 0.0
        %2800 = vmatprep.subr.mxu0 0.0
        %2801 = vmatpush2.msra.mxu0 0.0
        %2802 = vmatprep.subr.mxu0 0.0
        %2803 = vmatpush2.msra.mxu0 0.0
        %2804 = vmatprep.subr.mxu0 0.0
        %2805 = vmatpush2.msra.mxu0 0.0
        %2806 = vmatprep.subr.mxu0 0.0
        %2807 = vmatpush2.msra.mxu0 0.0
        %2808 = vmatprep.subr.mxu0 0.0
        %2809 = vmatpush2.msra.mxu0 0.0
        %2810 = vmatprep.subr.mxu0 0.0
        %2811 = vmatpush2.msra.mxu0 0.0
        %2812 = vmatprep.subr.mxu0 0.0
        %2813 = vmatpush2.msra.mxu0 0.0
        %2814 = vmatprep.subr.mxu0 0.0
        %2815 = vmatpush2.msra.mxu0 0.0
        %2816 = vmatprep.subr.mxu0 0.0
        %2817 = vmatpush2.msra.mxu0 0.0
        %2818 = vmatprep.subr.mxu0 0.0
        %2819 = vmatpush2.msra.mxu0 0.0
        %2820 = vmatprep.subr.mxu0 0.0
        %2821 = vmatpush2.msra.mxu0 0.0
        %2822 = vmatprep.subr.mxu0 0.0
        %2823 = vmatpush2.msra.mxu0 0.0
        %2824 = vmatprep.subr.mxu0 0.0
        %2825 = vmatpush2.msra.mxu0 0.0
        %2826 = vmatprep.mubr.f32.mxu0 0.0
        %2827 = vmatmul.mubr.f32.gmra.mxu0 %v2547
        %v2828 = vpop.f32.mrf.mxu0
        %v2829 = vadd.f32 0.0, %v2828
        %v2830 = vpop.f32.mrf.mxu0
        %v2831 = vadd.f32 0.0, %v2830
        %2832 = vdwg.mxu0
        %v2833 = vld [vmem:[#allocation2] sm:$0xff]
        %v2834 = vld [vmem:[#allocation2 + $0x8] sm:$0xff]
        %v2835 = vpack.c.bf16 %v2616, %v2616
        %v2836 = vpack.c.bf16 %v2618, %v2618
        %v2837 = vpack.c.bf16 %v2687, %v2687
        %v2838 = vpack.c.bf16 %v2689, %v2689
        %v2839 = vpack.c.bf16 %v2758, %v2758
        %v2840 = vpack.c.bf16 %v2760, %v2760
        %v2841 = vpack.c.bf16 %v2829, %v2829
        %v2842 = vpack.c.bf16 %v2831, %v2831
        %v2843 = vld [vmem:[%s806] sm:$0xff]
        %v2844 = vld [vmem:[%s806 + $0x8] sm:$0xff]
        %v2845 = vld [vmem:[%s806 + $0x10] sm:$0xff]
        %v2846 = vld [vmem:[%s806 + $0x18] sm:$0xff]
        %v2847 = vld [vmem:[%s806 + $0x20] sm:$0xff]
        %v2848 = vld [vmem:[%s806 + $0x28] sm:$0xff]
        %v2849 = vld [vmem:[%s806 + $0x30] sm:$0xff]
        %v2850 = vld [vmem:[%s806 + $0x38] sm:$0xff]
        %v2851 = vld [vmem:[%s806 + $0x40] sm:$0xff]
        %v2852 = vld [vmem:[%s806 + $0x48] sm:$0xff]
        %v2853 = vld [vmem:[%s806 + $0x50] sm:$0xff]
        %v2854 = vld [vmem:[%s806 + $0x58] sm:$0xff]
        %v2855 = vld [vmem:[%s806 + $0x60] sm:$0xff]
        %v2856 = vld [vmem:[%s806 + $0x68] sm:$0xff]
        %v2857 = vld [vmem:[%s806 + $0x70] sm:$0xff]
        %v2858 = vld [vmem:[%s806 + $0x78] sm:$0xff]
        %v2859 = vld [vmem:[%s806 + $0x80] sm:$0xff]
        %v2860 = vld [vmem:[%s806 + $0x88] sm:$0xff]
        %v2861 = vld [vmem:[%s806 + $0x90] sm:$0xff]
        %v2862 = vld [vmem:[%s806 + $0x98] sm:$0xff]
        %v2863 = vld [vmem:[%s806 + $0xa0] sm:$0xff]
        %v2864 = vld [vmem:[%s806 + $0xa8] sm:$0xff]
        %v2865 = vld [vmem:[%s806 + $0xb0] sm:$0xff]
        %v2866 = vld [vmem:[%s806 + $0xb8] sm:$0xff]
        %v2867 = vld [vmem:[%s806 + $0xc0] sm:$0xff]
        %v2868 = vld [vmem:[%s806 + $0xc8] sm:$0xff]
        %v2869 = vld [vmem:[%s806 + $0xd0] sm:$0xff]
        %v2870 = vld [vmem:[%s806 + $0xd8] sm:$0xff]
        %v2871 = vld [vmem:[%s806 + $0xe0] sm:$0xff]
        %v2872 = vld [vmem:[%s806 + $0xe8] sm:$0xff]
        %v2873 = vld [vmem:[%s806 + $0xf0] sm:$0xff]
        %v2874 = vld [vmem:[%s806 + $0xf8] sm:$0xff]
        %v2875 = vld [vmem:[%s806 + $0x100] sm:$0xff]
        %v2876 = vld [vmem:[%s806 + $0x108] sm:$0xff]
        %v2877 = vld [vmem:[%s806 + $0x110] sm:$0xff]
        %v2878 = vld [vmem:[%s806 + $0x118] sm:$0xff]
        %v2879 = vld [vmem:[%s806 + $0x120] sm:$0xff]
        %v2880 = vld [vmem:[%s806 + $0x128] sm:$0xff]
        %v2881 = vld [vmem:[%s806 + $0x130] sm:$0xff]
        %v2882 = vld [vmem:[%s806 + $0x138] sm:$0xff]
        %v2883 = vld [vmem:[%s806 + $0x140] sm:$0xff]
        %v2884 = vld [vmem:[%s806 + $0x148] sm:$0xff]
        %v2885 = vld [vmem:[%s806 + $0x150] sm:$0xff]
        %v2886 = vld [vmem:[%s806 + $0x158] sm:$0xff]
        %v2887 = vld [vmem:[%s806 + $0x160] sm:$0xff]
        %v2888 = vld [vmem:[%s806 + $0x168] sm:$0xff]
        %v2889 = vld [vmem:[%s806 + $0x170] sm:$0xff]
        %v2890 = vld [vmem:[%s806 + $0x178] sm:$0xff]
        %v2891 = vld [vmem:[%s806 + $0x180] sm:$0xff]
        %v2892 = vld [vmem:[%s806 + $0x188] sm:$0xff]
        %v2893 = vld [vmem:[%s806 + $0x190] sm:$0xff]
        %v2894 = vld [vmem:[%s806 + $0x198] sm:$0xff]
        %v2895 = vld [vmem:[%s806 + $0x1a0] sm:$0xff]
        %v2896 = vld [vmem:[%s806 + $0x1a8] sm:$0xff]
        %v2897 = vld [vmem:[%s806 + $0x1b0] sm:$0xff]
        %v2898 = vld [vmem:[%s806 + $0x1b8] sm:$0xff]
        %v2899 = vld [vmem:[%s806 + $0x1c0] sm:$0xff]
        %v2900 = vld [vmem:[%s806 + $0x1c8] sm:$0xff]
        %v2901 = vld [vmem:[%s806 + $0x1d0] sm:$0xff]
        %v2902 = vld [vmem:[%s806 + $0x1d8] sm:$0xff]
        %v2903 = vld [vmem:[%s806 + $0x1e0] sm:$0xff]
        %v2904 = vld [vmem:[%s806 + $0x1e8] sm:$0xff]
        %v2905 = vld [vmem:[%s806 + $0x1f0] sm:$0xff]
        %v2906 = vld [vmem:[%s806 + $0x1f8] sm:$0xff]
        %v2907 = vld [vmem:[%s806 + $0x200] sm:$0xff]
        %v2908 = vld [vmem:[%s806 + $0x208] sm:$0xff]
        %v2909 = vld [vmem:[%s806 + $0x210] sm:$0xff]
        %v2910 = vld [vmem:[%s806 + $0x218] sm:$0xff]
        %v2911 = vld [vmem:[%s806 + $0x220] sm:$0xff]
        %v2912 = vld [vmem:[%s806 + $0x228] sm:$0xff]
        %v2913 = vld [vmem:[%s806 + $0x230] sm:$0xff]
        %v2914 = vld [vmem:[%s806 + $0x238] sm:$0xff]
        %v2915 = vld [vmem:[%s806 + $0x240] sm:$0xff]
        %v2916 = vld [vmem:[%s806 + $0x248] sm:$0xff]
        %v2917 = vld [vmem:[%s806 + $0x250] sm:$0xff]
        %v2918 = vld [vmem:[%s806 + $0x258] sm:$0xff]
        %v2919 = vld [vmem:[%s806 + $0x260] sm:$0xff]
        %v2920 = vld [vmem:[%s806 + $0x268] sm:$0xff]
        %v2921 = vld [vmem:[%s806 + $0x270] sm:$0xff]
        %v2922 = vld [vmem:[%s806 + $0x278] sm:$0xff]
        %v2923 = vld [vmem:[%s806 + $0x280] sm:$0xff]
        %v2924 = vld [vmem:[%s806 + $0x288] sm:$0xff]
        %v2925 = vld [vmem:[%s806 + $0x290] sm:$0xff]
        %v2926 = vld [vmem:[%s806 + $0x298] sm:$0xff]
        %v2927 = vld [vmem:[%s806 + $0x2a0] sm:$0xff]
        %v2928 = vld [vmem:[%s806 + $0x2a8] sm:$0xff]
        %v2929 = vld [vmem:[%s806 + $0x2b0] sm:$0xff]
        %v2930 = vld [vmem:[%s806 + $0x2b8] sm:$0xff]
        %v2931 = vld [vmem:[%s806 + $0x2c0] sm:$0xff]
        %v2932 = vld [vmem:[%s806 + $0x2c8] sm:$0xff]
        %v2933 = vld [vmem:[%s806 + $0x2d0] sm:$0xff]
        %v2934 = vld [vmem:[%s806 + $0x2d8] sm:$0xff]
        %v2935 = vld [vmem:[%s806 + $0x2e0] sm:$0xff]
        %v2936 = vld [vmem:[%s806 + $0x2e8] sm:$0xff]
        %v2937 = vld [vmem:[%s806 + $0x2f0] sm:$0xff]
        %v2938 = vld [vmem:[%s806 + $0x2f8] sm:$0xff]
        %v2939 = vld [vmem:[%s806 + $0x300] sm:$0xff]
        %v2940 = vld [vmem:[%s806 + $0x308] sm:$0xff]
        %v2941 = vld [vmem:[%s806 + $0x310] sm:$0xff]
        %v2942 = vld [vmem:[%s806 + $0x318] sm:$0xff]
        %v2943 = vld [vmem:[%s806 + $0x320] sm:$0xff]
        %v2944 = vld [vmem:[%s806 + $0x328] sm:$0xff]
        %v2945 = vld [vmem:[%s806 + $0x330] sm:$0xff]
        %v2946 = vld [vmem:[%s806 + $0x338] sm:$0xff]
        %v2947 = vld [vmem:[%s806 + $0x340] sm:$0xff]
        %v2948 = vld [vmem:[%s806 + $0x348] sm:$0xff]
        %v2949 = vld [vmem:[%s806 + $0x350] sm:$0xff]
        %v2950 = vld [vmem:[%s806 + $0x358] sm:$0xff]
        %v2951 = vld [vmem:[%s806 + $0x360] sm:$0xff]
        %v2952 = vld [vmem:[%s806 + $0x368] sm:$0xff]
        %v2953 = vld [vmem:[%s806 + $0x370] sm:$0xff]
        %v2954 = vld [vmem:[%s806 + $0x378] sm:$0xff]
        %v2955 = vld [vmem:[%s806 + $0x380] sm:$0xff]
        %v2956 = vld [vmem:[%s806 + $0x388] sm:$0xff]
        %v2957 = vld [vmem:[%s806 + $0x390] sm:$0xff]
        %v2958 = vld [vmem:[%s806 + $0x398] sm:$0xff]
        %v2959 = vld [vmem:[%s806 + $0x3a0] sm:$0xff]
        %v2960 = vld [vmem:[%s806 + $0x3a8] sm:$0xff]
        %v2961 = vld [vmem:[%s806 + $0x3b0] sm:$0xff]
        %v2962 = vld [vmem:[%s806 + $0x3b8] sm:$0xff]
        %v2963 = vld [vmem:[%s806 + $0x3c0] sm:$0xff]
        %v2964 = vld [vmem:[%s806 + $0x3c8] sm:$0xff]
        %v2965 = vld [vmem:[%s806 + $0x3d0] sm:$0xff]
        %v2966 = vld [vmem:[%s806 + $0x3d8] sm:$0xff]
        %v2967 = vld [vmem:[%s806 + $0x3e0] sm:$0xff]
        %v2968 = vld [vmem:[%s806 + $0x3e8] sm:$0xff]
        %v2969 = vld [vmem:[%s806 + $0x3f0] sm:$0xff]
        %v2970 = vld [vmem:[%s806 + $0x3f8] sm:$0xff]
        %v2971 = vld [vmem:[%s806 + $0x400] sm:$0xff]
        %v2972 = vld [vmem:[%s806 + $0x408] sm:$0xff]
        %v2973 = vld [vmem:[%s806 + $0x410] sm:$0xff]
        %v2974 = vld [vmem:[%s806 + $0x418] sm:$0xff]
        %v2975 = vld [vmem:[%s806 + $0x420] sm:$0xff]
        %v2976 = vld [vmem:[%s806 + $0x428] sm:$0xff]
        %v2977 = vld [vmem:[%s806 + $0x430] sm:$0xff]
        %v2978 = vld [vmem:[%s806 + $0x438] sm:$0xff]
        %v2979 = vld [vmem:[%s806 + $0x440] sm:$0xff]
        %v2980 = vld [vmem:[%s806 + $0x448] sm:$0xff]
        %v2981 = vld [vmem:[%s806 + $0x450] sm:$0xff]
        %v2982 = vld [vmem:[%s806 + $0x458] sm:$0xff]
        %v2983 = vld [vmem:[%s806 + $0x460] sm:$0xff]
        %v2984 = vld [vmem:[%s806 + $0x468] sm:$0xff]
        %v2985 = vld [vmem:[%s806 + $0x470] sm:$0xff]
        %v2986 = vld [vmem:[%s806 + $0x478] sm:$0xff]
        %v2987 = vld [vmem:[%s806 + $0x480] sm:$0xff]
        %v2988 = vld [vmem:[%s806 + $0x488] sm:$0xff]
        %v2989 = vld [vmem:[%s806 + $0x490] sm:$0xff]
        %v2990 = vld [vmem:[%s806 + $0x498] sm:$0xff]
        %v2991 = vld [vmem:[%s806 + $0x4a0] sm:$0xff]
        %v2992 = vld [vmem:[%s806 + $0x4a8] sm:$0xff]
        %v2993 = vld [vmem:[%s806 + $0x4b0] sm:$0xff]
        %v2994 = vld [vmem:[%s806 + $0x4b8] sm:$0xff]
        %v2995 = vld [vmem:[%s806 + $0x4c0] sm:$0xff]
        %v2996 = vld [vmem:[%s806 + $0x4c8] sm:$0xff]
        %v2997 = vld [vmem:[%s806 + $0x4d0] sm:$0xff]
        %v2998 = vld [vmem:[%s806 + $0x4d8] sm:$0xff]
        %v2999 = vld [vmem:[%s806 + $0x4e0] sm:$0xff]
        %v3000 = vld [vmem:[%s806 + $0x4e8] sm:$0xff]
        %v3001 = vld [vmem:[%s806 + $0x4f0] sm:$0xff]
        %v3002 = vld [vmem:[%s806 + $0x4f8] sm:$0xff]
        %v3003 = vld [vmem:[%s806 + $0x500] sm:$0xff]
        %v3004 = vld [vmem:[%s806 + $0x508] sm:$0xff]
        %v3005 = vld [vmem:[%s806 + $0x510] sm:$0xff]
        %v3006 = vld [vmem:[%s806 + $0x518] sm:$0xff]
        %v3007 = vld [vmem:[%s806 + $0x520] sm:$0xff]
        %v3008 = vld [vmem:[%s806 + $0x528] sm:$0xff]
        %v3009 = vld [vmem:[%s806 + $0x530] sm:$0xff]
        %v3010 = vld [vmem:[%s806 + $0x538] sm:$0xff]
        %v3011 = vld [vmem:[%s806 + $0x540] sm:$0xff]
        %v3012 = vld [vmem:[%s806 + $0x548] sm:$0xff]
        %v3013 = vld [vmem:[%s806 + $0x550] sm:$0xff]
        %v3014 = vld [vmem:[%s806 + $0x558] sm:$0xff]
        %v3015 = vld [vmem:[%s806 + $0x560] sm:$0xff]
        %v3016 = vld [vmem:[%s806 + $0x568] sm:$0xff]
        %v3017 = vld [vmem:[%s806 + $0x570] sm:$0xff]
        %v3018 = vld [vmem:[%s806 + $0x578] sm:$0xff]
        %v3019 = vld [vmem:[%s806 + $0x580] sm:$0xff]
        %v3020 = vld [vmem:[%s806 + $0x588] sm:$0xff]
        %v3021 = vld [vmem:[%s806 + $0x590] sm:$0xff]
        %v3022 = vld [vmem:[%s806 + $0x598] sm:$0xff]
        %v3023 = vld [vmem:[%s806 + $0x5a0] sm:$0xff]
        %v3024 = vld [vmem:[%s806 + $0x5a8] sm:$0xff]
        %v3025 = vld [vmem:[%s806 + $0x5b0] sm:$0xff]
        %v3026 = vld [vmem:[%s806 + $0x5b8] sm:$0xff]
        %v3027 = vld [vmem:[%s806 + $0x5c0] sm:$0xff]
        %v3028 = vld [vmem:[%s806 + $0x5c8] sm:$0xff]
        %v3029 = vld [vmem:[%s806 + $0x5d0] sm:$0xff]
        %v3030 = vld [vmem:[%s806 + $0x5d8] sm:$0xff]
        %v3031 = vld [vmem:[%s806 + $0x5e0] sm:$0xff]
        %v3032 = vld [vmem:[%s806 + $0x5e8] sm:$0xff]
        %v3033 = vld [vmem:[%s806 + $0x5f0] sm:$0xff]
        %v3034 = vld [vmem:[%s806 + $0x5f8] sm:$0xff]
        %v3035 = vld [vmem:[%s806 + $0x600] sm:$0xff]
        %v3036 = vld [vmem:[%s806 + $0x608] sm:$0xff]
        %v3037 = vld [vmem:[%s806 + $0x610] sm:$0xff]
        %v3038 = vld [vmem:[%s806 + $0x618] sm:$0xff]
        %v3039 = vld [vmem:[%s806 + $0x620] sm:$0xff]
        %v3040 = vld [vmem:[%s806 + $0x628] sm:$0xff]
        %v3041 = vld [vmem:[%s806 + $0x630] sm:$0xff]
        %v3042 = vld [vmem:[%s806 + $0x638] sm:$0xff]
        %v3043 = vld [vmem:[%s806 + $0x640] sm:$0xff]
        %v3044 = vld [vmem:[%s806 + $0x648] sm:$0xff]
        %v3045 = vld [vmem:[%s806 + $0x650] sm:$0xff]
        %v3046 = vld [vmem:[%s806 + $0x658] sm:$0xff]
        %v3047 = vld [vmem:[%s806 + $0x660] sm:$0xff]
        %v3048 = vld [vmem:[%s806 + $0x668] sm:$0xff]
        %v3049 = vld [vmem:[%s806 + $0x670] sm:$0xff]
        %v3050 = vld [vmem:[%s806 + $0x678] sm:$0xff]
        %v3051 = vld [vmem:[%s806 + $0x680] sm:$0xff]
        %v3052 = vld [vmem:[%s806 + $0x688] sm:$0xff]
        %v3053 = vld [vmem:[%s806 + $0x690] sm:$0xff]
        %v3054 = vld [vmem:[%s806 + $0x698] sm:$0xff]
        %v3055 = vld [vmem:[%s806 + $0x6a0] sm:$0xff]
        %v3056 = vld [vmem:[%s806 + $0x6a8] sm:$0xff]
        %v3057 = vld [vmem:[%s806 + $0x6b0] sm:$0xff]
        %v3058 = vld [vmem:[%s806 + $0x6b8] sm:$0xff]
        %v3059 = vld [vmem:[%s806 + $0x6c0] sm:$0xff]
        %v3060 = vld [vmem:[%s806 + $0x6c8] sm:$0xff]
        %v3061 = vld [vmem:[%s806 + $0x6d0] sm:$0xff]
        %v3062 = vld [vmem:[%s806 + $0x6d8] sm:$0xff]
        %v3063 = vld [vmem:[%s806 + $0x6e0] sm:$0xff]
        %v3064 = vld [vmem:[%s806 + $0x6e8] sm:$0xff]
        %v3065 = vld [vmem:[%s806 + $0x6f0] sm:$0xff]
        %v3066 = vld [vmem:[%s806 + $0x6f8] sm:$0xff]
        %v3067 = vld [vmem:[%s806 + $0x700] sm:$0xff]
        %v3068 = vld [vmem:[%s806 + $0x708] sm:$0xff]
        %v3069 = vld [vmem:[%s806 + $0x710] sm:$0xff]
        %v3070 = vld [vmem:[%s806 + $0x718] sm:$0xff]
        %v3071 = vld [vmem:[%s806 + $0x720] sm:$0xff]
        %v3072 = vld [vmem:[%s806 + $0x728] sm:$0xff]
        %v3073 = vld [vmem:[%s806 + $0x730] sm:$0xff]
        %v3074 = vld [vmem:[%s806 + $0x738] sm:$0xff]
        %v3075 = vld [vmem:[%s806 + $0x740] sm:$0xff]
        %v3076 = vld [vmem:[%s806 + $0x748] sm:$0xff]
        %v3077 = vld [vmem:[%s806 + $0x750] sm:$0xff]
        %v3078 = vld [vmem:[%s806 + $0x758] sm:$0xff]
        %v3079 = vld [vmem:[%s806 + $0x760] sm:$0xff]
        %v3080 = vld [vmem:[%s806 + $0x768] sm:$0xff]
        %v3081 = vld [vmem:[%s806 + $0x770] sm:$0xff]
        %v3082 = vld [vmem:[%s806 + $0x778] sm:$0xff]
        %v3083 = vld [vmem:[%s806 + $0x780] sm:$0xff]
        %v3084 = vld [vmem:[%s806 + $0x788] sm:$0xff]
        %v3085 = vld [vmem:[%s806 + $0x790] sm:$0xff]
        %v3086 = vld [vmem:[%s806 + $0x798] sm:$0xff]
        %v3087 = vld [vmem:[%s806 + $0x7a0] sm:$0xff]
        %v3088 = vld [vmem:[%s806 + $0x7a8] sm:$0xff]
        %v3089 = vld [vmem:[%s806 + $0x7b0] sm:$0xff]
        %v3090 = vld [vmem:[%s806 + $0x7b8] sm:$0xff]
        %v3091 = vld [vmem:[%s806 + $0x7c0] sm:$0xff]
        %v3092 = vld [vmem:[%s806 + $0x7c8] sm:$0xff]
        %v3093 = vld [vmem:[%s806 + $0x7d0] sm:$0xff]
        %v3094 = vld [vmem:[%s806 + $0x7d8] sm:$0xff]
        %v3095 = vld [vmem:[%s806 + $0x7e0] sm:$0xff]
        %v3096 = vld [vmem:[%s806 + $0x7e8] sm:$0xff]
        %v3097 = vld [vmem:[%s806 + $0x7f0] sm:$0xff]
        %v3098 = vld [vmem:[%s806 + $0x7f8] sm:$0xff]
        %v3099 = vld [vmem:[%s806 + $0x800] sm:$0xff]
        %v3100 = vld [vmem:[%s806 + $0x808] sm:$0xff]
        %v3101 = vld [vmem:[%s806 + $0x810] sm:$0xff]
        %v3102 = vld [vmem:[%s806 + $0x818] sm:$0xff]
        %v3103 = vld [vmem:[%s806 + $0x820] sm:$0xff]
        %v3104 = vld [vmem:[%s806 + $0x828] sm:$0xff]
        %v3105 = vld [vmem:[%s806 + $0x830] sm:$0xff]
        %v3106 = vld [vmem:[%s806 + $0x838] sm:$0xff]
        %v3107 = vld [vmem:[%s806 + $0x840] sm:$0xff]
        %v3108 = vld [vmem:[%s806 + $0x848] sm:$0xff]
        %v3109 = vld [vmem:[%s806 + $0x850] sm:$0xff]
        %v3110 = vld [vmem:[%s806 + $0x858] sm:$0xff]
        %v3111 = vld [vmem:[%s806 + $0x860] sm:$0xff]
        %v3112 = vld [vmem:[%s806 + $0x868] sm:$0xff]
        %v3113 = vld [vmem:[%s806 + $0x870] sm:$0xff]
        %v3114 = vld [vmem:[%s806 + $0x878] sm:$0xff]
        %v3115 = vld [vmem:[%s806 + $0x880] sm:$0xff]
        %v3116 = vld [vmem:[%s806 + $0x888] sm:$0xff]
        %v3117 = vld [vmem:[%s806 + $0x890] sm:$0xff]
        %v3118 = vld [vmem:[%s806 + $0x898] sm:$0xff]
        %v3119 = vld [vmem:[%s806 + $0x8a0] sm:$0xff]
        %v3120 = vld [vmem:[%s806 + $0x8a8] sm:$0xff]
        %v3121 = vld [vmem:[%s806 + $0x8b0] sm:$0xff]
        %v3122 = vld [vmem:[%s806 + $0x8b8] sm:$0xff]
        %v3123 = vld [vmem:[%s806 + $0x8c0] sm:$0xff]
        %v3124 = vld [vmem:[%s806 + $0x8c8] sm:$0xff]
        %v3125 = vld [vmem:[%s806 + $0x8d0] sm:$0xff]
        %v3126 = vld [vmem:[%s806 + $0x8d8] sm:$0xff]
        %v3127 = vld [vmem:[%s806 + $0x8e0] sm:$0xff]
        %v3128 = vld [vmem:[%s806 + $0x8e8] sm:$0xff]
        %v3129 = vld [vmem:[%s806 + $0x8f0] sm:$0xff]
        %v3130 = vld [vmem:[%s806 + $0x8f8] sm:$0xff]
        %v3131 = vld [vmem:[%s806 + $0x900] sm:$0xff]
        %v3132 = vld [vmem:[%s806 + $0x908] sm:$0xff]
        %v3133 = vld [vmem:[%s806 + $0x910] sm:$0xff]
        %v3134 = vld [vmem:[%s806 + $0x918] sm:$0xff]
        %v3135 = vld [vmem:[%s806 + $0x920] sm:$0xff]
        %v3136 = vld [vmem:[%s806 + $0x928] sm:$0xff]
        %v3137 = vld [vmem:[%s806 + $0x930] sm:$0xff]
        %v3138 = vld [vmem:[%s806 + $0x938] sm:$0xff]
        %v3139 = vld [vmem:[%s806 + $0x940] sm:$0xff]
        %v3140 = vld [vmem:[%s806 + $0x948] sm:$0xff]
        %v3141 = vld [vmem:[%s806 + $0x950] sm:$0xff]
        %v3142 = vld [vmem:[%s806 + $0x958] sm:$0xff]
        %v3143 = vld [vmem:[%s806 + $0x960] sm:$0xff]
        %v3144 = vld [vmem:[%s806 + $0x968] sm:$0xff]
        %v3145 = vld [vmem:[%s806 + $0x970] sm:$0xff]
        %v3146 = vld [vmem:[%s806 + $0x978] sm:$0xff]
        %v3147 = vld [vmem:[%s806 + $0x980] sm:$0xff]
        %v3148 = vld [vmem:[%s806 + $0x988] sm:$0xff]
        %v3149 = vld [vmem:[%s806 + $0x990] sm:$0xff]
        %v3150 = vld [vmem:[%s806 + $0x998] sm:$0xff]
        %v3151 = vld [vmem:[%s806 + $0x9a0] sm:$0xff]
        %v3152 = vld [vmem:[%s806 + $0x9a8] sm:$0xff]
        %v3153 = vld [vmem:[%s806 + $0x9b0] sm:$0xff]
        %v3154 = vld [vmem:[%s806 + $0x9b8] sm:$0xff]
        %v3155 = vld [vmem:[%s806 + $0x9c0] sm:$0xff]
        %v3156 = vld [vmem:[%s806 + $0x9c8] sm:$0xff]
        %v3157 = vld [vmem:[%s806 + $0x9d0] sm:$0xff]
        %v3158 = vld [vmem:[%s806 + $0x9d8] sm:$0xff]
        %v3159 = vld [vmem:[%s806 + $0x9e0] sm:$0xff]
        %v3160 = vld [vmem:[%s806 + $0x9e8] sm:$0xff]
        %v3161 = vld [vmem:[%s806 + $0x9f0] sm:$0xff]
        %v3162 = vld [vmem:[%s806 + $0x9f8] sm:$0xff]
        %v3163 = vld [vmem:[%s806 + $0xa00] sm:$0xff]
        %v3164 = vld [vmem:[%s806 + $0xa08] sm:$0xff]
        %v3165 = vld [vmem:[%s806 + $0xa10] sm:$0xff]
        %v3166 = vld [vmem:[%s806 + $0xa18] sm:$0xff]
        %v3167 = vld [vmem:[%s806 + $0xa20] sm:$0xff]
        %v3168 = vld [vmem:[%s806 + $0xa28] sm:$0xff]
        %v3169 = vld [vmem:[%s806 + $0xa30] sm:$0xff]
        %v3170 = vld [vmem:[%s806 + $0xa38] sm:$0xff]
        %v3171 = vld [vmem:[%s806 + $0xa40] sm:$0xff]
        %v3172 = vld [vmem:[%s806 + $0xa48] sm:$0xff]
        %v3173 = vld [vmem:[%s806 + $0xa50] sm:$0xff]
        %v3174 = vld [vmem:[%s806 + $0xa58] sm:$0xff]
        %v3175 = vld [vmem:[%s806 + $0xa60] sm:$0xff]
        %v3176 = vld [vmem:[%s806 + $0xa68] sm:$0xff]
        %v3177 = vld [vmem:[%s806 + $0xa70] sm:$0xff]
        %v3178 = vld [vmem:[%s806 + $0xa78] sm:$0xff]
        %v3179 = vld [vmem:[%s806 + $0xa80] sm:$0xff]
        %v3180 = vld [vmem:[%s806 + $0xa88] sm:$0xff]
        %v3181 = vld [vmem:[%s806 + $0xa90] sm:$0xff]
        %v3182 = vld [vmem:[%s806 + $0xa98] sm:$0xff]
        %v3183 = vld [vmem:[%s806 + $0xaa0] sm:$0xff]
        %v3184 = vld [vmem:[%s806 + $0xaa8] sm:$0xff]
        %v3185 = vld [vmem:[%s806 + $0xab0] sm:$0xff]
        %v3186 = vld [vmem:[%s806 + $0xab8] sm:$0xff]
        %v3187 = vld [vmem:[%s806 + $0xac0] sm:$0xff]
        %v3188 = vld [vmem:[%s806 + $0xac8] sm:$0xff]
        %v3189 = vld [vmem:[%s806 + $0xad0] sm:$0xff]
        %v3190 = vld [vmem:[%s806 + $0xad8] sm:$0xff]
        %v3191 = vld [vmem:[%s806 + $0xae0] sm:$0xff]
        %v3192 = vld [vmem:[%s806 + $0xae8] sm:$0xff]
        %v3193 = vld [vmem:[%s806 + $0xaf0] sm:$0xff]
        %v3194 = vld [vmem:[%s806 + $0xaf8] sm:$0xff]
        %v3195 = vld [vmem:[%s806 + $0xb00] sm:$0xff]
        %v3196 = vld [vmem:[%s806 + $0xb08] sm:$0xff]
        %v3197 = vld [vmem:[%s806 + $0xb10] sm:$0xff]
        %v3198 = vld [vmem:[%s806 + $0xb18] sm:$0xff]
        %v3199 = vld [vmem:[%s806 + $0xb20] sm:$0xff]
        %v3200 = vld [vmem:[%s806 + $0xb28] sm:$0xff]
        %v3201 = vld [vmem:[%s806 + $0xb30] sm:$0xff]
        %v3202 = vld [vmem:[%s806 + $0xb38] sm:$0xff]
        %v3203 = vld [vmem:[%s806 + $0xb40] sm:$0xff]
        %v3204 = vld [vmem:[%s806 + $0xb48] sm:$0xff]
        %v3205 = vld [vmem:[%s806 + $0xb50] sm:$0xff]
        %v3206 = vld [vmem:[%s806 + $0xb58] sm:$0xff]
        %v3207 = vld [vmem:[%s806 + $0xb60] sm:$0xff]
        %v3208 = vld [vmem:[%s806 + $0xb68] sm:$0xff]
        %v3209 = vld [vmem:[%s806 + $0xb70] sm:$0xff]
        %v3210 = vld [vmem:[%s806 + $0xb78] sm:$0xff]
        %v3211 = vld [vmem:[%s806 + $0xb80] sm:$0xff]
        %v3212 = vld [vmem:[%s806 + $0xb88] sm:$0xff]
        %v3213 = vld [vmem:[%s806 + $0xb90] sm:$0xff]
        %v3214 = vld [vmem:[%s806 + $0xb98] sm:$0xff]
        %v3215 = vld [vmem:[%s806 + $0xba0] sm:$0xff]
        %v3216 = vld [vmem:[%s806 + $0xba8] sm:$0xff]
        %v3217 = vld [vmem:[%s806 + $0xbb0] sm:$0xff]
        %v3218 = vld [vmem:[%s806 + $0xbb8] sm:$0xff]
        %v3219 = vld [vmem:[%s806 + $0xbc0] sm:$0xff]
        %v3220 = vld [vmem:[%s806 + $0xbc8] sm:$0xff]
        %v3221 = vld [vmem:[%s806 + $0xbd0] sm:$0xff]
        %v3222 = vld [vmem:[%s806 + $0xbd8] sm:$0xff]
        %v3223 = vld [vmem:[%s806 + $0xbe0] sm:$0xff]
        %v3224 = vld [vmem:[%s806 + $0xbe8] sm:$0xff]
        %v3225 = vld [vmem:[%s806 + $0xbf0] sm:$0xff]
        %v3226 = vld [vmem:[%s806 + $0xbf8] sm:$0xff]
        %v3227 = vld [vmem:[%s806 + $0xc00] sm:$0xff]
        %v3228 = vld [vmem:[%s806 + $0xc08] sm:$0xff]
        %v3229 = vld [vmem:[%s806 + $0xc10] sm:$0xff]
        %v3230 = vld [vmem:[%s806 + $0xc18] sm:$0xff]
        %v3231 = vld [vmem:[%s806 + $0xc20] sm:$0xff]
        %v3232 = vld [vmem:[%s806 + $0xc28] sm:$0xff]
        %v3233 = vld [vmem:[%s806 + $0xc30] sm:$0xff]
        %v3234 = vld [vmem:[%s806 + $0xc38] sm:$0xff]
        %v3235 = vld [vmem:[%s806 + $0xc40] sm:$0xff]
        %v3236 = vld [vmem:[%s806 + $0xc48] sm:$0xff]
        %v3237 = vld [vmem:[%s806 + $0xc50] sm:$0xff]
        %v3238 = vld [vmem:[%s806 + $0xc58] sm:$0xff]
        %v3239 = vld [vmem:[%s806 + $0xc60] sm:$0xff]
        %v3240 = vld [vmem:[%s806 + $0xc68] sm:$0xff]
        %v3241 = vld [vmem:[%s806 + $0xc70] sm:$0xff]
        %v3242 = vld [vmem:[%s806 + $0xc78] sm:$0xff]
        %v3243 = vld [vmem:[%s806 + $0xc80] sm:$0xff]
        %v3244 = vld [vmem:[%s806 + $0xc88] sm:$0xff]
        %v3245 = vld [vmem:[%s806 + $0xc90] sm:$0xff]
        %v3246 = vld [vmem:[%s806 + $0xc98] sm:$0xff]
        %v3247 = vld [vmem:[%s806 + $0xca0] sm:$0xff]
        %v3248 = vld [vmem:[%s806 + $0xca8] sm:$0xff]
        %v3249 = vld [vmem:[%s806 + $0xcb0] sm:$0xff]
        %v3250 = vld [vmem:[%s806 + $0xcb8] sm:$0xff]
        %v3251 = vld [vmem:[%s806 + $0xcc0] sm:$0xff]
        %v3252 = vld [vmem:[%s806 + $0xcc8] sm:$0xff]
        %v3253 = vld [vmem:[%s806 + $0xcd0] sm:$0xff]
        %v3254 = vld [vmem:[%s806 + $0xcd8] sm:$0xff]
        %v3255 = vld [vmem:[%s806 + $0xce0] sm:$0xff]
        %v3256 = vld [vmem:[%s806 + $0xce8] sm:$0xff]
        %v3257 = vld [vmem:[%s806 + $0xcf0] sm:$0xff]
        %v3258 = vld [vmem:[%s806 + $0xcf8] sm:$0xff]
        %v3259 = vld [vmem:[%s806 + $0xd00] sm:$0xff]
        %v3260 = vld [vmem:[%s806 + $0xd08] sm:$0xff]
        %v3261 = vld [vmem:[%s806 + $0xd10] sm:$0xff]
        %v3262 = vld [vmem:[%s806 + $0xd18] sm:$0xff]
        %v3263 = vld [vmem:[%s806 + $0xd20] sm:$0xff]
        %v3264 = vld [vmem:[%s806 + $0xd28] sm:$0xff]
        %v3265 = vld [vmem:[%s806 + $0xd30] sm:$0xff]
        %v3266 = vld [vmem:[%s806 + $0xd38] sm:$0xff]
        %v3267 = vld [vmem:[%s806 + $0xd40] sm:$0xff]
        %v3268 = vld [vmem:[%s806 + $0xd48] sm:$0xff]
        %v3269 = vld [vmem:[%s806 + $0xd50] sm:$0xff]
        %v3270 = vld [vmem:[%s806 + $0xd58] sm:$0xff]
        %v3271 = vld [vmem:[%s806 + $0xd60] sm:$0xff]
        %v3272 = vld [vmem:[%s806 + $0xd68] sm:$0xff]
        %v3273 = vld [vmem:[%s806 + $0xd70] sm:$0xff]
        %v3274 = vld [vmem:[%s806 + $0xd78] sm:$0xff]
        %v3275 = vld [vmem:[%s806 + $0xd80] sm:$0xff]
        %v3276 = vld [vmem:[%s806 + $0xd88] sm:$0xff]
        %v3277 = vld [vmem:[%s806 + $0xd90] sm:$0xff]
        %v3278 = vld [vmem:[%s806 + $0xd98] sm:$0xff]
        %v3279 = vld [vmem:[%s806 + $0xda0] sm:$0xff]
        %v3280 = vld [vmem:[%s806 + $0xda8] sm:$0xff]
        %v3281 = vld [vmem:[%s806 + $0xdb0] sm:$0xff]
        %v3282 = vld [vmem:[%s806 + $0xdb8] sm:$0xff]
        %v3283 = vld [vmem:[%s806 + $0xdc0] sm:$0xff]
        %v3284 = vld [vmem:[%s806 + $0xdc8] sm:$0xff]
        %v3285 = vld [vmem:[%s806 + $0xdd0] sm:$0xff]
        %v3286 = vld [vmem:[%s806 + $0xdd8] sm:$0xff]
        %v3287 = vld [vmem:[%s806 + $0xde0] sm:$0xff]
        %v3288 = vld [vmem:[%s806 + $0xde8] sm:$0xff]
        %v3289 = vld [vmem:[%s806 + $0xdf0] sm:$0xff]
        %v3290 = vld [vmem:[%s806 + $0xdf8] sm:$0xff]
        %v3291 = vld [vmem:[%s806 + $0xe00] sm:$0xff]
        %v3292 = vld [vmem:[%s806 + $0xe08] sm:$0xff]
        %v3293 = vld [vmem:[%s806 + $0xe10] sm:$0xff]
        %v3294 = vld [vmem:[%s806 + $0xe18] sm:$0xff]
        %v3295 = vld [vmem:[%s806 + $0xe20] sm:$0xff]
        %v3296 = vld [vmem:[%s806 + $0xe28] sm:$0xff]
        %v3297 = vld [vmem:[%s806 + $0xe30] sm:$0xff]
        %v3298 = vld [vmem:[%s806 + $0xe38] sm:$0xff]
        %v3299 = vld [vmem:[%s806 + $0xe40] sm:$0xff]
        %v3300 = vld [vmem:[%s806 + $0xe48] sm:$0xff]
        %v3301 = vld [vmem:[%s806 + $0xe50] sm:$0xff]
        %v3302 = vld [vmem:[%s806 + $0xe58] sm:$0xff]
        %v3303 = vld [vmem:[%s806 + $0xe60] sm:$0xff]
        %v3304 = vld [vmem:[%s806 + $0xe68] sm:$0xff]
        %v3305 = vld [vmem:[%s806 + $0xe70] sm:$0xff]
        %v3306 = vld [vmem:[%s806 + $0xe78] sm:$0xff]
        %v3307 = vld [vmem:[%s806 + $0xe80] sm:$0xff]
        %v3308 = vld [vmem:[%s806 + $0xe88] sm:$0xff]
        %v3309 = vld [vmem:[%s806 + $0xe90] sm:$0xff]
        %v3310 = vld [vmem:[%s806 + $0xe98] sm:$0xff]
        %v3311 = vld [vmem:[%s806 + $0xea0] sm:$0xff]
        %v3312 = vld [vmem:[%s806 + $0xea8] sm:$0xff]
        %v3313 = vld [vmem:[%s806 + $0xeb0] sm:$0xff]
        %v3314 = vld [vmem:[%s806 + $0xeb8] sm:$0xff]
        %v3315 = vld [vmem:[%s806 + $0xec0] sm:$0xff]
        %v3316 = vld [vmem:[%s806 + $0xec8] sm:$0xff]
        %v3317 = vld [vmem:[%s806 + $0xed0] sm:$0xff]
        %v3318 = vld [vmem:[%s806 + $0xed8] sm:$0xff]
        %v3319 = vld [vmem:[%s806 + $0xee0] sm:$0xff]
        %v3320 = vld [vmem:[%s806 + $0xee8] sm:$0xff]
        %v3321 = vld [vmem:[%s806 + $0xef0] sm:$0xff]
        %v3322 = vld [vmem:[%s806 + $0xef8] sm:$0xff]
        %v3323 = vld [vmem:[%s806 + $0xf00] sm:$0xff]
        %v3324 = vld [vmem:[%s806 + $0xf08] sm:$0xff]
        %v3325 = vld [vmem:[%s806 + $0xf10] sm:$0xff]
        %v3326 = vld [vmem:[%s806 + $0xf18] sm:$0xff]
        %v3327 = vld [vmem:[%s806 + $0xf20] sm:$0xff]
        %v3328 = vld [vmem:[%s806 + $0xf28] sm:$0xff]
        %v3329 = vld [vmem:[%s806 + $0xf30] sm:$0xff]
        %v3330 = vld [vmem:[%s806 + $0xf38] sm:$0xff]
        %v3331 = vld [vmem:[%s806 + $0xf40] sm:$0xff]
        %v3332 = vld [vmem:[%s806 + $0xf48] sm:$0xff]
        %v3333 = vld [vmem:[%s806 + $0xf50] sm:$0xff]
        %v3334 = vld [vmem:[%s806 + $0xf58] sm:$0xff]
        %v3335 = vld [vmem:[%s806 + $0xf60] sm:$0xff]
        %v3336 = vld [vmem:[%s806 + $0xf68] sm:$0xff]
        %v3337 = vld [vmem:[%s806 + $0xf70] sm:$0xff]
        %v3338 = vld [vmem:[%s806 + $0xf78] sm:$0xff]
        %v3339 = vld [vmem:[%s806 + $0xf80] sm:$0xff]
        %v3340 = vld [vmem:[%s806 + $0xf88] sm:$0xff]
        %v3341 = vld [vmem:[%s806 + $0xf90] sm:$0xff]
        %v3342 = vld [vmem:[%s806 + $0xf98] sm:$0xff]
        %v3343 = vld [vmem:[%s806 + $0xfa0] sm:$0xff]
        %v3344 = vld [vmem:[%s806 + $0xfa8] sm:$0xff]
        %v3345 = vld [vmem:[%s806 + $0xfb0] sm:$0xff]
        %v3346 = vld [vmem:[%s806 + $0xfb8] sm:$0xff]
        %v3347 = vld [vmem:[%s806 + $0xfc0] sm:$0xff]
        %v3348 = vld [vmem:[%s806 + $0xfc8] sm:$0xff]
        %v3349 = vld [vmem:[%s806 + $0xfd0] sm:$0xff]
        %v3350 = vld [vmem:[%s806 + $0xfd8] sm:$0xff]
        %v3351 = vld [vmem:[%s806 + $0xfe0] sm:$0xff]
        %v3352 = vld [vmem:[%s806 + $0xfe8] sm:$0xff]
        %v3353 = vld [vmem:[%s806 + $0xff0] sm:$0xff]
        %v3354 = vld [vmem:[%s806 + $0xff8] sm:$0xff]
        %v3867 = vunpack.c.l.b16 %v2843
        %v3868 = vunpack.c.h.b16 %v2843
        %v3869 = vunpack.c.l.b16 %v2844
        %v3870 = vunpack.c.h.b16 %v2844
        %v3871 = vunpack.c.l.b16 %v2845
        %v3872 = vunpack.c.h.b16 %v2845
        %v3873 = vunpack.c.l.b16 %v2846
        %v3874 = vunpack.c.h.b16 %v2846
        %v3875 = vunpack.c.l.b16 %v2847
        %v3876 = vunpack.c.h.b16 %v2847
        %v3877 = vunpack.c.l.b16 %v2848
        %v3878 = vunpack.c.h.b16 %v2848
        %v3879 = vunpack.c.l.b16 %v2849
        %v3880 = vunpack.c.h.b16 %v2849
        %v3881 = vunpack.c.l.b16 %v2850
        %v3882 = vunpack.c.h.b16 %v2850
        %v3883 = vunpack.c.l.b16 %v2851
        %v3884 = vunpack.c.h.b16 %v2851
        %v3885 = vunpack.c.l.b16 %v2852
        %v3886 = vunpack.c.h.b16 %v2852
        %v3887 = vunpack.c.l.b16 %v2853
        %v3888 = vunpack.c.h.b16 %v2853
        %v3889 = vunpack.c.l.b16 %v2854
        %v3890 = vunpack.c.h.b16 %v2854
        %v3891 = vunpack.c.l.b16 %v2855
        %v3892 = vunpack.c.h.b16 %v2855
        %v3893 = vunpack.c.l.b16 %v2856
        %v3894 = vunpack.c.h.b16 %v2856
        %v3895 = vunpack.c.l.b16 %v2857
        %v3896 = vunpack.c.h.b16 %v2857
        %v3897 = vunpack.c.l.b16 %v2858
        %v3898 = vunpack.c.h.b16 %v2858
        %v3899 = vunpack.c.l.b16 %v2859
        %v3900 = vunpack.c.h.b16 %v2859
        %v3901 = vunpack.c.l.b16 %v2860
        %v3902 = vunpack.c.h.b16 %v2860
        %v3903 = vunpack.c.l.b16 %v2861
        %v3904 = vunpack.c.h.b16 %v2861
        %v3905 = vunpack.c.l.b16 %v2862
        %v3906 = vunpack.c.h.b16 %v2862
        %v3907 = vunpack.c.l.b16 %v2863
        %v3908 = vunpack.c.h.b16 %v2863
        %v3909 = vunpack.c.l.b16 %v2864
        %v3910 = vunpack.c.h.b16 %v2864
        %v3911 = vunpack.c.l.b16 %v2865
        %v3912 = vunpack.c.h.b16 %v2865
        %v3913 = vunpack.c.l.b16 %v2866
        %v3914 = vunpack.c.h.b16 %v2866
        %v3915 = vunpack.c.l.b16 %v2867
        %v3916 = vunpack.c.h.b16 %v2867
        %v3917 = vunpack.c.l.b16 %v2868
        %v3918 = vunpack.c.h.b16 %v2868
        %v3919 = vunpack.c.l.b16 %v2869
        %v3920 = vunpack.c.h.b16 %v2869
        %v3921 = vunpack.c.l.b16 %v2870
        %v3922 = vunpack.c.h.b16 %v2870
        %v3923 = vunpack.c.l.b16 %v2871
        %v3924 = vunpack.c.h.b16 %v2871
        %v3925 = vunpack.c.l.b16 %v2872
        %v3926 = vunpack.c.h.b16 %v2872
        %v3927 = vunpack.c.l.b16 %v2873
        %v3928 = vunpack.c.h.b16 %v2873
        %v3929 = vunpack.c.l.b16 %v2874
        %v3930 = vunpack.c.h.b16 %v2874
        %v3931 = vunpack.c.l.b16 %v2875
        %v3932 = vunpack.c.h.b16 %v2875
        %v3933 = vunpack.c.l.b16 %v2876
        %v3934 = vunpack.c.h.b16 %v2876
        %v3935 = vunpack.c.l.b16 %v2877
        %v3936 = vunpack.c.h.b16 %v2877
        %v3937 = vunpack.c.l.b16 %v2878
        %v3938 = vunpack.c.h.b16 %v2878
        %v3939 = vunpack.c.l.b16 %v2879
        %v3940 = vunpack.c.h.b16 %v2879
        %v3941 = vunpack.c.l.b16 %v2880
        %v3942 = vunpack.c.h.b16 %v2880
        %v3943 = vunpack.c.l.b16 %v2881
        %v3944 = vunpack.c.h.b16 %v2881
        %v3945 = vunpack.c.l.b16 %v2882
        %v3946 = vunpack.c.h.b16 %v2882
        %v3947 = vunpack.c.l.b16 %v2883
        %v3948 = vunpack.c.h.b16 %v2883
        %v3949 = vunpack.c.l.b16 %v2884
        %v3950 = vunpack.c.h.b16 %v2884
        %v3951 = vunpack.c.l.b16 %v2885
        %v3952 = vunpack.c.h.b16 %v2885
        %v3953 = vunpack.c.l.b16 %v2886
        %v3954 = vunpack.c.h.b16 %v2886
        %v3955 = vunpack.c.l.b16 %v2887
        %v3956 = vunpack.c.h.b16 %v2887
        %v3957 = vunpack.c.l.b16 %v2888
        %v3958 = vunpack.c.h.b16 %v2888
        %v3959 = vunpack.c.l.b16 %v2889
        %v3960 = vunpack.c.h.b16 %v2889
        %v3961 = vunpack.c.l.b16 %v2890
        %v3962 = vunpack.c.h.b16 %v2890
        %v3963 = vunpack.c.l.b16 %v2891
        %v3964 = vunpack.c.h.b16 %v2891
        %v3965 = vunpack.c.l.b16 %v2892
        %v3966 = vunpack.c.h.b16 %v2892
        %v3967 = vunpack.c.l.b16 %v2893
        %v3968 = vunpack.c.h.b16 %v2893
        %v3969 = vunpack.c.l.b16 %v2894
        %v3970 = vunpack.c.h.b16 %v2894
        %v3971 = vunpack.c.l.b16 %v2895
        %v3972 = vunpack.c.h.b16 %v2895
        %v3973 = vunpack.c.l.b16 %v2896
        %v3974 = vunpack.c.h.b16 %v2896
        %v3975 = vunpack.c.l.b16 %v2897
        %v3976 = vunpack.c.h.b16 %v2897
        %v3977 = vunpack.c.l.b16 %v2898
        %v3978 = vunpack.c.h.b16 %v2898
        %v3979 = vunpack.c.l.b16 %v2899
        %v3980 = vunpack.c.h.b16 %v2899
        %v3981 = vunpack.c.l.b16 %v2900
        %v3982 = vunpack.c.h.b16 %v2900
        %v3983 = vunpack.c.l.b16 %v2901
        %v3984 = vunpack.c.h.b16 %v2901
        %v3985 = vunpack.c.l.b16 %v2902
        %v3986 = vunpack.c.h.b16 %v2902
        %v3987 = vunpack.c.l.b16 %v2903
        %v3988 = vunpack.c.h.b16 %v2903
        %v3989 = vunpack.c.l.b16 %v2904
        %v3990 = vunpack.c.h.b16 %v2904
        %v3991 = vunpack.c.l.b16 %v2905
        %v3992 = vunpack.c.h.b16 %v2905
        %v3993 = vunpack.c.l.b16 %v2906
        %v3994 = vunpack.c.h.b16 %v2906
        %v3995 = vunpack.c.l.b16 %v2907
        %v3996 = vunpack.c.h.b16 %v2907
        %v3997 = vunpack.c.l.b16 %v2908
        %v3998 = vunpack.c.h.b16 %v2908
        %v3999 = vunpack.c.l.b16 %v2909
        %v4000 = vunpack.c.h.b16 %v2909
        %v4001 = vunpack.c.l.b16 %v2910
        %v4002 = vunpack.c.h.b16 %v2910
        %v4003 = vunpack.c.l.b16 %v2911
        %v4004 = vunpack.c.h.b16 %v2911
        %v4005 = vunpack.c.l.b16 %v2912
        %v4006 = vunpack.c.h.b16 %v2912
        %v4007 = vunpack.c.l.b16 %v2913
        %v4008 = vunpack.c.h.b16 %v2913
        %v4009 = vunpack.c.l.b16 %v2914
        %v4010 = vunpack.c.h.b16 %v2914
        %v4011 = vunpack.c.l.b16 %v2915
        %v4012 = vunpack.c.h.b16 %v2915
        %v4013 = vunpack.c.l.b16 %v2916
        %v4014 = vunpack.c.h.b16 %v2916
        %v4015 = vunpack.c.l.b16 %v2917
        %v4016 = vunpack.c.h.b16 %v2917
        %v4017 = vunpack.c.l.b16 %v2918
        %v4018 = vunpack.c.h.b16 %v2918
        %v4019 = vunpack.c.l.b16 %v2919
        %v4020 = vunpack.c.h.b16 %v2919
        %v4021 = vunpack.c.l.b16 %v2920
        %v4022 = vunpack.c.h.b16 %v2920
        %v4023 = vunpack.c.l.b16 %v2921
        %v4024 = vunpack.c.h.b16 %v2921
        %v4025 = vunpack.c.l.b16 %v2922
        %v4026 = vunpack.c.h.b16 %v2922
        %v4027 = vunpack.c.l.b16 %v2923
        %v4028 = vunpack.c.h.b16 %v2923
        %v4029 = vunpack.c.l.b16 %v2924
        %v4030 = vunpack.c.h.b16 %v2924
        %v4031 = vunpack.c.l.b16 %v2925
        %v4032 = vunpack.c.h.b16 %v2925
        %v4033 = vunpack.c.l.b16 %v2926
        %v4034 = vunpack.c.h.b16 %v2926
        %v4035 = vunpack.c.l.b16 %v2927
        %v4036 = vunpack.c.h.b16 %v2927
        %v4037 = vunpack.c.l.b16 %v2928
        %v4038 = vunpack.c.h.b16 %v2928
        %v4039 = vunpack.c.l.b16 %v2929
        %v4040 = vunpack.c.h.b16 %v2929
        %v4041 = vunpack.c.l.b16 %v2930
        %v4042 = vunpack.c.h.b16 %v2930
        %v4043 = vunpack.c.l.b16 %v2931
        %v4044 = vunpack.c.h.b16 %v2931
        %v4045 = vunpack.c.l.b16 %v2932
        %v4046 = vunpack.c.h.b16 %v2932
        %v4047 = vunpack.c.l.b16 %v2933
        %v4048 = vunpack.c.h.b16 %v2933
        %v4049 = vunpack.c.l.b16 %v2934
        %v4050 = vunpack.c.h.b16 %v2934
        %v4051 = vunpack.c.l.b16 %v2935
        %v4052 = vunpack.c.h.b16 %v2935
        %v4053 = vunpack.c.l.b16 %v2936
        %v4054 = vunpack.c.h.b16 %v2936
        %v4055 = vunpack.c.l.b16 %v2937
        %v4056 = vunpack.c.h.b16 %v2937
        %v4057 = vunpack.c.l.b16 %v2938
        %v4058 = vunpack.c.h.b16 %v2938
        %v4059 = vunpack.c.l.b16 %v2939
        %v4060 = vunpack.c.h.b16 %v2939
        %v4061 = vunpack.c.l.b16 %v2940
        %v4062 = vunpack.c.h.b16 %v2940
        %v4063 = vunpack.c.l.b16 %v2941
        %v4064 = vunpack.c.h.b16 %v2941
        %v4065 = vunpack.c.l.b16 %v2942
        %v4066 = vunpack.c.h.b16 %v2942
        %v4067 = vunpack.c.l.b16 %v2943
        %v4068 = vunpack.c.h.b16 %v2943
        %v4069 = vunpack.c.l.b16 %v2944
        %v4070 = vunpack.c.h.b16 %v2944
        %v4071 = vunpack.c.l.b16 %v2945
        %v4072 = vunpack.c.h.b16 %v2945
        %v4073 = vunpack.c.l.b16 %v2946
        %v4074 = vunpack.c.h.b16 %v2946
        %v4075 = vunpack.c.l.b16 %v2947
        %v4076 = vunpack.c.h.b16 %v2947
        %v4077 = vunpack.c.l.b16 %v2948
        %v4078 = vunpack.c.h.b16 %v2948
        %v4079 = vunpack.c.l.b16 %v2949
        %v4080 = vunpack.c.h.b16 %v2949
        %v4081 = vunpack.c.l.b16 %v2950
        %v4082 = vunpack.c.h.b16 %v2950
        %v4083 = vunpack.c.l.b16 %v2951
        %v4084 = vunpack.c.h.b16 %v2951
        %v4085 = vunpack.c.l.b16 %v2952
        %v4086 = vunpack.c.h.b16 %v2952
        %v4087 = vunpack.c.l.b16 %v2953
        %v4088 = vunpack.c.h.b16 %v2953
        %v4089 = vunpack.c.l.b16 %v2954
        %v4090 = vunpack.c.h.b16 %v2954
        %v4091 = vunpack.c.l.b16 %v2955
        %v4092 = vunpack.c.h.b16 %v2955
        %v4093 = vunpack.c.l.b16 %v2956
        %v4094 = vunpack.c.h.b16 %v2956
        %v4095 = vunpack.c.l.b16 %v2957
        %v4096 = vunpack.c.h.b16 %v2957
        %v4097 = vunpack.c.l.b16 %v2958
        %v4098 = vunpack.c.h.b16 %v2958
        %v4099 = vunpack.c.l.b16 %v2959
        %v4100 = vunpack.c.h.b16 %v2959
        %v4101 = vunpack.c.l.b16 %v2960
        %v4102 = vunpack.c.h.b16 %v2960
        %v4103 = vunpack.c.l.b16 %v2961
        %v4104 = vunpack.c.h.b16 %v2961
        %v4105 = vunpack.c.l.b16 %v2962
        %v4106 = vunpack.c.h.b16 %v2962
        %v4107 = vunpack.c.l.b16 %v2963
        %v4108 = vunpack.c.h.b16 %v2963
        %v4109 = vunpack.c.l.b16 %v2964
        %v4110 = vunpack.c.h.b16 %v2964
        %v4111 = vunpack.c.l.b16 %v2965
        %v4112 = vunpack.c.h.b16 %v2965
        %v4113 = vunpack.c.l.b16 %v2966
        %v4114 = vunpack.c.h.b16 %v2966
        %v4115 = vunpack.c.l.b16 %v2967
        %v4116 = vunpack.c.h.b16 %v2967
        %v4117 = vunpack.c.l.b16 %v2968
        %v4118 = vunpack.c.h.b16 %v2968
        %v4119 = vunpack.c.l.b16 %v2969
        %v4120 = vunpack.c.h.b16 %v2969
        %v4121 = vunpack.c.l.b16 %v2970
        %v4122 = vunpack.c.h.b16 %v2970
        %v4123 = vunpack.c.l.b16 %v2971
        %v4124 = vunpack.c.h.b16 %v2971
        %v4125 = vunpack.c.l.b16 %v2972
        %v4126 = vunpack.c.h.b16 %v2972
        %v4127 = vunpack.c.l.b16 %v2973
        %v4128 = vunpack.c.h.b16 %v2973
        %v4129 = vunpack.c.l.b16 %v2974
        %v4130 = vunpack.c.h.b16 %v2974
        %v4131 = vunpack.c.l.b16 %v2975
        %v4132 = vunpack.c.h.b16 %v2975
        %v4133 = vunpack.c.l.b16 %v2976
        %v4134 = vunpack.c.h.b16 %v2976
        %v4135 = vunpack.c.l.b16 %v2977
        %v4136 = vunpack.c.h.b16 %v2977
        %v4137 = vunpack.c.l.b16 %v2978
        %v4138 = vunpack.c.h.b16 %v2978
        %v4139 = vunpack.c.l.b16 %v2979
        %v4140 = vunpack.c.h.b16 %v2979
        %v4141 = vunpack.c.l.b16 %v2980
        %v4142 = vunpack.c.h.b16 %v2980
        %v4143 = vunpack.c.l.b16 %v2981
        %v4144 = vunpack.c.h.b16 %v2981
        %v4145 = vunpack.c.l.b16 %v2982
        %v4146 = vunpack.c.h.b16 %v2982
        %v4147 = vunpack.c.l.b16 %v2983
        %v4148 = vunpack.c.h.b16 %v2983
        %v4149 = vunpack.c.l.b16 %v2984
        %v4150 = vunpack.c.h.b16 %v2984
        %v4151 = vunpack.c.l.b16 %v2985
        %v4152 = vunpack.c.h.b16 %v2985
        %v4153 = vunpack.c.l.b16 %v2986
        %v4154 = vunpack.c.h.b16 %v2986
        %v4155 = vunpack.c.l.b16 %v2987
        %v4156 = vunpack.c.h.b16 %v2987
        %v4157 = vunpack.c.l.b16 %v2988
        %v4158 = vunpack.c.h.b16 %v2988
        %v4159 = vunpack.c.l.b16 %v2989
        %v4160 = vunpack.c.h.b16 %v2989
        %v4161 = vunpack.c.l.b16 %v2990
        %v4162 = vunpack.c.h.b16 %v2990
        %v4163 = vunpack.c.l.b16 %v2991
        %v4164 = vunpack.c.h.b16 %v2991
        %v4165 = vunpack.c.l.b16 %v2992
        %v4166 = vunpack.c.h.b16 %v2992
        %v4167 = vunpack.c.l.b16 %v2993
        %v4168 = vunpack.c.h.b16 %v2993
        %v4169 = vunpack.c.l.b16 %v2994
        %v4170 = vunpack.c.h.b16 %v2994
        %v4171 = vunpack.c.l.b16 %v2995
        %v4172 = vunpack.c.h.b16 %v2995
        %v4173 = vunpack.c.l.b16 %v2996
        %v4174 = vunpack.c.h.b16 %v2996
        %v4175 = vunpack.c.l.b16 %v2997
        %v4176 = vunpack.c.h.b16 %v2997
        %v4177 = vunpack.c.l.b16 %v2998
        %v4178 = vunpack.c.h.b16 %v2998
        %v4179 = vunpack.c.l.b16 %v2999
        %v4180 = vunpack.c.h.b16 %v2999
        %v4181 = vunpack.c.l.b16 %v3000
        %v4182 = vunpack.c.h.b16 %v3000
        %v4183 = vunpack.c.l.b16 %v3001
        %v4184 = vunpack.c.h.b16 %v3001
        %v4185 = vunpack.c.l.b16 %v3002
        %v4186 = vunpack.c.h.b16 %v3002
        %v4187 = vunpack.c.l.b16 %v3003
        %v4188 = vunpack.c.h.b16 %v3003
        %v4189 = vunpack.c.l.b16 %v3004
        %v4190 = vunpack.c.h.b16 %v3004
        %v4191 = vunpack.c.l.b16 %v3005
        %v4192 = vunpack.c.h.b16 %v3005
        %v4193 = vunpack.c.l.b16 %v3006
        %v4194 = vunpack.c.h.b16 %v3006
        %v4195 = vunpack.c.l.b16 %v3007
        %v4196 = vunpack.c.h.b16 %v3007
        %v4197 = vunpack.c.l.b16 %v3008
        %v4198 = vunpack.c.h.b16 %v3008
        %v4199 = vunpack.c.l.b16 %v3009
        %v4200 = vunpack.c.h.b16 %v3009
        %v4201 = vunpack.c.l.b16 %v3010
        %v4202 = vunpack.c.h.b16 %v3010
        %v4203 = vunpack.c.l.b16 %v3011
        %v4204 = vunpack.c.h.b16 %v3011
        %v4205 = vunpack.c.l.b16 %v3012
        %v4206 = vunpack.c.h.b16 %v3012
        %v4207 = vunpack.c.l.b16 %v3013
        %v4208 = vunpack.c.h.b16 %v3013
        %v4209 = vunpack.c.l.b16 %v3014
        %v4210 = vunpack.c.h.b16 %v3014
        %v4211 = vunpack.c.l.b16 %v3015
        %v4212 = vunpack.c.h.b16 %v3015
        %v4213 = vunpack.c.l.b16 %v3016
        %v4214 = vunpack.c.h.b16 %v3016
        %v4215 = vunpack.c.l.b16 %v3017
        %v4216 = vunpack.c.h.b16 %v3017
        %v4217 = vunpack.c.l.b16 %v3018
        %v4218 = vunpack.c.h.b16 %v3018
        %v4219 = vunpack.c.l.b16 %v3019
        %v4220 = vunpack.c.h.b16 %v3019
        %v4221 = vunpack.c.l.b16 %v3020
        %v4222 = vunpack.c.h.b16 %v3020
        %v4223 = vunpack.c.l.b16 %v3021
        %v4224 = vunpack.c.h.b16 %v3021
        %v4225 = vunpack.c.l.b16 %v3022
        %v4226 = vunpack.c.h.b16 %v3022
        %v4227 = vunpack.c.l.b16 %v3023
        %v4228 = vunpack.c.h.b16 %v3023
        %v4229 = vunpack.c.l.b16 %v3024
        %v4230 = vunpack.c.h.b16 %v3024
        %v4231 = vunpack.c.l.b16 %v3025
        %v4232 = vunpack.c.h.b16 %v3025
        %v4233 = vunpack.c.l.b16 %v3026
        %v4234 = vunpack.c.h.b16 %v3026
        %v4235 = vunpack.c.l.b16 %v3027
        %v4236 = vunpack.c.h.b16 %v3027
        %v4237 = vunpack.c.l.b16 %v3028
        %v4238 = vunpack.c.h.b16 %v3028
        %v4239 = vunpack.c.l.b16 %v3029
        %v4240 = vunpack.c.h.b16 %v3029
        %v4241 = vunpack.c.l.b16 %v3030
        %v4242 = vunpack.c.h.b16 %v3030
        %v4243 = vunpack.c.l.b16 %v3031
        %v4244 = vunpack.c.h.b16 %v3031
        %v4245 = vunpack.c.l.b16 %v3032
        %v4246 = vunpack.c.h.b16 %v3032
        %v4247 = vunpack.c.l.b16 %v3033
        %v4248 = vunpack.c.h.b16 %v3033
        %v4249 = vunpack.c.l.b16 %v3034
        %v4250 = vunpack.c.h.b16 %v3034
        %v4251 = vunpack.c.l.b16 %v3035
        %v4252 = vunpack.c.h.b16 %v3035
        %v4253 = vunpack.c.l.b16 %v3036
        %v4254 = vunpack.c.h.b16 %v3036
        %v4255 = vunpack.c.l.b16 %v3037
        %v4256 = vunpack.c.h.b16 %v3037
        %v4257 = vunpack.c.l.b16 %v3038
        %v4258 = vunpack.c.h.b16 %v3038
        %v4259 = vunpack.c.l.b16 %v3039
        %v4260 = vunpack.c.h.b16 %v3039
        %v4261 = vunpack.c.l.b16 %v3040
        %v4262 = vunpack.c.h.b16 %v3040
        %v4263 = vunpack.c.l.b16 %v3041
        %v4264 = vunpack.c.h.b16 %v3041
        %v4265 = vunpack.c.l.b16 %v3042
        %v4266 = vunpack.c.h.b16 %v3042
        %v4267 = vunpack.c.l.b16 %v3043
        %v4268 = vunpack.c.h.b16 %v3043
        %v4269 = vunpack.c.l.b16 %v3044
        %v4270 = vunpack.c.h.b16 %v3044
        %v4271 = vunpack.c.l.b16 %v3045
        %v4272 = vunpack.c.h.b16 %v3045
        %v4273 = vunpack.c.l.b16 %v3046
        %v4274 = vunpack.c.h.b16 %v3046
        %v4275 = vunpack.c.l.b16 %v3047
        %v4276 = vunpack.c.h.b16 %v3047
        %v4277 = vunpack.c.l.b16 %v3048
        %v4278 = vunpack.c.h.b16 %v3048
        %v4279 = vunpack.c.l.b16 %v3049
        %v4280 = vunpack.c.h.b16 %v3049
        %v4281 = vunpack.c.l.b16 %v3050
        %v4282 = vunpack.c.h.b16 %v3050
        %v4283 = vunpack.c.l.b16 %v3051
        %v4284 = vunpack.c.h.b16 %v3051
        %v4285 = vunpack.c.l.b16 %v3052
        %v4286 = vunpack.c.h.b16 %v3052
        %v4287 = vunpack.c.l.b16 %v3053
        %v4288 = vunpack.c.h.b16 %v3053
        %v4289 = vunpack.c.l.b16 %v3054
        %v4290 = vunpack.c.h.b16 %v3054
        %v4291 = vunpack.c.l.b16 %v3055
        %v4292 = vunpack.c.h.b16 %v3055
        %v4293 = vunpack.c.l.b16 %v3056
        %v4294 = vunpack.c.h.b16 %v3056
        %v4295 = vunpack.c.l.b16 %v3057
        %v4296 = vunpack.c.h.b16 %v3057
        %v4297 = vunpack.c.l.b16 %v3058
        %v4298 = vunpack.c.h.b16 %v3058
        %v4299 = vunpack.c.l.b16 %v3059
        %v4300 = vunpack.c.h.b16 %v3059
        %v4301 = vunpack.c.l.b16 %v3060
        %v4302 = vunpack.c.h.b16 %v3060
        %v4303 = vunpack.c.l.b16 %v3061
        %v4304 = vunpack.c.h.b16 %v3061
        %v4305 = vunpack.c.l.b16 %v3062
        %v4306 = vunpack.c.h.b16 %v3062
        %v4307 = vunpack.c.l.b16 %v3063
        %v4308 = vunpack.c.h.b16 %v3063
        %v4309 = vunpack.c.l.b16 %v3064
        %v4310 = vunpack.c.h.b16 %v3064
        %v4311 = vunpack.c.l.b16 %v3065
        %v4312 = vunpack.c.h.b16 %v3065
        %v4313 = vunpack.c.l.b16 %v3066
        %v4314 = vunpack.c.h.b16 %v3066
        %v4315 = vunpack.c.l.b16 %v3067
        %v4316 = vunpack.c.h.b16 %v3067
        %v4317 = vunpack.c.l.b16 %v3068
        %v4318 = vunpack.c.h.b16 %v3068
        %v4319 = vunpack.c.l.b16 %v3069
        %v4320 = vunpack.c.h.b16 %v3069
        %v4321 = vunpack.c.l.b16 %v3070
        %v4322 = vunpack.c.h.b16 %v3070
        %v4323 = vunpack.c.l.b16 %v3071
        %v4324 = vunpack.c.h.b16 %v3071
        %v4325 = vunpack.c.l.b16 %v3072
        %v4326 = vunpack.c.h.b16 %v3072
        %v4327 = vunpack.c.l.b16 %v3073
        %v4328 = vunpack.c.h.b16 %v3073
        %v4329 = vunpack.c.l.b16 %v3074
        %v4330 = vunpack.c.h.b16 %v3074
        %v4331 = vunpack.c.l.b16 %v3075
        %v4332 = vunpack.c.h.b16 %v3075
        %v4333 = vunpack.c.l.b16 %v3076
        %v4334 = vunpack.c.h.b16 %v3076
        %v4335 = vunpack.c.l.b16 %v3077
        %v4336 = vunpack.c.h.b16 %v3077
        %v4337 = vunpack.c.l.b16 %v3078
        %v4338 = vunpack.c.h.b16 %v3078
        %v4339 = vunpack.c.l.b16 %v3079
        %v4340 = vunpack.c.h.b16 %v3079
        %v4341 = vunpack.c.l.b16 %v3080
        %v4342 = vunpack.c.h.b16 %v3080
        %v4343 = vunpack.c.l.b16 %v3081
        %v4344 = vunpack.c.h.b16 %v3081
        %v4345 = vunpack.c.l.b16 %v3082
        %v4346 = vunpack.c.h.b16 %v3082
        %v4347 = vunpack.c.l.b16 %v3083
        %v4348 = vunpack.c.h.b16 %v3083
        %v4349 = vunpack.c.l.b16 %v3084
        %v4350 = vunpack.c.h.b16 %v3084
        %v4351 = vunpack.c.l.b16 %v3085
        %v4352 = vunpack.c.h.b16 %v3085
        %v4353 = vunpack.c.l.b16 %v3086
        %v4354 = vunpack.c.h.b16 %v3086
        %v4355 = vunpack.c.l.b16 %v3087
        %v4356 = vunpack.c.h.b16 %v3087
        %v4357 = vunpack.c.l.b16 %v3088
        %v4358 = vunpack.c.h.b16 %v3088
        %v4359 = vunpack.c.l.b16 %v3089
        %v4360 = vunpack.c.h.b16 %v3089
        %v4361 = vunpack.c.l.b16 %v3090
        %v4362 = vunpack.c.h.b16 %v3090
        %v4363 = vunpack.c.l.b16 %v3091
        %v4364 = vunpack.c.h.b16 %v3091
        %v4365 = vunpack.c.l.b16 %v3092
        %v4366 = vunpack.c.h.b16 %v3092
        %v4367 = vunpack.c.l.b16 %v3093
        %v4368 = vunpack.c.h.b16 %v3093
        %v4369 = vunpack.c.l.b16 %v3094
        %v4370 = vunpack.c.h.b16 %v3094
        %v4371 = vunpack.c.l.b16 %v3095
        %v4372 = vunpack.c.h.b16 %v3095
        %v4373 = vunpack.c.l.b16 %v3096
        %v4374 = vunpack.c.h.b16 %v3096
        %v4375 = vunpack.c.l.b16 %v3097
        %v4376 = vunpack.c.h.b16 %v3097
        %v4377 = vunpack.c.l.b16 %v3098
        %v4378 = vunpack.c.h.b16 %v3098
        %v4379 = vunpack.c.l.b16 %v3099
        %v4380 = vunpack.c.h.b16 %v3099
        %v4381 = vunpack.c.l.b16 %v3100
        %v4382 = vunpack.c.h.b16 %v3100
        %v4383 = vunpack.c.l.b16 %v3101
        %v4384 = vunpack.c.h.b16 %v3101
        %v4385 = vunpack.c.l.b16 %v3102
        %v4386 = vunpack.c.h.b16 %v3102
        %v4387 = vunpack.c.l.b16 %v3103
        %v4388 = vunpack.c.h.b16 %v3103
        %v4389 = vunpack.c.l.b16 %v3104
        %v4390 = vunpack.c.h.b16 %v3104
        %v4391 = vunpack.c.l.b16 %v3105
        %v4392 = vunpack.c.h.b16 %v3105
        %v4393 = vunpack.c.l.b16 %v3106
        %v4394 = vunpack.c.h.b16 %v3106
        %v4395 = vunpack.c.l.b16 %v3107
        %v4396 = vunpack.c.h.b16 %v3107
        %v4397 = vunpack.c.l.b16 %v3108
        %v4398 = vunpack.c.h.b16 %v3108
        %v4399 = vunpack.c.l.b16 %v3109
        %v4400 = vunpack.c.h.b16 %v3109
        %v4401 = vunpack.c.l.b16 %v3110
        %v4402 = vunpack.c.h.b16 %v3110
        %v4403 = vunpack.c.l.b16 %v3111
        %v4404 = vunpack.c.h.b16 %v3111
        %v4405 = vunpack.c.l.b16 %v3112
        %v4406 = vunpack.c.h.b16 %v3112
        %v4407 = vunpack.c.l.b16 %v3113
        %v4408 = vunpack.c.h.b16 %v3113
        %v4409 = vunpack.c.l.b16 %v3114
        %v4410 = vunpack.c.h.b16 %v3114
        %v4411 = vunpack.c.l.b16 %v3115
        %v4412 = vunpack.c.h.b16 %v3115
        %v4413 = vunpack.c.l.b16 %v3116
        %v4414 = vunpack.c.h.b16 %v3116
        %v4415 = vunpack.c.l.b16 %v3117
        %v4416 = vunpack.c.h.b16 %v3117
        %v4417 = vunpack.c.l.b16 %v3118
        %v4418 = vunpack.c.h.b16 %v3118
        %v4419 = vunpack.c.l.b16 %v3119
        %v4420 = vunpack.c.h.b16 %v3119
        %v4421 = vunpack.c.l.b16 %v3120
        %v4422 = vunpack.c.h.b16 %v3120
        %v4423 = vunpack.c.l.b16 %v3121
        %v4424 = vunpack.c.h.b16 %v3121
        %v4425 = vunpack.c.l.b16 %v3122
        %v4426 = vunpack.c.h.b16 %v3122
        %v4427 = vunpack.c.l.b16 %v3123
        %v4428 = vunpack.c.h.b16 %v3123
        %v4429 = vunpack.c.l.b16 %v3124
        %v4430 = vunpack.c.h.b16 %v3124
        %v4431 = vunpack.c.l.b16 %v3125
        %v4432 = vunpack.c.h.b16 %v3125
        %v4433 = vunpack.c.l.b16 %v3126
        %v4434 = vunpack.c.h.b16 %v3126
        %v4435 = vunpack.c.l.b16 %v3127
        %v4436 = vunpack.c.h.b16 %v3127
        %v4437 = vunpack.c.l.b16 %v3128
        %v4438 = vunpack.c.h.b16 %v3128
        %v4439 = vunpack.c.l.b16 %v3129
        %v4440 = vunpack.c.h.b16 %v3129
        %v4441 = vunpack.c.l.b16 %v3130
        %v4442 = vunpack.c.h.b16 %v3130
        %v4443 = vunpack.c.l.b16 %v3131
        %v4444 = vunpack.c.h.b16 %v3131
        %v4445 = vunpack.c.l.b16 %v3132
        %v4446 = vunpack.c.h.b16 %v3132
        %v4447 = vunpack.c.l.b16 %v3133
        %v4448 = vunpack.c.h.b16 %v3133
        %v4449 = vunpack.c.l.b16 %v3134
        %v4450 = vunpack.c.h.b16 %v3134
        %v4451 = vunpack.c.l.b16 %v3135
        %v4452 = vunpack.c.h.b16 %v3135
        %v4453 = vunpack.c.l.b16 %v3136
        %v4454 = vunpack.c.h.b16 %v3136
        %v4455 = vunpack.c.l.b16 %v3137
        %v4456 = vunpack.c.h.b16 %v3137
        %v4457 = vunpack.c.l.b16 %v3138
        %v4458 = vunpack.c.h.b16 %v3138
        %v4459 = vunpack.c.l.b16 %v3139
        %v4460 = vunpack.c.h.b16 %v3139
        %v4461 = vunpack.c.l.b16 %v3140
        %v4462 = vunpack.c.h.b16 %v3140
        %v4463 = vunpack.c.l.b16 %v3141
        %v4464 = vunpack.c.h.b16 %v3141
        %v4465 = vunpack.c.l.b16 %v3142
        %v4466 = vunpack.c.h.b16 %v3142
        %v4467 = vunpack.c.l.b16 %v3143
        %v4468 = vunpack.c.h.b16 %v3143
        %v4469 = vunpack.c.l.b16 %v3144
        %v4470 = vunpack.c.h.b16 %v3144
        %v4471 = vunpack.c.l.b16 %v3145
        %v4472 = vunpack.c.h.b16 %v3145
        %v4473 = vunpack.c.l.b16 %v3146
        %v4474 = vunpack.c.h.b16 %v3146
        %v4475 = vunpack.c.l.b16 %v3147
        %v4476 = vunpack.c.h.b16 %v3147
        %v4477 = vunpack.c.l.b16 %v3148
        %v4478 = vunpack.c.h.b16 %v3148
        %v4479 = vunpack.c.l.b16 %v3149
        %v4480 = vunpack.c.h.b16 %v3149
        %v4481 = vunpack.c.l.b16 %v3150
        %v4482 = vunpack.c.h.b16 %v3150
        %v4483 = vunpack.c.l.b16 %v3151
        %v4484 = vunpack.c.h.b16 %v3151
        %v4485 = vunpack.c.l.b16 %v3152
        %v4486 = vunpack.c.h.b16 %v3152
        %v4487 = vunpack.c.l.b16 %v3153
        %v4488 = vunpack.c.h.b16 %v3153
        %v4489 = vunpack.c.l.b16 %v3154
        %v4490 = vunpack.c.h.b16 %v3154
        %v4491 = vunpack.c.l.b16 %v3155
        %v4492 = vunpack.c.h.b16 %v3155
        %v4493 = vunpack.c.l.b16 %v3156
        %v4494 = vunpack.c.h.b16 %v3156
        %v4495 = vunpack.c.l.b16 %v3157
        %v4496 = vunpack.c.h.b16 %v3157
        %v4497 = vunpack.c.l.b16 %v3158
        %v4498 = vunpack.c.h.b16 %v3158
        %v4499 = vunpack.c.l.b16 %v3159
        %v4500 = vunpack.c.h.b16 %v3159
        %v4501 = vunpack.c.l.b16 %v3160
        %v4502 = vunpack.c.h.b16 %v3160
        %v4503 = vunpack.c.l.b16 %v3161
        %v4504 = vunpack.c.h.b16 %v3161
        %v4505 = vunpack.c.l.b16 %v3162
        %v4506 = vunpack.c.h.b16 %v3162
        %v4507 = vunpack.c.l.b16 %v3163
        %v4508 = vunpack.c.h.b16 %v3163
        %v4509 = vunpack.c.l.b16 %v3164
        %v4510 = vunpack.c.h.b16 %v3164
        %v4511 = vunpack.c.l.b16 %v3165
        %v4512 = vunpack.c.h.b16 %v3165
        %v4513 = vunpack.c.l.b16 %v3166
        %v4514 = vunpack.c.h.b16 %v3166
        %v4515 = vunpack.c.l.b16 %v3167
        %v4516 = vunpack.c.h.b16 %v3167
        %v4517 = vunpack.c.l.b16 %v3168
        %v4518 = vunpack.c.h.b16 %v3168
        %v4519 = vunpack.c.l.b16 %v3169
        %v4520 = vunpack.c.h.b16 %v3169
        %v4521 = vunpack.c.l.b16 %v3170
        %v4522 = vunpack.c.h.b16 %v3170
        %v4523 = vunpack.c.l.b16 %v3171
        %v4524 = vunpack.c.h.b16 %v3171
        %v4525 = vunpack.c.l.b16 %v3172
        %v4526 = vunpack.c.h.b16 %v3172
        %v4527 = vunpack.c.l.b16 %v3173
        %v4528 = vunpack.c.h.b16 %v3173
        %v4529 = vunpack.c.l.b16 %v3174
        %v4530 = vunpack.c.h.b16 %v3174
        %v4531 = vunpack.c.l.b16 %v3175
        %v4532 = vunpack.c.h.b16 %v3175
        %v4533 = vunpack.c.l.b16 %v3176
        %v4534 = vunpack.c.h.b16 %v3176
        %v4535 = vunpack.c.l.b16 %v3177
        %v4536 = vunpack.c.h.b16 %v3177
        %v4537 = vunpack.c.l.b16 %v3178
        %v4538 = vunpack.c.h.b16 %v3178
        %v4539 = vunpack.c.l.b16 %v3179
        %v4540 = vunpack.c.h.b16 %v3179
        %v4541 = vunpack.c.l.b16 %v3180
        %v4542 = vunpack.c.h.b16 %v3180
        %v4543 = vunpack.c.l.b16 %v3181
        %v4544 = vunpack.c.h.b16 %v3181
        %v4545 = vunpack.c.l.b16 %v3182
        %v4546 = vunpack.c.h.b16 %v3182
        %v4547 = vunpack.c.l.b16 %v3183
        %v4548 = vunpack.c.h.b16 %v3183
        %v4549 = vunpack.c.l.b16 %v3184
        %v4550 = vunpack.c.h.b16 %v3184
        %v4551 = vunpack.c.l.b16 %v3185
        %v4552 = vunpack.c.h.b16 %v3185
        %v4553 = vunpack.c.l.b16 %v3186
        %v4554 = vunpack.c.h.b16 %v3186
        %v4555 = vunpack.c.l.b16 %v3187
        %v4556 = vunpack.c.h.b16 %v3187
        %v4557 = vunpack.c.l.b16 %v3188
        %v4558 = vunpack.c.h.b16 %v3188
        %v4559 = vunpack.c.l.b16 %v3189
        %v4560 = vunpack.c.h.b16 %v3189
        %v4561 = vunpack.c.l.b16 %v3190
        %v4562 = vunpack.c.h.b16 %v3190
        %v4563 = vunpack.c.l.b16 %v3191
        %v4564 = vunpack.c.h.b16 %v3191
        %v4565 = vunpack.c.l.b16 %v3192
        %v4566 = vunpack.c.h.b16 %v3192
        %v4567 = vunpack.c.l.b16 %v3193
        %v4568 = vunpack.c.h.b16 %v3193
        %v4569 = vunpack.c.l.b16 %v3194
        %v4570 = vunpack.c.h.b16 %v3194
        %v4571 = vunpack.c.l.b16 %v3195
        %v4572 = vunpack.c.h.b16 %v3195
        %v4573 = vunpack.c.l.b16 %v3196
        %v4574 = vunpack.c.h.b16 %v3196
        %v4575 = vunpack.c.l.b16 %v3197
        %v4576 = vunpack.c.h.b16 %v3197
        %v4577 = vunpack.c.l.b16 %v3198
        %v4578 = vunpack.c.h.b16 %v3198
        %v4579 = vunpack.c.l.b16 %v3199
        %v4580 = vunpack.c.h.b16 %v3199
        %v4581 = vunpack.c.l.b16 %v3200
        %v4582 = vunpack.c.h.b16 %v3200
        %v4583 = vunpack.c.l.b16 %v3201
        %v4584 = vunpack.c.h.b16 %v3201
        %v4585 = vunpack.c.l.b16 %v3202
        %v4586 = vunpack.c.h.b16 %v3202
        %v4587 = vunpack.c.l.b16 %v3203
        %v4588 = vunpack.c.h.b16 %v3203
        %v4589 = vunpack.c.l.b16 %v3204
        %v4590 = vunpack.c.h.b16 %v3204
        %v4591 = vunpack.c.l.b16 %v3205
        %v4592 = vunpack.c.h.b16 %v3205
        %v4593 = vunpack.c.l.b16 %v3206
        %v4594 = vunpack.c.h.b16 %v3206
        %v4595 = vunpack.c.l.b16 %v3207
        %v4596 = vunpack.c.h.b16 %v3207
        %v4597 = vunpack.c.l.b16 %v3208
        %v4598 = vunpack.c.h.b16 %v3208
        %v4599 = vunpack.c.l.b16 %v3209
        %v4600 = vunpack.c.h.b16 %v3209
        %v4601 = vunpack.c.l.b16 %v3210
        %v4602 = vunpack.c.h.b16 %v3210
        %v4603 = vunpack.c.l.b16 %v3211
        %v4604 = vunpack.c.h.b16 %v3211
        %v4605 = vunpack.c.l.b16 %v3212
        %v4606 = vunpack.c.h.b16 %v3212
        %v4607 = vunpack.c.l.b16 %v3213
        %v4608 = vunpack.c.h.b16 %v3213
        %v4609 = vunpack.c.l.b16 %v3214
        %v4610 = vunpack.c.h.b16 %v3214
        %v4611 = vunpack.c.l.b16 %v3215
        %v4612 = vunpack.c.h.b16 %v3215
        %v4613 = vunpack.c.l.b16 %v3216
        %v4614 = vunpack.c.h.b16 %v3216
        %v4615 = vunpack.c.l.b16 %v3217
        %v4616 = vunpack.c.h.b16 %v3217
        %v4617 = vunpack.c.l.b16 %v3218
        %v4618 = vunpack.c.h.b16 %v3218
        %v4619 = vunpack.c.l.b16 %v3219
        %v4620 = vunpack.c.h.b16 %v3219
        %v4621 = vunpack.c.l.b16 %v3220
        %v4622 = vunpack.c.h.b16 %v3220
        %v4623 = vunpack.c.l.b16 %v3221
        %v4624 = vunpack.c.h.b16 %v3221
        %v4625 = vunpack.c.l.b16 %v3222
        %v4626 = vunpack.c.h.b16 %v3222
        %v4627 = vunpack.c.l.b16 %v3223
        %v4628 = vunpack.c.h.b16 %v3223
        %v4629 = vunpack.c.l.b16 %v3224
        %v4630 = vunpack.c.h.b16 %v3224
        %v4631 = vunpack.c.l.b16 %v3225
        %v4632 = vunpack.c.h.b16 %v3225
        %v4633 = vunpack.c.l.b16 %v3226
        %v4634 = vunpack.c.h.b16 %v3226
        %v4635 = vunpack.c.l.b16 %v3227
        %v4636 = vunpack.c.h.b16 %v3227
        %v4637 = vunpack.c.l.b16 %v3228
        %v4638 = vunpack.c.h.b16 %v3228
        %v4639 = vunpack.c.l.b16 %v3229
        %v4640 = vunpack.c.h.b16 %v3229
        %v4641 = vunpack.c.l.b16 %v3230
        %v4642 = vunpack.c.h.b16 %v3230
        %v4643 = vunpack.c.l.b16 %v3231
        %v4644 = vunpack.c.h.b16 %v3231
        %v4645 = vunpack.c.l.b16 %v3232
        %v4646 = vunpack.c.h.b16 %v3232
        %v4647 = vunpack.c.l.b16 %v3233
        %v4648 = vunpack.c.h.b16 %v3233
        %v4649 = vunpack.c.l.b16 %v3234
        %v4650 = vunpack.c.h.b16 %v3234
        %v4651 = vunpack.c.l.b16 %v3235
        %v4652 = vunpack.c.h.b16 %v3235
        %v4653 = vunpack.c.l.b16 %v3236
        %v4654 = vunpack.c.h.b16 %v3236
        %v4655 = vunpack.c.l.b16 %v3237
        %v4656 = vunpack.c.h.b16 %v3237
        %v4657 = vunpack.c.l.b16 %v3238
        %v4658 = vunpack.c.h.b16 %v3238
        %v4659 = vunpack.c.l.b16 %v3239
        %v4660 = vunpack.c.h.b16 %v3239
        %v4661 = vunpack.c.l.b16 %v3240
        %v4662 = vunpack.c.h.b16 %v3240
        %v4663 = vunpack.c.l.b16 %v3241
        %v4664 = vunpack.c.h.b16 %v3241
        %v4665 = vunpack.c.l.b16 %v3242
        %v4666 = vunpack.c.h.b16 %v3242
        %v4667 = vunpack.c.l.b16 %v3243
        %v4668 = vunpack.c.h.b16 %v3243
        %v4669 = vunpack.c.l.b16 %v3244
        %v4670 = vunpack.c.h.b16 %v3244
        %v4671 = vunpack.c.l.b16 %v3245
        %v4672 = vunpack.c.h.b16 %v3245
        %v4673 = vunpack.c.l.b16 %v3246
        %v4674 = vunpack.c.h.b16 %v3246
        %v4675 = vunpack.c.l.b16 %v3247
        %v4676 = vunpack.c.h.b16 %v3247
        %v4677 = vunpack.c.l.b16 %v3248
        %v4678 = vunpack.c.h.b16 %v3248
        %v4679 = vunpack.c.l.b16 %v3249
        %v4680 = vunpack.c.h.b16 %v3249
        %v4681 = vunpack.c.l.b16 %v3250
        %v4682 = vunpack.c.h.b16 %v3250
        %v4683 = vunpack.c.l.b16 %v3251
        %v4684 = vunpack.c.h.b16 %v3251
        %v4685 = vunpack.c.l.b16 %v3252
        %v4686 = vunpack.c.h.b16 %v3252
        %v4687 = vunpack.c.l.b16 %v3253
        %v4688 = vunpack.c.h.b16 %v3253
        %v4689 = vunpack.c.l.b16 %v3254
        %v4690 = vunpack.c.h.b16 %v3254
        %v4691 = vunpack.c.l.b16 %v3255
        %v4692 = vunpack.c.h.b16 %v3255
        %v4693 = vunpack.c.l.b16 %v3256
        %v4694 = vunpack.c.h.b16 %v3256
        %v4695 = vunpack.c.l.b16 %v3257
        %v4696 = vunpack.c.h.b16 %v3257
        %v4697 = vunpack.c.l.b16 %v3258
        %v4698 = vunpack.c.h.b16 %v3258
        %v4699 = vunpack.c.l.b16 %v3259
        %v4700 = vunpack.c.h.b16 %v3259
        %v4701 = vunpack.c.l.b16 %v3260
        %v4702 = vunpack.c.h.b16 %v3260
        %v4703 = vunpack.c.l.b16 %v3261
        %v4704 = vunpack.c.h.b16 %v3261
        %v4705 = vunpack.c.l.b16 %v3262
        %v4706 = vunpack.c.h.b16 %v3262
        %v4707 = vunpack.c.l.b16 %v3263
        %v4708 = vunpack.c.h.b16 %v3263
        %v4709 = vunpack.c.l.b16 %v3264
        %v4710 = vunpack.c.h.b16 %v3264
        %v4711 = vunpack.c.l.b16 %v3265
        %v4712 = vunpack.c.h.b16 %v3265
        %v4713 = vunpack.c.l.b16 %v3266
        %v4714 = vunpack.c.h.b16 %v3266
        %v4715 = vunpack.c.l.b16 %v3267
        %v4716 = vunpack.c.h.b16 %v3267
        %v4717 = vunpack.c.l.b16 %v3268
        %v4718 = vunpack.c.h.b16 %v3268
        %v4719 = vunpack.c.l.b16 %v3269
        %v4720 = vunpack.c.h.b16 %v3269
        %v4721 = vunpack.c.l.b16 %v3270
        %v4722 = vunpack.c.h.b16 %v3270
        %v4723 = vunpack.c.l.b16 %v3271
        %v4724 = vunpack.c.h.b16 %v3271
        %v4725 = vunpack.c.l.b16 %v3272
        %v4726 = vunpack.c.h.b16 %v3272
        %v4727 = vunpack.c.l.b16 %v3273
        %v4728 = vunpack.c.h.b16 %v3273
        %v4729 = vunpack.c.l.b16 %v3274
        %v4730 = vunpack.c.h.b16 %v3274
        %v4731 = vunpack.c.l.b16 %v3275
        %v4732 = vunpack.c.h.b16 %v3275
        %v4733 = vunpack.c.l.b16 %v3276
        %v4734 = vunpack.c.h.b16 %v3276
        %v4735 = vunpack.c.l.b16 %v3277
        %v4736 = vunpack.c.h.b16 %v3277
        %v4737 = vunpack.c.l.b16 %v3278
        %v4738 = vunpack.c.h.b16 %v3278
        %v4739 = vunpack.c.l.b16 %v3279
        %v4740 = vunpack.c.h.b16 %v3279
        %v4741 = vunpack.c.l.b16 %v3280
        %v4742 = vunpack.c.h.b16 %v3280
        %v4743 = vunpack.c.l.b16 %v3281
        %v4744 = vunpack.c.h.b16 %v3281
        %v4745 = vunpack.c.l.b16 %v3282
        %v4746 = vunpack.c.h.b16 %v3282
        %v4747 = vunpack.c.l.b16 %v3283
        %v4748 = vunpack.c.h.b16 %v3283
        %v4749 = vunpack.c.l.b16 %v3284
        %v4750 = vunpack.c.h.b16 %v3284
        %v4751 = vunpack.c.l.b16 %v3285
        %v4752 = vunpack.c.h.b16 %v3285
        %v4753 = vunpack.c.l.b16 %v3286
        %v4754 = vunpack.c.h.b16 %v3286
        %v4755 = vunpack.c.l.b16 %v3287
        %v4756 = vunpack.c.h.b16 %v3287
        %v4757 = vunpack.c.l.b16 %v3288
        %v4758 = vunpack.c.h.b16 %v3288
        %v4759 = vunpack.c.l.b16 %v3289
        %v4760 = vunpack.c.h.b16 %v3289
        %v4761 = vunpack.c.l.b16 %v3290
        %v4762 = vunpack.c.h.b16 %v3290
        %v4763 = vunpack.c.l.b16 %v3291
        %v4764 = vunpack.c.h.b16 %v3291
        %v4765 = vunpack.c.l.b16 %v3292
        %v4766 = vunpack.c.h.b16 %v3292
        %v4767 = vunpack.c.l.b16 %v3293
        %v4768 = vunpack.c.h.b16 %v3293
        %v4769 = vunpack.c.l.b16 %v3294
        %v4770 = vunpack.c.h.b16 %v3294
        %v4771 = vunpack.c.l.b16 %v3295
        %v4772 = vunpack.c.h.b16 %v3295
        %v4773 = vunpack.c.l.b16 %v3296
        %v4774 = vunpack.c.h.b16 %v3296
        %v4775 = vunpack.c.l.b16 %v3297
        %v4776 = vunpack.c.h.b16 %v3297
        %v4777 = vunpack.c.l.b16 %v3298
        %v4778 = vunpack.c.h.b16 %v3298
        %v4779 = vunpack.c.l.b16 %v3299
        %v4780 = vunpack.c.h.b16 %v3299
        %v4781 = vunpack.c.l.b16 %v3300
        %v4782 = vunpack.c.h.b16 %v3300
        %v4783 = vunpack.c.l.b16 %v3301
        %v4784 = vunpack.c.h.b16 %v3301
        %v4785 = vunpack.c.l.b16 %v3302
        %v4786 = vunpack.c.h.b16 %v3302
        %v4787 = vunpack.c.l.b16 %v3303
        %v4788 = vunpack.c.h.b16 %v3303
        %v4789 = vunpack.c.l.b16 %v3304
        %v4790 = vunpack.c.h.b16 %v3304
        %v4791 = vunpack.c.l.b16 %v3305
        %v4792 = vunpack.c.h.b16 %v3305
        %v4793 = vunpack.c.l.b16 %v3306
        %v4794 = vunpack.c.h.b16 %v3306
        %v4795 = vunpack.c.l.b16 %v3307
        %v4796 = vunpack.c.h.b16 %v3307
        %v4797 = vunpack.c.l.b16 %v3308
        %v4798 = vunpack.c.h.b16 %v3308
        %v4799 = vunpack.c.l.b16 %v3309
        %v4800 = vunpack.c.h.b16 %v3309
        %v4801 = vunpack.c.l.b16 %v3310
        %v4802 = vunpack.c.h.b16 %v3310
        %v4803 = vunpack.c.l.b16 %v3311
        %v4804 = vunpack.c.h.b16 %v3311
        %v4805 = vunpack.c.l.b16 %v3312
        %v4806 = vunpack.c.h.b16 %v3312
        %v4807 = vunpack.c.l.b16 %v3313
        %v4808 = vunpack.c.h.b16 %v3313
        %v4809 = vunpack.c.l.b16 %v3314
        %v4810 = vunpack.c.h.b16 %v3314
        %v4811 = vunpack.c.l.b16 %v3315
        %v4812 = vunpack.c.h.b16 %v3315
        %v4813 = vunpack.c.l.b16 %v3316
        %v4814 = vunpack.c.h.b16 %v3316
        %v4815 = vunpack.c.l.b16 %v3317
        %v4816 = vunpack.c.h.b16 %v3317
        %v4817 = vunpack.c.l.b16 %v3318
        %v4818 = vunpack.c.h.b16 %v3318
        %v4819 = vunpack.c.l.b16 %v3319
        %v4820 = vunpack.c.h.b16 %v3319
        %v4821 = vunpack.c.l.b16 %v3320
        %v4822 = vunpack.c.h.b16 %v3320
        %v4823 = vunpack.c.l.b16 %v3321
        %v4824 = vunpack.c.h.b16 %v3321
        %v4825 = vunpack.c.l.b16 %v3322
        %v4826 = vunpack.c.h.b16 %v3322
        %v4827 = vunpack.c.l.b16 %v3323
        %v4828 = vunpack.c.h.b16 %v3323
        %v4829 = vunpack.c.l.b16 %v3324
        %v4830 = vunpack.c.h.b16 %v3324
        %v4831 = vunpack.c.l.b16 %v3325
        %v4832 = vunpack.c.h.b16 %v3325
        %v4833 = vunpack.c.l.b16 %v3326
        %v4834 = vunpack.c.h.b16 %v3326
        %v4835 = vunpack.c.l.b16 %v3327
        %v4836 = vunpack.c.h.b16 %v3327
        %v4837 = vunpack.c.l.b16 %v3328
        %v4838 = vunpack.c.h.b16 %v3328
        %v4839 = vunpack.c.l.b16 %v3329
        %v4840 = vunpack.c.h.b16 %v3329
        %v4841 = vunpack.c.l.b16 %v3330
        %v4842 = vunpack.c.h.b16 %v3330
        %v4843 = vunpack.c.l.b16 %v3331
        %v4844 = vunpack.c.h.b16 %v3331
        %v4845 = vunpack.c.l.b16 %v3332
        %v4846 = vunpack.c.h.b16 %v3332
        %v4847 = vunpack.c.l.b16 %v3333
        %v4848 = vunpack.c.h.b16 %v3333
        %v4849 = vunpack.c.l.b16 %v3334
        %v4850 = vunpack.c.h.b16 %v3334
        %v4851 = vunpack.c.l.b16 %v3335
        %v4852 = vunpack.c.h.b16 %v3335
        %v4853 = vunpack.c.l.b16 %v3336
        %v4854 = vunpack.c.h.b16 %v3336
        %v4855 = vunpack.c.l.b16 %v3337
        %v4856 = vunpack.c.h.b16 %v3337
        %v4857 = vunpack.c.l.b16 %v3338
        %v4858 = vunpack.c.h.b16 %v3338
        %v4859 = vunpack.c.l.b16 %v3339
        %v4860 = vunpack.c.h.b16 %v3339
        %v4861 = vunpack.c.l.b16 %v3340
        %v4862 = vunpack.c.h.b16 %v3340
        %v4863 = vunpack.c.l.b16 %v3341
        %v4864 = vunpack.c.h.b16 %v3341
        %v4865 = vunpack.c.l.b16 %v3342
        %v4866 = vunpack.c.h.b16 %v3342
        %v4867 = vunpack.c.l.b16 %v3343
        %v4868 = vunpack.c.h.b16 %v3343
        %v4869 = vunpack.c.l.b16 %v3344
        %v4870 = vunpack.c.h.b16 %v3344
        %v4871 = vunpack.c.l.b16 %v3345
        %v4872 = vunpack.c.h.b16 %v3345
        %v4873 = vunpack.c.l.b16 %v3346
        %v4874 = vunpack.c.h.b16 %v3346
        %v4875 = vunpack.c.l.b16 %v3347
        %v4876 = vunpack.c.h.b16 %v3347
        %v4877 = vunpack.c.l.b16 %v3348
        %v4878 = vunpack.c.h.b16 %v3348
        %v4879 = vunpack.c.l.b16 %v3349
        %v4880 = vunpack.c.h.b16 %v3349
        %v4881 = vunpack.c.l.b16 %v3350
        %v4882 = vunpack.c.h.b16 %v3350
        %v4883 = vunpack.c.l.b16 %v3351
        %v4884 = vunpack.c.h.b16 %v3351
        %v4885 = vunpack.c.l.b16 %v3352
        %v4886 = vunpack.c.h.b16 %v3352
        %v4887 = vunpack.c.l.b16 %v3353
        %v4888 = vunpack.c.h.b16 %v3353
        %v4889 = vunpack.c.l.b16 %v3354
        %v4890 = vunpack.c.h.b16 %v3354
        %v4891 = vpack.c.b16 %v3875, %v3867
        %v4892 = vpack.c.b16 %v3876, %v3868
        %v4893 = vpack.c.b16 %v3877, %v3869
        %v4894 = vpack.c.b16 %v3878, %v3870
        %v4895 = vpack.c.b16 %v3879, %v3871
        %v4896 = vpack.c.b16 %v3880, %v3872
        %v4897 = vpack.c.b16 %v3881, %v3873
        %v4898 = vpack.c.b16 %v3882, %v3874
        %v4899 = vpack.c.b16 %v3891, %v3883
        %v4900 = vpack.c.b16 %v3892, %v3884
        %v4901 = vpack.c.b16 %v3893, %v3885
        %v4902 = vpack.c.b16 %v3894, %v3886
        %v4903 = vpack.c.b16 %v3895, %v3887
        %v4904 = vpack.c.b16 %v3896, %v3888
        %v4905 = vpack.c.b16 %v3897, %v3889
        %v4906 = vpack.c.b16 %v3898, %v3890
        %v4907 = vpack.c.b16 %v3907, %v3899
        %v4908 = vpack.c.b16 %v3908, %v3900
        %v4909 = vpack.c.b16 %v3909, %v3901
        %v4910 = vpack.c.b16 %v3910, %v3902
        %v4911 = vpack.c.b16 %v3911, %v3903
        %v4912 = vpack.c.b16 %v3912, %v3904
        %v4913 = vpack.c.b16 %v3913, %v3905
        %v4914 = vpack.c.b16 %v3914, %v3906
        %v4915 = vpack.c.b16 %v3923, %v3915
        %v4916 = vpack.c.b16 %v3924, %v3916
        %v4917 = vpack.c.b16 %v3925, %v3917
        %v4918 = vpack.c.b16 %v3926, %v3918
        %v4919 = vpack.c.b16 %v3927, %v3919
        %v4920 = vpack.c.b16 %v3928, %v3920
        %v4921 = vpack.c.b16 %v3929, %v3921
        %v4922 = vpack.c.b16 %v3930, %v3922
        %v4923 = vpack.c.b16 %v3939, %v3931
        %v4924 = vpack.c.b16 %v3940, %v3932
        %v4925 = vpack.c.b16 %v3941, %v3933
        %v4926 = vpack.c.b16 %v3942, %v3934
        %v4927 = vpack.c.b16 %v3943, %v3935
        %v4928 = vpack.c.b16 %v3944, %v3936
        %v4929 = vpack.c.b16 %v3945, %v3937
        %v4930 = vpack.c.b16 %v3946, %v3938
        %v4931 = vpack.c.b16 %v3955, %v3947
        %v4932 = vpack.c.b16 %v3956, %v3948
        %v4933 = vpack.c.b16 %v3957, %v3949
        %v4934 = vpack.c.b16 %v3958, %v3950
        %v4935 = vpack.c.b16 %v3959, %v3951
        %v4936 = vpack.c.b16 %v3960, %v3952
        %v4937 = vpack.c.b16 %v3961, %v3953
        %v4938 = vpack.c.b16 %v3962, %v3954
        %v4939 = vpack.c.b16 %v3971, %v3963
        %v4940 = vpack.c.b16 %v3972, %v3964
        %v4941 = vpack.c.b16 %v3973, %v3965
        %v4942 = vpack.c.b16 %v3974, %v3966
        %v4943 = vpack.c.b16 %v3975, %v3967
        %v4944 = vpack.c.b16 %v3976, %v3968
        %v4945 = vpack.c.b16 %v3977, %v3969
        %v4946 = vpack.c.b16 %v3978, %v3970
        %v4947 = vpack.c.b16 %v3987, %v3979
        %v4948 = vpack.c.b16 %v3988, %v3980
        %v4949 = vpack.c.b16 %v3989, %v3981
        %v4950 = vpack.c.b16 %v3990, %v3982
        %v4951 = vpack.c.b16 %v3991, %v3983
        %v4952 = vpack.c.b16 %v3992, %v3984
        %v4953 = vpack.c.b16 %v3993, %v3985
        %v4954 = vpack.c.b16 %v3994, %v3986
        %v4955 = vpack.c.b16 %v4003, %v3995
        %v4956 = vpack.c.b16 %v4004, %v3996
        %v4957 = vpack.c.b16 %v4005, %v3997
        %v4958 = vpack.c.b16 %v4006, %v3998
        %v4959 = vpack.c.b16 %v4007, %v3999
        %v4960 = vpack.c.b16 %v4008, %v4000
        %v4961 = vpack.c.b16 %v4009, %v4001
        %v4962 = vpack.c.b16 %v4010, %v4002
        %v4963 = vpack.c.b16 %v4019, %v4011
        %v4964 = vpack.c.b16 %v4020, %v4012
        %v4965 = vpack.c.b16 %v4021, %v4013
        %v4966 = vpack.c.b16 %v4022, %v4014
        %v4967 = vpack.c.b16 %v4023, %v4015
        %v4968 = vpack.c.b16 %v4024, %v4016
        %v4969 = vpack.c.b16 %v4025, %v4017
        %v4970 = vpack.c.b16 %v4026, %v4018
        %v4971 = vpack.c.b16 %v4035, %v4027
        %v4972 = vpack.c.b16 %v4036, %v4028
        %v4973 = vpack.c.b16 %v4037, %v4029
        %v4974 = vpack.c.b16 %v4038, %v4030
        %v4975 = vpack.c.b16 %v4039, %v4031
        %v4976 = vpack.c.b16 %v4040, %v4032
        %v4977 = vpack.c.b16 %v4041, %v4033
        %v4978 = vpack.c.b16 %v4042, %v4034
        %v4979 = vpack.c.b16 %v4051, %v4043
        %v4980 = vpack.c.b16 %v4052, %v4044
        %v4981 = vpack.c.b16 %v4053, %v4045
        %v4982 = vpack.c.b16 %v4054, %v4046
        %v4983 = vpack.c.b16 %v4055, %v4047
        %v4984 = vpack.c.b16 %v4056, %v4048
        %v4985 = vpack.c.b16 %v4057, %v4049
        %v4986 = vpack.c.b16 %v4058, %v4050
        %v4987 = vpack.c.b16 %v4067, %v4059
        %v4988 = vpack.c.b16 %v4068, %v4060
        %v4989 = vpack.c.b16 %v4069, %v4061
        %v4990 = vpack.c.b16 %v4070, %v4062
        %v4991 = vpack.c.b16 %v4071, %v4063
        %v4992 = vpack.c.b16 %v4072, %v4064
        %v4993 = vpack.c.b16 %v4073, %v4065
        %v4994 = vpack.c.b16 %v4074, %v4066
        %v4995 = vpack.c.b16 %v4083, %v4075
        %v4996 = vpack.c.b16 %v4084, %v4076
        %v4997 = vpack.c.b16 %v4085, %v4077
        %v4998 = vpack.c.b16 %v4086, %v4078
        %v4999 = vpack.c.b16 %v4087, %v4079
        %v5000 = vpack.c.b16 %v4088, %v4080
        %v5001 = vpack.c.b16 %v4089, %v4081
        %v5002 = vpack.c.b16 %v4090, %v4082
        %v5003 = vpack.c.b16 %v4099, %v4091
        %v5004 = vpack.c.b16 %v4100, %v4092
        %v5005 = vpack.c.b16 %v4101, %v4093
        %v5006 = vpack.c.b16 %v4102, %v4094
        %v5007 = vpack.c.b16 %v4103, %v4095
        %v5008 = vpack.c.b16 %v4104, %v4096
        %v5009 = vpack.c.b16 %v4105, %v4097
        %v5010 = vpack.c.b16 %v4106, %v4098
        %v5011 = vpack.c.b16 %v4115, %v4107
        %v5012 = vpack.c.b16 %v4116, %v4108
        %v5013 = vpack.c.b16 %v4117, %v4109
        %v5014 = vpack.c.b16 %v4118, %v4110
        %v5015 = vpack.c.b16 %v4119, %v4111
        %v5016 = vpack.c.b16 %v4120, %v4112
        %v5017 = vpack.c.b16 %v4121, %v4113
        %v5018 = vpack.c.b16 %v4122, %v4114
        %v5019 = vpack.c.b16 %v4131, %v4123
        %v5020 = vpack.c.b16 %v4132, %v4124
        %v5021 = vpack.c.b16 %v4133, %v4125
        %v5022 = vpack.c.b16 %v4134, %v4126
        %v5023 = vpack.c.b16 %v4135, %v4127
        %v5024 = vpack.c.b16 %v4136, %v4128
        %v5025 = vpack.c.b16 %v4137, %v4129
        %v5026 = vpack.c.b16 %v4138, %v4130
        %v5027 = vpack.c.b16 %v4147, %v4139
        %v5028 = vpack.c.b16 %v4148, %v4140
        %v5029 = vpack.c.b16 %v4149, %v4141
        %v5030 = vpack.c.b16 %v4150, %v4142
        %v5031 = vpack.c.b16 %v4151, %v4143
        %v5032 = vpack.c.b16 %v4152, %v4144
        %v5033 = vpack.c.b16 %v4153, %v4145
        %v5034 = vpack.c.b16 %v4154, %v4146
        %v5035 = vpack.c.b16 %v4163, %v4155
        %v5036 = vpack.c.b16 %v4164, %v4156
        %v5037 = vpack.c.b16 %v4165, %v4157
        %v5038 = vpack.c.b16 %v4166, %v4158
        %v5039 = vpack.c.b16 %v4167, %v4159
        %v5040 = vpack.c.b16 %v4168, %v4160
        %v5041 = vpack.c.b16 %v4169, %v4161
        %v5042 = vpack.c.b16 %v4170, %v4162
        %v5043 = vpack.c.b16 %v4179, %v4171
        %v5044 = vpack.c.b16 %v4180, %v4172
        %v5045 = vpack.c.b16 %v4181, %v4173
        %v5046 = vpack.c.b16 %v4182, %v4174
        %v5047 = vpack.c.b16 %v4183, %v4175
        %v5048 = vpack.c.b16 %v4184, %v4176
        %v5049 = vpack.c.b16 %v4185, %v4177
        %v5050 = vpack.c.b16 %v4186, %v4178
        %v5051 = vpack.c.b16 %v4195, %v4187
        %v5052 = vpack.c.b16 %v4196, %v4188
        %v5053 = vpack.c.b16 %v4197, %v4189
        %v5054 = vpack.c.b16 %v4198, %v4190
        %v5055 = vpack.c.b16 %v4199, %v4191
        %v5056 = vpack.c.b16 %v4200, %v4192
        %v5057 = vpack.c.b16 %v4201, %v4193
        %v5058 = vpack.c.b16 %v4202, %v4194
        %v5059 = vpack.c.b16 %v4211, %v4203
        %v5060 = vpack.c.b16 %v4212, %v4204
        %v5061 = vpack.c.b16 %v4213, %v4205
        %v5062 = vpack.c.b16 %v4214, %v4206
        %v5063 = vpack.c.b16 %v4215, %v4207
        %v5064 = vpack.c.b16 %v4216, %v4208
        %v5065 = vpack.c.b16 %v4217, %v4209
        %v5066 = vpack.c.b16 %v4218, %v4210
        %v5067 = vpack.c.b16 %v4227, %v4219
        %v5068 = vpack.c.b16 %v4228, %v4220
        %v5069 = vpack.c.b16 %v4229, %v4221
        %v5070 = vpack.c.b16 %v4230, %v4222
        %v5071 = vpack.c.b16 %v4231, %v4223
        %v5072 = vpack.c.b16 %v4232, %v4224
        %v5073 = vpack.c.b16 %v4233, %v4225
        %v5074 = vpack.c.b16 %v4234, %v4226
        %v5075 = vpack.c.b16 %v4243, %v4235
        %v5076 = vpack.c.b16 %v4244, %v4236
        %v5077 = vpack.c.b16 %v4245, %v4237
        %v5078 = vpack.c.b16 %v4246, %v4238
        %v5079 = vpack.c.b16 %v4247, %v4239
        %v5080 = vpack.c.b16 %v4248, %v4240
        %v5081 = vpack.c.b16 %v4249, %v4241
        %v5082 = vpack.c.b16 %v4250, %v4242
        %v5083 = vpack.c.b16 %v4259, %v4251
        %v5084 = vpack.c.b16 %v4260, %v4252
        %v5085 = vpack.c.b16 %v4261, %v4253
        %v5086 = vpack.c.b16 %v4262, %v4254
        %v5087 = vpack.c.b16 %v4263, %v4255
        %v5088 = vpack.c.b16 %v4264, %v4256
        %v5089 = vpack.c.b16 %v4265, %v4257
        %v5090 = vpack.c.b16 %v4266, %v4258
        %v5091 = vpack.c.b16 %v4275, %v4267
        %v5092 = vpack.c.b16 %v4276, %v4268
        %v5093 = vpack.c.b16 %v4277, %v4269
        %v5094 = vpack.c.b16 %v4278, %v4270
        %v5095 = vpack.c.b16 %v4279, %v4271
        %v5096 = vpack.c.b16 %v4280, %v4272
        %v5097 = vpack.c.b16 %v4281, %v4273
        %v5098 = vpack.c.b16 %v4282, %v4274
        %v5099 = vpack.c.b16 %v4291, %v4283
        %v5100 = vpack.c.b16 %v4292, %v4284
        %v5101 = vpack.c.b16 %v4293, %v4285
        %v5102 = vpack.c.b16 %v4294, %v4286
        %v5103 = vpack.c.b16 %v4295, %v4287
        %v5104 = vpack.c.b16 %v4296, %v4288
        %v5105 = vpack.c.b16 %v4297, %v4289
        %v5106 = vpack.c.b16 %v4298, %v4290
        %v5107 = vpack.c.b16 %v4307, %v4299
        %v5108 = vpack.c.b16 %v4308, %v4300
        %v5109 = vpack.c.b16 %v4309, %v4301
        %v5110 = vpack.c.b16 %v4310, %v4302
        %v5111 = vpack.c.b16 %v4311, %v4303
        %v5112 = vpack.c.b16 %v4312, %v4304
        %v5113 = vpack.c.b16 %v4313, %v4305
        %v5114 = vpack.c.b16 %v4314, %v4306
        %v5115 = vpack.c.b16 %v4323, %v4315
        %v5116 = vpack.c.b16 %v4324, %v4316
        %v5117 = vpack.c.b16 %v4325, %v4317
        %v5118 = vpack.c.b16 %v4326, %v4318
        %v5119 = vpack.c.b16 %v4327, %v4319
        %v5120 = vpack.c.b16 %v4328, %v4320
        %v5121 = vpack.c.b16 %v4329, %v4321
        %v5122 = vpack.c.b16 %v4330, %v4322
        %v5123 = vpack.c.b16 %v4339, %v4331
        %v5124 = vpack.c.b16 %v4340, %v4332
        %v5125 = vpack.c.b16 %v4341, %v4333
        %v5126 = vpack.c.b16 %v4342, %v4334
        %v5127 = vpack.c.b16 %v4343, %v4335
        %v5128 = vpack.c.b16 %v4344, %v4336
        %v5129 = vpack.c.b16 %v4345, %v4337
        %v5130 = vpack.c.b16 %v4346, %v4338
        %v5131 = vpack.c.b16 %v4355, %v4347
        %v5132 = vpack.c.b16 %v4356, %v4348
        %v5133 = vpack.c.b16 %v4357, %v4349
        %v5134 = vpack.c.b16 %v4358, %v4350
        %v5135 = vpack.c.b16 %v4359, %v4351
        %v5136 = vpack.c.b16 %v4360, %v4352
        %v5137 = vpack.c.b16 %v4361, %v4353
        %v5138 = vpack.c.b16 %v4362, %v4354
        %v5139 = vpack.c.b16 %v4371, %v4363
        %v5140 = vpack.c.b16 %v4372, %v4364
        %v5141 = vpack.c.b16 %v4373, %v4365
        %v5142 = vpack.c.b16 %v4374, %v4366
        %v5143 = vpack.c.b16 %v4375, %v4367
        %v5144 = vpack.c.b16 %v4376, %v4368
        %v5145 = vpack.c.b16 %v4377, %v4369
        %v5146 = vpack.c.b16 %v4378, %v4370
        %v5147 = vpack.c.b16 %v4387, %v4379
        %v5148 = vpack.c.b16 %v4388, %v4380
        %v5149 = vpack.c.b16 %v4389, %v4381
        %v5150 = vpack.c.b16 %v4390, %v4382
        %v5151 = vpack.c.b16 %v4391, %v4383
        %v5152 = vpack.c.b16 %v4392, %v4384
        %v5153 = vpack.c.b16 %v4393, %v4385
        %v5154 = vpack.c.b16 %v4394, %v4386
        %v5155 = vpack.c.b16 %v4403, %v4395
        %v5156 = vpack.c.b16 %v4404, %v4396
        %v5157 = vpack.c.b16 %v4405, %v4397
        %v5158 = vpack.c.b16 %v4406, %v4398
        %v5159 = vpack.c.b16 %v4407, %v4399
        %v5160 = vpack.c.b16 %v4408, %v4400
        %v5161 = vpack.c.b16 %v4409, %v4401
        %v5162 = vpack.c.b16 %v4410, %v4402
        %v5163 = vpack.c.b16 %v4419, %v4411
        %v5164 = vpack.c.b16 %v4420, %v4412
        %v5165 = vpack.c.b16 %v4421, %v4413
        %v5166 = vpack.c.b16 %v4422, %v4414
        %v5167 = vpack.c.b16 %v4423, %v4415
        %v5168 = vpack.c.b16 %v4424, %v4416
        %v5169 = vpack.c.b16 %v4425, %v4417
        %v5170 = vpack.c.b16 %v4426, %v4418
        %v5171 = vpack.c.b16 %v4435, %v4427
        %v5172 = vpack.c.b16 %v4436, %v4428
        %v5173 = vpack.c.b16 %v4437, %v4429
        %v5174 = vpack.c.b16 %v4438, %v4430
        %v5175 = vpack.c.b16 %v4439, %v4431
        %v5176 = vpack.c.b16 %v4440, %v4432
        %v5177 = vpack.c.b16 %v4441, %v4433
        %v5178 = vpack.c.b16 %v4442, %v4434
        %v5179 = vpack.c.b16 %v4451, %v4443
        %v5180 = vpack.c.b16 %v4452, %v4444
        %v5181 = vpack.c.b16 %v4453, %v4445
        %v5182 = vpack.c.b16 %v4454, %v4446
        %v5183 = vpack.c.b16 %v4455, %v4447
        %v5184 = vpack.c.b16 %v4456, %v4448
        %v5185 = vpack.c.b16 %v4457, %v4449
        %v5186 = vpack.c.b16 %v4458, %v4450
        %v5187 = vpack.c.b16 %v4467, %v4459
        %v5188 = vpack.c.b16 %v4468, %v4460
        %v5189 = vpack.c.b16 %v4469, %v4461
        %v5190 = vpack.c.b16 %v4470, %v4462
        %v5191 = vpack.c.b16 %v4471, %v4463
        %v5192 = vpack.c.b16 %v4472, %v4464
        %v5193 = vpack.c.b16 %v4473, %v4465
        %v5194 = vpack.c.b16 %v4474, %v4466
        %v5195 = vpack.c.b16 %v4483, %v4475
        %v5196 = vpack.c.b16 %v4484, %v4476
        %v5197 = vpack.c.b16 %v4485, %v4477
        %v5198 = vpack.c.b16 %v4486, %v4478
        %v5199 = vpack.c.b16 %v4487, %v4479
        %v5200 = vpack.c.b16 %v4488, %v4480
        %v5201 = vpack.c.b16 %v4489, %v4481
        %v5202 = vpack.c.b16 %v4490, %v4482
        %v5203 = vpack.c.b16 %v4499, %v4491
        %v5204 = vpack.c.b16 %v4500, %v4492
        %v5205 = vpack.c.b16 %v4501, %v4493
        %v5206 = vpack.c.b16 %v4502, %v4494
        %v5207 = vpack.c.b16 %v4503, %v4495
        %v5208 = vpack.c.b16 %v4504, %v4496
        %v5209 = vpack.c.b16 %v4505, %v4497
        %v5210 = vpack.c.b16 %v4506, %v4498
        %v5211 = vpack.c.b16 %v4515, %v4507
        %v5212 = vpack.c.b16 %v4516, %v4508
        %v5213 = vpack.c.b16 %v4517, %v4509
        %v5214 = vpack.c.b16 %v4518, %v4510
        %v5215 = vpack.c.b16 %v4519, %v4511
        %v5216 = vpack.c.b16 %v4520, %v4512
        %v5217 = vpack.c.b16 %v4521, %v4513
        %v5218 = vpack.c.b16 %v4522, %v4514
        %v5219 = vpack.c.b16 %v4531, %v4523
        %v5220 = vpack.c.b16 %v4532, %v4524
        %v5221 = vpack.c.b16 %v4533, %v4525
        %v5222 = vpack.c.b16 %v4534, %v4526
        %v5223 = vpack.c.b16 %v4535, %v4527
        %v5224 = vpack.c.b16 %v4536, %v4528
        %v5225 = vpack.c.b16 %v4537, %v4529
        %v5226 = vpack.c.b16 %v4538, %v4530
        %v5227 = vpack.c.b16 %v4547, %v4539
        %v5228 = vpack.c.b16 %v4548, %v4540
        %v5229 = vpack.c.b16 %v4549, %v4541
        %v5230 = vpack.c.b16 %v4550, %v4542
        %v5231 = vpack.c.b16 %v4551, %v4543
        %v5232 = vpack.c.b16 %v4552, %v4544
        %v5233 = vpack.c.b16 %v4553, %v4545
        %v5234 = vpack.c.b16 %v4554, %v4546
        %v5235 = vpack.c.b16 %v4563, %v4555
        %v5236 = vpack.c.b16 %v4564, %v4556
        %v5237 = vpack.c.b16 %v4565, %v4557
        %v5238 = vpack.c.b16 %v4566, %v4558
        %v5239 = vpack.c.b16 %v4567, %v4559
        %v5240 = vpack.c.b16 %v4568, %v4560
        %v5241 = vpack.c.b16 %v4569, %v4561
        %v5242 = vpack.c.b16 %v4570, %v4562
        %v5243 = vpack.c.b16 %v4579, %v4571
        %v5244 = vpack.c.b16 %v4580, %v4572
        %v5245 = vpack.c.b16 %v4581, %v4573
        %v5246 = vpack.c.b16 %v4582, %v4574
        %v5247 = vpack.c.b16 %v4583, %v4575
        %v5248 = vpack.c.b16 %v4584, %v4576
        %v5249 = vpack.c.b16 %v4585, %v4577
        %v5250 = vpack.c.b16 %v4586, %v4578
        %v5251 = vpack.c.b16 %v4595, %v4587
        %v5252 = vpack.c.b16 %v4596, %v4588
        %v5253 = vpack.c.b16 %v4597, %v4589
        %v5254 = vpack.c.b16 %v4598, %v4590
        %v5255 = vpack.c.b16 %v4599, %v4591
        %v5256 = vpack.c.b16 %v4600, %v4592
        %v5257 = vpack.c.b16 %v4601, %v4593
        %v5258 = vpack.c.b16 %v4602, %v4594
        %v5259 = vpack.c.b16 %v4611, %v4603
        %v5260 = vpack.c.b16 %v4612, %v4604
        %v5261 = vpack.c.b16 %v4613, %v4605
        %v5262 = vpack.c.b16 %v4614, %v4606
        %v5263 = vpack.c.b16 %v4615, %v4607
        %v5264 = vpack.c.b16 %v4616, %v4608
        %v5265 = vpack.c.b16 %v4617, %v4609
        %v5266 = vpack.c.b16 %v4618, %v4610
        %v5267 = vpack.c.b16 %v4627, %v4619
        %v5268 = vpack.c.b16 %v4628, %v4620
        %v5269 = vpack.c.b16 %v4629, %v4621
        %v5270 = vpack.c.b16 %v4630, %v4622
        %v5271 = vpack.c.b16 %v4631, %v4623
        %v5272 = vpack.c.b16 %v4632, %v4624
        %v5273 = vpack.c.b16 %v4633, %v4625
        %v5274 = vpack.c.b16 %v4634, %v4626
        %v5275 = vpack.c.b16 %v4643, %v4635
        %v5276 = vpack.c.b16 %v4644, %v4636
        %v5277 = vpack.c.b16 %v4645, %v4637
        %v5278 = vpack.c.b16 %v4646, %v4638
        %v5279 = vpack.c.b16 %v4647, %v4639
        %v5280 = vpack.c.b16 %v4648, %v4640
        %v5281 = vpack.c.b16 %v4649, %v4641
        %v5282 = vpack.c.b16 %v4650, %v4642
        %v5283 = vpack.c.b16 %v4659, %v4651
        %v5284 = vpack.c.b16 %v4660, %v4652
        %v5285 = vpack.c.b16 %v4661, %v4653
        %v5286 = vpack.c.b16 %v4662, %v4654
        %v5287 = vpack.c.b16 %v4663, %v4655
        %v5288 = vpack.c.b16 %v4664, %v4656
        %v5289 = vpack.c.b16 %v4665, %v4657
        %v5290 = vpack.c.b16 %v4666, %v4658
        %v5291 = vpack.c.b16 %v4675, %v4667
        %v5292 = vpack.c.b16 %v4676, %v4668
        %v5293 = vpack.c.b16 %v4677, %v4669
        %v5294 = vpack.c.b16 %v4678, %v4670
        %v5295 = vpack.c.b16 %v4679, %v4671
        %v5296 = vpack.c.b16 %v4680, %v4672
        %v5297 = vpack.c.b16 %v4681, %v4673
        %v5298 = vpack.c.b16 %v4682, %v4674
        %v5299 = vpack.c.b16 %v4691, %v4683
        %v5300 = vpack.c.b16 %v4692, %v4684
        %v5301 = vpack.c.b16 %v4693, %v4685
        %v5302 = vpack.c.b16 %v4694, %v4686
        %v5303 = vpack.c.b16 %v4695, %v4687
        %v5304 = vpack.c.b16 %v4696, %v4688
        %v5305 = vpack.c.b16 %v4697, %v4689
        %v5306 = vpack.c.b16 %v4698, %v4690
        %v5307 = vpack.c.b16 %v4707, %v4699
        %v5308 = vpack.c.b16 %v4708, %v4700
        %v5309 = vpack.c.b16 %v4709, %v4701
        %v5310 = vpack.c.b16 %v4710, %v4702
        %v5311 = vpack.c.b16 %v4711, %v4703
        %v5312 = vpack.c.b16 %v4712, %v4704
        %v5313 = vpack.c.b16 %v4713, %v4705
        %v5314 = vpack.c.b16 %v4714, %v4706
        %v5315 = vpack.c.b16 %v4723, %v4715
        %v5316 = vpack.c.b16 %v4724, %v4716
        %v5317 = vpack.c.b16 %v4725, %v4717
        %v5318 = vpack.c.b16 %v4726, %v4718
        %v5319 = vpack.c.b16 %v4727, %v4719
        %v5320 = vpack.c.b16 %v4728, %v4720
        %v5321 = vpack.c.b16 %v4729, %v4721
        %v5322 = vpack.c.b16 %v4730, %v4722
        %v5323 = vpack.c.b16 %v4739, %v4731
        %v5324 = vpack.c.b16 %v4740, %v4732
        %v5325 = vpack.c.b16 %v4741, %v4733
        %v5326 = vpack.c.b16 %v4742, %v4734
        %v5327 = vpack.c.b16 %v4743, %v4735
        %v5328 = vpack.c.b16 %v4744, %v4736
        %v5329 = vpack.c.b16 %v4745, %v4737
        %v5330 = vpack.c.b16 %v4746, %v4738
        %v5331 = vpack.c.b16 %v4755, %v4747
        %v5332 = vpack.c.b16 %v4756, %v4748
        %v5333 = vpack.c.b16 %v4757, %v4749
        %v5334 = vpack.c.b16 %v4758, %v4750
        %v5335 = vpack.c.b16 %v4759, %v4751
        %v5336 = vpack.c.b16 %v4760, %v4752
        %v5337 = vpack.c.b16 %v4761, %v4753
        %v5338 = vpack.c.b16 %v4762, %v4754
        %v5339 = vpack.c.b16 %v4771, %v4763
        %v5340 = vpack.c.b16 %v4772, %v4764
        %v5341 = vpack.c.b16 %v4773, %v4765
        %v5342 = vpack.c.b16 %v4774, %v4766
        %v5343 = vpack.c.b16 %v4775, %v4767
        %v5344 = vpack.c.b16 %v4776, %v4768
        %v5345 = vpack.c.b16 %v4777, %v4769
        %v5346 = vpack.c.b16 %v4778, %v4770
        %v5347 = vpack.c.b16 %v4787, %v4779
        %v5348 = vpack.c.b16 %v4788, %v4780
        %v5349 = vpack.c.b16 %v4789, %v4781
        %v5350 = vpack.c.b16 %v4790, %v4782
        %v5351 = vpack.c.b16 %v4791, %v4783
        %v5352 = vpack.c.b16 %v4792, %v4784
        %v5353 = vpack.c.b16 %v4793, %v4785
        %v5354 = vpack.c.b16 %v4794, %v4786
        %v5355 = vpack.c.b16 %v4803, %v4795
        %v5356 = vpack.c.b16 %v4804, %v4796
        %v5357 = vpack.c.b16 %v4805, %v4797
        %v5358 = vpack.c.b16 %v4806, %v4798
        %v5359 = vpack.c.b16 %v4807, %v4799
        %v5360 = vpack.c.b16 %v4808, %v4800
        %v5361 = vpack.c.b16 %v4809, %v4801
        %v5362 = vpack.c.b16 %v4810, %v4802
        %v5363 = vpack.c.b16 %v4819, %v4811
        %v5364 = vpack.c.b16 %v4820, %v4812
        %v5365 = vpack.c.b16 %v4821, %v4813
        %v5366 = vpack.c.b16 %v4822, %v4814
        %v5367 = vpack.c.b16 %v4823, %v4815
        %v5368 = vpack.c.b16 %v4824, %v4816
        %v5369 = vpack.c.b16 %v4825, %v4817
        %v5370 = vpack.c.b16 %v4826, %v4818
        %v5371 = vpack.c.b16 %v4835, %v4827
        %v5372 = vpack.c.b16 %v4836, %v4828
        %v5373 = vpack.c.b16 %v4837, %v4829
        %v5374 = vpack.c.b16 %v4838, %v4830
        %v5375 = vpack.c.b16 %v4839, %v4831
        %v5376 = vpack.c.b16 %v4840, %v4832
        %v5377 = vpack.c.b16 %v4841, %v4833
        %v5378 = vpack.c.b16 %v4842, %v4834
        %v5379 = vpack.c.b16 %v4851, %v4843
        %v5380 = vpack.c.b16 %v4852, %v4844
        %v5381 = vpack.c.b16 %v4853, %v4845
        %v5382 = vpack.c.b16 %v4854, %v4846
        %v5383 = vpack.c.b16 %v4855, %v4847
        %v5384 = vpack.c.b16 %v4856, %v4848
        %v5385 = vpack.c.b16 %v4857, %v4849
        %v5386 = vpack.c.b16 %v4858, %v4850
        %v5387 = vpack.c.b16 %v4867, %v4859
        %v5388 = vpack.c.b16 %v4868, %v4860
        %v5389 = vpack.c.b16 %v4869, %v4861
        %v5390 = vpack.c.b16 %v4870, %v4862
        %v5391 = vpack.c.b16 %v4871, %v4863
        %v5392 = vpack.c.b16 %v4872, %v4864
        %v5393 = vpack.c.b16 %v4873, %v4865
        %v5394 = vpack.c.b16 %v4874, %v4866
        %v5395 = vpack.c.b16 %v4883, %v4875
        %v5396 = vpack.c.b16 %v4884, %v4876
        %v5397 = vpack.c.b16 %v4885, %v4877
        %v5398 = vpack.c.b16 %v4886, %v4878
        %v5399 = vpack.c.b16 %v4887, %v4879
        %v5400 = vpack.c.b16 %v4888, %v4880
        %v5401 = vpack.c.b16 %v4889, %v4881
        %v5402 = vpack.c.b16 %v4890, %v4882
        %5915 = vmatprep.subr.bf16.mxu0 %v4948
        %5916 = vmatpush1.bf16.msra.mxu0 %v4947
        %5917 = vmatprep.subr.bf16.mxu0 %v4940
        %5918 = vmatpush1.bf16.msra.mxu0 %v4939
        %5919 = vmatprep.subr.bf16.mxu0 %v4932
        %5920 = vmatpush1.bf16.msra.mxu0 %v4931
        %5921 = vmatprep.subr.bf16.mxu0 %v4924
        %5922 = vmatpush1.bf16.msra.mxu0 %v4923
        %5923 = vmatprep.subr.bf16.mxu0 %v4916
        %5924 = vmatpush1.bf16.msra.mxu0 %v4915
        %5925 = vmatprep.subr.bf16.mxu0 %v4908
        %5926 = vmatpush1.bf16.msra.mxu0 %v4907
        %5927 = vmatprep.subr.bf16.mxu0 %v4900
        %5928 = vmatpush1.bf16.msra.mxu0 %v4899
        %5929 = vmatprep.subr.bf16.mxu0 %v4892
        %5930 = vmatpush1.bf16.msra.mxu0 %v4891
        %5931 = vmatprep.subr.bf16.mxu0 %v5012
        %5932 = vmatpush2.bf16.msra.mxu0 %v5011
        %5933 = vmatprep.subr.bf16.mxu0 %v5004
        %5934 = vmatpush2.bf16.msra.mxu0 %v5003
        %5935 = vmatprep.subr.bf16.mxu0 %v4996
        %5936 = vmatpush2.bf16.msra.mxu0 %v4995
        %5937 = vmatprep.subr.bf16.mxu0 %v4988
        %5938 = vmatpush2.bf16.msra.mxu0 %v4987
        %5939 = vmatprep.subr.bf16.mxu0 %v4980
        %5940 = vmatpush2.bf16.msra.mxu0 %v4979
        %5941 = vmatprep.subr.bf16.mxu0 %v4972
        %5942 = vmatpush2.bf16.msra.mxu0 %v4971
        %5943 = vmatprep.subr.bf16.mxu0 %v4964
        %5944 = vmatpush2.bf16.msra.mxu0 %v4963
        %5945 = vmatprep.subr.bf16.mxu0 %v4956
        %5946 = vmatpush2.bf16.msra.mxu0 %v4955
        %5947 = vmatprep.mubr.bf16.mxu0 %v2836
        %5948 = vmatmul.mubr.bf16.gmra.mxu0 %v2835
        %v5949 = vpop.f32.mrf.mxu0
        %v5950 = vadd.f32 0.0, %v5949
        %v5951 = vpop.f32.mrf.mxu0
        %v5952 = vadd.f32 0.0, %v5951
        %v5953 = vpop.f32.mrf.mxu0
        %v5954 = vpop.f32.mrf.mxu0
        %5955 = vdwg.mxu0
        %5956 = vmatprep.subr.bf16.mxu0 %v5076
        %5957 = vmatpush1.bf16.msra.mxu0 %v5075
        %5958 = vmatprep.subr.bf16.mxu0 %v5068
        %5959 = vmatpush1.bf16.msra.mxu0 %v5067
        %5960 = vmatprep.subr.bf16.mxu0 %v5060
        %5961 = vmatpush1.bf16.msra.mxu0 %v5059
        %5962 = vmatprep.subr.bf16.mxu0 %v5052
        %5963 = vmatpush1.bf16.msra.mxu0 %v5051
        %5964 = vmatprep.subr.bf16.mxu0 %v5044
        %5965 = vmatpush1.bf16.msra.mxu0 %v5043
        %5966 = vmatprep.subr.bf16.mxu0 %v5036
        %5967 = vmatpush1.bf16.msra.mxu0 %v5035
        %5968 = vmatprep.subr.bf16.mxu0 %v5028
        %5969 = vmatpush1.bf16.msra.mxu0 %v5027
        %5970 = vmatprep.subr.bf16.mxu0 %v5020
        %5971 = vmatpush1.bf16.msra.mxu0 %v5019
        %5972 = vmatprep.subr.bf16.mxu0 %v5140
        %5973 = vmatpush2.bf16.msra.mxu0 %v5139
        %5974 = vmatprep.subr.bf16.mxu0 %v5132
        %5975 = vmatpush2.bf16.msra.mxu0 %v5131
        %5976 = vmatprep.subr.bf16.mxu0 %v5124
        %5977 = vmatpush2.bf16.msra.mxu0 %v5123
        %5978 = vmatprep.subr.bf16.mxu0 %v5116
        %5979 = vmatpush2.bf16.msra.mxu0 %v5115
        %5980 = vmatprep.subr.bf16.mxu0 %v5108
        %5981 = vmatpush2.bf16.msra.mxu0 %v5107
        %5982 = vmatprep.subr.bf16.mxu0 %v5100
        %5983 = vmatpush2.bf16.msra.mxu0 %v5099
        %5984 = vmatprep.subr.bf16.mxu0 %v5092
        %5985 = vmatpush2.bf16.msra.mxu0 %v5091
        %5986 = vmatprep.subr.bf16.mxu0 %v5084
        %5987 = vmatpush2.bf16.msra.mxu0 %v5083
        %5988 = vmatprep.mubr.bf16.mxu0 %v2838
        %5989 = vmatmul.mubr.bf16.gmra.mxu0 %v2837
        %v5990 = vpop.f32.mrf.mxu0
        %v5991 = vadd.f32 %v5950, %v5990
        %v5992 = vpop.f32.mrf.mxu0
        %v5993 = vadd.f32 %v5952, %v5992
        %v5994 = vpop.f32.mrf.mxu0
        %v5995 = vpop.f32.mrf.mxu0
        %5996 = vdwg.mxu0
        %5997 = vmatprep.subr.bf16.mxu0 %v5204
        %5998 = vmatpush1.bf16.msra.mxu0 %v5203
        %5999 = vmatprep.subr.bf16.mxu0 %v5196
        %6000 = vmatpush1.bf16.msra.mxu0 %v5195
        %6001 = vmatprep.subr.bf16.mxu0 %v5188
        %6002 = vmatpush1.bf16.msra.mxu0 %v5187
        %6003 = vmatprep.subr.bf16.mxu0 %v5180
        %6004 = vmatpush1.bf16.msra.mxu0 %v5179
        %6005 = vmatprep.subr.bf16.mxu0 %v5172
        %6006 = vmatpush1.bf16.msra.mxu0 %v5171
        %6007 = vmatprep.subr.bf16.mxu0 %v5164
        %6008 = vmatpush1.bf16.msra.mxu0 %v5163
        %6009 = vmatprep.subr.bf16.mxu0 %v5156
        %6010 = vmatpush1.bf16.msra.mxu0 %v5155
        %6011 = vmatprep.subr.bf16.mxu0 %v5148
        %6012 = vmatpush1.bf16.msra.mxu0 %v5147
        %6013 = vmatprep.subr.bf16.mxu0 %v5268
        %6014 = vmatpush2.bf16.msra.mxu0 %v5267
        %6015 = vmatprep.subr.bf16.mxu0 %v5260
        %6016 = vmatpush2.bf16.msra.mxu0 %v5259
        %6017 = vmatprep.subr.bf16.mxu0 %v5252
        %6018 = vmatpush2.bf16.msra.mxu0 %v5251
        %6019 = vmatprep.subr.bf16.mxu0 %v5244
        %6020 = vmatpush2.bf16.msra.mxu0 %v5243
        %6021 = vmatprep.subr.bf16.mxu0 %v5236
        %6022 = vmatpush2.bf16.msra.mxu0 %v5235
        %6023 = vmatprep.subr.bf16.mxu0 %v5228
        %6024 = vmatpush2.bf16.msra.mxu0 %v5227
        %6025 = vmatprep.subr.bf16.mxu0 %v5220
        %6026 = vmatpush2.bf16.msra.mxu0 %v5219
        %6027 = vmatprep.subr.bf16.mxu0 %v5212
        %6028 = vmatpush2.bf16.msra.mxu0 %v5211
        %6029 = vmatprep.mubr.bf16.mxu0 %v2840
        %6030 = vmatmul.mubr.bf16.gmra.mxu0 %v2839
        %v6031 = vpop.f32.mrf.mxu0
        %v6032 = vadd.f32 %v5991, %v6031
        %v6033 = vpop.f32.mrf.mxu0
        %v6034 = vadd.f32 %v5993, %v6033
        %v6035 = vpop.f32.mrf.mxu0
        %v6036 = vpop.f32.mrf.mxu0
        %6037 = vdwg.mxu0
        %6038 = vmatprep.subr.bf16.mxu0 %v5332
        %6039 = vmatpush1.bf16.msra.mxu0 %v5331
        %6040 = vmatprep.subr.bf16.mxu0 %v5324
        %6041 = vmatpush1.bf16.msra.mxu0 %v5323
        %6042 = vmatprep.subr.bf16.mxu0 %v5316
        %6043 = vmatpush1.bf16.msra.mxu0 %v5315
        %6044 = vmatprep.subr.bf16.mxu0 %v5308
        %6045 = vmatpush1.bf16.msra.mxu0 %v5307
        %6046 = vmatprep.subr.bf16.mxu0 %v5300
        %6047 = vmatpush1.bf16.msra.mxu0 %v5299
        %6048 = vmatprep.subr.bf16.mxu0 %v5292
        %6049 = vmatpush1.bf16.msra.mxu0 %v5291
        %6050 = vmatprep.subr.bf16.mxu0 %v5284
        %6051 = vmatpush1.bf16.msra.mxu0 %v5283
        %6052 = vmatprep.subr.bf16.mxu0 %v5276
        %6053 = vmatpush1.bf16.msra.mxu0 %v5275
        %6054 = vmatprep.subr.bf16.mxu0 %v5396
        %6055 = vmatpush2.bf16.msra.mxu0 %v5395
        %6056 = vmatprep.subr.bf16.mxu0 %v5388
        %6057 = vmatpush2.bf16.msra.mxu0 %v5387
        %6058 = vmatprep.subr.bf16.mxu0 %v5380
        %6059 = vmatpush2.bf16.msra.mxu0 %v5379
        %6060 = vmatprep.subr.bf16.mxu0 %v5372
        %6061 = vmatpush2.bf16.msra.mxu0 %v5371
        %6062 = vmatprep.subr.bf16.mxu0 %v5364
        %6063 = vmatpush2.bf16.msra.mxu0 %v5363
        %6064 = vmatprep.subr.bf16.mxu0 %v5356
        %6065 = vmatpush2.bf16.msra.mxu0 %v5355
        %6066 = vmatprep.subr.bf16.mxu0 %v5348
        %6067 = vmatpush2.bf16.msra.mxu0 %v5347
        %6068 = vmatprep.subr.bf16.mxu0 %v5340
        %6069 = vmatpush2.bf16.msra.mxu0 %v5339
        %6070 = vmatprep.mubr.bf16.mxu0 %v2842
        %6071 = vmatmul.mubr.bf16.gmra.mxu0 %v2841
        %v6072 = vpop.f32.mrf.mxu0
        %v6073 = vadd.f32 %v6032, %v6072
        %v6074 = vpop.f32.mrf.mxu0
        %v6075 = vadd.f32 %v6034, %v6074
        %v6076 = vpop.f32.mrf.mxu0
        %v6077 = vpop.f32.mrf.mxu0
        %6078 = vdwg.mxu0
        %6079 = vmatprep.subr.bf16.mxu0 %v4950
        %6080 = vmatpush1.bf16.msra.mxu0 %v4949
        %6081 = vmatprep.subr.bf16.mxu0 %v4942
        %6082 = vmatpush1.bf16.msra.mxu0 %v4941
        %6083 = vmatprep.subr.bf16.mxu0 %v4934
        %6084 = vmatpush1.bf16.msra.mxu0 %v4933
        %6085 = vmatprep.subr.bf16.mxu0 %v4926
        %6086 = vmatpush1.bf16.msra.mxu0 %v4925
        %6087 = vmatprep.subr.bf16.mxu0 %v4918
        %6088 = vmatpush1.bf16.msra.mxu0 %v4917
        %6089 = vmatprep.subr.bf16.mxu0 %v4910
        %6090 = vmatpush1.bf16.msra.mxu0 %v4909
        %6091 = vmatprep.subr.bf16.mxu0 %v4902
        %6092 = vmatpush1.bf16.msra.mxu0 %v4901
        %6093 = vmatprep.subr.bf16.mxu0 %v4894
        %6094 = vmatpush1.bf16.msra.mxu0 %v4893
        %6095 = vmatprep.subr.bf16.mxu0 %v5014
        %6096 = vmatpush2.bf16.msra.mxu0 %v5013
        %6097 = vmatprep.subr.bf16.mxu0 %v5006
        %6098 = vmatpush2.bf16.msra.mxu0 %v5005
        %6099 = vmatprep.subr.bf16.mxu0 %v4998
        %6100 = vmatpush2.bf16.msra.mxu0 %v4997
        %6101 = vmatprep.subr.bf16.mxu0 %v4990
        %6102 = vmatpush2.bf16.msra.mxu0 %v4989
        %6103 = vmatprep.subr.bf16.mxu0 %v4982
        %6104 = vmatpush2.bf16.msra.mxu0 %v4981
        %6105 = vmatprep.subr.bf16.mxu0 %v4974
        %6106 = vmatpush2.bf16.msra.mxu0 %v4973
        %6107 = vmatprep.subr.bf16.mxu0 %v4966
        %6108 = vmatpush2.bf16.msra.mxu0 %v4965
        %6109 = vmatprep.subr.bf16.mxu0 %v4958
        %6110 = vmatpush2.bf16.msra.mxu0 %v4957
        %6111 = vmatprep.mubr.bf16.mxu0 %v2836
        %6112 = vmatmul.mubr.bf16.gmra.mxu0 %v2835
        %v6113 = vpop.f32.mrf.mxu0
        %v6114 = vadd.f32 0.0, %v6113
        %v6115 = vpop.f32.mrf.mxu0
        %v6116 = vadd.f32 0.0, %v6115
        %v6117 = vpop.f32.mrf.mxu0
        %v6118 = vpop.f32.mrf.mxu0
        %6119 = vdwg.mxu0
        %6120 = vmatprep.subr.bf16.mxu0 %v5078
        %6121 = vmatpush1.bf16.msra.mxu0 %v5077
        %6122 = vmatprep.subr.bf16.mxu0 %v5070
        %6123 = vmatpush1.bf16.msra.mxu0 %v5069
        %6124 = vmatprep.subr.bf16.mxu0 %v5062
        %6125 = vmatpush1.bf16.msra.mxu0 %v5061
        %6126 = vmatprep.subr.bf16.mxu0 %v5054
        %6127 = vmatpush1.bf16.msra.mxu0 %v5053
        %6128 = vmatprep.subr.bf16.mxu0 %v5046
        %6129 = vmatpush1.bf16.msra.mxu0 %v5045
        %6130 = vmatprep.subr.bf16.mxu0 %v5038
        %6131 = vmatpush1.bf16.msra.mxu0 %v5037
        %6132 = vmatprep.subr.bf16.mxu0 %v5030
        %6133 = vmatpush1.bf16.msra.mxu0 %v5029
        %6134 = vmatprep.subr.bf16.mxu0 %v5022
        %6135 = vmatpush1.bf16.msra.mxu0 %v5021
        %6136 = vmatprep.subr.bf16.mxu0 %v5142
        %6137 = vmatpush2.bf16.msra.mxu0 %v5141
        %6138 = vmatprep.subr.bf16.mxu0 %v5134
        %6139 = vmatpush2.bf16.msra.mxu0 %v5133
        %6140 = vmatprep.subr.bf16.mxu0 %v5126
        %6141 = vmatpush2.bf16.msra.mxu0 %v5125
        %6142 = vmatprep.subr.bf16.mxu0 %v5118
        %6143 = vmatpush2.bf16.msra.mxu0 %v5117
        %6144 = vmatprep.subr.bf16.mxu0 %v5110
        %6145 = vmatpush2.bf16.msra.mxu0 %v5109
        %6146 = vmatprep.subr.bf16.mxu0 %v5102
        %6147 = vmatpush2.bf16.msra.mxu0 %v5101
        %6148 = vmatprep.subr.bf16.mxu0 %v5094
        %6149 = vmatpush2.bf16.msra.mxu0 %v5093
        %6150 = vmatprep.subr.bf16.mxu0 %v5086
        %6151 = vmatpush2.bf16.msra.mxu0 %v5085
        %6152 = vmatprep.mubr.bf16.mxu0 %v2838
        %6153 = vmatmul.mubr.bf16.gmra.mxu0 %v2837
        %v6154 = vpop.f32.mrf.mxu0
        %v6155 = vadd.f32 %v6114, %v6154
        %v6156 = vpop.f32.mrf.mxu0
        %v6157 = vadd.f32 %v6116, %v6156
        %v6158 = vpop.f32.mrf.mxu0
        %v6159 = vpop.f32.mrf.mxu0
        %6160 = vdwg.mxu0
        %6161 = vmatprep.subr.bf16.mxu0 %v5206
        %6162 = vmatpush1.bf16.msra.mxu0 %v5205
        %6163 = vmatprep.subr.bf16.mxu0 %v5198
        %6164 = vmatpush1.bf16.msra.mxu0 %v5197
        %6165 = vmatprep.subr.bf16.mxu0 %v5190
        %6166 = vmatpush1.bf16.msra.mxu0 %v5189
        %6167 = vmatprep.subr.bf16.mxu0 %v5182
        %6168 = vmatpush1.bf16.msra.mxu0 %v5181
        %6169 = vmatprep.subr.bf16.mxu0 %v5174
        %6170 = vmatpush1.bf16.msra.mxu0 %v5173
        %6171 = vmatprep.subr.bf16.mxu0 %v5166
        %6172 = vmatpush1.bf16.msra.mxu0 %v5165
        %6173 = vmatprep.subr.bf16.mxu0 %v5158
        %6174 = vmatpush1.bf16.msra.mxu0 %v5157
        %6175 = vmatprep.subr.bf16.mxu0 %v5150
        %6176 = vmatpush1.bf16.msra.mxu0 %v5149
        %6177 = vmatprep.subr.bf16.mxu0 %v5270
        %6178 = vmatpush2.bf16.msra.mxu0 %v5269
        %6179 = vmatprep.subr.bf16.mxu0 %v5262
        %6180 = vmatpush2.bf16.msra.mxu0 %v5261
        %6181 = vmatprep.subr.bf16.mxu0 %v5254
        %6182 = vmatpush2.bf16.msra.mxu0 %v5253
        %6183 = vmatprep.subr.bf16.mxu0 %v5246
        %6184 = vmatpush2.bf16.msra.mxu0 %v5245
        %6185 = vmatprep.subr.bf16.mxu0 %v5238
        %6186 = vmatpush2.bf16.msra.mxu0 %v5237
        %6187 = vmatprep.subr.bf16.mxu0 %v5230
        %6188 = vmatpush2.bf16.msra.mxu0 %v5229
        %6189 = vmatprep.subr.bf16.mxu0 %v5222
        %6190 = vmatpush2.bf16.msra.mxu0 %v5221
        %6191 = vmatprep.subr.bf16.mxu0 %v5214
        %6192 = vmatpush2.bf16.msra.mxu0 %v5213
        %6193 = vmatprep.mubr.bf16.mxu0 %v2840
        %6194 = vmatmul.mubr.bf16.gmra.mxu0 %v2839
        %v6195 = vpop.f32.mrf.mxu0
        %v6196 = vadd.f32 %v6155, %v6195
        %v6197 = vpop.f32.mrf.mxu0
        %v6198 = vadd.f32 %v6157, %v6197
        %v6199 = vpop.f32.mrf.mxu0
        %v6200 = vpop.f32.mrf.mxu0
        %6201 = vdwg.mxu0
        %6202 = vmatprep.subr.bf16.mxu0 %v5334
        %6203 = vmatpush1.bf16.msra.mxu0 %v5333
        %6204 = vmatprep.subr.bf16.mxu0 %v5326
        %6205 = vmatpush1.bf16.msra.mxu0 %v5325
        %6206 = vmatprep.subr.bf16.mxu0 %v5318
        %6207 = vmatpush1.bf16.msra.mxu0 %v5317
        %6208 = vmatprep.subr.bf16.mxu0 %v5310
        %6209 = vmatpush1.bf16.msra.mxu0 %v5309
        %6210 = vmatprep.subr.bf16.mxu0 %v5302
        %6211 = vmatpush1.bf16.msra.mxu0 %v5301
        %6212 = vmatprep.subr.bf16.mxu0 %v5294
        %6213 = vmatpush1.bf16.msra.mxu0 %v5293
        %6214 = vmatprep.subr.bf16.mxu0 %v5286
        %6215 = vmatpush1.bf16.msra.mxu0 %v5285
        %6216 = vmatprep.subr.bf16.mxu0 %v5278
        %6217 = vmatpush1.bf16.msra.mxu0 %v5277
        %6218 = vmatprep.subr.bf16.mxu0 %v5398
        %6219 = vmatpush2.bf16.msra.mxu0 %v5397
        %6220 = vmatprep.subr.bf16.mxu0 %v5390
        %6221 = vmatpush2.bf16.msra.mxu0 %v5389
        %6222 = vmatprep.subr.bf16.mxu0 %v5382
        %6223 = vmatpush2.bf16.msra.mxu0 %v5381
        %6224 = vmatprep.subr.bf16.mxu0 %v5374
        %6225 = vmatpush2.bf16.msra.mxu0 %v5373
        %6226 = vmatprep.subr.bf16.mxu0 %v5366
        %6227 = vmatpush2.bf16.msra.mxu0 %v5365
        %6228 = vmatprep.subr.bf16.mxu0 %v5358
        %6229 = vmatpush2.bf16.msra.mxu0 %v5357
        %6230 = vmatprep.subr.bf16.mxu0 %v5350
        %6231 = vmatpush2.bf16.msra.mxu0 %v5349
        %6232 = vmatprep.subr.bf16.mxu0 %v5342
        %6233 = vmatpush2.bf16.msra.mxu0 %v5341
        %6234 = vmatprep.mubr.bf16.mxu0 %v2842
        %6235 = vmatmul.mubr.bf16.gmra.mxu0 %v2841
        %v6236 = vpop.f32.mrf.mxu0
        %v6237 = vadd.f32 %v6196, %v6236
        %v6238 = vpop.f32.mrf.mxu0
        %v6239 = vadd.f32 %v6198, %v6238
        %v6240 = vpop.f32.mrf.mxu0
        %v6241 = vpop.f32.mrf.mxu0
        %6242 = vdwg.mxu0
        %6243 = vmatprep.subr.bf16.mxu0 %v4952
        %6244 = vmatpush1.bf16.msra.mxu0 %v4951
        %6245 = vmatprep.subr.bf16.mxu0 %v4944
        %6246 = vmatpush1.bf16.msra.mxu0 %v4943
        %6247 = vmatprep.subr.bf16.mxu0 %v4936
        %6248 = vmatpush1.bf16.msra.mxu0 %v4935
        %6249 = vmatprep.subr.bf16.mxu0 %v4928
        %6250 = vmatpush1.bf16.msra.mxu0 %v4927
        %6251 = vmatprep.subr.bf16.mxu0 %v4920
        %6252 = vmatpush1.bf16.msra.mxu0 %v4919
        %6253 = vmatprep.subr.bf16.mxu0 %v4912
        %6254 = vmatpush1.bf16.msra.mxu0 %v4911
        %6255 = vmatprep.subr.bf16.mxu0 %v4904
        %6256 = vmatpush1.bf16.msra.mxu0 %v4903
        %6257 = vmatprep.subr.bf16.mxu0 %v4896
        %6258 = vmatpush1.bf16.msra.mxu0 %v4895
        %6259 = vmatprep.subr.bf16.mxu0 %v5016
        %6260 = vmatpush2.bf16.msra.mxu0 %v5015
        %6261 = vmatprep.subr.bf16.mxu0 %v5008
        %6262 = vmatpush2.bf16.msra.mxu0 %v5007
        %6263 = vmatprep.subr.bf16.mxu0 %v5000
        %6264 = vmatpush2.bf16.msra.mxu0 %v4999
        %6265 = vmatprep.subr.bf16.mxu0 %v4992
        %6266 = vmatpush2.bf16.msra.mxu0 %v4991
        %6267 = vmatprep.subr.bf16.mxu0 %v4984
        %6268 = vmatpush2.bf16.msra.mxu0 %v4983
        %6269 = vmatprep.subr.bf16.mxu0 %v4976
        %6270 = vmatpush2.bf16.msra.mxu0 %v4975
        %6271 = vmatprep.subr.bf16.mxu0 %v4968
        %6272 = vmatpush2.bf16.msra.mxu0 %v4967
        %6273 = vmatprep.subr.bf16.mxu0 %v4960
        %6274 = vmatpush2.bf16.msra.mxu0 %v4959
        %6275 = vmatprep.mubr.bf16.mxu0 %v2836
        %6276 = vmatmul.mubr.bf16.gmra.mxu0 %v2835
        %v6277 = vpop.f32.mrf.mxu0
        %v6278 = vadd.f32 0.0, %v6277
        %v6279 = vpop.f32.mrf.mxu0
        %v6280 = vadd.f32 0.0, %v6279
        %v6281 = vpop.f32.mrf.mxu0
        %v6282 = vpop.f32.mrf.mxu0
        %6283 = vdwg.mxu0
        %6284 = vmatprep.subr.bf16.mxu0 %v5080
        %6285 = vmatpush1.bf16.msra.mxu0 %v5079
        %6286 = vmatprep.subr.bf16.mxu0 %v5072
        %6287 = vmatpush1.bf16.msra.mxu0 %v5071
        %6288 = vmatprep.subr.bf16.mxu0 %v5064
        %6289 = vmatpush1.bf16.msra.mxu0 %v5063
        %6290 = vmatprep.subr.bf16.mxu0 %v5056
        %6291 = vmatpush1.bf16.msra.mxu0 %v5055
        %6292 = vmatprep.subr.bf16.mxu0 %v5048
        %6293 = vmatpush1.bf16.msra.mxu0 %v5047
        %6294 = vmatprep.subr.bf16.mxu0 %v5040
        %6295 = vmatpush1.bf16.msra.mxu0 %v5039
        %6296 = vmatprep.subr.bf16.mxu0 %v5032
        %6297 = vmatpush1.bf16.msra.mxu0 %v5031
        %6298 = vmatprep.subr.bf16.mxu0 %v5024
        %6299 = vmatpush1.bf16.msra.mxu0 %v5023
        %6300 = vmatprep.subr.bf16.mxu0 %v5144
        %6301 = vmatpush2.bf16.msra.mxu0 %v5143
        %6302 = vmatprep.subr.bf16.mxu0 %v5136
        %6303 = vmatpush2.bf16.msra.mxu0 %v5135
        %6304 = vmatprep.subr.bf16.mxu0 %v5128
        %6305 = vmatpush2.bf16.msra.mxu0 %v5127
        %6306 = vmatprep.subr.bf16.mxu0 %v5120
        %6307 = vmatpush2.bf16.msra.mxu0 %v5119
        %6308 = vmatprep.subr.bf16.mxu0 %v5112
        %6309 = vmatpush2.bf16.msra.mxu0 %v5111
        %6310 = vmatprep.subr.bf16.mxu0 %v5104
        %6311 = vmatpush2.bf16.msra.mxu0 %v5103
        %6312 = vmatprep.subr.bf16.mxu0 %v5096
        %6313 = vmatpush2.bf16.msra.mxu0 %v5095
        %6314 = vmatprep.subr.bf16.mxu0 %v5088
        %6315 = vmatpush2.bf16.msra.mxu0 %v5087
        %6316 = vmatprep.mubr.bf16.mxu0 %v2838
        %6317 = vmatmul.mubr.bf16.gmra.mxu0 %v2837
        %v6318 = vpop.f32.mrf.mxu0
        %v6319 = vadd.f32 %v6278, %v6318
        %v6320 = vpop.f32.mrf.mxu0
        %v6321 = vadd.f32 %v6280, %v6320
        %v6322 = vpop.f32.mrf.mxu0
        %v6323 = vpop.f32.mrf.mxu0
        %6324 = vdwg.mxu0
        %6325 = vmatprep.subr.bf16.mxu0 %v5208
        %6326 = vmatpush1.bf16.msra.mxu0 %v5207
        %6327 = vmatprep.subr.bf16.mxu0 %v5200
        %6328 = vmatpush1.bf16.msra.mxu0 %v5199
        %6329 = vmatprep.subr.bf16.mxu0 %v5192
        %6330 = vmatpush1.bf16.msra.mxu0 %v5191
        %6331 = vmatprep.subr.bf16.mxu0 %v5184
        %6332 = vmatpush1.bf16.msra.mxu0 %v5183
        %6333 = vmatprep.subr.bf16.mxu0 %v5176
        %6334 = vmatpush1.bf16.msra.mxu0 %v5175
        %6335 = vmatprep.subr.bf16.mxu0 %v5168
        %6336 = vmatpush1.bf16.msra.mxu0 %v5167
        %6337 = vmatprep.subr.bf16.mxu0 %v5160
        %6338 = vmatpush1.bf16.msra.mxu0 %v5159
        %6339 = vmatprep.subr.bf16.mxu0 %v5152
        %6340 = vmatpush1.bf16.msra.mxu0 %v5151
        %6341 = vmatprep.subr.bf16.mxu0 %v5272
        %6342 = vmatpush2.bf16.msra.mxu0 %v5271
        %6343 = vmatprep.subr.bf16.mxu0 %v5264
        %6344 = vmatpush2.bf16.msra.mxu0 %v5263
        %6345 = vmatprep.subr.bf16.mxu0 %v5256
        %6346 = vmatpush2.bf16.msra.mxu0 %v5255
        %6347 = vmatprep.subr.bf16.mxu0 %v5248
        %6348 = vmatpush2.bf16.msra.mxu0 %v5247
        %6349 = vmatprep.subr.bf16.mxu0 %v5240
        %6350 = vmatpush2.bf16.msra.mxu0 %v5239
        %6351 = vmatprep.subr.bf16.mxu0 %v5232
        %6352 = vmatpush2.bf16.msra.mxu0 %v5231
        %6353 = vmatprep.subr.bf16.mxu0 %v5224
        %6354 = vmatpush2.bf16.msra.mxu0 %v5223
        %6355 = vmatprep.subr.bf16.mxu0 %v5216
        %6356 = vmatpush2.bf16.msra.mxu0 %v5215
        %6357 = vmatprep.mubr.bf16.mxu0 %v2840
        %6358 = vmatmul.mubr.bf16.gmra.mxu0 %v2839
        %v6359 = vpop.f32.mrf.mxu0
        %v6360 = vadd.f32 %v6319, %v6359
        %v6361 = vpop.f32.mrf.mxu0
        %v6362 = vadd.f32 %v6321, %v6361
        %v6363 = vpop.f32.mrf.mxu0
        %v6364 = vpop.f32.mrf.mxu0
        %6365 = vdwg.mxu0
        %6366 = vmatprep.subr.bf16.mxu0 %v5336
        %6367 = vmatpush1.bf16.msra.mxu0 %v5335
        %6368 = vmatprep.subr.bf16.mxu0 %v5328
        %6369 = vmatpush1.bf16.msra.mxu0 %v5327
        %6370 = vmatprep.subr.bf16.mxu0 %v5320
        %6371 = vmatpush1.bf16.msra.mxu0 %v5319
        %6372 = vmatprep.subr.bf16.mxu0 %v5312
        %6373 = vmatpush1.bf16.msra.mxu0 %v5311
        %6374 = vmatprep.subr.bf16.mxu0 %v5304
        %6375 = vmatpush1.bf16.msra.mxu0 %v5303
        %6376 = vmatprep.subr.bf16.mxu0 %v5296
        %6377 = vmatpush1.bf16.msra.mxu0 %v5295
        %6378 = vmatprep.subr.bf16.mxu0 %v5288
        %6379 = vmatpush1.bf16.msra.mxu0 %v5287
        %6380 = vmatprep.subr.bf16.mxu0 %v5280
        %6381 = vmatpush1.bf16.msra.mxu0 %v5279
        %6382 = vmatprep.subr.bf16.mxu0 %v5400
        %6383 = vmatpush2.bf16.msra.mxu0 %v5399
        %6384 = vmatprep.subr.bf16.mxu0 %v5392
        %6385 = vmatpush2.bf16.msra.mxu0 %v5391
        %6386 = vmatprep.subr.bf16.mxu0 %v5384
        %6387 = vmatpush2.bf16.msra.mxu0 %v5383
        %6388 = vmatprep.subr.bf16.mxu0 %v5376
        %6389 = vmatpush2.bf16.msra.mxu0 %v5375
        %6390 = vmatprep.subr.bf16.mxu0 %v5368
        %6391 = vmatpush2.bf16.msra.mxu0 %v5367
        %6392 = vmatprep.subr.bf16.mxu0 %v5360
        %6393 = vmatpush2.bf16.msra.mxu0 %v5359
        %6394 = vmatprep.subr.bf16.mxu0 %v5352
        %6395 = vmatpush2.bf16.msra.mxu0 %v5351
        %6396 = vmatprep.subr.bf16.mxu0 %v5344
        %6397 = vmatpush2.bf16.msra.mxu0 %v5343
        %6398 = vmatprep.mubr.bf16.mxu0 %v2842
        %6399 = vmatmul.mubr.bf16.gmra.mxu0 %v2841
        %v6400 = vpop.f32.mrf.mxu0
        %v6401 = vadd.f32 %v6360, %v6400
        %v6402 = vpop.f32.mrf.mxu0
        %v6403 = vadd.f32 %v6362, %v6402
        %v6404 = vpop.f32.mrf.mxu0
        %v6405 = vpop.f32.mrf.mxu0
        %6406 = vdwg.mxu0
        %6407 = vmatprep.subr.bf16.mxu0 %v4954
        %6408 = vmatpush1.bf16.msra.mxu0 %v4953
        %6409 = vmatprep.subr.bf16.mxu0 %v4946
        %6410 = vmatpush1.bf16.msra.mxu0 %v4945
        %6411 = vmatprep.subr.bf16.mxu0 %v4938
        %6412 = vmatpush1.bf16.msra.mxu0 %v4937
        %6413 = vmatprep.subr.bf16.mxu0 %v4930
        %6414 = vmatpush1.bf16.msra.mxu0 %v4929
        %6415 = vmatprep.subr.bf16.mxu0 %v4922
        %6416 = vmatpush1.bf16.msra.mxu0 %v4921
        %6417 = vmatprep.subr.bf16.mxu0 %v4914
        %6418 = vmatpush1.bf16.msra.mxu0 %v4913
        %6419 = vmatprep.subr.bf16.mxu0 %v4906
        %6420 = vmatpush1.bf16.msra.mxu0 %v4905
        %6421 = vmatprep.subr.bf16.mxu0 %v4898
        %6422 = vmatpush1.bf16.msra.mxu0 %v4897
        %6423 = vmatprep.subr.bf16.mxu0 %v5018
        %6424 = vmatpush2.bf16.msra.mxu0 %v5017
        %6425 = vmatprep.subr.bf16.mxu0 %v5010
        %6426 = vmatpush2.bf16.msra.mxu0 %v5009
        %6427 = vmatprep.subr.bf16.mxu0 %v5002
        %6428 = vmatpush2.bf16.msra.mxu0 %v5001
        %6429 = vmatprep.subr.bf16.mxu0 %v4994
        %6430 = vmatpush2.bf16.msra.mxu0 %v4993
        %6431 = vmatprep.subr.bf16.mxu0 %v4986
        %6432 = vmatpush2.bf16.msra.mxu0 %v4985
        %6433 = vmatprep.subr.bf16.mxu0 %v4978
        %6434 = vmatpush2.bf16.msra.mxu0 %v4977
        %6435 = vmatprep.subr.bf16.mxu0 %v4970
        %6436 = vmatpush2.bf16.msra.mxu0 %v4969
        %6437 = vmatprep.subr.bf16.mxu0 %v4962
        %6438 = vmatpush2.bf16.msra.mxu0 %v4961
        %6439 = vmatprep.mubr.bf16.mxu0 %v2836
        %6440 = vmatmul.mubr.bf16.gmra.mxu0 %v2835
        %v6441 = vpop.f32.mrf.mxu0
        %v6442 = vadd.f32 0.0, %v6441
        %v6443 = vpop.f32.mrf.mxu0
        %v6444 = vadd.f32 0.0, %v6443
        %v6445 = vpop.f32.mrf.mxu0
        %v6446 = vpop.f32.mrf.mxu0
        %6447 = vdwg.mxu0
        %6448 = vmatprep.subr.bf16.mxu0 %v5082
        %6449 = vmatpush1.bf16.msra.mxu0 %v5081
        %6450 = vmatprep.subr.bf16.mxu0 %v5074
        %6451 = vmatpush1.bf16.msra.mxu0 %v5073
        %6452 = vmatprep.subr.bf16.mxu0 %v5066
        %6453 = vmatpush1.bf16.msra.mxu0 %v5065
        %6454 = vmatprep.subr.bf16.mxu0 %v5058
        %6455 = vmatpush1.bf16.msra.mxu0 %v5057
        %6456 = vmatprep.subr.bf16.mxu0 %v5050
        %6457 = vmatpush1.bf16.msra.mxu0 %v5049
        %6458 = vmatprep.subr.bf16.mxu0 %v5042
        %6459 = vmatpush1.bf16.msra.mxu0 %v5041
        %6460 = vmatprep.subr.bf16.mxu0 %v5034
        %6461 = vmatpush1.bf16.msra.mxu0 %v5033
        %6462 = vmatprep.subr.bf16.mxu0 %v5026
        %6463 = vmatpush1.bf16.msra.mxu0 %v5025
        %6464 = vmatprep.subr.bf16.mxu0 %v5146
        %6465 = vmatpush2.bf16.msra.mxu0 %v5145
        %6466 = vmatprep.subr.bf16.mxu0 %v5138
        %6467 = vmatpush2.bf16.msra.mxu0 %v5137
        %6468 = vmatprep.subr.bf16.mxu0 %v5130
        %6469 = vmatpush2.bf16.msra.mxu0 %v5129
        %6470 = vmatprep.subr.bf16.mxu0 %v5122
        %6471 = vmatpush2.bf16.msra.mxu0 %v5121
        %6472 = vmatprep.subr.bf16.mxu0 %v5114
        %6473 = vmatpush2.bf16.msra.mxu0 %v5113
        %6474 = vmatprep.subr.bf16.mxu0 %v5106
        %6475 = vmatpush2.bf16.msra.mxu0 %v5105
        %6476 = vmatprep.subr.bf16.mxu0 %v5098
        %6477 = vmatpush2.bf16.msra.mxu0 %v5097
        %6478 = vmatprep.subr.bf16.mxu0 %v5090
        %6479 = vmatpush2.bf16.msra.mxu0 %v5089
        %6480 = vmatprep.mubr.bf16.mxu0 %v2838
        %6481 = vmatmul.mubr.bf16.gmra.mxu0 %v2837
        %v6482 = vpop.f32.mrf.mxu0
        %v6483 = vadd.f32 %v6442, %v6482
        %v6484 = vpop.f32.mrf.mxu0
        %v6485 = vadd.f32 %v6444, %v6484
        %v6486 = vpop.f32.mrf.mxu0
        %v6487 = vpop.f32.mrf.mxu0
        %6488 = vdwg.mxu0
        %6489 = vmatprep.subr.bf16.mxu0 %v5210
        %6490 = vmatpush1.bf16.msra.mxu0 %v5209
        %6491 = vmatprep.subr.bf16.mxu0 %v5202
        %6492 = vmatpush1.bf16.msra.mxu0 %v5201
        %6493 = vmatprep.subr.bf16.mxu0 %v5194
        %6494 = vmatpush1.bf16.msra.mxu0 %v5193
        %6495 = vmatprep.subr.bf16.mxu0 %v5186
        %6496 = vmatpush1.bf16.msra.mxu0 %v5185
        %6497 = vmatprep.subr.bf16.mxu0 %v5178
        %6498 = vmatpush1.bf16.msra.mxu0 %v5177
        %6499 = vmatprep.subr.bf16.mxu0 %v5170
        %6500 = vmatpush1.bf16.msra.mxu0 %v5169
        %6501 = vmatprep.subr.bf16.mxu0 %v5162
        %6502 = vmatpush1.bf16.msra.mxu0 %v5161
        %6503 = vmatprep.subr.bf16.mxu0 %v5154
        %6504 = vmatpush1.bf16.msra.mxu0 %v5153
        %6505 = vmatprep.subr.bf16.mxu0 %v5274
        %6506 = vmatpush2.bf16.msra.mxu0 %v5273
        %6507 = vmatprep.subr.bf16.mxu0 %v5266
        %6508 = vmatpush2.bf16.msra.mxu0 %v5265
        %6509 = vmatprep.subr.bf16.mxu0 %v5258
        %6510 = vmatpush2.bf16.msra.mxu0 %v5257
        %6511 = vmatprep.subr.bf16.mxu0 %v5250
        %6512 = vmatpush2.bf16.msra.mxu0 %v5249
        %6513 = vmatprep.subr.bf16.mxu0 %v5242
        %6514 = vmatpush2.bf16.msra.mxu0 %v5241
        %6515 = vmatprep.subr.bf16.mxu0 %v5234
        %6516 = vmatpush2.bf16.msra.mxu0 %v5233
        %6517 = vmatprep.subr.bf16.mxu0 %v5226
        %6518 = vmatpush2.bf16.msra.mxu0 %v5225
        %6519 = vmatprep.subr.bf16.mxu0 %v5218
        %6520 = vmatpush2.bf16.msra.mxu0 %v5217
        %6521 = vmatprep.mubr.bf16.mxu0 %v2840
        %6522 = vmatmul.mubr.bf16.gmra.mxu0 %v2839
        %v6523 = vpop.f32.mrf.mxu0
        %v6524 = vadd.f32 %v6483, %v6523
        %v6525 = vpop.f32.mrf.mxu0
        %v6526 = vadd.f32 %v6485, %v6525
        %v6527 = vpop.f32.mrf.mxu0
        %v6528 = vpop.f32.mrf.mxu0
        %6529 = vdwg.mxu0
        %6530 = vmatprep.subr.bf16.mxu0 %v5338
        %6531 = vmatpush1.bf16.msra.mxu0 %v5337
        %6532 = vmatprep.subr.bf16.mxu0 %v5330
        %6533 = vmatpush1.bf16.msra.mxu0 %v5329
        %6534 = vmatprep.subr.bf16.mxu0 %v5322
        %6535 = vmatpush1.bf16.msra.mxu0 %v5321
        %6536 = vmatprep.subr.bf16.mxu0 %v5314
        %6537 = vmatpush1.bf16.msra.mxu0 %v5313
        %6538 = vmatprep.subr.bf16.mxu0 %v5306
        %6539 = vmatpush1.bf16.msra.mxu0 %v5305
        %6540 = vmatprep.subr.bf16.mxu0 %v5298
        %6541 = vmatpush1.bf16.msra.mxu0 %v5297
        %6542 = vmatprep.subr.bf16.mxu0 %v5290
        %6543 = vmatpush1.bf16.msra.mxu0 %v5289
        %6544 = vmatprep.subr.bf16.mxu0 %v5282
        %6545 = vmatpush1.bf16.msra.mxu0 %v5281
        %6546 = vmatprep.subr.bf16.mxu0 %v5402
        %6547 = vmatpush2.bf16.msra.mxu0 %v5401
        %6548 = vmatprep.subr.bf16.mxu0 %v5394
        %6549 = vmatpush2.bf16.msra.mxu0 %v5393
        %6550 = vmatprep.subr.bf16.mxu0 %v5386
        %6551 = vmatpush2.bf16.msra.mxu0 %v5385
        %6552 = vmatprep.subr.bf16.mxu0 %v5378
        %6553 = vmatpush2.bf16.msra.mxu0 %v5377
        %6554 = vmatprep.subr.bf16.mxu0 %v5370
        %6555 = vmatpush2.bf16.msra.mxu0 %v5369
        %6556 = vmatprep.subr.bf16.mxu0 %v5362
        %6557 = vmatpush2.bf16.msra.mxu0 %v5361
        %6558 = vmatprep.subr.bf16.mxu0 %v5354
        %6559 = vmatpush2.bf16.msra.mxu0 %v5353
        %6560 = vmatprep.subr.bf16.mxu0 %v5346
        %6561 = vmatpush2.bf16.msra.mxu0 %v5345
        %6562 = vmatprep.mubr.bf16.mxu0 %v2842
        %6563 = vmatmul.mubr.bf16.gmra.mxu0 %v2841
        %v6564 = vpop.f32.mrf.mxu0
        %v6565 = vadd.f32 %v6524, %v6564
        %v6566 = vpop.f32.mrf.mxu0
        %v6567 = vadd.f32 %v6526, %v6566
        %v6568 = vpop.f32.mrf.mxu0
        %v6569 = vpop.f32.mrf.mxu0
        %6570 = vdwg.mxu0
        %v6579 = vcombine.low %v6073, %v6075
        %v6580 = vcombine.low %v6237, %v6239
        %v6582 = vunpack.c.l.s4 1983009808
        %v6583 = vunpack.c.0.s8 %v6582
        %v6584 = vlaneseq
        %v6585 = vshrl.u32 %v6584, 7
        %v6586 = vsub.s32 %v6583, %v6585
        %v6587 = vrot.slane %v6579, %v6586
        %v6589 = vunpack.c.l.s4 1983009808
        %v6590 = vunpack.c.0.s8 %v6589
        %v6591 = vlaneseq
        %v6592 = vshrl.u32 %v6591, 7
        %v6593 = vsub.s32 %v6590, %v6592
        %v6594 = vrot.slane %v6580, %v6593
        %v6595 = vcombine.low %v6587, %v6594
        %v6596 = vcombine.low %v6401, %v6403
        %v6597 = vcombine.low %v6565, %v6567
        %v6599 = vunpack.c.l.s4 1983009808
        %v6600 = vunpack.c.0.s8 %v6599
        %v6601 = vlaneseq
        %v6602 = vshrl.u32 %v6601, 7
        %v6603 = vsub.s32 %v6600, %v6602
        %v6604 = vrot.slane %v6596, %v6603
        %v6606 = vunpack.c.l.s4 1983009808
        %v6607 = vunpack.c.0.s8 %v6606
        %v6608 = vlaneseq
        %v6609 = vshrl.u32 %v6608, 7
        %v6610 = vsub.s32 %v6607, %v6609
        %v6611 = vrot.slane %v6597, %v6610
        %v6612 = vcombine.low %v6604, %v6611
        %v6615 = vadd.f32 %v2833, %v6595
        %v6616 = vadd.f32 %v2834, %v6612
        %6617 = vst [vmem:[#allocation2] sm:$0xff] %v6615
        %6618 = vst [vmem:[#allocation2 + $0x8] sm:$0xff] %v6616
        %p6619 = scmp.eq.s32.totalorder %s41, 3
        // Predicated region
        $region153: #{llm_forward.1} parent=87 // pred_check
          %p6620 = pneg %p6619
        $region154: #{llm_forward.1} parent=87 // pred_check_branch
          %6622 = sbr.rel (%p6620) target = $region156
        $region155: #{llm_forward.1} parent=87 // pred_region
          %v6623 = vld [vmem:[#allocation3] sm:$0xff]
          %v6624 = vld [vmem:[#allocation3 + $0x8] sm:$0xff]
          %v6625 = vld [vmem:[#allocation4] sm:$0xff]
          %v6626 = vld [vmem:[#allocation4 + $0x8] sm:$0xff]
          %v6627 = vrsqrt.pop %v6625
          %v6628 = vmul.f32 %v6625, %v6627
          %vm6629 = vcmp.eq.f32.partialorder %v6625, inf
          %v6630 = vsel %vm6629, %v6625, %v6628
          %vm6631 = vcmp.eq.f32.partialorder %v6625, 0.0
          %v6632 = vand.u32 %v6625, 2147483648
          %v6633 = vsel %vm6631, %v6632, %v6630
          %v6634 = vrsqrt.pop %v6626
          %v6635 = vmul.f32 %v6626, %v6634
          %vm6636 = vcmp.eq.f32.partialorder %v6626, inf
          %v6637 = vsel %vm6636, %v6626, %v6635
          %vm6638 = vcmp.eq.f32.partialorder %v6626, 0.0
          %v6639 = vand.u32 %v6626, 2147483648
          %v6640 = vsel %vm6638, %v6639, %v6637
          %v6641 = vmax.f32 %v6633, 1e-08
          %v6642 = vmax.f32 %v6640, 1e-08
          %v6643 = vld [vmem:[#allocation5] sm:$0xff]
          %v6644 = vld [vmem:[#allocation5 + $0x8] sm:$0xff]
          %v6645 = vrsqrt.pop %v6643
          %v6646 = vmul.f32 %v6643, %v6645
          %vm6647 = vcmp.eq.f32.partialorder %v6643, inf
          %v6648 = vsel %vm6647, %v6643, %v6646
          %vm6649 = vcmp.eq.f32.partialorder %v6643, 0.0
          %v6650 = vand.u32 %v6643, 2147483648
          %v6651 = vsel %vm6649, %v6650, %v6648
          %v6652 = vrsqrt.pop %v6644
          %v6653 = vmul.f32 %v6644, %v6652
          %vm6654 = vcmp.eq.f32.partialorder %v6644, inf
          %v6655 = vsel %vm6654, %v6644, %v6653
          %vm6656 = vcmp.eq.f32.partialorder %v6644, 0.0
          %v6657 = vand.u32 %v6644, 2147483648
          %v6658 = vsel %vm6656, %v6657, %v6655
          %v6659 = vmax.f32 %v6651, 1e-08
          %v6660 = vmax.f32 %v6658, 1e-08
          %v6661 = vmul.f32 %v6641, %v6659
          %v6662 = vmul.f32 %v6642, %v6660
          %v6663 = vrcp.pop %v6661
          %v6664 = vmul.f32 %v6623, %v6663
          %v6665 = vrcp.pop %v6662
          %v6666 = vmul.f32 %v6624, %v6665
          %v6667 = vld [vmem:[#allocation6] sm:$0xff]
          %v6668 = vld [vmem:[#allocation6 + $0x8] sm:$0xff]
          %v6669 = vld [vmem:[#allocation7] sm:$0xff]
          %v6670 = vld [vmem:[#allocation7 + $0x8] sm:$0xff]
          %v6671 = vrsqrt.pop %v6669
          %v6672 = vmul.f32 %v6669, %v6671
          %vm6673 = vcmp.eq.f32.partialorder %v6669, inf
          %v6674 = vsel %vm6673, %v6669, %v6672
          %vm6675 = vcmp.eq.f32.partialorder %v6669, 0.0
          %v6676 = vand.u32 %v6669, 2147483648
          %v6677 = vsel %vm6675, %v6676, %v6674
          %v6678 = vrsqrt.pop %v6670
          %v6679 = vmul.f32 %v6670, %v6678
          %vm6680 = vcmp.eq.f32.partialorder %v6670, inf
          %v6681 = vsel %vm6680, %v6670, %v6679
          %vm6682 = vcmp.eq.f32.partialorder %v6670, 0.0
          %v6683 = vand.u32 %v6670, 2147483648
          %v6684 = vsel %vm6682, %v6683, %v6681
          %v6685 = vmax.f32 %v6677, 1e-08
          %v6686 = vmax.f32 %v6684, 1e-08
          %v6687 = vld [vmem:[#allocation8] sm:$0xff]
          %v6688 = vld [vmem:[#allocation8 + $0x8] sm:$0xff]
          %v6689 = vrsqrt.pop %v6687
          %v6690 = vmul.f32 %v6687, %v6689
          %vm6691 = vcmp.eq.f32.partialorder %v6687, inf
          %v6692 = vsel %vm6691, %v6687, %v6690
          %vm6693 = vcmp.eq.f32.partialorder %v6687, 0.0
          %v6694 = vand.u32 %v6687, 2147483648
          %v6695 = vsel %vm6693, %v6694, %v6692
          %v6696 = vrsqrt.pop %v6688
          %v6697 = vmul.f32 %v6688, %v6696
          %vm6698 = vcmp.eq.f32.partialorder %v6688, inf
          %v6699 = vsel %vm6698, %v6688, %v6697
          %vm6700 = vcmp.eq.f32.partialorder %v6688, 0.0
          %v6701 = vand.u32 %v6688, 2147483648
          %v6702 = vsel %vm6700, %v6701, %v6699
          %v6703 = vmax.f32 %v6695, 1e-08
          %v6704 = vmax.f32 %v6702, 1e-08
          %v6705 = vmul.f32 %v6685, %v6703
          %v6706 = vmul.f32 %v6686, %v6704
          %v6707 = vrcp.pop %v6705
          %v6708 = vmul.f32 %v6667, %v6707
          %v6709 = vrcp.pop %v6706
          %v6710 = vmul.f32 %v6668, %v6709
          %v6711 = vsel %vm2341, %v6664, 0.0
          %v6712 = vsel %vm2341, %v6666, 0.0
          %v6713 = vadd.f32 %v6711, %v6712
          %v6714 = vrot.slane %v6713, 4
          %v6715 = vadd.f32 %v6713, %v6714
          %v6716 = vrot.slane %v6715, 2
          %v6717 = vadd.f32 %v6715, %v6716
          %v6718 = vrot.slane %v6717, 1
          %v6719 = vadd.f32 %v6717, %v6718
          %v6720 = vrcp.pop 16.0
          %v6721 = vmul.f32 %v6719, %v6720
          %v6722 = vsub.f32 1.0, %v6721
          %vm6723 = vcmask 0
          %6724 = vst.msk [vmem:[#allocation32] sm:$0x1] %vm6723, %v6722
          %v6725 = vsel %vm2341, %v6708, 0.0
          %v6726 = vsel %vm2341, %v6710, 0.0
          %v6727 = vadd.f32 %v6725, %v6726
          %v6728 = vrot.slane %v6727, 4
          %v6729 = vadd.f32 %v6727, %v6728
          %v6730 = vrot.slane %v6729, 2
          %v6731 = vadd.f32 %v6729, %v6730
          %v6732 = vrot.slane %v6731, 1
          %v6733 = vadd.f32 %v6731, %v6732
          %v6734 = vmul.f32 %v6733, %v6720
          %v6735 = vsub.f32 1.0, %v6734
          %6736 = vst.msk [vmem:[#allocation34] sm:$0x1] %vm6723, %v6735
          %v6737 = vld [vmem:[#allocation2] sm:$0xff]
          %v6738 = vld [vmem:[#allocation2 + $0x8] sm:$0xff]
          %v6739 = vld [vmem:[#allocation24] sm:$0xff]
          %v6741 = vlaneseq
          %v6742 = vshrl.u32 %v6741, 7
          %v6743 = vsub.s32 0, %v6742
          %v6744 = vrot.slane %v6739, %v6743
          %v6745 = vlaneseq
          %v6746 = vshrl.u32 %v6745, 7
          %v6747 = vsub.s32 1, %v6746
          %v6748 = vrot.slane %v6739, %v6747
          %v6749 = vlaneseq
          %v6750 = vshrl.u32 %v6749, 7
          %v6751 = vsub.s32 2, %v6750
          %v6752 = vrot.slane %v6739, %v6751
          %v6753 = vlaneseq
          %v6754 = vshrl.u32 %v6753, 7
          %v6755 = vsub.s32 3, %v6754
          %v6756 = vrot.slane %v6739, %v6755
          %v6757 = vlaneseq
          %v6758 = vshrl.u32 %v6757, 7
          %v6759 = vsub.s32 4, %v6758
          %v6760 = vrot.slane %v6739, %v6759
          %v6761 = vlaneseq
          %v6762 = vshrl.u32 %v6761, 7
          %v6763 = vsub.s32 5, %v6762
          %v6764 = vrot.slane %v6739, %v6763
          %v6765 = vlaneseq
          %v6766 = vshrl.u32 %v6765, 7
          %v6767 = vsub.s32 6, %v6766
          %v6768 = vrot.slane %v6739, %v6767
          %v6769 = vlaneseq
          %v6770 = vshrl.u32 %v6769, 7
          %v6771 = vsub.s32 7, %v6770
          %v6772 = vrot.slane %v6739, %v6771
          %v6773 = vcombine.low %v6744, %v6748
          %v6774 = vcombine.low %v6752, %v6756
          %v6776 = vunpack.c.l.s4 1983009808
          %v6777 = vunpack.c.0.s8 %v6776
          %v6778 = vlaneseq
          %v6779 = vshrl.u32 %v6778, 7
          %v6780 = vsub.s32 %v6777, %v6779
          %v6781 = vrot.slane %v6773, %v6780
          %v6783 = vunpack.c.l.s4 1983009808
          %v6784 = vunpack.c.0.s8 %v6783
          %v6785 = vlaneseq
          %v6786 = vshrl.u32 %v6785, 7
          %v6787 = vsub.s32 %v6784, %v6786
          %v6788 = vrot.slane %v6774, %v6787
          %v6789 = vcombine.low %v6781, %v6788
          %v6790 = vcombine.low %v6760, %v6764
          %v6791 = vcombine.low %v6768, %v6772
          %v6793 = vunpack.c.l.s4 1983009808
          %v6794 = vunpack.c.0.s8 %v6793
          %v6795 = vlaneseq
          %v6796 = vshrl.u32 %v6795, 7
          %v6797 = vsub.s32 %v6794, %v6796
          %v6798 = vrot.slane %v6790, %v6797
          %v6800 = vunpack.c.l.s4 1983009808
          %v6801 = vunpack.c.0.s8 %v6800
          %v6802 = vlaneseq
          %v6803 = vshrl.u32 %v6802, 7
          %v6804 = vsub.s32 %v6801, %v6803
          %v6805 = vrot.slane %v6791, %v6804
          %v6806 = vcombine.low %v6798, %v6805
          %v6809 = vadd.f32 %v6737, %v6789
          %v6810 = vadd.f32 %v6738, %v6806
          %v6813 = vcombine.high %v6809, %v6809
          %v6815 = vunpack.c.l.s4 1983009808
          %v6816 = vunpack.c.0.s8 %v6815
          %v6817 = vlaneseq
          %v6818 = vshrl.u32 %v6817, 7
          %v6819 = vsub.s32 %v6816, %v6818
          %v6820 = vrot.slane %v6809, %v6819
          %v6822 = vunpack.c.l.s4 1983009808
          %v6823 = vunpack.c.0.s8 %v6822
          %v6824 = vlaneseq
          %v6825 = vshrl.u32 %v6824, 7
          %v6826 = vsub.s32 %v6823, %v6825
          %v6827 = vrot.slane %v6813, %v6826
          %v6828 = vcombine.high %v6820, %v6820
          %v6829 = vcombine.high %v6827, %v6827
          %v6830 = vcombine.high %v6810, %v6810
          %v6832 = vunpack.c.l.s4 1983009808
          %v6833 = vunpack.c.0.s8 %v6832
          %v6834 = vlaneseq
          %v6835 = vshrl.u32 %v6834, 7
          %v6836 = vsub.s32 %v6833, %v6835
          %v6837 = vrot.slane %v6810, %v6836
          %v6839 = vunpack.c.l.s4 1983009808
          %v6840 = vunpack.c.0.s8 %v6839
          %v6841 = vlaneseq
          %v6842 = vshrl.u32 %v6841, 7
          %v6843 = vsub.s32 %v6840, %v6842
          %v6844 = vrot.slane %v6830, %v6843
          %v6845 = vcombine.high %v6837, %v6837
          %v6846 = vcombine.high %v6844, %v6844
          %v6855 = vpack.c.bf16 %v6820, %v6820
          %v6856 = vpack.c.bf16 %v6828, %v6828
          %v6857 = vpack.c.bf16 %v6827, %v6827
          %v6858 = vpack.c.bf16 %v6829, %v6829
          %v6859 = vpack.c.bf16 %v6837, %v6837
          %v6860 = vpack.c.bf16 %v6845, %v6845
          %v6861 = vpack.c.bf16 %v6844, %v6844
          %v6862 = vpack.c.bf16 %v6846, %v6846
          %v6863 = vld [vmem:[#allocation25] sm:$0xf]
          %v6864 = vld [vmem:[#allocation25 + $0x4] sm:$0xf]
          %v6865 = vld [vmem:[#allocation25 + $0x8] sm:$0xf]
          %v6866 = vld [vmem:[#allocation25 + $0xc] sm:$0xf]
          %v6867 = vld [vmem:[#allocation25 + $0x10] sm:$0xf]
          %v6868 = vld [vmem:[#allocation25 + $0x14] sm:$0xf]
          %v6869 = vld [vmem:[#allocation25 + $0x18] sm:$0xf]
          %v6870 = vld [vmem:[#allocation25 + $0x1c] sm:$0xf]
          %v6871 = vld [vmem:[#allocation25 + $0x20] sm:$0xf]
          %v6872 = vld [vmem:[#allocation25 + $0x24] sm:$0xf]
          %v6873 = vld [vmem:[#allocation25 + $0x28] sm:$0xf]
          %v6874 = vld [vmem:[#allocation25 + $0x2c] sm:$0xf]
          %v6875 = vld [vmem:[#allocation25 + $0x30] sm:$0xf]
          %v6876 = vld [vmem:[#allocation25 + $0x34] sm:$0xf]
          %v6877 = vld [vmem:[#allocation25 + $0x38] sm:$0xf]
          %v6878 = vld [vmem:[#allocation25 + $0x3c] sm:$0xf]
          %v6879 = vld [vmem:[#allocation25 + $0x40] sm:$0xf]
          %v6880 = vld [vmem:[#allocation25 + $0x44] sm:$0xf]
          %v6881 = vld [vmem:[#allocation25 + $0x48] sm:$0xf]
          %v6882 = vld [vmem:[#allocation25 + $0x4c] sm:$0xf]
          %v6883 = vld [vmem:[#allocation25 + $0x50] sm:$0xf]
          %v6884 = vld [vmem:[#allocation25 + $0x54] sm:$0xf]
          %v6885 = vld [vmem:[#allocation25 + $0x58] sm:$0xf]
          %v6886 = vld [vmem:[#allocation25 + $0x5c] sm:$0xf]
          %v6887 = vld [vmem:[#allocation25 + $0x60] sm:$0xf]
          %v6888 = vld [vmem:[#allocation25 + $0x64] sm:$0xf]
          %v6889 = vld [vmem:[#allocation25 + $0x68] sm:$0xf]
          %v6890 = vld [vmem:[#allocation25 + $0x6c] sm:$0xf]
          %v6891 = vld [vmem:[#allocation25 + $0x70] sm:$0xf]
          %v6892 = vld [vmem:[#allocation25 + $0x74] sm:$0xf]
          %v6893 = vld [vmem:[#allocation25 + $0x78] sm:$0xf]
          %v6894 = vld [vmem:[#allocation25 + $0x7c] sm:$0xf]
          %v6895 = vld [vmem:[#allocation25 + $0x80] sm:$0xf]
          %v6896 = vld [vmem:[#allocation25 + $0x84] sm:$0xf]
          %v6897 = vld [vmem:[#allocation25 + $0x88] sm:$0xf]
          %v6898 = vld [vmem:[#allocation25 + $0x8c] sm:$0xf]
          %v6899 = vld [vmem:[#allocation25 + $0x90] sm:$0xf]
          %v6900 = vld [vmem:[#allocation25 + $0x94] sm:$0xf]
          %v6901 = vld [vmem:[#allocation25 + $0x98] sm:$0xf]
          %v6902 = vld [vmem:[#allocation25 + $0x9c] sm:$0xf]
          %v6903 = vld [vmem:[#allocation25 + $0xa0] sm:$0xf]
          %v6904 = vld [vmem:[#allocation25 + $0xa4] sm:$0xf]
          %v6905 = vld [vmem:[#allocation25 + $0xa8] sm:$0xf]
          %v6906 = vld [vmem:[#allocation25 + $0xac] sm:$0xf]
          %v6907 = vld [vmem:[#allocation25 + $0xb0] sm:$0xf]
          %v6908 = vld [vmem:[#allocation25 + $0xb4] sm:$0xf]
          %v6909 = vld [vmem:[#allocation25 + $0xb8] sm:$0xf]
          %v6910 = vld [vmem:[#allocation25 + $0xbc] sm:$0xf]
          %v6911 = vld [vmem:[#allocation25 + $0xc0] sm:$0xf]
          %v6912 = vld [vmem:[#allocation25 + $0xc4] sm:$0xf]
          %v6913 = vld [vmem:[#allocation25 + $0xc8] sm:$0xf]
          %v6914 = vld [vmem:[#allocation25 + $0xcc] sm:$0xf]
          %v6915 = vld [vmem:[#allocation25 + $0xd0] sm:$0xf]
          %v6916 = vld [vmem:[#allocation25 + $0xd4] sm:$0xf]
          %v6917 = vld [vmem:[#allocation25 + $0xd8] sm:$0xf]
          %v6918 = vld [vmem:[#allocation25 + $0xdc] sm:$0xf]
          %v6919 = vld [vmem:[#allocation25 + $0xe0] sm:$0xf]
          %v6920 = vld [vmem:[#allocation25 + $0xe4] sm:$0xf]
          %v6921 = vld [vmem:[#allocation25 + $0xe8] sm:$0xf]
          %v6922 = vld [vmem:[#allocation25 + $0xec] sm:$0xf]
          %v6923 = vld [vmem:[#allocation25 + $0xf0] sm:$0xf]
          %v6924 = vld [vmem:[#allocation25 + $0xf4] sm:$0xf]
          %v6925 = vld [vmem:[#allocation25 + $0xf8] sm:$0xf]
          %v6926 = vld [vmem:[#allocation25 + $0xfc] sm:$0xf]
          %v6927 = vld [vmem:[#allocation25 + $0x100] sm:$0xf]
          %v6928 = vld [vmem:[#allocation25 + $0x104] sm:$0xf]
          %v6929 = vld [vmem:[#allocation25 + $0x108] sm:$0xf]
          %v6930 = vld [vmem:[#allocation25 + $0x10c] sm:$0xf]
          %v6931 = vld [vmem:[#allocation25 + $0x110] sm:$0xf]
          %v6932 = vld [vmem:[#allocation25 + $0x114] sm:$0xf]
          %v6933 = vld [vmem:[#allocation25 + $0x118] sm:$0xf]
          %v6934 = vld [vmem:[#allocation25 + $0x11c] sm:$0xf]
          %v6935 = vld [vmem:[#allocation25 + $0x120] sm:$0xf]
          %v6936 = vld [vmem:[#allocation25 + $0x124] sm:$0xf]
          %v6937 = vld [vmem:[#allocation25 + $0x128] sm:$0xf]
          %v6938 = vld [vmem:[#allocation25 + $0x12c] sm:$0xf]
          %v6939 = vld [vmem:[#allocation25 + $0x130] sm:$0xf]
          %v6940 = vld [vmem:[#allocation25 + $0x134] sm:$0xf]
          %v6941 = vld [vmem:[#allocation25 + $0x138] sm:$0xf]
          %v6942 = vld [vmem:[#allocation25 + $0x13c] sm:$0xf]
          %v6943 = vld [vmem:[#allocation25 + $0x140] sm:$0xf]
          %v6944 = vld [vmem:[#allocation25 + $0x144] sm:$0xf]
          %v6945 = vld [vmem:[#allocation25 + $0x148] sm:$0xf]
          %v6946 = vld [vmem:[#allocation25 + $0x14c] sm:$0xf]
          %v6947 = vld [vmem:[#allocation25 + $0x150] sm:$0xf]
          %v6948 = vld [vmem:[#allocation25 + $0x154] sm:$0xf]
          %v6949 = vld [vmem:[#allocation25 + $0x158] sm:$0xf]
          %v6950 = vld [vmem:[#allocation25 + $0x15c] sm:$0xf]
          %v6951 = vld [vmem:[#allocation25 + $0x160] sm:$0xf]
          %v6952 = vld [vmem:[#allocation25 + $0x164] sm:$0xf]
          %v6953 = vld [vmem:[#allocation25 + $0x168] sm:$0xf]
          %v6954 = vld [vmem:[#allocation25 + $0x16c] sm:$0xf]
          %v6955 = vld [vmem:[#allocation25 + $0x170] sm:$0xf]
          %v6956 = vld [vmem:[#allocation25 + $0x174] sm:$0xf]
          %v6957 = vld [vmem:[#allocation25 + $0x178] sm:$0xf]
          %v6958 = vld [vmem:[#allocation25 + $0x17c] sm:$0xf]
          %v6959 = vld [vmem:[#allocation25 + $0x180] sm:$0xf]
          %v6960 = vld [vmem:[#allocation25 + $0x184] sm:$0xf]
          %v6961 = vld [vmem:[#allocation25 + $0x188] sm:$0xf]
          %v6962 = vld [vmem:[#allocation25 + $0x18c] sm:$0xf]
          %v6963 = vld [vmem:[#allocation25 + $0x190] sm:$0xf]
          %v6964 = vld [vmem:[#allocation25 + $0x194] sm:$0xf]
          %v6965 = vld [vmem:[#allocation25 + $0x198] sm:$0xf]
          %v6966 = vld [vmem:[#allocation25 + $0x19c] sm:$0xf]
          %v6967 = vld [vmem:[#allocation25 + $0x1a0] sm:$0xf]
          %v6968 = vld [vmem:[#allocation25 + $0x1a4] sm:$0xf]
          %v6969 = vld [vmem:[#allocation25 + $0x1a8] sm:$0xf]
          %v6970 = vld [vmem:[#allocation25 + $0x1ac] sm:$0xf]
          %v6971 = vld [vmem:[#allocation25 + $0x1b0] sm:$0xf]
          %v6972 = vld [vmem:[#allocation25 + $0x1b4] sm:$0xf]
          %v6973 = vld [vmem:[#allocation25 + $0x1b8] sm:$0xf]
          %v6974 = vld [vmem:[#allocation25 + $0x1bc] sm:$0xf]
          %v6975 = vld [vmem:[#allocation25 + $0x1c0] sm:$0xf]
          %v6976 = vld [vmem:[#allocation25 + $0x1c4] sm:$0xf]
          %v6977 = vld [vmem:[#allocation25 + $0x1c8] sm:$0xf]
          %v6978 = vld [vmem:[#allocation25 + $0x1cc] sm:$0xf]
          %v6979 = vld [vmem:[#allocation25 + $0x1d0] sm:$0xf]
          %v6980 = vld [vmem:[#allocation25 + $0x1d4] sm:$0xf]
          %v6981 = vld [vmem:[#allocation25 + $0x1d8] sm:$0xf]
          %v6982 = vld [vmem:[#allocation25 + $0x1dc] sm:$0xf]
          %v6983 = vld [vmem:[#allocation25 + $0x1e0] sm:$0xf]
          %v6984 = vld [vmem:[#allocation25 + $0x1e4] sm:$0xf]
          %v6985 = vld [vmem:[#allocation25 + $0x1e8] sm:$0xf]
          %v6986 = vld [vmem:[#allocation25 + $0x1ec] sm:$0xf]
          %v6987 = vld [vmem:[#allocation25 + $0x1f0] sm:$0xf]
          %v6988 = vld [vmem:[#allocation25 + $0x1f4] sm:$0xf]
          %v6989 = vld [vmem:[#allocation25 + $0x1f8] sm:$0xf]
          %v6990 = vld [vmem:[#allocation25 + $0x1fc] sm:$0xf]
          %v6991 = vld [vmem:[#allocation27] sm:$0x1]
          %v6993 = vlaneseq
          %v6994 = vshrl.u32 %v6993, 7
          %v6995 = vsub.s32 0, %v6994
          %v6996 = vrot.slane %v6991, %v6995
          %v7126 = vunpack.c.l.b16 %v6863
          %v7127 = vunpack.c.l.b16 %v6864
          %v7128 = vunpack.c.l.b16 %v6865
          %v7129 = vunpack.c.l.b16 %v6866
          %v7130 = vunpack.c.l.b16 %v6867
          %v7131 = vunpack.c.l.b16 %v6868
          %v7132 = vunpack.c.l.b16 %v6869
          %v7133 = vunpack.c.l.b16 %v6870
          %v7134 = vunpack.c.l.b16 %v6871
          %v7135 = vunpack.c.l.b16 %v6872
          %v7136 = vunpack.c.l.b16 %v6873
          %v7137 = vunpack.c.l.b16 %v6874
          %v7138 = vunpack.c.l.b16 %v6875
          %v7139 = vunpack.c.l.b16 %v6876
          %v7140 = vunpack.c.l.b16 %v6877
          %v7141 = vunpack.c.l.b16 %v6878
          %v7142 = vunpack.c.l.b16 %v6879
          %v7143 = vunpack.c.l.b16 %v6880
          %v7144 = vunpack.c.l.b16 %v6881
          %v7145 = vunpack.c.l.b16 %v6882
          %v7146 = vunpack.c.l.b16 %v6883
          %v7147 = vunpack.c.l.b16 %v6884
          %v7148 = vunpack.c.l.b16 %v6885
          %v7149 = vunpack.c.l.b16 %v6886
          %v7150 = vunpack.c.l.b16 %v6887
          %v7151 = vunpack.c.l.b16 %v6888
          %v7152 = vunpack.c.l.b16 %v6889
          %v7153 = vunpack.c.l.b16 %v6890
          %v7154 = vunpack.c.l.b16 %v6891
          %v7155 = vunpack.c.l.b16 %v6892
          %v7156 = vunpack.c.l.b16 %v6893
          %v7157 = vunpack.c.l.b16 %v6894
          %v7158 = vunpack.c.l.b16 %v6895
          %v7159 = vunpack.c.l.b16 %v6896
          %v7160 = vunpack.c.l.b16 %v6897
          %v7161 = vunpack.c.l.b16 %v6898
          %v7162 = vunpack.c.l.b16 %v6899
          %v7163 = vunpack.c.l.b16 %v6900
          %v7164 = vunpack.c.l.b16 %v6901
          %v7165 = vunpack.c.l.b16 %v6902
          %v7166 = vunpack.c.l.b16 %v6903
          %v7167 = vunpack.c.l.b16 %v6904
          %v7168 = vunpack.c.l.b16 %v6905
          %v7169 = vunpack.c.l.b16 %v6906
          %v7170 = vunpack.c.l.b16 %v6907
          %v7171 = vunpack.c.l.b16 %v6908
          %v7172 = vunpack.c.l.b16 %v6909
          %v7173 = vunpack.c.l.b16 %v6910
          %v7174 = vunpack.c.l.b16 %v6911
          %v7175 = vunpack.c.l.b16 %v6912
          %v7176 = vunpack.c.l.b16 %v6913
          %v7177 = vunpack.c.l.b16 %v6914
          %v7178 = vunpack.c.l.b16 %v6915
          %v7179 = vunpack.c.l.b16 %v6916
          %v7180 = vunpack.c.l.b16 %v6917
          %v7181 = vunpack.c.l.b16 %v6918
          %v7182 = vunpack.c.l.b16 %v6919
          %v7183 = vunpack.c.l.b16 %v6920
          %v7184 = vunpack.c.l.b16 %v6921
          %v7185 = vunpack.c.l.b16 %v6922
          %v7186 = vunpack.c.l.b16 %v6923
          %v7187 = vunpack.c.l.b16 %v6924
          %v7188 = vunpack.c.l.b16 %v6925
          %v7189 = vunpack.c.l.b16 %v6926
          %v7190 = vunpack.c.l.b16 %v6927
          %v7191 = vunpack.c.l.b16 %v6928
          %v7192 = vunpack.c.l.b16 %v6929
          %v7193 = vunpack.c.l.b16 %v6930
          %v7194 = vunpack.c.l.b16 %v6931
          %v7195 = vunpack.c.l.b16 %v6932
          %v7196 = vunpack.c.l.b16 %v6933
          %v7197 = vunpack.c.l.b16 %v6934
          %v7198 = vunpack.c.l.b16 %v6935
          %v7199 = vunpack.c.l.b16 %v6936
          %v7200 = vunpack.c.l.b16 %v6937
          %v7201 = vunpack.c.l.b16 %v6938
          %v7202 = vunpack.c.l.b16 %v6939
          %v7203 = vunpack.c.l.b16 %v6940
          %v7204 = vunpack.c.l.b16 %v6941
          %v7205 = vunpack.c.l.b16 %v6942
          %v7206 = vunpack.c.l.b16 %v6943
          %v7207 = vunpack.c.l.b16 %v6944
          %v7208 = vunpack.c.l.b16 %v6945
          %v7209 = vunpack.c.l.b16 %v6946
          %v7210 = vunpack.c.l.b16 %v6947
          %v7211 = vunpack.c.l.b16 %v6948
          %v7212 = vunpack.c.l.b16 %v6949
          %v7213 = vunpack.c.l.b16 %v6950
          %v7214 = vunpack.c.l.b16 %v6951
          %v7215 = vunpack.c.l.b16 %v6952
          %v7216 = vunpack.c.l.b16 %v6953
          %v7217 = vunpack.c.l.b16 %v6954
          %v7218 = vunpack.c.l.b16 %v6955
          %v7219 = vunpack.c.l.b16 %v6956
          %v7220 = vunpack.c.l.b16 %v6957
          %v7221 = vunpack.c.l.b16 %v6958
          %v7222 = vunpack.c.l.b16 %v6959
          %v7223 = vunpack.c.l.b16 %v6960
          %v7224 = vunpack.c.l.b16 %v6961
          %v7225 = vunpack.c.l.b16 %v6962
          %v7226 = vunpack.c.l.b16 %v6963
          %v7227 = vunpack.c.l.b16 %v6964
          %v7228 = vunpack.c.l.b16 %v6965
          %v7229 = vunpack.c.l.b16 %v6966
          %v7230 = vunpack.c.l.b16 %v6967
          %v7231 = vunpack.c.l.b16 %v6968
          %v7232 = vunpack.c.l.b16 %v6969
          %v7233 = vunpack.c.l.b16 %v6970
          %v7234 = vunpack.c.l.b16 %v6971
          %v7235 = vunpack.c.l.b16 %v6972
          %v7236 = vunpack.c.l.b16 %v6973
          %v7237 = vunpack.c.l.b16 %v6974
          %v7238 = vunpack.c.l.b16 %v6975
          %v7239 = vunpack.c.l.b16 %v6976
          %v7240 = vunpack.c.l.b16 %v6977
          %v7241 = vunpack.c.l.b16 %v6978
          %v7242 = vunpack.c.l.b16 %v6979
          %v7243 = vunpack.c.l.b16 %v6980
          %v7244 = vunpack.c.l.b16 %v6981
          %v7245 = vunpack.c.l.b16 %v6982
          %v7246 = vunpack.c.l.b16 %v6983
          %v7247 = vunpack.c.l.b16 %v6984
          %v7248 = vunpack.c.l.b16 %v6985
          %v7249 = vunpack.c.l.b16 %v6986
          %v7250 = vunpack.c.l.b16 %v6987
          %v7251 = vunpack.c.l.b16 %v6988
          %v7252 = vunpack.c.l.b16 %v6989
          %v7253 = vunpack.c.l.b16 %v6990
          %v7254 = vpack.c.b16 %v7127, %v7126
          %v7255 = vpack.c.b16 %v7129, %v7128
          %v7256 = vpack.c.b16 %v7131, %v7130
          %v7257 = vpack.c.b16 %v7133, %v7132
          %v7258 = vpack.c.b16 %v7135, %v7134
          %v7259 = vpack.c.b16 %v7137, %v7136
          %v7260 = vpack.c.b16 %v7139, %v7138
          %v7261 = vpack.c.b16 %v7141, %v7140
          %v7262 = vpack.c.b16 %v7143, %v7142
          %v7263 = vpack.c.b16 %v7145, %v7144
          %v7264 = vpack.c.b16 %v7147, %v7146
          %v7265 = vpack.c.b16 %v7149, %v7148
          %v7266 = vpack.c.b16 %v7151, %v7150
          %v7267 = vpack.c.b16 %v7153, %v7152
          %v7268 = vpack.c.b16 %v7155, %v7154
          %v7269 = vpack.c.b16 %v7157, %v7156
          %v7270 = vpack.c.b16 %v7159, %v7158
          %v7271 = vpack.c.b16 %v7161, %v7160
          %v7272 = vpack.c.b16 %v7163, %v7162
          %v7273 = vpack.c.b16 %v7165, %v7164
          %v7274 = vpack.c.b16 %v7167, %v7166
          %v7275 = vpack.c.b16 %v7169, %v7168
          %v7276 = vpack.c.b16 %v7171, %v7170
          %v7277 = vpack.c.b16 %v7173, %v7172
          %v7278 = vpack.c.b16 %v7175, %v7174
          %v7279 = vpack.c.b16 %v7177, %v7176
          %v7280 = vpack.c.b16 %v7179, %v7178
          %v7281 = vpack.c.b16 %v7181, %v7180
          %v7282 = vpack.c.b16 %v7183, %v7182
          %v7283 = vpack.c.b16 %v7185, %v7184
          %v7284 = vpack.c.b16 %v7187, %v7186
          %v7285 = vpack.c.b16 %v7189, %v7188
          %v7286 = vpack.c.b16 %v7191, %v7190
          %v7287 = vpack.c.b16 %v7193, %v7192
          %v7288 = vpack.c.b16 %v7195, %v7194
          %v7289 = vpack.c.b16 %v7197, %v7196
          %v7290 = vpack.c.b16 %v7199, %v7198
          %v7291 = vpack.c.b16 %v7201, %v7200
          %v7292 = vpack.c.b16 %v7203, %v7202
          %v7293 = vpack.c.b16 %v7205, %v7204
          %v7294 = vpack.c.b16 %v7207, %v7206
          %v7295 = vpack.c.b16 %v7209, %v7208
          %v7296 = vpack.c.b16 %v7211, %v7210
          %v7297 = vpack.c.b16 %v7213, %v7212
          %v7298 = vpack.c.b16 %v7215, %v7214
          %v7299 = vpack.c.b16 %v7217, %v7216
          %v7300 = vpack.c.b16 %v7219, %v7218
          %v7301 = vpack.c.b16 %v7221, %v7220
          %v7302 = vpack.c.b16 %v7223, %v7222
          %v7303 = vpack.c.b16 %v7225, %v7224
          %v7304 = vpack.c.b16 %v7227, %v7226
          %v7305 = vpack.c.b16 %v7229, %v7228
          %v7306 = vpack.c.b16 %v7231, %v7230
          %v7307 = vpack.c.b16 %v7233, %v7232
          %v7308 = vpack.c.b16 %v7235, %v7234
          %v7309 = vpack.c.b16 %v7237, %v7236
          %v7310 = vpack.c.b16 %v7239, %v7238
          %v7311 = vpack.c.b16 %v7241, %v7240
          %v7312 = vpack.c.b16 %v7243, %v7242
          %v7313 = vpack.c.b16 %v7245, %v7244
          %v7314 = vpack.c.b16 %v7247, %v7246
          %v7315 = vpack.c.b16 %v7249, %v7248
          %v7316 = vpack.c.b16 %v7251, %v7250
          %v7317 = vpack.c.b16 %v7253, %v7252
          %7382 = vmatprep.subr.bf16.mxu0 0
          %7383 = vmatpush1.bf16.msra.mxu0 %v7261
          %7384 = vmatprep.subr.bf16.mxu0 0
          %7385 = vmatpush1.bf16.msra.mxu0 %v7260
          %7386 = vmatprep.subr.bf16.mxu0 0
          %7387 = vmatpush1.bf16.msra.mxu0 %v7259
          %7388 = vmatprep.subr.bf16.mxu0 0
          %7389 = vmatpush1.bf16.msra.mxu0 %v7258
          %7390 = vmatprep.subr.bf16.mxu0 0
          %7391 = vmatpush1.bf16.msra.mxu0 %v7257
          %7392 = vmatprep.subr.bf16.mxu0 0
          %7393 = vmatpush1.bf16.msra.mxu0 %v7256
          %7394 = vmatprep.subr.bf16.mxu0 0
          %7395 = vmatpush1.bf16.msra.mxu0 %v7255
          %7396 = vmatprep.subr.bf16.mxu0 0
          %7397 = vmatpush1.bf16.msra.mxu0 %v7254
          %7398 = vmatprep.subr.bf16.mxu0 0
          %7399 = vmatpush2.bf16.msra.mxu0 %v7269
          %7400 = vmatprep.subr.bf16.mxu0 0
          %7401 = vmatpush2.bf16.msra.mxu0 %v7268
          %7402 = vmatprep.subr.bf16.mxu0 0
          %7403 = vmatpush2.bf16.msra.mxu0 %v7267
          %7404 = vmatprep.subr.bf16.mxu0 0
          %7405 = vmatpush2.bf16.msra.mxu0 %v7266
          %7406 = vmatprep.subr.bf16.mxu0 0
          %7407 = vmatpush2.bf16.msra.mxu0 %v7265
          %7408 = vmatprep.subr.bf16.mxu0 0
          %7409 = vmatpush2.bf16.msra.mxu0 %v7264
          %7410 = vmatprep.subr.bf16.mxu0 0
          %7411 = vmatpush2.bf16.msra.mxu0 %v7263
          %7412 = vmatprep.subr.bf16.mxu0 0
          %7413 = vmatpush2.bf16.msra.mxu0 %v7262
          %7414 = vmatprep.mubr.bf16.mxu0 %v6856
          %7415 = vmatmul.mubr.bf16.gmra.mxu0 %v6855
          %v7416 = vpop.f32.mrf.mxu0
          %v7417 = vadd.f32 %v6996, %v7416
          %v7418 = vpop.f32.mrf.mxu0
          %v7419 = vpop.f32.mrf.mxu0
          %v7420 = vpop.f32.mrf.mxu0
          %7421 = vdwg.mxu0
          %7422 = vmatprep.subr.bf16.mxu0 0
          %7423 = vmatpush1.bf16.msra.mxu0 %v7277
          %7424 = vmatprep.subr.bf16.mxu0 0
          %7425 = vmatpush1.bf16.msra.mxu0 %v7276
          %7426 = vmatprep.subr.bf16.mxu0 0
          %7427 = vmatpush1.bf16.msra.mxu0 %v7275
          %7428 = vmatprep.subr.bf16.mxu0 0
          %7429 = vmatpush1.bf16.msra.mxu0 %v7274
          %7430 = vmatprep.subr.bf16.mxu0 0
          %7431 = vmatpush1.bf16.msra.mxu0 %v7273
          %7432 = vmatprep.subr.bf16.mxu0 0
          %7433 = vmatpush1.bf16.msra.mxu0 %v7272
          %7434 = vmatprep.subr.bf16.mxu0 0
          %7435 = vmatpush1.bf16.msra.mxu0 %v7271
          %7436 = vmatprep.subr.bf16.mxu0 0
          %7437 = vmatpush1.bf16.msra.mxu0 %v7270
          %7438 = vmatprep.subr.bf16.mxu0 0
          %7439 = vmatpush2.bf16.msra.mxu0 %v7285
          %7440 = vmatprep.subr.bf16.mxu0 0
          %7441 = vmatpush2.bf16.msra.mxu0 %v7284
          %7442 = vmatprep.subr.bf16.mxu0 0
          %7443 = vmatpush2.bf16.msra.mxu0 %v7283
          %7444 = vmatprep.subr.bf16.mxu0 0
          %7445 = vmatpush2.bf16.msra.mxu0 %v7282
          %7446 = vmatprep.subr.bf16.mxu0 0
          %7447 = vmatpush2.bf16.msra.mxu0 %v7281
          %7448 = vmatprep.subr.bf16.mxu0 0
          %7449 = vmatpush2.bf16.msra.mxu0 %v7280
          %7450 = vmatprep.subr.bf16.mxu0 0
          %7451 = vmatpush2.bf16.msra.mxu0 %v7279
          %7452 = vmatprep.subr.bf16.mxu0 0
          %7453 = vmatpush2.bf16.msra.mxu0 %v7278
          %7454 = vmatprep.mubr.bf16.mxu0 %v6858
          %7455 = vmatmul.mubr.bf16.gmra.mxu0 %v6857
          %v7456 = vpop.f32.mrf.mxu0
          %v7457 = vadd.f32 %v7417, %v7456
          %v7458 = vpop.f32.mrf.mxu0
          %v7459 = vpop.f32.mrf.mxu0
          %v7460 = vpop.f32.mrf.mxu0
          %7461 = vdwg.mxu0
          %7462 = vmatprep.subr.bf16.mxu0 0
          %7463 = vmatpush1.bf16.msra.mxu0 %v7293
          %7464 = vmatprep.subr.bf16.mxu0 0
          %7465 = vmatpush1.bf16.msra.mxu0 %v7292
          %7466 = vmatprep.subr.bf16.mxu0 0
          %7467 = vmatpush1.bf16.msra.mxu0 %v7291
          %7468 = vmatprep.subr.bf16.mxu0 0
          %7469 = vmatpush1.bf16.msra.mxu0 %v7290
          %7470 = vmatprep.subr.bf16.mxu0 0
          %7471 = vmatpush1.bf16.msra.mxu0 %v7289
          %7472 = vmatprep.subr.bf16.mxu0 0
          %7473 = vmatpush1.bf16.msra.mxu0 %v7288
          %7474 = vmatprep.subr.bf16.mxu0 0
          %7475 = vmatpush1.bf16.msra.mxu0 %v7287
          %7476 = vmatprep.subr.bf16.mxu0 0
          %7477 = vmatpush1.bf16.msra.mxu0 %v7286
          %7478 = vmatprep.subr.bf16.mxu0 0
          %7479 = vmatpush2.bf16.msra.mxu0 %v7301
          %7480 = vmatprep.subr.bf16.mxu0 0
          %7481 = vmatpush2.bf16.msra.mxu0 %v7300
          %7482 = vmatprep.subr.bf16.mxu0 0
          %7483 = vmatpush2.bf16.msra.mxu0 %v7299
          %7484 = vmatprep.subr.bf16.mxu0 0
          %7485 = vmatpush2.bf16.msra.mxu0 %v7298
          %7486 = vmatprep.subr.bf16.mxu0 0
          %7487 = vmatpush2.bf16.msra.mxu0 %v7297
          %7488 = vmatprep.subr.bf16.mxu0 0
          %7489 = vmatpush2.bf16.msra.mxu0 %v7296
          %7490 = vmatprep.subr.bf16.mxu0 0
          %7491 = vmatpush2.bf16.msra.mxu0 %v7295
          %7492 = vmatprep.subr.bf16.mxu0 0
          %7493 = vmatpush2.bf16.msra.mxu0 %v7294
          %7494 = vmatprep.mubr.bf16.mxu0 %v6860
          %7495 = vmatmul.mubr.bf16.gmra.mxu0 %v6859
          %v7496 = vpop.f32.mrf.mxu0
          %v7497 = vadd.f32 %v7457, %v7496
          %v7498 = vpop.f32.mrf.mxu0
          %v7499 = vpop.f32.mrf.mxu0
          %v7500 = vpop.f32.mrf.mxu0
          %7501 = vdwg.mxu0
          %7502 = vmatprep.subr.bf16.mxu0 0
          %7503 = vmatpush1.bf16.msra.mxu0 %v7309
          %7504 = vmatprep.subr.bf16.mxu0 0
          %7505 = vmatpush1.bf16.msra.mxu0 %v7308
          %7506 = vmatprep.subr.bf16.mxu0 0
          %7507 = vmatpush1.bf16.msra.mxu0 %v7307
          %7508 = vmatprep.subr.bf16.mxu0 0
          %7509 = vmatpush1.bf16.msra.mxu0 %v7306
          %7510 = vmatprep.subr.bf16.mxu0 0
          %7511 = vmatpush1.bf16.msra.mxu0 %v7305
          %7512 = vmatprep.subr.bf16.mxu0 0
          %7513 = vmatpush1.bf16.msra.mxu0 %v7304
          %7514 = vmatprep.subr.bf16.mxu0 0
          %7515 = vmatpush1.bf16.msra.mxu0 %v7303
          %7516 = vmatprep.subr.bf16.mxu0 0
          %7517 = vmatpush1.bf16.msra.mxu0 %v7302
          %7518 = vmatprep.subr.bf16.mxu0 0
          %7519 = vmatpush2.bf16.msra.mxu0 %v7317
          %7520 = vmatprep.subr.bf16.mxu0 0
          %7521 = vmatpush2.bf16.msra.mxu0 %v7316
          %7522 = vmatprep.subr.bf16.mxu0 0
          %7523 = vmatpush2.bf16.msra.mxu0 %v7315
          %7524 = vmatprep.subr.bf16.mxu0 0
          %7525 = vmatpush2.bf16.msra.mxu0 %v7314
          %7526 = vmatprep.subr.bf16.mxu0 0
          %7527 = vmatpush2.bf16.msra.mxu0 %v7313
          %7528 = vmatprep.subr.bf16.mxu0 0
          %7529 = vmatpush2.bf16.msra.mxu0 %v7312
          %7530 = vmatprep.subr.bf16.mxu0 0
          %7531 = vmatpush2.bf16.msra.mxu0 %v7311
          %7532 = vmatprep.subr.bf16.mxu0 0
          %7533 = vmatpush2.bf16.msra.mxu0 %v7310
          %7534 = vmatprep.mubr.bf16.mxu0 %v6862
          %7535 = vmatmul.mubr.bf16.gmra.mxu0 %v6861
          %v7536 = vpop.f32.mrf.mxu0
          %v7537 = vadd.f32 %v7497, %v7536
          %v7538 = vpop.f32.mrf.mxu0
          %v7539 = vpop.f32.mrf.mxu0
          %v7540 = vpop.f32.mrf.mxu0
          %7541 = vdwg.mxu0
          %v7542 = vld [vmem:[%s14] sm:$0xff]
          %v7543 = vld [vmem:[%s14 + $0x8] sm:$0xff]
          %v7544 = vld [vmem:[%s14 + $0x10] sm:$0xff]
          %v7545 = vld [vmem:[%s14 + $0x18] sm:$0xff]
          %v7546 = vld [vmem:[%s14 + $0x20] sm:$0xff]
          %v7547 = vld [vmem:[%s14 + $0x28] sm:$0xff]
          %v7548 = vld [vmem:[%s14 + $0x30] sm:$0xff]
          %v7549 = vld [vmem:[%s14 + $0x38] sm:$0xff]
          %v7550 = vld [vmem:[%s14 + $0x40] sm:$0xff]
          %v7551 = vld [vmem:[%s14 + $0x48] sm:$0xff]
          %v7552 = vld [vmem:[%s14 + $0x50] sm:$0xff]
          %v7553 = vld [vmem:[%s14 + $0x58] sm:$0xff]
          %v7554 = vld [vmem:[%s14 + $0x60] sm:$0xff]
          %v7555 = vld [vmem:[%s14 + $0x68] sm:$0xff]
          %v7556 = vld [vmem:[%s14 + $0x70] sm:$0xff]
          %v7557 = vld [vmem:[%s14 + $0x78] sm:$0xff]
          %v7558 = vld [vmem:[#allocation28] sm:$0x1]
          %v7560 = vlaneseq
          %v7561 = vshrl.u32 %v7560, 7
          %v7562 = vsub.s32 0, %v7561
          %v7563 = vrot.slane %v7558, %v7562
          %7565 = vmatprep.subr.mxu0 0.0
          %7566 = vmatpush1.msra.mxu0 %v7557
          %7567 = vmatprep.subr.mxu0 0.0
          %7568 = vmatpush1.msra.mxu0 %v7556
          %7569 = vmatprep.subr.mxu0 0.0
          %7570 = vmatpush1.msra.mxu0 %v7555
          %7571 = vmatprep.subr.mxu0 0.0
          %7572 = vmatpush1.msra.mxu0 %v7554
          %7573 = vmatprep.subr.mxu0 0.0
          %7574 = vmatpush1.msra.mxu0 %v7553
          %7575 = vmatprep.subr.mxu0 0.0
          %7576 = vmatpush1.msra.mxu0 %v7552
          %7577 = vmatprep.subr.mxu0 0.0
          %7578 = vmatpush1.msra.mxu0 %v7551
          %7579 = vmatprep.subr.mxu0 0.0
          %7580 = vmatpush1.msra.mxu0 %v7550
          %7581 = vmatprep.subr.mxu0 0.0
          %7582 = vmatpush1.msra.mxu0 %v7549
          %7583 = vmatprep.subr.mxu0 0.0
          %7584 = vmatpush1.msra.mxu0 %v7548
          %7585 = vmatprep.subr.mxu0 0.0
          %7586 = vmatpush1.msra.mxu0 %v7547
          %7587 = vmatprep.subr.mxu0 0.0
          %7588 = vmatpush1.msra.mxu0 %v7546
          %7589 = vmatprep.subr.mxu0 0.0
          %7590 = vmatpush1.msra.mxu0 %v7545
          %7591 = vmatprep.subr.mxu0 0.0
          %7592 = vmatpush1.msra.mxu0 %v7544
          %7593 = vmatprep.subr.mxu0 0.0
          %7594 = vmatpush1.msra.mxu0 %v7543
          %7595 = vmatprep.subr.mxu0 0.0
          %7596 = vmatpush1.msra.mxu0 %v7542
          %7597 = vmatprep.subr.mxu0 0.0
          %7598 = vmatpush2.msra.mxu0 0.0
          %7599 = vmatprep.subr.mxu0 0.0
          %7600 = vmatpush2.msra.mxu0 0.0
          %7601 = vmatprep.subr.mxu0 0.0
          %7602 = vmatpush2.msra.mxu0 0.0
          %7603 = vmatprep.subr.mxu0 0.0
          %7604 = vmatpush2.msra.mxu0 0.0
          %7605 = vmatprep.subr.mxu0 0.0
          %7606 = vmatpush2.msra.mxu0 0.0
          %7607 = vmatprep.subr.mxu0 0.0
          %7608 = vmatpush2.msra.mxu0 0.0
          %7609 = vmatprep.subr.mxu0 0.0
          %7610 = vmatpush2.msra.mxu0 0.0
          %7611 = vmatprep.subr.mxu0 0.0
          %7612 = vmatpush2.msra.mxu0 0.0
          %7613 = vmatprep.subr.mxu0 0.0
          %7614 = vmatpush2.msra.mxu0 0.0
          %7615 = vmatprep.subr.mxu0 0.0
          %7616 = vmatpush2.msra.mxu0 0.0
          %7617 = vmatprep.subr.mxu0 0.0
          %7618 = vmatpush2.msra.mxu0 0.0
          %7619 = vmatprep.subr.mxu0 0.0
          %7620 = vmatpush2.msra.mxu0 0.0
          %7621 = vmatprep.subr.mxu0 0.0
          %7622 = vmatpush2.msra.mxu0 0.0
          %7623 = vmatprep.subr.mxu0 0.0
          %7624 = vmatpush2.msra.mxu0 0.0
          %7625 = vmatprep.subr.mxu0 0.0
          %7626 = vmatpush2.msra.mxu0 0.0
          %7627 = vmatprep.subr.mxu0 0.0
          %7628 = vmatpush2.msra.mxu0 0.0
          %7629 = vmatprep.mubr.f32.mxu0 0.0
          %7630 = vmatmul.mubr.f32.gmra.mxu0 %v7537
          %v7631 = vpop.f32.mrf.mxu0
          %v7632 = vadd.f32 %v7563, %v7631
          %v7633 = vpop.f32.mrf.mxu0
          %7634 = vdwg.mxu0
          %v7635 = vld [vmem:[#allocation30] sm:$0x3]
          %v7636 = vmax.f32 %v7632, %v7635
          %vm7637 = vcmask 58368
          %7638 = vst.msk [vmem:[#allocation31] sm:$0x3] %vm7637, %v7636
        $region156: #{llm_forward.1} parent=87 // pred_fallthru
          _
        // Predicated region
        $region157: #{llm_forward.1} parent=87 // pred_check
          %p7639 = pneg %p441
        $region158: #{llm_forward.1} parent=87 // pred_check_branch
          %7641 = sbr.rel (%p7639) target = $region160
        $region159: #{llm_forward.1} parent=87 // pred_region
          %s7643 = ssub.s32 32, 32
          %7644 = vsyncadd [#allocation11], %s7643
          %s7646 = sshll.u32 [#allocation31], 4
          %s7647 = int_to_ptr.vmem [resolvable:$true] %s7646
          %7649 = dma.vmem_to_hbm [thread:$0]  %s7647, 32, %s17, [#allocation11]
        $region160: #{llm_forward.1} parent=87 // pred_fallthru
          _
        // Predicated region
        $region161: #{llm_forward.1} parent=87 // pred_check
          %p7650 = pneg %p462
        $region162: #{llm_forward.1} parent=87 // pred_check_branch
          %7652 = sbr.rel (%p7650) target = $region164
        $region163: #{llm_forward.1} parent=87 // pred_region
          %s7654 = ssub.s32 16, 16
          %7655 = vsyncadd [#allocation33], %s7654
          %s7657 = sshll.u32 [#allocation32], 4
          %s7658 = int_to_ptr.vmem [resolvable:$true] %s7657
          %7660 = dma.vmem_to_hbm [thread:$0]  %s7658, 16, %s18, [#allocation33]
        $region164: #{llm_forward.1} parent=87 // pred_fallthru
          _
        // Predicated region
        $region165: #{llm_forward.1} parent=87 // pred_check
          %p7661 = pneg %p483
        $region166: #{llm_forward.1} parent=87 // pred_check_branch
          %7663 = sbr.rel (%p7661) target = $region168
        $region167: #{llm_forward.1} parent=87 // pred_region
          %s7665 = ssub.s32 16, 16
          %7666 = vsyncadd [#allocation33], %s7665
          %s7668 = sshll.u32 [#allocation34], 4
          %s7669 = int_to_ptr.vmem [resolvable:$true] %s7668
          %7671 = dma.vmem_to_hbm [thread:$0]  %s7669, 16, %s19, [#allocation33]
        $region168: #{llm_forward.1} parent=87 // pred_fallthru
          _
        // Predicated region
        $region169: #{llm_forward.1} parent=87 // pred_check
          %p7672 = pneg %p441
        $region170: #{llm_forward.1} parent=87 // pred_check_branch
          %7674 = sbr.rel (%p7672) target = $region172
        $region171: #{llm_forward.1} parent=87 // pred_region
          %7675 = dma.done [#allocation11], 32
        $region172: #{llm_forward.1} parent=87 // pred_fallthru
          _
        // Predicated region
        $region173: #{llm_forward.1} parent=87 // pred_check
          %p7676 = pneg %p462
        $region174: #{llm_forward.1} parent=87 // pred_check_branch
          %7678 = sbr.rel (%p7676) target = $region176
        $region175: #{llm_forward.1} parent=87 // pred_region
          %7679 = dma.done [#allocation33], 16
        $region176: #{llm_forward.1} parent=87 // pred_fallthru
          _
        // Predicated region
        $region177: #{llm_forward.1} parent=87 // pred_check
          %p7680 = pneg %p483
        $region178: #{llm_forward.1} parent=87 // pred_check_branch
          %7682 = sbr.rel (%p7680) target = $region180
        $region179: #{llm_forward.1} parent=87 // pred_region
          %7683 = dma.done [#allocation33], 16
        $region180: #{llm_forward.1} parent=87 // pred_fallthru
          _
      $region88: #{llm_forward.1} parent=5 // pred_fallthru
        _
      %p7684 = scmp.le.s32.totalorder 2, %s36
      // Predicated region
      $region181: #{llm_forward.1} parent=5 // pred_check
        %p7685 = pneg %p7684
      $region182: #{llm_forward.1} parent=5 // pred_check_branch
        %7687 = sbr.rel (%p7685) target = $region184
      $region183: #{llm_forward.1} parent=5 // pred_region
        %s7688 = ssub.s32 %s36, 2
      $region184: #{llm_forward.1} parent=5 // pred_fallthru
        _
    $region6: #{llm_forward.1} parent=1 // loop_footer
      %s40 = sadd.s32 1, %s36
    $region7: #{llm_forward.1} parent=1 // loop_footer_branch
      %35 = sbr.rel target = $region3
    $region8: #{llm_forward.1} parent=1 // loop_exit
      _
    %7689 = vsyncpa [#allocation10], 1
    %s7690 = scalar_lea.sflag [#allocation10], 1
    %7691 = vsyncpa %s7690, 1
    %7692 = vsyncpa [#allocation13], 1
    %7693 = vsyncpa [#allocation20], 1
    %7694 = vsyncpa [#allocation23], 1
    %s7695 = scalar_lea.sflag [#allocation23], 1
    %7696 = vsyncpa %s7695, 1
    %7697 = vsyncpa [#allocation26], 1
    %7698 = vsyncpa [#allocation29], 1
    %7699 = vsyncpa [#allocation11], 1
    %s7700 = scalar_lea.sflag [#allocation11], 1
    %7701 = vsyncpa %s7700, 1
    %7702 = vsyncpa [#allocation33], 1

</llo_original>
